<compile_context>
chip_gen: v5e
topology: v5e:2x2
jax: 0.10.0
libtpu: 0.0.40
codegen_flags: <defaults>
</compile_context>

<pallas_src>
import jax
import jax.numpy as jnp
from jax.experimental import pallas as pl
from jax.experimental.pallas import tpu as pltpu

GROWTH = 8                  # densenet growth rate k
BOTTLENECK = 4 * GROWTH     # bottleneck width (4k), as in DenseNet-BC
SLAB = 32                   # channel-slab width of the in-VMEM dense-block feature map
STEM_CH = 16
LAYERS_PER_BLOCK = 2
_PAD_W = 8                  # sublane-aligned interior offset inside the zero-halo buffers

VMEM_SPEC = pl.BlockSpec(memory_space=pltpu.MemorySpace.VMEM)


# ------------------------------ fused Pallas kernel --------------------------------

def _fused_main_model_kernel(
    x_ref,                      # (1, H, W, SLAB)            per-image input block
    stem_w_ref,                 # (9*SLAB, STEM_CH)          stem 3x3 conv (kh,kw,cin rows)
    stem_s_ref, stem_b_ref,     # (1, 1, 1, STEM_CH)         folded eval-mode BN
    bn1_s_ref, bn1_b_ref,       # (L, 1, 1, 1, SLAB)
    w1_ref,                     # (L, SLAB, BOTTLENECK)      1x1 bottleneck convs
    bn2_s_ref, bn2_b_ref,       # (L, 1, BOTTLENECK)
    w2_ref,                     # (L, 9*BOTTLENECK, GROWTH)  3x3 convs (kh,kw,cin rows)
    tr_s_ref, tr_b_ref,         # (1, 1, 1, SLAB)
    tr_w_ref,                   # (SLAB, SLAB // 2)          transition 1x1 conv
    fin_s_ref, fin_b_ref,       # (1, 1, 1, SLAB)
    fc_w_ref, fc_b_ref,         # (SLAB, O), (1, O)
    o_ref,                      # (1, 1, O)                  per-image logits
    feat1_ref,                  # (1, H,  W,  SLAB)          scratch: block-1 feature slab
    feat2_ref,                  # (1, H2, W2, SLAB)          scratch: block-2 feature slab
    pad1_ref,                   # (1, H+2,  W+_PAD_W+1,  SLAB) scratch: zero-halo conv buf
    pad2_ref,                   # (1, H2+2, W2+_PAD_W+1, SLAB) scratch: zero-halo conv buf
    hs_ref,                     # (H2, W, SLAB//2)           scratch: H-pooled transition
):
    n, H, W, slab = feat1_ref.shape
    _, H2, W2, _ = feat2_ref.shape
    stem_ch = stem_w_ref.shape[1]
    growth = w2_ref.shape[2]
    per_block = w1_ref.shape[0] // 2
    trans_out = tr_w_ref.shape[1]
    f32 = jnp.float32

    # ---- zero ONLY what is read before being written (done every grid step so it is
    # ---- safe under "parallel" megacore scheduling; interiors are overwritten in place)
    def zero_halo(pad_ref):
        _, hp, wp, ch = pad_ref.shape
        row = jnp.zeros((n, 1, wp, ch), f32)
        col = jnp.zeros((n, hp, 1, ch), f32)
        pad_ref[:, 0:1, :, :] = row                   # top halo row
        pad_ref[:, hp - 1:hp, :, :] = row             # bottom halo row
        pad_ref[:, :, _PAD_W - 1:_PAD_W, :] = col     # left halo column (kw=0 tap)
        pad_ref[:, :, wp - 1:wp, :] = col             # right halo column (kw=2 tap)

    zero_halo(pad1_ref)
    zero_halo(pad2_ref)
    # tail channels of the slabs are read (with zero BN scale / zero w1 rows) before the
    # dense layers write them: zero them so stale-VMEM NaN can never propagate.
    feat1_ref[:, :, :, stem_ch:slab] = jnp.zeros((n, H, W, slab - stem_ch), f32)
    feat2_ref[:, :, :, trans_out:slab] = jnp.zeros((n, H2, W2, slab - trans_out), f32)

    def bn_relu(v, s, b):                       # folded eval-mode BN + ReLU (VPU epilogue)
        return jnp.maximum(v * s + b, 0.0)

    def conv3x3(pad_ref, w, h, wd):
        # One lane-concat of the 3 kw taps (K = 3*slab) built once over the full padded
        # height, then 3 accumulating MXU dots over kh (free leading-dim slices).
        xp = pad_ref[...]                                       # (n, h+2, wd+9, ci)
        ci = xp.shape[-1]
        cat = jnp.concatenate(
            [xp[:, :, _PAD_W - 1 + kw:_PAD_W - 1 + kw + wd, :] for kw in range(3)],
            axis=-1)                                            # (n, h+2, wd, 3*ci)
        acc = jnp.zeros((n * h * wd, w.shape[1]), f32)
        for kh in range(3):
            taps = cat[:, kh:kh + h].reshape(n * h * wd, 3 * ci)
            acc = acc + jnp.dot(taps, w[kh * 3 * ci:(kh + 1) * 3 * ci],
                                preferred_element_type=f32)
        return acc                                              # (n*h*wd, cout)

    # -------------------------- stem: 3x3 conv -> BN -> ReLU ------------------------
    pad1_ref[:, pl.ds(1, H), pl.ds(_PAD_W, W), :] = x_ref[...]
    stem = conv3x3(pad1_ref, stem_w_ref[...], H, W).reshape(n, H, W, stem_ch)
    feat1_ref[:, :, :, 0:stem_ch] = bn_relu(stem, stem_s_ref[...], stem_b_ref[...])

    # -------- dense layer: BN-ReLU-1x1(4k) -> BN-ReLU-3x3(k), new channels in place --
    def dense_layer(feat_ref, pad_ref, h, wd, li, c_in):
        a = bn_relu(feat_ref[...], bn1_s_ref[li], bn1_b_ref[li])     # full slab; padded
        btl = jnp.dot(a.reshape(n * h * wd, slab), w1_ref[li],       # zero w1 rows kill
                      preferred_element_type=f32)                    # the extra channels
        btl = bn_relu(btl, bn2_s_ref[li], bn2_b_ref[li])
        pad_ref[:, pl.ds(1, h), pl.ds(_PAD_W, wd), :] = btl.reshape(n, h, wd, -1)
        new = conv3x3(pad_ref, w2_ref[li], h, wd)                    # (n*h*wd, growth)
        feat_ref[:, :, :, c_in:c_in + growth] = new.reshape(n, h, wd, growth)

    c = stem_ch
    for i in range(per_block):                  # dense block 1 (H x W)
        dense_layer(feat1_ref, pad1_ref, H, W, i, c)
        c += growth

    # ---------------- transition: BN-ReLU -> 1x1 conv -> 2x2 avg-pool ----------------
    # (conv before pool = native torchvision order; halves the data being pooled)
    t = bn_relu(feat1_ref[...], tr_s_ref[...], tr_b_ref[...])
    tr = jnp.dot(t.reshape(n * H * W, slab), tr_w_ref[...],
                 preferred_element_type=f32)                          # (n*H*W, trans_out)
    tr = tr.reshape(n * H2, 2, W, trans_out)                          # split H (leading)
    hs_ref[...] = tr[:, 0] + tr[:, 1]                                 # H-pair sums (free)
    pooled = (hs_ref[:, pl.ds(0, W2, 2), :]                           # strided sublane
              + hs_ref[:, pl.ds(1, W2, 2), :]) * 0.25                 # reads pool over W
    feat2_ref[:, :, :, 0:trans_out] = pooled.reshape(n, H2, W2, trans_out)

    c = trans_out
    for i in range(per_block):                  # dense block 2 (H2 x W2)
        dense_layer(feat2_ref, pad2_ref, H2, W2, per_block + i, c)
        c += growth

    # ---------------- final BN-ReLU -> global average pool -> fc ---------------------
    y = bn_relu(feat2_ref[...], fin_s_ref[...], fin_b_ref[...])
    feat = jnp.sum(y.reshape(n, H2 * W2, slab), axis=1) * (1.0 / (H2 * W2))   # (n, slab)
    logits = jnp.dot(feat, fc_w_ref[...], preferred_element_type=f32) + fc_b_ref[...]
    o_ref[...] = logits.reshape(n, 1, -1).astype(o_ref.dtype)


# ---------------------------------- JAX wrapper -------------------------------------

def main_model_forward(params, x_nchw):
    """MainModel.forward: feat = self.feature(x); logit = self.fc(feat) — one fused kernel."""
    N, C_in, H, W = x_nchw.shape
    assert H % 2 == 0 and W % 2 == 0 and C_in <= SLAB
    Ho, Wo = H // 2, W // 2
    num_classes = params['fc_w'].shape[1]
    trans_out = params['tr_w'].shape[1]

    # NCHW (PyTorch) -> NHWC and zero-pad channels into the SLAB-wide slab
    # (single tiny XLA op on the 3 KB network input; everything else is in-kernel).
    x = jnp.transpose(x_nchw, (0, 2, 3, 1))
    x = jnp.pad(x, ((0, 0), (0, 0), (0, 0), (0, SLAB - C_in)))

    out = pl.pallas_call(
        _fused_main_model_kernel,
        out_shape=jax.ShapeDtypeStruct((N, 1, num_classes), jnp.float32),
        grid=(N,),                                                    # batch grid: v7x's
        in_specs=[pl.BlockSpec((1, H, W, SLAB), lambda b: (b, 0, 0, 0))]  # 2 TCs split it
                 + [VMEM_SPEC] * 16,
        out_specs=pl.BlockSpec((1, 1, num_classes), lambda b: (b, 0, 0)),
        scratch_shapes=[
            pltpu.VMEM((1, H, W, SLAB), jnp.float32),                      # feature slab 1
            pltpu.VMEM((1, Ho, Wo, SLAB), jnp.float32),                    # feature slab 2
            pltpu.VMEM((1, H + 2, W + _PAD_W + 1, SLAB), jnp.float32),     # zero-halo buf 1
            pltpu.VMEM((1, Ho + 2, Wo + _PAD_W + 1, SLAB), jnp.float32),   # zero-halo buf 2
            pltpu.VMEM((Ho, W, trans_out), jnp.float32),                   # H-pooled trans.
        ],
        compiler_params=pltpu.CompilerParams(
            dimension_semantics=("parallel",),
            vmem_limit_bytes=32 * 1024 * 1024),
    )(x, params['stem_w'], params['stem_s'], params['stem_b'],
      params['bn1_s'], params['bn1_b'], params['w1'],
      params['bn2_s'], params['bn2_b'], params['w2'],
      params['tr_s'], params['tr_b'], params['tr_w'],
      params['fin_s'], params['fin_b'],
      params['fc_w'], params['fc_b'])
    return out[:, 0, :]


# --------------------------- parameters (deterministic) -----------------------------

def init_main_model_params(key, in_ch=3, num_classes=4, stem_ch=STEM_CH,
                           layers_per_block=LAYERS_PER_BLOCK):
    keys = jax.random.split(key, 64)
    kit = iter(keys)

    def he(k, shape, fan_in):
        return jax.random.normal(k, shape, jnp.float32) * (2.0 / fan_in) ** 0.5

    def bn(k, c):
        # Folded eval-mode BN: scale = gamma/sqrt(var+eps), bias = beta - mean*scale.
        k1, k2 = jax.random.split(k)
        scale = 1.0 + 0.1 * jax.random.normal(k1, (c,), jnp.float32)
        bias = 0.1 * jax.random.normal(k2, (c,), jnp.float32)
        return scale, bias

    p = {}

    # stem: 3x3 conv (in_ch -> stem_ch); cin zero-padded into the SLAB-wide slab,
    # weight laid out in the kernel's (kh, kw, cin) row order.
    w = he(next(kit), (3, 3, in_ch, stem_ch), 9 * in_ch)
    wp = jnp.zeros((3, 3, SLAB, stem_ch), jnp.float32).at[:, :, :in_ch, :].set(w)
    p['stem_w'] = wp.reshape(9 * SLAB, stem_ch)
    s, b = bn(next(kit), stem_ch)
    p['stem_s'] = s.reshape(1, 1, 1, stem_ch)
    p['stem_b'] = b.reshape(1, 1, 1, stem_ch)

    # channel count entering each of the 2*layers_per_block dense layers
    cins, c = [], stem_ch
    for _ in range(layers_per_block):
        cins.append(c); c += GROWTH
    trans_in, trans_out = c, c // 2
    c = trans_out
    for _ in range(layers_per_block):
        cins.append(c); c += GROWTH
    n_feat = c
    assert trans_in == SLAB and n_feat == SLAB   # slab-width invariant of the fused kernel

    bn1_s, bn1_b, w1, bn2_s, bn2_b, w2 = [], [], [], [], [], []
    for cin in cins:
        s, b = bn(next(kit), cin)
        bn1_s.append(jnp.zeros((SLAB,), jnp.float32).at[:cin].set(s))
        bn1_b.append(jnp.zeros((SLAB,), jnp.float32).at[:cin].set(b))
        wl = he(next(kit), (cin, BOTTLENECK), cin)                 # 1x1 conv, bias=False
        w1.append(jnp.zeros((SLAB, BOTTLENECK), jnp.float32).at[:cin, :].set(wl))
        s2, b2 = bn(next(kit), BOTTLENECK)
        bn2_s.append(s2); bn2_b.append(b2)
        w2.append(he(next(kit), (3, 3, BOTTLENECK, GROWTH), 9 * BOTTLENECK)
                  .reshape(9 * BOTTLENECK, GROWTH))                # 3x3 conv, bias=False
    L = len(cins)
    p['bn1_s'] = jnp.stack(bn1_s).reshape(L, 1, 1, 1, SLAB)
    p['bn1_b'] = jnp.stack(bn1_b).reshape(L, 1, 1, 1, SLAB)
    p['w1'] = jnp.stack(w1)
    p['bn2_s'] = jnp.stack(bn2_s).reshape(L, 1, BOTTLENECK)
    p['bn2_b'] = jnp.stack(bn2_b).reshape(L, 1, BOTTLENECK)
    p['w2'] = jnp.stack(w2)

    # transition (BN + ReLU + 1x1 conv + 2x2 avg-pool; pool done in-kernel)
    s, b = bn(next(kit), trans_in)
    p['tr_s'] = s.reshape(1, 1, 1, trans_in)
    p['tr_b'] = b.reshape(1, 1, 1, trans_in)
    p['tr_w'] = he(next(kit), (trans_in, trans_out), trans_in)

    # final BN + fc head (classifier of the backbone replaced by identity, then nn.Linear)
    s, b = bn(next(kit), n_feat)
    p['fin_s'] = s.reshape(1, 1, 1, n_feat)
    p['fin_b'] = b.reshape(1, 1, 1, n_feat)
    p['fc_w'] = (jax.random.normal(next(kit), (n_feat, num_classes), jnp.float32)
                 * (1.0 / n_feat) ** 0.5)
    p['fc_b'] = (0.01 * jax.random.normal(next(kit), (num_classes,), jnp.float32)
                 ).reshape(1, num_classes)
    return p


if __name__ == "__main__":
    key = jax.random.PRNGKey(0)
    pkey, xkey = jax.random.split(key)
    num_classes = 4
    params = init_main_model_params(pkey, in_ch=3, num_classes=num_classes)

    # small input consistent with the module: batch=2, 3-channel 16x16 image (NCHW)
    x = jax.random.normal(xkey, (2, 3, 16, 16), jnp.float32)

    logits = jax.jit(main_model_forward)(params, x)
    jax.block_until_ready(logits)
    assert logits.shape == (2, num_classes) and logits.dtype == jnp.float32
    assert bool(jnp.all(jnp.isfinite(logits)))
    print("KERNEL_OK")
</pallas_src>

<mosaic_0001>
module attributes {stable_mosaic.version = 11 : i64} {
  func.func @_fused_main_model_kernel(%arg0: i32, %arg1: memref<1x16x16x32xf32, #tpu.memory_space<vmem>>, %arg2: memref<288x16xf32, #tpu.memory_space<vmem>>, %arg3: memref<1x1x1x16xf32, #tpu.memory_space<vmem>>, %arg4: memref<1x1x1x16xf32, #tpu.memory_space<vmem>>, %arg5: memref<4x1x1x1x32xf32, #tpu.memory_space<vmem>>, %arg6: memref<4x1x1x1x32xf32, #tpu.memory_space<vmem>>, %arg7: memref<4x32x32xf32, #tpu.memory_space<vmem>>, %arg8: memref<4x1x32xf32, #tpu.memory_space<vmem>>, %arg9: memref<4x1x32xf32, #tpu.memory_space<vmem>>, %arg10: memref<4x288x8xf32, #tpu.memory_space<vmem>>, %arg11: memref<1x1x1x32xf32, #tpu.memory_space<vmem>>, %arg12: memref<1x1x1x32xf32, #tpu.memory_space<vmem>>, %arg13: memref<32x16xf32, #tpu.memory_space<vmem>>, %arg14: memref<1x1x1x32xf32, #tpu.memory_space<vmem>>, %arg15: memref<1x1x1x32xf32, #tpu.memory_space<vmem>>, %arg16: memref<32x4xf32, #tpu.memory_space<vmem>>, %arg17: memref<1x4xf32, #tpu.memory_space<vmem>>, %arg18: memref<1x1x4xf32, #tpu.memory_space<vmem>>, %arg19: memref<1x16x16x32xf32, #tpu.memory_space<vmem>>, %arg20: memref<1x8x8x32xf32, #tpu.memory_space<vmem>>, %arg21: memref<1x18x25x32xf32, #tpu.memory_space<vmem>>, %arg22: memref<1x10x17x32xf32, #tpu.memory_space<vmem>>, %arg23: memref<8x16x16xf32, #tpu.memory_space<vmem>>) attributes {dimension_semantics = [#tpu.dimension_semantics<parallel>], iteration_bounds = array<i64: 2>, scalar_prefetch = 0 : i64, scratch_operands = 5 : i64, tpu.core_type = #tpu.core_type<tc>, window_params = [{transform_indices = @transform_0, window_bounds = array<i64: 1, 16, 16, 32>}, {pipeline_mode = #tpu.pipeline_mode<synchronous>, transform_indices = @transform_1, window_bounds = array<i64: 288, 16>}, {pipeline_mode = #tpu.pipeline_mode<synchronous>, transform_indices = @transform_2, window_bounds = array<i64: 1, 1, 1, 16>}, {pipeline_mode = #tpu.pipeline_mode<synchronous>, transform_indices = @transform_3, window_bounds = array<i64: 1, 1, 1, 16>}, {pipeline_mode = #tpu.pipeline_mode<synchronous>, transform_indices = @transform_4, window_bounds = array<i64: 4, 1, 1, 1, 32>}, {pipeline_mode = #tpu.pipeline_mode<synchronous>, transform_indices = @transform_5, window_bounds = array<i64: 4, 1, 1, 1, 32>}, {pipeline_mode = #tpu.pipeline_mode<synchronous>, transform_indices = @transform_6, window_bounds = array<i64: 4, 32, 32>}, {pipeline_mode = #tpu.pipeline_mode<synchronous>, transform_indices = @transform_7, window_bounds = array<i64: 4, 1, 32>}, {pipeline_mode = #tpu.pipeline_mode<synchronous>, transform_indices = @transform_8, window_bounds = array<i64: 4, 1, 32>}, {pipeline_mode = #tpu.pipeline_mode<synchronous>, transform_indices = @transform_9, window_bounds = array<i64: 4, 288, 8>}, {pipeline_mode = #tpu.pipeline_mode<synchronous>, transform_indices = @transform_10, window_bounds = array<i64: 1, 1, 1, 32>}, {pipeline_mode = #tpu.pipeline_mode<synchronous>, transform_indices = @transform_11, window_bounds = array<i64: 1, 1, 1, 32>}, {pipeline_mode = #tpu.pipeline_mode<synchronous>, transform_indices = @transform_12, window_bounds = array<i64: 32, 16>}, {pipeline_mode = #tpu.pipeline_mode<synchronous>, transform_indices = @transform_13, window_bounds = array<i64: 1, 1, 1, 32>}, {pipeline_mode = #tpu.pipeline_mode<synchronous>, transform_indices = @transform_14, window_bounds = array<i64: 1, 1, 1, 32>}, {pipeline_mode = #tpu.pipeline_mode<synchronous>, transform_indices = @transform_15, window_bounds = array<i64: 32, 4>}, {pipeline_mode = #tpu.pipeline_mode<synchronous>, transform_indices = @transform_16, window_bounds = array<i64: 1, 4>}, {transform_indices = @transform_17, window_bounds = array<i64: 1, 1, 4>}]} {
    %cst = arith.constant 0.000000e+00 : f32
    %0 = vector.broadcast %cst : f32 to vector<1x1x25x32xf32>
    %cst_0 = arith.constant 0.000000e+00 : f32
    %1 = vector.broadcast %cst_0 : f32 to vector<1x18x1x32xf32>
    %c0 = arith.constant 0 : index
    %c0_1 = arith.constant 0 : index
    %c0_2 = arith.constant 0 : index
    %c0_3 = arith.constant 0 : index
    %2 = vector.load %arg21[%c0, %c0_1, %c0_2, %c0_3] : memref<1x18x25x32xf32, #tpu.memory_space<vmem>>, vector<1x1x25x32xf32>
    tpu.vector_store %arg21[%c0, %c0_1, %c0_2, %c0_3], %0 {strides = array<i32>} : memref<1x18x25x32xf32, #tpu.memory_space<vmem>>, vector<1x1x25x32xf32>,
    %c0_4 = arith.constant 0 : index
    %c17 = arith.constant 17 : index
    %c0_5 = arith.constant 0 : index
    %c0_6 = arith.constant 0 : index
    %3 = vector.load %arg21[%c0_4, %c17, %c0_5, %c0_6] : memref<1x18x25x32xf32, #tpu.memory_space<vmem>>, vector<1x1x25x32xf32>
    tpu.vector_store %arg21[%c0_4, %c17, %c0_5, %c0_6], %0 {strides = array<i32>} : memref<1x18x25x32xf32, #tpu.memory_space<vmem>>, vector<1x1x25x32xf32>,
    %c0_7 = arith.constant 0 : index
    %c0_8 = arith.constant 0 : index
    %c7 = arith.constant 7 : index
    %c0_9 = arith.constant 0 : index
    %4 = vector.load %arg21[%c0_7, %c0_8, %c7, %c0_9] : memref<1x18x25x32xf32, #tpu.memory_space<vmem>>, vector<1x18x1x32xf32>
    tpu.vector_store %arg21[%c0_7, %c0_8, %c7, %c0_9], %1 {strides = array<i32>} : memref<1x18x25x32xf32, #tpu.memory_space<vmem>>, vector<1x18x1x32xf32>,
    %c0_10 = arith.constant 0 : index
    %c0_11 = arith.constant 0 : index
    %c24 = arith.constant 24 : index
    %c0_12 = arith.constant 0 : index
    %5 = vector.load %arg21[%c0_10, %c0_11, %c24, %c0_12] : memref<1x18x25x32xf32, #tpu.memory_space<vmem>>, vector<1x18x1x32xf32>
    tpu.vector_store %arg21[%c0_10, %c0_11, %c24, %c0_12], %1 {strides = array<i32>} : memref<1x18x25x32xf32, #tpu.memory_space<vmem>>, vector<1x18x1x32xf32>,
    %cst_13 = arith.constant 0.000000e+00 : f32
    %6 = vector.broadcast %cst_13 : f32 to vector<1x1x17x32xf32>
    %cst_14 = arith.constant 0.000000e+00 : f32
    %7 = vector.broadcast %cst_14 : f32 to vector<1x10x1x32xf32>
    %c0_15 = arith.constant 0 : index
    %c0_16 = arith.constant 0 : index
    %c0_17 = arith.constant 0 : index
    %c0_18 = arith.constant 0 : index
    %8 = vector.load %arg22[%c0_15, %c0_16, %c0_17, %c0_18] : memref<1x10x17x32xf32, #tpu.memory_space<vmem>>, vector<1x1x17x32xf32>
    tpu.vector_store %arg22[%c0_15, %c0_16, %c0_17, %c0_18], %6 {strides = array<i32>} : memref<1x10x17x32xf32, #tpu.memory_space<vmem>>, vector<1x1x17x32xf32>,
    %c0_19 = arith.constant 0 : index
    %c9 = arith.constant 9 : index
    %c0_20 = arith.constant 0 : index
    %c0_21 = arith.constant 0 : index
    %9 = vector.load %arg22[%c0_19, %c9, %c0_20, %c0_21] : memref<1x10x17x32xf32, #tpu.memory_space<vmem>>, vector<1x1x17x32xf32>
    tpu.vector_store %arg22[%c0_19, %c9, %c0_20, %c0_21], %6 {strides = array<i32>} : memref<1x10x17x32xf32, #tpu.memory_space<vmem>>, vector<1x1x17x32xf32>,
    %c0_22 = arith.constant 0 : index
    %c0_23 = arith.constant 0 : index
    %c7_24 = arith.constant 7 : index
    %c0_25 = arith.constant 0 : index
    %10 = vector.load %arg22[%c0_22, %c0_23, %c7_24, %c0_25] : memref<1x10x17x32xf32, #tpu.memory_space<vmem>>, vector<1x10x1x32xf32>
    tpu.vector_store %arg22[%c0_22, %c0_23, %c7_24, %c0_25], %7 {strides = array<i32>} : memref<1x10x17x32xf32, #tpu.memory_space<vmem>>, vector<1x10x1x32xf32>,
    %c0_26 = arith.constant 0 : index
    %c0_27 = arith.constant 0 : index
    %c16 = arith.constant 16 : index
    %c0_28 = arith.constant 0 : index
    %11 = vector.load %arg22[%c0_26, %c0_27, %c16, %c0_28] : memref<1x10x17x32xf32, #tpu.memory_space<vmem>>, vector<1x10x1x32xf32>
    tpu.vector_store %arg22[%c0_26, %c0_27, %c16, %c0_28], %7 {strides = array<i32>} : memref<1x10x17x32xf32, #tpu.memory_space<vmem>>, vector<1x10x1x32xf32>,
    %cst_29 = arith.constant 0.000000e+00 : f32
    %12 = vector.broadcast %cst_29 : f32 to vector<1x16x16x16xf32>
    %c0_30 = arith.constant 0 : index
    %c0_31 = arith.constant 0 : index
    %c0_32 = arith.constant 0 : index
    %c16_33 = arith.constant 16 : index
    %13 = vector.load %arg19[%c0_30, %c0_31, %c0_32, %c16_33] : memref<1x16x16x32xf32, #tpu.memory_space<vmem>>, vector<1x16x16x16xf32>
    tpu.vector_store %arg19[%c0_30, %c0_31, %c0_32, %c16_33], %12 {strides = array<i32>} : memref<1x16x16x32xf32, #tpu.memory_space<vmem>>, vector<1x16x16x16xf32>,
    %cst_34 = arith.constant 0.000000e+00 : f32
    %14 = vector.broadcast %cst_34 : f32 to vector<1x8x8x16xf32>
    %c0_35 = arith.constant 0 : index
    %c0_36 = arith.constant 0 : index
    %c0_37 = arith.constant 0 : index
    %c16_38 = arith.constant 16 : index
    %15 = vector.load %arg20[%c0_35, %c0_36, %c0_37, %c16_38] : memref<1x8x8x32xf32, #tpu.memory_space<vmem>>, vector<1x8x8x16xf32>
    tpu.vector_store %arg20[%c0_35, %c0_36, %c0_37, %c16_38], %14 {strides = array<i32>} : memref<1x8x8x32xf32, #tpu.memory_space<vmem>>, vector<1x8x8x16xf32>,
    %c0_39 = arith.constant 0 : index
    %c0_40 = arith.constant 0 : index
    %c0_41 = arith.constant 0 : index
    %c0_42 = arith.constant 0 : index
    %16 = vector.load %arg1[%c0_39, %c0_40, %c0_41, %c0_42] : memref<1x16x16x32xf32, #tpu.memory_space<vmem>>, vector<1x16x16x32xf32>
    %c0_43 = arith.constant 0 : index
    %c1 = arith.constant 1 : index
    %c8 = arith.constant 8 : index
    %c0_44 = arith.constant 0 : index
    %17 = vector.load %arg21[%c0_43, %c1, %c8, %c0_44] : memref<1x18x25x32xf32, #tpu.memory_space<vmem>>, vector<1x16x16x32xf32>
    tpu.vector_store %arg21[%c0_43, %c1, %c8, %c0_44], %16 {strides = array<i32>} : memref<1x18x25x32xf32, #tpu.memory_space<vmem>>, vector<1x16x16x32xf32>,
    %c0_45 = arith.constant 0 : index
    %c0_46 = arith.constant 0 : index
    %18 = vector.load %arg2[%c0_45, %c0_46] : memref<288x16xf32, #tpu.memory_space<vmem>>, vector<288x16xf32>
    %c0_47 = arith.constant 0 : index
    %c0_48 = arith.constant 0 : index
    %c0_49 = arith.constant 0 : index
    %c0_50 = arith.constant 0 : index
    %19 = vector.load %arg21[%c0_47, %c0_48, %c0_49, %c0_50] : memref<1x18x25x32xf32, #tpu.memory_space<vmem>>, vector<1x18x25x32xf32>
    %20 = vector.extract_strided_slice %19 {offsets = [0, 0, 7, 0], sizes = [1, 18, 16, 32], strides = [1, 1, 1, 1]} : vector<1x18x25x32xf32> to vector<1x18x16x32xf32>
    %21 = vector.extract_strided_slice %19 {offsets = [0, 0, 8, 0], sizes = [1, 18, 16, 32], strides = [1, 1, 1, 1]} : vector<1x18x25x32xf32> to vector<1x18x16x32xf32>
    %22 = vector.extract_strided_slice %19 {offsets = [0, 0, 9, 0], sizes = [1, 18, 16, 32], strides = [1, 1, 1, 1]} : vector<1x18x25x32xf32> to vector<1x18x16x32xf32>
    %23 = tpu.concatenate %20, %21, %22 in 3 : vector<1x18x16x32xf32>, vector<1x18x16x32xf32>, vector<1x18x16x32xf32> -> vector<1x18x16x96xf32>
    %cst_51 = arith.constant 0.000000e+00 : f32
    %24 = vector.broadcast %cst_51 : f32 to vector<256x16xf32>
    %25 = vector.extract_strided_slice %23 {offsets = [0, 0, 0, 0], sizes = [1, 16, 16, 96], strides = [1, 1, 1, 1]} : vector<1x18x16x96xf32> to vector<1x16x16x96xf32>
    %26 = vector.shape_cast %25 : vector<1x16x16x96xf32> to vector<256x96xf32>
    %27 = vector.extract_strided_slice %18 {offsets = [0, 0], sizes = [96, 16], strides = [1, 1]} : vector<288x16xf32> to vector<96x16xf32>
    %cst_52 = arith.constant dense<0.000000e+00> : vector<256x16xf32>
    %28 = tpu.matmul %26, %27, %cst_52 {dimension_numbers = #tpu.dot_dimension_numbers<[1], [0], [0], [1], [0, 0, 1, 1], [], []>} : vector<256x96xf32>, vector<96x16xf32>, vector<256x16xf32> -> vector<256x16xf32>
    %29 = arith.addf %24, %28 : vector<256x16xf32>
    %30 = vector.extract_strided_slice %23 {offsets = [0, 1, 0, 0], sizes = [1, 16, 16, 96], strides = [1, 1, 1, 1]} : vector<1x18x16x96xf32> to vector<1x16x16x96xf32>
    %31 = vector.shape_cast %30 : vector<1x16x16x96xf32> to vector<256x96xf32>
    %32 = vector.extract_strided_slice %18 {offsets = [96, 0], sizes = [96, 16], strides = [1, 1]} : vector<288x16xf32> to vector<96x16xf32>
    %cst_53 = arith.constant dense<0.000000e+00> : vector<256x16xf32>
    %33 = tpu.matmul %31, %32, %cst_53 {dimension_numbers = #tpu.dot_dimension_numbers<[1], [0], [0], [1], [0, 0, 1, 1], [], []>} : vector<256x96xf32>, vector<96x16xf32>, vector<256x16xf32> -> vector<256x16xf32>
    %34 = arith.addf %29, %33 : vector<256x16xf32>
    %35 = vector.extract_strided_slice %23 {offsets = [0, 2, 0, 0], sizes = [1, 16, 16, 96], strides = [1, 1, 1, 1]} : vector<1x18x16x96xf32> to vector<1x16x16x96xf32>
    %36 = vector.shape_cast %35 : vector<1x16x16x96xf32> to vector<256x96xf32>
    %37 = vector.extract_strided_slice %18 {offsets = [192, 0], sizes = [96, 16], strides = [1, 1]} : vector<288x16xf32> to vector<96x16xf32>
    %cst_54 = arith.constant dense<0.000000e+00> : vector<256x16xf32>
    %38 = tpu.matmul %36, %37, %cst_54 {dimension_numbers = #tpu.dot_dimension_numbers<[1], [0], [0], [1], [0, 0, 1, 1], [], []>} : vector<256x96xf32>, vector<96x16xf32>, vector<256x16xf32> -> vector<256x16xf32>
    %39 = arith.addf %34, %38 : vector<256x16xf32>
    %40 = vector.shape_cast %39 : vector<256x16xf32> to vector<1x16x16x16xf32>
    %c0_55 = arith.constant 0 : index
    %c0_56 = arith.constant 0 : index
    %c0_57 = arith.constant 0 : index
    %c0_58 = arith.constant 0 : index
    %41 = vector.load %arg3[%c0_55, %c0_56, %c0_57, %c0_58] : memref<1x1x1x16xf32, #tpu.memory_space<vmem>>, vector<1x1x1x16xf32>
    %c0_59 = arith.constant 0 : index
    %c0_60 = arith.constant 0 : index
    %c0_61 = arith.constant 0 : index
    %c0_62 = arith.constant 0 : index
    %42 = vector.load %arg4[%c0_59, %c0_60, %c0_61, %c0_62] : memref<1x1x1x16xf32, #tpu.memory_space<vmem>>, vector<1x1x1x16xf32>
    %43 = vector.broadcast %41 : vector<1x1x1x16xf32> to vector<1x16x16x16xf32>
    %44 = arith.mulf %40, %43 : vector<1x16x16x16xf32>
    %45 = vector.broadcast %42 : vector<1x1x1x16xf32> to vector<1x16x16x16xf32>
    %46 = arith.addf %44, %45 : vector<1x16x16x16xf32>
    %cst_63 = arith.constant 0.000000e+00 : f32
    %47 = vector.broadcast %cst_63 : f32 to vector<1x16x16x16xf32>
    %48 = arith.maximumf %46, %47 : vector<1x16x16x16xf32>
    %c0_64 = arith.constant 0 : index
    %c0_65 = arith.constant 0 : index
    %c0_66 = arith.constant 0 : index
    %c0_67 = arith.constant 0 : index
    %49 = vector.load %arg19[%c0_64, %c0_65, %c0_66, %c0_67] : memref<1x16x16x32xf32, #tpu.memory_space<vmem>>, vector<1x16x16x16xf32>
    tpu.vector_store %arg19[%c0_64, %c0_65, %c0_66, %c0_67], %48 {strides = array<i32>} : memref<1x16x16x32xf32, #tpu.memory_space<vmem>>, vector<1x16x16x16xf32>,
    %c0_68 = arith.constant 0 : index
    %c0_69 = arith.constant 0 : index
    %c0_70 = arith.constant 0 : index
    %c0_71 = arith.constant 0 : index
    %50 = vector.load %arg19[%c0_68, %c0_69, %c0_70, %c0_71] : memref<1x16x16x32xf32, #tpu.memory_space<vmem>>, vector<1x16x16x32xf32>
    %c0_72 = arith.constant 0 : index
    %c0_73 = arith.constant 0 : index
    %c0_74 = arith.constant 0 : index
    %c0_75 = arith.constant 0 : index
    %c0_76 = arith.constant 0 : index
    %51 = vector.load %arg5[%c0_72, %c0_73, %c0_74, %c0_75, %c0_76] : memref<4x1x1x1x32xf32, #tpu.memory_space<vmem>>, vector<1x1x1x1x32xf32>
    %52 = vector.shape_cast %51 : vector<1x1x1x1x32xf32> to vector<1x1x1x32xf32>
    %c0_77 = arith.constant 0 : index
    %c0_78 = arith.constant 0 : index
    %c0_79 = arith.constant 0 : index
    %c0_80 = arith.constant 0 : index
    %c0_81 = arith.constant 0 : index
    %53 = vector.load %arg6[%c0_77, %c0_78, %c0_79, %c0_80, %c0_81] : memref<4x1x1x1x32xf32, #tpu.memory_space<vmem>>, vector<1x1x1x1x32xf32>
    %54 = vector.shape_cast %53 : vector<1x1x1x1x32xf32> to vector<1x1x1x32xf32>
    %55 = vector.broadcast %52 : vector<1x1x1x32xf32> to vector<1x16x16x32xf32>
    %56 = arith.mulf %50, %55 : vector<1x16x16x32xf32>
    %57 = vector.broadcast %54 : vector<1x1x1x32xf32> to vector<1x16x16x32xf32>
    %58 = arith.addf %56, %57 : vector<1x16x16x32xf32>
    %cst_82 = arith.constant 0.000000e+00 : f32
    %59 = vector.broadcast %cst_82 : f32 to vector<1x16x16x32xf32>
    %60 = arith.maximumf %58, %59 : vector<1x16x16x32xf32>
    %61 = vector.shape_cast %60 : vector<1x16x16x32xf32> to vector<256x32xf32>
    %c0_83 = arith.constant 0 : index
    %c0_84 = arith.constant 0 : index
    %c0_85 = arith.constant 0 : index
    %62 = vector.load %arg7[%c0_83, %c0_84, %c0_85] : memref<4x32x32xf32, #tpu.memory_space<vmem>>, vector<1x32x32xf32>
    %63 = vector.shape_cast %62 : vector<1x32x32xf32> to vector<32x32xf32>
    %cst_86 = arith.constant dense<0.000000e+00> : vector<256x32xf32>
    %64 = tpu.matmul %61, %63, %cst_86 {dimension_numbers = #tpu.dot_dimension_numbers<[1], [0], [0], [1], [0, 0, 1, 1], [], []>} : vector<256x32xf32>, vector<32x32xf32>, vector<256x32xf32> -> vector<256x32xf32>
    %c0_87 = arith.constant 0 : index
    %c0_88 = arith.constant 0 : index
    %c0_89 = arith.constant 0 : index
    %65 = vector.load %arg8[%c0_87, %c0_88, %c0_89] : memref<4x1x32xf32, #tpu.memory_space<vmem>>, vector<1x1x32xf32>
    %66 = vector.shape_cast %65 : vector<1x1x32xf32> to vector<1x32xf32>
    %c0_90 = arith.constant 0 : index
    %c0_91 = arith.constant 0 : index
    %c0_92 = arith.constant 0 : index
    %67 = vector.load %arg9[%c0_90, %c0_91, %c0_92] : memref<4x1x32xf32, #tpu.memory_space<vmem>>, vector<1x1x32xf32>
    %68 = vector.shape_cast %67 : vector<1x1x32xf32> to vector<1x32xf32>
    %69 = vector.broadcast %66 : vector<1x32xf32> to vector<256x32xf32>
    %70 = arith.mulf %64, %69 : vector<256x32xf32>
    %71 = vector.broadcast %68 : vector<1x32xf32> to vector<256x32xf32>
    %72 = arith.addf %70, %71 : vector<256x32xf32>
    %cst_93 = arith.constant 0.000000e+00 : f32
    %73 = vector.broadcast %cst_93 : f32 to vector<256x32xf32>
    %74 = arith.maximumf %72, %73 : vector<256x32xf32>
    %75 = vector.shape_cast %74 : vector<256x32xf32> to vector<1x16x16x32xf32>
    %c0_94 = arith.constant 0 : index
    %c1_95 = arith.constant 1 : index
    %c8_96 = arith.constant 8 : index
    %c0_97 = arith.constant 0 : index
    %76 = vector.load %arg21[%c0_94, %c1_95, %c8_96, %c0_97] : memref<1x18x25x32xf32, #tpu.memory_space<vmem>>, vector<1x16x16x32xf32>
    tpu.vector_store %arg21[%c0_94, %c1_95, %c8_96, %c0_97], %75 {strides = array<i32>} : memref<1x18x25x32xf32, #tpu.memory_space<vmem>>, vector<1x16x16x32xf32>,
    %c0_98 = arith.constant 0 : index
    %c0_99 = arith.constant 0 : index
    %c0_100 = arith.constant 0 : index
    %77 = vector.load %arg10[%c0_98, %c0_99, %c0_100] : memref<4x288x8xf32, #tpu.memory_space<vmem>>, vector<1x288x8xf32>
    %78 = vector.shape_cast %77 : vector<1x288x8xf32> to vector<288x8xf32>
    %c0_101 = arith.constant 0 : index
    %c0_102 = arith.constant 0 : index
    %c0_103 = arith.constant 0 : index
    %c0_104 = arith.constant 0 : index
    %79 = vector.load %arg21[%c0_101, %c0_102, %c0_103, %c0_104] : memref<1x18x25x32xf32, #tpu.memory_space<vmem>>, vector<1x18x25x32xf32>
    %80 = vector.extract_strided_slice %79 {offsets = [0, 0, 7, 0], sizes = [1, 18, 16, 32], strides = [1, 1, 1, 1]} : vector<1x18x25x32xf32> to vector<1x18x16x32xf32>
    %81 = vector.extract_strided_slice %79 {offsets = [0, 0, 8, 0], sizes = [1, 18, 16, 32], strides = [1, 1, 1, 1]} : vector<1x18x25x32xf32> to vector<1x18x16x32xf32>
    %82 = vector.extract_strided_slice %79 {offsets = [0, 0, 9, 0], sizes = [1, 18, 16, 32], strides = [1, 1, 1, 1]} : vector<1x18x25x32xf32> to vector<1x18x16x32xf32>
    %83 = tpu.concatenate %80, %81, %82 in 3 : vector<1x18x16x32xf32>, vector<1x18x16x32xf32>, vector<1x18x16x32xf32> -> vector<1x18x16x96xf32>
    %cst_105 = arith.constant 0.000000e+00 : f32
    %84 = vector.broadcast %cst_105 : f32 to vector<256x8xf32>
    %85 = vector.extract_strided_slice %83 {offsets = [0, 0, 0, 0], sizes = [1, 16, 16, 96], strides = [1, 1, 1, 1]} : vector<1x18x16x96xf32> to vector<1x16x16x96xf32>
    %86 = vector.shape_cast %85 : vector<1x16x16x96xf32> to vector<256x96xf32>
    %87 = vector.extract_strided_slice %78 {offsets = [0, 0], sizes = [96, 8], strides = [1, 1]} : vector<288x8xf32> to vector<96x8xf32>
    %cst_106 = arith.constant dense<0.000000e+00> : vector<256x8xf32>
    %88 = tpu.matmul %86, %87, %cst_106 {dimension_numbers = #tpu.dot_dimension_numbers<[1], [0], [0], [1], [0, 0, 1, 1], [], []>} : vector<256x96xf32>, vector<96x8xf32>, vector<256x8xf32> -> vector<256x8xf32>
    %89 = arith.addf %84, %88 : vector<256x8xf32>
    %90 = vector.extract_strided_slice %83 {offsets = [0, 1, 0, 0], sizes = [1, 16, 16, 96], strides = [1, 1, 1, 1]} : vector<1x18x16x96xf32> to vector<1x16x16x96xf32>
    %91 = vector.shape_cast %90 : vector<1x16x16x96xf32> to vector<256x96xf32>
    %92 = vector.extract_strided_slice %78 {offsets = [96, 0], sizes = [96, 8], strides = [1, 1]} : vector<288x8xf32> to vector<96x8xf32>
    %cst_107 = arith.constant dense<0.000000e+00> : vector<256x8xf32>
    %93 = tpu.matmul %91, %92, %cst_107 {dimension_numbers = #tpu.dot_dimension_numbers<[1], [0], [0], [1], [0, 0, 1, 1], [], []>} : vector<256x96xf32>, vector<96x8xf32>, vector<256x8xf32> -> vector<256x8xf32>
    %94 = arith.addf %89, %93 : vector<256x8xf32>
    %95 = vector.extract_strided_slice %83 {offsets = [0, 2, 0, 0], sizes = [1, 16, 16, 96], strides = [1, 1, 1, 1]} : vector<1x18x16x96xf32> to vector<1x16x16x96xf32>
    %96 = vector.shape_cast %95 : vector<1x16x16x96xf32> to vector<256x96xf32>
    %97 = vector.extract_strided_slice %78 {offsets = [192, 0], sizes = [96, 8], strides = [1, 1]} : vector<288x8xf32> to vector<96x8xf32>
    %cst_108 = arith.constant dense<0.000000e+00> : vector<256x8xf32>
    %98 = tpu.matmul %96, %97, %cst_108 {dimension_numbers = #tpu.dot_dimension_numbers<[1], [0], [0], [1], [0, 0, 1, 1], [], []>} : vector<256x96xf32>, vector<96x8xf32>, vector<256x8xf32> -> vector<256x8xf32>
    %99 = arith.addf %94, %98 : vector<256x8xf32>
    %100 = vector.shape_cast %99 : vector<256x8xf32> to vector<1x16x16x8xf32>
    %c0_109 = arith.constant 0 : index
    %c0_110 = arith.constant 0 : index
    %c0_111 = arith.constant 0 : index
    %c16_112 = arith.constant 16 : index
    %101 = vector.load %arg19[%c0_109, %c0_110, %c0_111, %c16_112] : memref<1x16x16x32xf32, #tpu.memory_space<vmem>>, vector<1x16x16x8xf32>
    tpu.vector_store %arg19[%c0_109, %c0_110, %c0_111, %c16_112], %100 {strides = array<i32>} : memref<1x16x16x32xf32, #tpu.memory_space<vmem>>, vector<1x16x16x8xf32>,
    %c0_113 = arith.constant 0 : index
    %c0_114 = arith.constant 0 : index
    %c0_115 = arith.constant 0 : index
    %c0_116 = arith.constant 0 : index
    %102 = vector.load %arg19[%c0_113, %c0_114, %c0_115, %c0_116] : memref<1x16x16x32xf32, #tpu.memory_space<vmem>>, vector<1x16x16x32xf32>
    %c1_117 = arith.constant 1 : index
    %c0_118 = arith.constant 0 : index
    %c0_119 = arith.constant 0 : index
    %c0_120 = arith.constant 0 : index
    %c0_121 = arith.constant 0 : index
    %103 = vector.load %arg5[%c1_117, %c0_118, %c0_119, %c0_120, %c0_121] : memref<4x1x1x1x32xf32, #tpu.memory_space<vmem>>, vector<1x1x1x1x32xf32>
    %104 = vector.shape_cast %103 : vector<1x1x1x1x32xf32> to vector<1x1x1x32xf32>
    %c1_122 = arith.constant 1 : index
    %c0_123 = arith.constant 0 : index
    %c0_124 = arith.constant 0 : index
    %c0_125 = arith.constant 0 : index
    %c0_126 = arith.constant 0 : index
    %105 = vector.load %arg6[%c1_122, %c0_123, %c0_124, %c0_125, %c0_126] : memref<4x1x1x1x32xf32, #tpu.memory_space<vmem>>, vector<1x1x1x1x32xf32>
    %106 = vector.shape_cast %105 : vector<1x1x1x1x32xf32> to vector<1x1x1x32xf32>
    %107 = vector.broadcast %104 : vector<1x1x1x32xf32> to vector<1x16x16x32xf32>
    %108 = arith.mulf %102, %107 : vector<1x16x16x32xf32>
    %109 = vector.broadcast %106 : vector<1x1x1x32xf32> to vector<1x16x16x32xf32>
    %110 = arith.addf %108, %109 : vector<1x16x16x32xf32>
    %cst_127 = arith.constant 0.000000e+00 : f32
    %111 = vector.broadcast %cst_127 : f32 to vector<1x16x16x32xf32>
    %112 = arith.maximumf %110, %111 : vector<1x16x16x32xf32>
    %113 = vector.shape_cast %112 : vector<1x16x16x32xf32> to vector<256x32xf32>
    %c1_128 = arith.constant 1 : index
    %c0_129 = arith.constant 0 : index
    %c0_130 = arith.constant 0 : index
    %114 = vector.load %arg7[%c1_128, %c0_129, %c0_130] : memref<4x32x32xf32, #tpu.memory_space<vmem>>, vector<1x32x32xf32>
    %115 = vector.shape_cast %114 : vector<1x32x32xf32> to vector<32x32xf32>
    %cst_131 = arith.constant dense<0.000000e+00> : vector<256x32xf32>
    %116 = tpu.matmul %113, %115, %cst_131 {dimension_numbers = #tpu.dot_dimension_numbers<[1], [0], [0], [1], [0, 0, 1, 1], [], []>} : vector<256x32xf32>, vector<32x32xf32>, vector<256x32xf32> -> vector<256x32xf32>
    %c1_132 = arith.constant 1 : index
    %c0_133 = arith.constant 0 : index
    %c0_134 = arith.constant 0 : index
    %117 = vector.load %arg8[%c1_132, %c0_133, %c0_134] : memref<4x1x32xf32, #tpu.memory_space<vmem>>, vector<1x1x32xf32>
    %118 = vector.shape_cast %117 : vector<1x1x32xf32> to vector<1x32xf32>
    %c1_135 = arith.constant 1 : index
    %c0_136 = arith.constant 0 : index
    %c0_137 = arith.constant 0 : index
    %119 = vector.load %arg9[%c1_135, %c0_136, %c0_137] : memref<4x1x32xf32, #tpu.memory_space<vmem>>, vector<1x1x32xf32>
    %120 = vector.shape_cast %119 : vector<1x1x32xf32> to vector<1x32xf32>
    %121 = vector.broadcast %118 : vector<1x32xf32> to vector<256x32xf32>
    %122 = arith.mulf %116, %121 : vector<256x32xf32>
    %123 = vector.broadcast %120 : vector<1x32xf32> to vector<256x32xf32>
    %124 = arith.addf %122, %123 : vector<256x32xf32>
    %cst_138 = arith.constant 0.000000e+00 : f32
    %125 = vector.broadcast %cst_138 : f32 to vector<256x32xf32>
    %126 = arith.maximumf %124, %125 : vector<256x32xf32>
    %127 = vector.shape_cast %126 : vector<256x32xf32> to vector<1x16x16x32xf32>
    %c0_139 = arith.constant 0 : index
    %c1_140 = arith.constant 1 : index
    %c8_141 = arith.constant 8 : index
    %c0_142 = arith.constant 0 : index
    %128 = vector.load %arg21[%c0_139, %c1_140, %c8_141, %c0_142] : memref<1x18x25x32xf32, #tpu.memory_space<vmem>>, vector<1x16x16x32xf32>
    tpu.vector_store %arg21[%c0_139, %c1_140, %c8_141, %c0_142], %127 {strides = array<i32>} : memref<1x18x25x32xf32, #tpu.memory_space<vmem>>, vector<1x16x16x32xf32>,
    %c1_143 = arith.constant 1 : index
    %c0_144 = arith.constant 0 : index
    %c0_145 = arith.constant 0 : index
    %129 = vector.load %arg10[%c1_143, %c0_144, %c0_145] : memref<4x288x8xf32, #tpu.memory_space<vmem>>, vector<1x288x8xf32>
    %130 = vector.shape_cast %129 : vector<1x288x8xf32> to vector<288x8xf32>
    %c0_146 = arith.constant 0 : index
    %c0_147 = arith.constant 0 : index
    %c0_148 = arith.constant 0 : index
    %c0_149 = arith.constant 0 : index
    %131 = vector.load %arg21[%c0_146, %c0_147, %c0_148, %c0_149] : memref<1x18x25x32xf32, #tpu.memory_space<vmem>>, vector<1x18x25x32xf32>
    %132 = vector.extract_strided_slice %131 {offsets = [0, 0, 7, 0], sizes = [1, 18, 16, 32], strides = [1, 1, 1, 1]} : vector<1x18x25x32xf32> to vector<1x18x16x32xf32>
    %133 = vector.extract_strided_slice %131 {offsets = [0, 0, 8, 0], sizes = [1, 18, 16, 32], strides = [1, 1, 1, 1]} : vector<1x18x25x32xf32> to vector<1x18x16x32xf32>
    %134 = vector.extract_strided_slice %131 {offsets = [0, 0, 9, 0], sizes = [1, 18, 16, 32], strides = [1, 1, 1, 1]} : vector<1x18x25x32xf32> to vector<1x18x16x32xf32>
    %135 = tpu.concatenate %132, %133, %134 in 3 : vector<1x18x16x32xf32>, vector<1x18x16x32xf32>, vector<1x18x16x32xf32> -> vector<1x18x16x96xf32>
    %cst_150 = arith.constant 0.000000e+00 : f32
    %136 = vector.broadcast %cst_150 : f32 to vector<256x8xf32>
    %137 = vector.extract_strided_slice %135 {offsets = [0, 0, 0, 0], sizes = [1, 16, 16, 96], strides = [1, 1, 1, 1]} : vector<1x18x16x96xf32> to vector<1x16x16x96xf32>
    %138 = vector.shape_cast %137 : vector<1x16x16x96xf32> to vector<256x96xf32>
    %139 = vector.extract_strided_slice %130 {offsets = [0, 0], sizes = [96, 8], strides = [1, 1]} : vector<288x8xf32> to vector<96x8xf32>
    %cst_151 = arith.constant dense<0.000000e+00> : vector<256x8xf32>
    %140 = tpu.matmul %138, %139, %cst_151 {dimension_numbers = #tpu.dot_dimension_numbers<[1], [0], [0], [1], [0, 0, 1, 1], [], []>} : vector<256x96xf32>, vector<96x8xf32>, vector<256x8xf32> -> vector<256x8xf32>
    %141 = arith.addf %136, %140 : vector<256x8xf32>
    %142 = vector.extract_strided_slice %135 {offsets = [0, 1, 0, 0], sizes = [1, 16, 16, 96], strides = [1, 1, 1, 1]} : vector<1x18x16x96xf32> to vector<1x16x16x96xf32>
    %143 = vector.shape_cast %142 : vector<1x16x16x96xf32> to vector<256x96xf32>
    %144 = vector.extract_strided_slice %130 {offsets = [96, 0], sizes = [96, 8], strides = [1, 1]} : vector<288x8xf32> to vector<96x8xf32>
    %cst_152 = arith.constant dense<0.000000e+00> : vector<256x8xf32>
    %145 = tpu.matmul %143, %144, %cst_152 {dimension_numbers = #tpu.dot_dimension_numbers<[1], [0], [0], [1], [0, 0, 1, 1], [], []>} : vector<256x96xf32>, vector<96x8xf32>, vector<256x8xf32> -> vector<256x8xf32>
    %146 = arith.addf %141, %145 : vector<256x8xf32>
    %147 = vector.extract_strided_slice %135 {offsets = [0, 2, 0, 0], sizes = [1, 16, 16, 96], strides = [1, 1, 1, 1]} : vector<1x18x16x96xf32> to vector<1x16x16x96xf32>
    %148 = vector.shape_cast %147 : vector<1x16x16x96xf32> to vector<256x96xf32>
    %149 = vector.extract_strided_slice %130 {offsets = [192, 0], sizes = [96, 8], strides = [1, 1]} : vector<288x8xf32> to vector<96x8xf32>
    %cst_153 = arith.constant dense<0.000000e+00> : vector<256x8xf32>
    %150 = tpu.matmul %148, %149, %cst_153 {dimension_numbers = #tpu.dot_dimension_numbers<[1], [0], [0], [1], [0, 0, 1, 1], [], []>} : vector<256x96xf32>, vector<96x8xf32>, vector<256x8xf32> -> vector<256x8xf32>
    %151 = arith.addf %146, %150 : vector<256x8xf32>
    %152 = vector.shape_cast %151 : vector<256x8xf32> to vector<1x16x16x8xf32>
    %c0_154 = arith.constant 0 : index
    %c0_155 = arith.constant 0 : index
    %c0_156 = arith.constant 0 : index
    %c24_157 = arith.constant 24 : index
    %153 = vector.load %arg19[%c0_154, %c0_155, %c0_156, %c24_157] : memref<1x16x16x32xf32, #tpu.memory_space<vmem>>, vector<1x16x16x8xf32>
    tpu.vector_store %arg19[%c0_154, %c0_155, %c0_156, %c24_157], %152 {strides = array<i32>} : memref<1x16x16x32xf32, #tpu.memory_space<vmem>>, vector<1x16x16x8xf32>,
    %c0_158 = arith.constant 0 : index
    %c0_159 = arith.constant 0 : index
    %c0_160 = arith.constant 0 : index
    %c0_161 = arith.constant 0 : index
    %154 = vector.load %arg19[%c0_158, %c0_159, %c0_160, %c0_161] : memref<1x16x16x32xf32, #tpu.memory_space<vmem>>, vector<1x16x16x32xf32>
    %c0_162 = arith.constant 0 : index
    %c0_163 = arith.constant 0 : index
    %c0_164 = arith.constant 0 : index
    %c0_165 = arith.constant 0 : index
    %155 = vector.load %arg11[%c0_162, %c0_163, %c0_164, %c0_165] : memref<1x1x1x32xf32, #tpu.memory_space<vmem>>, vector<1x1x1x32xf32>
    %c0_166 = arith.constant 0 : index
    %c0_167 = arith.constant 0 : index
    %c0_168 = arith.constant 0 : index
    %c0_169 = arith.constant 0 : index
    %156 = vector.load %arg12[%c0_166, %c0_167, %c0_168, %c0_169] : memref<1x1x1x32xf32, #tpu.memory_space<vmem>>, vector<1x1x1x32xf32>
    %157 = vector.broadcast %155 : vector<1x1x1x32xf32> to vector<1x16x16x32xf32>
    %158 = arith.mulf %154, %157 : vector<1x16x16x32xf32>
    %159 = vector.broadcast %156 : vector<1x1x1x32xf32> to vector<1x16x16x32xf32>
    %160 = arith.addf %158, %159 : vector<1x16x16x32xf32>
    %cst_170 = arith.constant 0.000000e+00 : f32
    %161 = vector.broadcast %cst_170 : f32 to vector<1x16x16x32xf32>
    %162 = arith.maximumf %160, %161 : vector<1x16x16x32xf32>
    %163 = vector.shape_cast %162 : vector<1x16x16x32xf32> to vector<256x32xf32>
    %c0_171 = arith.constant 0 : index
    %c0_172 = arith.constant 0 : index
    %164 = vector.load %arg13[%c0_171, %c0_172] : memref<32x16xf32, #tpu.memory_space<vmem>>, vector<32x16xf32>
    %cst_173 = arith.constant dense<0.000000e+00> : vector<256x16xf32>
    %165 = tpu.matmul %163, %164, %cst_173 {dimension_numbers = #tpu.dot_dimension_numbers<[1], [0], [0], [1], [0, 0, 1, 1], [], []>} : vector<256x32xf32>, vector<32x16xf32>, vector<256x16xf32> -> vector<256x16xf32>
    %166 = vector.shape_cast %165 : vector<256x16xf32> to vector<8x2x16x16xf32>
    %167 = vector.extract_strided_slice %166 {offsets = [0, 0, 0, 0], sizes = [8, 1, 16, 16], strides = [1, 1, 1, 1]} : vector<8x2x16x16xf32> to vector<8x1x16x16xf32>
    %168 = vector.shape_cast %167 : vector<8x1x16x16xf32> to vector<8x16x16xf32>
    %169 = vector.extract_strided_slice %166 {offsets = [0, 1, 0, 0], sizes = [8, 1, 16, 16], strides = [1, 1, 1, 1]} : vector<8x2x16x16xf32> to vector<8x1x16x16xf32>
    %170 = vector.shape_cast %169 : vector<8x1x16x16xf32> to vector<8x16x16xf32>
    %171 = arith.addf %168, %170 : vector<8x16x16xf32>
    %c0_174 = arith.constant 0 : index
    %c0_175 = arith.constant 0 : index
    %c0_176 = arith.constant 0 : index
    %172 = vector.load %arg23[%c0_174, %c0_175, %c0_176] : memref<8x16x16xf32, #tpu.memory_space<vmem>>, vector<8x16x16xf32>
    tpu.vector_store %arg23[%c0_174, %c0_175, %c0_176], %171 {strides = array<i32>} : memref<8x16x16xf32, #tpu.memory_space<vmem>>, vector<8x16x16xf32>,
    %c0_177 = arith.constant 0 : index
    %c0_178 = arith.constant 0 : index
    %c0_179 = arith.constant 0 : index
    %173 = tpu.strided_load %arg23[%c0_177, %c0_178, %c0_179] {strides = array<i32: 1, 2, 1>} : memref<8x16x16xf32, #tpu.memory_space<vmem>>, vector<8x8x16xf32>
    %c0_180 = arith.constant 0 : index
    %c1_181 = arith.constant 1 : index
    %c0_182 = arith.constant 0 : index
    %174 = tpu.strided_load %arg23[%c0_180, %c1_181, %c0_182] {strides = array<i32: 1, 2, 1>} : memref<8x16x16xf32, #tpu.memory_space<vmem>>, vector<8x8x16xf32>
    %175 = arith.addf %173, %174 : vector<8x8x16xf32>
    %cst_183 = arith.constant 2.500000e-01 : f32
    %176 = vector.broadcast %cst_183 : f32 to vector<8x8x16xf32>
    %177 = arith.mulf %175, %176 : vector<8x8x16xf32>
    %178 = vector.shape_cast %177 : vector<8x8x16xf32> to vector<1x8x8x16xf32>
    %c0_184 = arith.constant 0 : index
    %c0_185 = arith.constant 0 : index
    %c0_186 = arith.constant 0 : index
    %c0_187 = arith.constant 0 : index
    %179 = vector.load %arg20[%c0_184, %c0_185, %c0_186, %c0_187] : memref<1x8x8x32xf32, #tpu.memory_space<vmem>>, vector<1x8x8x16xf32>
    tpu.vector_store %arg20[%c0_184, %c0_185, %c0_186, %c0_187], %178 {strides = array<i32>} : memref<1x8x8x32xf32, #tpu.memory_space<vmem>>, vector<1x8x8x16xf32>,
    %c0_188 = arith.constant 0 : index
    %c0_189 = arith.constant 0 : index
    %c0_190 = arith.constant 0 : index
    %c0_191 = arith.constant 0 : index
    %180 = vector.load %arg20[%c0_188, %c0_189, %c0_190, %c0_191] : memref<1x8x8x32xf32, #tpu.memory_space<vmem>>, vector<1x8x8x32xf32>
    %c2 = arith.constant 2 : index
    %c0_192 = arith.constant 0 : index
    %c0_193 = arith.constant 0 : index
    %c0_194 = arith.constant 0 : index
    %c0_195 = arith.constant 0 : index
    %181 = vector.load %arg5[%c2, %c0_192, %c0_193, %c0_194, %c0_195] : memref<4x1x1x1x32xf32, #tpu.memory_space<vmem>>, vector<1x1x1x1x32xf32>
    %182 = vector.shape_cast %181 : vector<1x1x1x1x32xf32> to vector<1x1x1x32xf32>
    %c2_196 = arith.constant 2 : index
    %c0_197 = arith.constant 0 : index
    %c0_198 = arith.constant 0 : index
    %c0_199 = arith.constant 0 : index
    %c0_200 = arith.constant 0 : index
    %183 = vector.load %arg6[%c2_196, %c0_197, %c0_198, %c0_199, %c0_200] : memref<4x1x1x1x32xf32, #tpu.memory_space<vmem>>, vector<1x1x1x1x32xf32>
    %184 = vector.shape_cast %183 : vector<1x1x1x1x32xf32> to vector<1x1x1x32xf32>
    %185 = vector.broadcast %182 : vector<1x1x1x32xf32> to vector<1x8x8x32xf32>
    %186 = arith.mulf %180, %185 : vector<1x8x8x32xf32>
    %187 = vector.broadcast %184 : vector<1x1x1x32xf32> to vector<1x8x8x32xf32>
    %188 = arith.addf %186, %187 : vector<1x8x8x32xf32>
    %cst_201 = arith.constant 0.000000e+00 : f32
    %189 = vector.broadcast %cst_201 : f32 to vector<1x8x8x32xf32>
    %190 = arith.maximumf %188, %189 : vector<1x8x8x32xf32>
    %191 = vector.shape_cast %190 : vector<1x8x8x32xf32> to vector<64x32xf32>
    %c2_202 = arith.constant 2 : index
    %c0_203 = arith.constant 0 : index
    %c0_204 = arith.constant 0 : index
    %192 = vector.load %arg7[%c2_202, %c0_203, %c0_204] : memref<4x32x32xf32, #tpu.memory_space<vmem>>, vector<1x32x32xf32>
    %193 = vector.shape_cast %192 : vector<1x32x32xf32> to vector<32x32xf32>
    %cst_205 = arith.constant dense<0.000000e+00> : vector<64x32xf32>
    %194 = tpu.matmul %191, %193, %cst_205 {dimension_numbers = #tpu.dot_dimension_numbers<[1], [0], [0], [1], [0, 0, 1, 1], [], []>} : vector<64x32xf32>, vector<32x32xf32>, vector<64x32xf32> -> vector<64x32xf32>
    %c2_206 = arith.constant 2 : index
    %c0_207 = arith.constant 0 : index
    %c0_208 = arith.constant 0 : index
    %195 = vector.load %arg8[%c2_206, %c0_207, %c0_208] : memref<4x1x32xf32, #tpu.memory_space<vmem>>, vector<1x1x32xf32>
    %196 = vector.shape_cast %195 : vector<1x1x32xf32> to vector<1x32xf32>
    %c2_209 = arith.constant 2 : index
    %c0_210 = arith.constant 0 : index
    %c0_211 = arith.constant 0 : index
    %197 = vector.load %arg9[%c2_209, %c0_210, %c0_211] : memref<4x1x32xf32, #tpu.memory_space<vmem>>, vector<1x1x32xf32>
    %198 = vector.shape_cast %197 : vector<1x1x32xf32> to vector<1x32xf32>
    %199 = vector.broadcast %196 : vector<1x32xf32> to vector<64x32xf32>
    %200 = arith.mulf %194, %199 : vector<64x32xf32>
    %201 = vector.broadcast %198 : vector<1x32xf32> to vector<64x32xf32>
    %202 = arith.addf %200, %201 : vector<64x32xf32>
    %cst_212 = arith.constant 0.000000e+00 : f32
    %203 = vector.broadcast %cst_212 : f32 to vector<64x32xf32>
    %204 = arith.maximumf %202, %203 : vector<64x32xf32>
    %205 = vector.shape_cast %204 : vector<64x32xf32> to vector<1x8x8x32xf32>
    %c0_213 = arith.constant 0 : index
    %c1_214 = arith.constant 1 : index
    %c8_215 = arith.constant 8 : index
    %c0_216 = arith.constant 0 : index
    %206 = vector.load %arg22[%c0_213, %c1_214, %c8_215, %c0_216] : memref<1x10x17x32xf32, #tpu.memory_space<vmem>>, vector<1x8x8x32xf32>
    tpu.vector_store %arg22[%c0_213, %c1_214, %c8_215, %c0_216], %205 {strides = array<i32>} : memref<1x10x17x32xf32, #tpu.memory_space<vmem>>, vector<1x8x8x32xf32>,
    %c2_217 = arith.constant 2 : index
    %c0_218 = arith.constant 0 : index
    %c0_219 = arith.constant 0 : index
    %207 = vector.load %arg10[%c2_217, %c0_218, %c0_219] : memref<4x288x8xf32, #tpu.memory_space<vmem>>, vector<1x288x8xf32>
    %208 = vector.shape_cast %207 : vector<1x288x8xf32> to vector<288x8xf32>
    %c0_220 = arith.constant 0 : index
    %c0_221 = arith.constant 0 : index
    %c0_222 = arith.constant 0 : index
    %c0_223 = arith.constant 0 : index
    %209 = vector.load %arg22[%c0_220, %c0_221, %c0_222, %c0_223] : memref<1x10x17x32xf32, #tpu.memory_space<vmem>>, vector<1x10x17x32xf32>
    %210 = vector.extract_strided_slice %209 {offsets = [0, 0, 7, 0], sizes = [1, 10, 8, 32], strides = [1, 1, 1, 1]} : vector<1x10x17x32xf32> to vector<1x10x8x32xf32>
    %211 = vector.extract_strided_slice %209 {offsets = [0, 0, 8, 0], sizes = [1, 10, 8, 32], strides = [1, 1, 1, 1]} : vector<1x10x17x32xf32> to vector<1x10x8x32xf32>
    %212 = vector.extract_strided_slice %209 {offsets = [0, 0, 9, 0], sizes = [1, 10, 8, 32], strides = [1, 1, 1, 1]} : vector<1x10x17x32xf32> to vector<1x10x8x32xf32>
    %213 = tpu.concatenate %210, %211, %212 in 3 : vector<1x10x8x32xf32>, vector<1x10x8x32xf32>, vector<1x10x8x32xf32> -> vector<1x10x8x96xf32>
    %cst_224 = arith.constant 0.000000e+00 : f32
    %214 = vector.broadcast %cst_224 : f32 to vector<64x8xf32>
    %215 = vector.extract_strided_slice %213 {offsets = [0, 0, 0, 0], sizes = [1, 8, 8, 96], strides = [1, 1, 1, 1]} : vector<1x10x8x96xf32> to vector<1x8x8x96xf32>
    %216 = vector.shape_cast %215 : vector<1x8x8x96xf32> to vector<64x96xf32>
    %217 = vector.extract_strided_slice %208 {offsets = [0, 0], sizes = [96, 8], strides = [1, 1]} : vector<288x8xf32> to vector<96x8xf32>
    %cst_225 = arith.constant dense<0.000000e+00> : vector<64x8xf32>
    %218 = tpu.matmul %216, %217, %cst_225 {dimension_numbers = #tpu.dot_dimension_numbers<[1], [0], [0], [1], [0, 0, 1, 1], [], []>} : vector<64x96xf32>, vector<96x8xf32>, vector<64x8xf32> -> vector<64x8xf32>
    %219 = arith.addf %214, %218 : vector<64x8xf32>
    %220 = vector.extract_strided_slice %213 {offsets = [0, 1, 0, 0], sizes = [1, 8, 8, 96], strides = [1, 1, 1, 1]} : vector<1x10x8x96xf32> to vector<1x8x8x96xf32>
    %221 = vector.shape_cast %220 : vector<1x8x8x96xf32> to vector<64x96xf32>
    %222 = vector.extract_strided_slice %208 {offsets = [96, 0], sizes = [96, 8], strides = [1, 1]} : vector<288x8xf32> to vector<96x8xf32>
    %cst_226 = arith.constant dense<0.000000e+00> : vector<64x8xf32>
    %223 = tpu.matmul %221, %222, %cst_226 {dimension_numbers = #tpu.dot_dimension_numbers<[1], [0], [0], [1], [0, 0, 1, 1], [], []>} : vector<64x96xf32>, vector<96x8xf32>, vector<64x8xf32> -> vector<64x8xf32>
    %224 = arith.addf %219, %223 : vector<64x8xf32>
    %225 = vector.extract_strided_slice %213 {offsets = [0, 2, 0, 0], sizes = [1, 8, 8, 96], strides = [1, 1, 1, 1]} : vector<1x10x8x96xf32> to vector<1x8x8x96xf32>
    %226 = vector.shape_cast %225 : vector<1x8x8x96xf32> to vector<64x96xf32>
    %227 = vector.extract_strided_slice %208 {offsets = [192, 0], sizes = [96, 8], strides = [1, 1]} : vector<288x8xf32> to vector<96x8xf32>
    %cst_227 = arith.constant dense<0.000000e+00> : vector<64x8xf32>
    %228 = tpu.matmul %226, %227, %cst_227 {dimension_numbers = #tpu.dot_dimension_numbers<[1], [0], [0], [1], [0, 0, 1, 1], [], []>} : vector<64x96xf32>, vector<96x8xf32>, vector<64x8xf32> -> vector<64x8xf32>
    %229 = arith.addf %224, %228 : vector<64x8xf32>
    %230 = vector.shape_cast %229 : vector<64x8xf32> to vector<1x8x8x8xf32>
    %c0_228 = arith.constant 0 : index
    %c0_229 = arith.constant 0 : index
    %c0_230 = arith.constant 0 : index
    %c16_231 = arith.constant 16 : index
    %231 = vector.load %arg20[%c0_228, %c0_229, %c0_230, %c16_231] : memref<1x8x8x32xf32, #tpu.memory_space<vmem>>, vector<1x8x8x8xf32>
    tpu.vector_store %arg20[%c0_228, %c0_229, %c0_230, %c16_231], %230 {strides = array<i32>} : memref<1x8x8x32xf32, #tpu.memory_space<vmem>>, vector<1x8x8x8xf32>,
    %c0_232 = arith.constant 0 : index
    %c0_233 = arith.constant 0 : index
    %c0_234 = arith.constant 0 : index
    %c0_235 = arith.constant 0 : index
    %232 = vector.load %arg20[%c0_232, %c0_233, %c0_234, %c0_235] : memref<1x8x8x32xf32, #tpu.memory_space<vmem>>, vector<1x8x8x32xf32>
    %c3 = arith.constant 3 : index
    %c0_236 = arith.constant 0 : index
    %c0_237 = arith.constant 0 : index
    %c0_238 = arith.constant 0 : index
    %c0_239 = arith.constant 0 : index
    %233 = vector.load %arg5[%c3, %c0_236, %c0_237, %c0_238, %c0_239] : memref<4x1x1x1x32xf32, #tpu.memory_space<vmem>>, vector<1x1x1x1x32xf32>
    %234 = vector.shape_cast %233 : vector<1x1x1x1x32xf32> to vector<1x1x1x32xf32>
    %c3_240 = arith.constant 3 : index
    %c0_241 = arith.constant 0 : index
    %c0_242 = arith.constant 0 : index
    %c0_243 = arith.constant 0 : index
    %c0_244 = arith.constant 0 : index
    %235 = vector.load %arg6[%c3_240, %c0_241, %c0_242, %c0_243, %c0_244] : memref<4x1x1x1x32xf32, #tpu.memory_space<vmem>>, vector<1x1x1x1x32xf32>
    %236 = vector.shape_cast %235 : vector<1x1x1x1x32xf32> to vector<1x1x1x32xf32>
    %237 = vector.broadcast %234 : vector<1x1x1x32xf32> to vector<1x8x8x32xf32>
    %238 = arith.mulf %232, %237 : vector<1x8x8x32xf32>
    %239 = vector.broadcast %236 : vector<1x1x1x32xf32> to vector<1x8x8x32xf32>
    %240 = arith.addf %238, %239 : vector<1x8x8x32xf32>
    %cst_245 = arith.constant 0.000000e+00 : f32
    %241 = vector.broadcast %cst_245 : f32 to vector<1x8x8x32xf32>
    %242 = arith.maximumf %240, %241 : vector<1x8x8x32xf32>
    %243 = vector.shape_cast %242 : vector<1x8x8x32xf32> to vector<64x32xf32>
    %c3_246 = arith.constant 3 : index
    %c0_247 = arith.constant 0 : index
    %c0_248 = arith.constant 0 : index
    %244 = vector.load %arg7[%c3_246, %c0_247, %c0_248] : memref<4x32x32xf32, #tpu.memory_space<vmem>>, vector<1x32x32xf32>
    %245 = vector.shape_cast %244 : vector<1x32x32xf32> to vector<32x32xf32>
    %cst_249 = arith.constant dense<0.000000e+00> : vector<64x32xf32>
    %246 = tpu.matmul %243, %245, %cst_249 {dimension_numbers = #tpu.dot_dimension_numbers<[1], [0], [0], [1], [0, 0, 1, 1], [], []>} : vector<64x32xf32>, vector<32x32xf32>, vector<64x32xf32> -> vector<64x32xf32>
    %c3_250 = arith.constant 3 : index
    %c0_251 = arith.constant 0 : index
    %c0_252 = arith.constant 0 : index
    %247 = vector.load %arg8[%c3_250, %c0_251, %c0_252] : memref<4x1x32xf32, #tpu.memory_space<vmem>>, vector<1x1x32xf32>
    %248 = vector.shape_cast %247 : vector<1x1x32xf32> to vector<1x32xf32>
    %c3_253 = arith.constant 3 : index
    %c0_254 = arith.constant 0 : index
    %c0_255 = arith.constant 0 : index
    %249 = vector.load %arg9[%c3_253, %c0_254, %c0_255] : memref<4x1x32xf32, #tpu.memory_space<vmem>>, vector<1x1x32xf32>
    %250 = vector.shape_cast %249 : vector<1x1x32xf32> to vector<1x32xf32>
    %251 = vector.broadcast %248 : vector<1x32xf32> to vector<64x32xf32>
    %252 = arith.mulf %246, %251 : vector<64x32xf32>
    %253 = vector.broadcast %250 : vector<1x32xf32> to vector<64x32xf32>
    %254 = arith.addf %252, %253 : vector<64x32xf32>
    %cst_256 = arith.constant 0.000000e+00 : f32
    %255 = vector.broadcast %cst_256 : f32 to vector<64x32xf32>
    %256 = arith.maximumf %254, %255 : vector<64x32xf32>
    %257 = vector.shape_cast %256 : vector<64x32xf32> to vector<1x8x8x32xf32>
    %c0_257 = arith.constant 0 : index
    %c1_258 = arith.constant 1 : index
    %c8_259 = arith.constant 8 : index
    %c0_260 = arith.constant 0 : index
    %258 = vector.load %arg22[%c0_257, %c1_258, %c8_259, %c0_260] : memref<1x10x17x32xf32, #tpu.memory_space<vmem>>, vector<1x8x8x32xf32>
    tpu.vector_store %arg22[%c0_257, %c1_258, %c8_259, %c0_260], %257 {strides = array<i32>} : memref<1x10x17x32xf32, #tpu.memory_space<vmem>>, vector<1x8x8x32xf32>,
    %c3_261 = arith.constant 3 : index
    %c0_262 = arith.constant 0 : index
    %c0_263 = arith.constant 0 : index
    %259 = vector.load %arg10[%c3_261, %c0_262, %c0_263] : memref<4x288x8xf32, #tpu.memory_space<vmem>>, vector<1x288x8xf32>
    %260 = vector.shape_cast %259 : vector<1x288x8xf32> to vector<288x8xf32>
    %c0_264 = arith.constant 0 : index
    %c0_265 = arith.constant 0 : index
    %c0_266 = arith.constant 0 : index
    %c0_267 = arith.constant 0 : index
    %261 = vector.load %arg22[%c0_264, %c0_265, %c0_266, %c0_267] : memref<1x10x17x32xf32, #tpu.memory_space<vmem>>, vector<1x10x17x32xf32>
    %262 = vector.extract_strided_slice %261 {offsets = [0, 0, 7, 0], sizes = [1, 10, 8, 32], strides = [1, 1, 1, 1]} : vector<1x10x17x32xf32> to vector<1x10x8x32xf32>
    %263 = vector.extract_strided_slice %261 {offsets = [0, 0, 8, 0], sizes = [1, 10, 8, 32], strides = [1, 1, 1, 1]} : vector<1x10x17x32xf32> to vector<1x10x8x32xf32>
    %264 = vector.extract_strided_slice %261 {offsets = [0, 0, 9, 0], sizes = [1, 10, 8, 32], strides = [1, 1, 1, 1]} : vector<1x10x17x32xf32> to vector<1x10x8x32xf32>
    %265 = tpu.concatenate %262, %263, %264 in 3 : vector<1x10x8x32xf32>, vector<1x10x8x32xf32>, vector<1x10x8x32xf32> -> vector<1x10x8x96xf32>
    %cst_268 = arith.constant 0.000000e+00 : f32
    %266 = vector.broadcast %cst_268 : f32 to vector<64x8xf32>
    %267 = vector.extract_strided_slice %265 {offsets = [0, 0, 0, 0], sizes = [1, 8, 8, 96], strides = [1, 1, 1, 1]} : vector<1x10x8x96xf32> to vector<1x8x8x96xf32>
    %268 = vector.shape_cast %267 : vector<1x8x8x96xf32> to vector<64x96xf32>
    %269 = vector.extract_strided_slice %260 {offsets = [0, 0], sizes = [96, 8], strides = [1, 1]} : vector<288x8xf32> to vector<96x8xf32>
    %cst_269 = arith.constant dense<0.000000e+00> : vector<64x8xf32>
    %270 = tpu.matmul %268, %269, %cst_269 {dimension_numbers = #tpu.dot_dimension_numbers<[1], [0], [0], [1], [0, 0, 1, 1], [], []>} : vector<64x96xf32>, vector<96x8xf32>, vector<64x8xf32> -> vector<64x8xf32>
    %271 = arith.addf %266, %270 : vector<64x8xf32>
    %272 = vector.extract_strided_slice %265 {offsets = [0, 1, 0, 0], sizes = [1, 8, 8, 96], strides = [1, 1, 1, 1]} : vector<1x10x8x96xf32> to vector<1x8x8x96xf32>
    %273 = vector.shape_cast %272 : vector<1x8x8x96xf32> to vector<64x96xf32>
    %274 = vector.extract_strided_slice %260 {offsets = [96, 0], sizes = [96, 8], strides = [1, 1]} : vector<288x8xf32> to vector<96x8xf32>
    %cst_270 = arith.constant dense<0.000000e+00> : vector<64x8xf32>
    %275 = tpu.matmul %273, %274, %cst_270 {dimension_numbers = #tpu.dot_dimension_numbers<[1], [0], [0], [1], [0, 0, 1, 1], [], []>} : vector<64x96xf32>, vector<96x8xf32>, vector<64x8xf32> -> vector<64x8xf32>
    %276 = arith.addf %271, %275 : vector<64x8xf32>
    %277 = vector.extract_strided_slice %265 {offsets = [0, 2, 0, 0], sizes = [1, 8, 8, 96], strides = [1, 1, 1, 1]} : vector<1x10x8x96xf32> to vector<1x8x8x96xf32>
    %278 = vector.shape_cast %277 : vector<1x8x8x96xf32> to vector<64x96xf32>
    %279 = vector.extract_strided_slice %260 {offsets = [192, 0], sizes = [96, 8], strides = [1, 1]} : vector<288x8xf32> to vector<96x8xf32>
    %cst_271 = arith.constant dense<0.000000e+00> : vector<64x8xf32>
    %280 = tpu.matmul %278, %279, %cst_271 {dimension_numbers = #tpu.dot_dimension_numbers<[1], [0], [0], [1], [0, 0, 1, 1], [], []>} : vector<64x96xf32>, vector<96x8xf32>, vector<64x8xf32> -> vector<64x8xf32>
    %281 = arith.addf %276, %280 : vector<64x8xf32>
    %282 = vector.shape_cast %281 : vector<64x8xf32> to vector<1x8x8x8xf32>
    %c0_272 = arith.constant 0 : index
    %c0_273 = arith.constant 0 : index
    %c0_274 = arith.constant 0 : index
    %c24_275 = arith.constant 24 : index
    %283 = vector.load %arg20[%c0_272, %c0_273, %c0_274, %c24_275] : memref<1x8x8x32xf32, #tpu.memory_space<vmem>>, vector<1x8x8x8xf32>
    tpu.vector_store %arg20[%c0_272, %c0_273, %c0_274, %c24_275], %282 {strides = array<i32>} : memref<1x8x8x32xf32, #tpu.memory_space<vmem>>, vector<1x8x8x8xf32>,
    %c0_276 = arith.constant 0 : index
    %c0_277 = arith.constant 0 : index
    %c0_278 = arith.constant 0 : index
    %c0_279 = arith.constant 0 : index
    %284 = vector.load %arg20[%c0_276, %c0_277, %c0_278, %c0_279] : memref<1x8x8x32xf32, #tpu.memory_space<vmem>>, vector<1x8x8x32xf32>
    %c0_280 = arith.constant 0 : index
    %c0_281 = arith.constant 0 : index
    %c0_282 = arith.constant 0 : index
    %c0_283 = arith.constant 0 : index
    %285 = vector.load %arg14[%c0_280, %c0_281, %c0_282, %c0_283] : memref<1x1x1x32xf32, #tpu.memory_space<vmem>>, vector<1x1x1x32xf32>
    %c0_284 = arith.constant 0 : index
    %c0_285 = arith.constant 0 : index
    %c0_286 = arith.constant 0 : index
    %c0_287 = arith.constant 0 : index
    %286 = vector.load %arg15[%c0_284, %c0_285, %c0_286, %c0_287] : memref<1x1x1x32xf32, #tpu.memory_space<vmem>>, vector<1x1x1x32xf32>
    %287 = vector.broadcast %285 : vector<1x1x1x32xf32> to vector<1x8x8x32xf32>
    %288 = arith.mulf %284, %287 : vector<1x8x8x32xf32>
    %289 = vector.broadcast %286 : vector<1x1x1x32xf32> to vector<1x8x8x32xf32>
    %290 = arith.addf %288, %289 : vector<1x8x8x32xf32>
    %cst_288 = arith.constant 0.000000e+00 : f32
    %291 = vector.broadcast %cst_288 : f32 to vector<1x8x8x32xf32>
    %292 = arith.maximumf %290, %291 : vector<1x8x8x32xf32>
    %293 = vector.shape_cast %292 : vector<1x8x8x32xf32> to vector<1x64x32xf32>
    %cst_289 = arith.constant dense<0.000000e+00> : vector<1x32xf32>
    %294 = vector.multi_reduction <add>, %293, %cst_289 [1] : vector<1x64x32xf32> to vector<1x32xf32>
    %cst_290 = arith.constant 1.562500e-02 : f32
    %295 = vector.broadcast %cst_290 : f32 to vector<1x32xf32>
    %296 = arith.mulf %294, %295 : vector<1x32xf32>
    %c0_291 = arith.constant 0 : index
    %c0_292 = arith.constant 0 : index
    %297 = vector.load %arg16[%c0_291, %c0_292] : memref<32x4xf32, #tpu.memory_space<vmem>>, vector<32x4xf32>
    %cst_293 = arith.constant dense<0.000000e+00> : vector<1x4xf32>
    %298 = tpu.matmul %296, %297, %cst_293 {dimension_numbers = #tpu.dot_dimension_numbers<[1], [0], [0], [1], [0, 0, 1, 1], [], []>} : vector<1x32xf32>, vector<32x4xf32>, vector<1x4xf32> -> vector<1x4xf32>
    %c0_294 = arith.constant 0 : index
    %c0_295 = arith.constant 0 : index
    %299 = vector.load %arg17[%c0_294, %c0_295] : memref<1x4xf32, #tpu.memory_space<vmem>>, vector<1x4xf32>
    %300 = arith.addf %298, %299 : vector<1x4xf32>
    %301 = vector.shape_cast %300 : vector<1x4xf32> to vector<1x1x4xf32>
    %c0_296 = arith.constant 0 : index
    %c0_297 = arith.constant 0 : index
    %c0_298 = arith.constant 0 : index
    %302 = vector.load %arg18[%c0_296, %c0_297, %c0_298] : memref<1x1x4xf32, #tpu.memory_space<vmem>>, vector<1x1x4xf32>
    tpu.vector_store %arg18[%c0_296, %c0_297, %c0_298], %301 {strides = array<i32>} : memref<1x1x4xf32, #tpu.memory_space<vmem>>, vector<1x1x4xf32>,
    return
  }
  func.func @transform_0(%arg0: i32) -> (i32, i32, i32, i32) {
    %c0_i32 = arith.constant 0 : i32
    %c0_i32_0 = arith.constant 0 : i32
    %c0_i32_1 = arith.constant 0 : i32
    %c0_i32_2 = arith.constant 0 : i32
    return %arg0, %c0_i32, %c0_i32_0, %c0_i32_1 : i32, i32, i32, i32
  }
  func.func @transform_1(%arg0: i32) -> (i32, i32) {
    %c0_i32 = arith.constant 0 : i32
    %c0_i32_0 = arith.constant 0 : i32
    %c0_i32_1 = arith.constant 0 : i32
    return %c0_i32, %c0_i32_0 : i32, i32
  }
  func.func @transform_2(%arg0: i32) -> (i32, i32, i32, i32) {
    %c0_i32 = arith.constant 0 : i32
    %c0_i32_0 = arith.constant 0 : i32
    %c0_i32_1 = arith.constant 0 : i32
    %c0_i32_2 = arith.constant 0 : i32
    %c0_i32_3 = arith.constant 0 : i32
    return %c0_i32, %c0_i32_0, %c0_i32_1, %c0_i32_2 : i32, i32, i32, i32
  }
  func.func @transform_3(%arg0: i32) -> (i32, i32, i32, i32) {
    %c0_i32 = arith.constant 0 : i32
    %c0_i32_0 = arith.constant 0 : i32
    %c0_i32_1 = arith.constant 0 : i32
    %c0_i32_2 = arith.constant 0 : i32
    %c0_i32_3 = arith.constant 0 : i32
    return %c0_i32, %c0_i32_0, %c0_i32_1, %c0_i32_2 : i32, i32, i32, i32
  }
  func.func @transform_4(%arg0: i32) -> (i32, i32, i32, i32, i32) {
    %c0_i32 = arith.constant 0 : i32
    %c0_i32_0 = arith.constant 0 : i32
    %c0_i32_1 = arith.constant 0 : i32
    %c0_i32_2 = arith.constant 0 : i32
    %c0_i32_3 = arith.constant 0 : i32
    %c0_i32_4 = arith.constant 0 : i32
    return %c0_i32, %c0_i32_0, %c0_i32_1, %c0_i32_2, %c0_i32_3 : i32, i32, i32, i32, i32
  }
  func.func @transform_5(%arg0: i32) -> (i32, i32, i32, i32, i32) {
    %c0_i32 = arith.constant 0 : i32
    %c0_i32_0 = arith.constant 0 : i32
    %c0_i32_1 = arith.constant 0 : i32
    %c0_i32_2 = arith.constant 0 : i32
    %c0_i32_3 = arith.constant 0 : i32
    %c0_i32_4 = arith.constant 0 : i32
    return %c0_i32, %c0_i32_0, %c0_i32_1, %c0_i32_2, %c0_i32_3 : i32, i32, i32, i32, i32
  }
  func.func @transform_6(%arg0: i32) -> (i32, i32, i32) {
    %c0_i32 = arith.constant 0 : i32
    %c0_i32_0 = arith.constant 0 : i32
    %c0_i32_1 = arith.constant 0 : i32
    %c0_i32_2 = arith.constant 0 : i32
    return %c0_i32, %c0_i32_0, %c0_i32_1 : i32, i32, i32
  }
  func.func @transform_7(%arg0: i32) -> (i32, i32, i32) {
    %c0_i32 = arith.constant 0 : i32
    %c0_i32_0 = arith.constant 0 : i32
    %c0_i32_1 = arith.constant 0 : i32
    %c0_i32_2 = arith.constant 0 : i32
    return %c0_i32, %c0_i32_0, %c0_i32_1 : i32, i32, i32
  }
  func.func @transform_8(%arg0: i32) -> (i32, i32, i32) {
    %c0_i32 = arith.constant 0 : i32
    %c0_i32_0 = arith.constant 0 : i32
    %c0_i32_1 = arith.constant 0 : i32
    %c0_i32_2 = arith.constant 0 : i32
    return %c0_i32, %c0_i32_0, %c0_i32_1 : i32, i32, i32
  }
  func.func @transform_9(%arg0: i32) -> (i32, i32, i32) {
    %c0_i32 = arith.constant 0 : i32
    %c0_i32_0 = arith.constant 0 : i32
    %c0_i32_1 = arith.constant 0 : i32
    %c0_i32_2 = arith.constant 0 : i32
    return %c0_i32, %c0_i32_0, %c0_i32_1 : i32, i32, i32
  }
  func.func @transform_10(%arg0: i32) -> (i32, i32, i32, i32) {
    %c0_i32 = arith.constant 0 : i32
    %c0_i32_0 = arith.constant 0 : i32
    %c0_i32_1 = arith.constant 0 : i32
    %c0_i32_2 = arith.constant 0 : i32
    %c0_i32_3 = arith.constant 0 : i32
    return %c0_i32, %c0_i32_0, %c0_i32_1, %c0_i32_2 : i32, i32, i32, i32
  }
  func.func @transform_11(%arg0: i32) -> (i32, i32, i32, i32) {
    %c0_i32 = arith.constant 0 : i32
    %c0_i32_0 = arith.constant 0 : i32
    %c0_i32_1 = arith.constant 0 : i32
    %c0_i32_2 = arith.constant 0 : i32
    %c0_i32_3 = arith.constant 0 : i32
    return %c0_i32, %c0_i32_0, %c0_i32_1, %c0_i32_2 : i32, i32, i32, i32
  }
  func.func @transform_12(%arg0: i32) -> (i32, i32) {
    %c0_i32 = arith.constant 0 : i32
    %c0_i32_0 = arith.constant 0 : i32
    %c0_i32_1 = arith.constant 0 : i32
    return %c0_i32, %c0_i32_0 : i32, i32
  }
  func.func @transform_13(%arg0: i32) -> (i32, i32, i32, i32) {
    %c0_i32 = arith.constant 0 : i32
    %c0_i32_0 = arith.constant 0 : i32
    %c0_i32_1 = arith.constant 0 : i32
    %c0_i32_2 = arith.constant 0 : i32
    %c0_i32_3 = arith.constant 0 : i32
    return %c0_i32, %c0_i32_0, %c0_i32_1, %c0_i32_2 : i32, i32, i32, i32
  }
  func.func @transform_14(%arg0: i32) -> (i32, i32, i32, i32) {
    %c0_i32 = arith.constant 0 : i32
    %c0_i32_0 = arith.constant 0 : i32
    %c0_i32_1 = arith.constant 0 : i32
    %c0_i32_2 = arith.constant 0 : i32
    %c0_i32_3 = arith.constant 0 : i32
    return %c0_i32, %c0_i32_0, %c0_i32_1, %c0_i32_2 : i32, i32, i32, i32
  }
  func.func @transform_15(%arg0: i32) -> (i32, i32) {
    %c0_i32 = arith.constant 0 : i32
    %c0_i32_0 = arith.constant 0 : i32
    %c0_i32_1 = arith.constant 0 : i32
    return %c0_i32, %c0_i32_0 : i32, i32
  }
  func.func @transform_16(%arg0: i32) -> (i32, i32) {
    %c0_i32 = arith.constant 0 : i32
    %c0_i32_0 = arith.constant 0 : i32
    %c0_i32_1 = arith.constant 0 : i32
    return %c0_i32, %c0_i32_0 : i32, i32
  }
  func.func @transform_17(%arg0: i32) -> (i32, i32, i32) {
    %c0_i32 = arith.constant 0 : i32
    %c0_i32_0 = arith.constant 0 : i32
    %c0_i32_1 = arith.constant 0 : i32
    return %arg0, %c0_i32, %c0_i32_0 : i32, i32, i32
  }
}

</mosaic_0001>

<llo_original>
// kernel: main_model_forward.1
$region0: #{main_model_forward.1}
  #allocation0 [shape = 'u32[]', space=smem, size = 0x4, offset = 0x4, fixed_abs, tag = 'smem constant byte address 0x4 - core index']
  #allocation1 [shape = 'u32[72,128]{1,0:T(1,128)}', space=vmem, size = 0x9000, scoped, tag = 'internal scratch']
  #allocation2 [shape = 'f32[1,16,16,32]{3,2,1,0:T(8,128)}', space=vmem, size = 0x20000, scoped, tag = 'scratch operand']
  #allocation3 [shape = 'f32[1,8,8,32]{3,2,1,0:T(8,128)}', space=vmem, size = 0x8000, scoped, tag = 'scratch operand']
  #allocation4 [shape = 'f32[1,18,25,32]{3,2,1,0:T(8,128)}', space=vmem, size = 0x48000, scoped, tag = 'scratch operand']
  #allocation5 [shape = 'f32[1,10,17,32]{3,2,1,0:T(8,128)}', space=vmem, size = 0x1e000, scoped, tag = 'scratch operand']
  #allocation6 [shape = 'f32[8,16,16]{2,1,0:T(8,128)}', space=vmem, size = 0x10000, scoped, tag = 'scratch operand']
  %s0 = inlined_call_operand.vmem [shape: f32[2,16,16,32], index: 0, kind: input, shape index: {}]
  %s1 = inlined_call_operand.vmem [shape: f32[288,16], index: 1, kind: input, shape index: {}]
  %s2 = inlined_call_operand.vmem [shape: f32[1,1,1,16], index: 2, kind: input, shape index: {}]
  %s3 = inlined_call_operand.vmem [shape: f32[1,1,1,16], index: 3, kind: input, shape index: {}]
  %s4 = inlined_call_operand.vmem [shape: f32[4,1,1,1,32], index: 4, kind: input, shape index: {}]
  %s5 = inlined_call_operand.vmem [shape: f32[4,1,1,1,32], index: 5, kind: input, shape index: {}]
  %s6 = inlined_call_operand.vmem [shape: f32[4,32,32], index: 6, kind: input, shape index: {}]
  %s7 = inlined_call_operand.vmem [shape: f32[4,1,32], index: 7, kind: input, shape index: {}]
  %s8 = inlined_call_operand.vmem [shape: f32[4,1,32], index: 8, kind: input, shape index: {}]
  %s9 = inlined_call_operand.vmem [shape: f32[4,288,8], index: 9, kind: input, shape index: {}]
  %s10 = inlined_call_operand.vmem [shape: f32[1,1,1,32], index: 10, kind: input, shape index: {}]
  %s11 = inlined_call_operand.vmem [shape: f32[1,1,1,32], index: 11, kind: input, shape index: {}]
  %s12 = inlined_call_operand.vmem [shape: f32[32,16], index: 12, kind: input, shape index: {}]
  %s13 = inlined_call_operand.vmem [shape: f32[1,1,1,32], index: 13, kind: input, shape index: {}]
  %s14 = inlined_call_operand.vmem [shape: f32[1,1,1,32], index: 14, kind: input, shape index: {}]
  %s15 = inlined_call_operand.vmem [shape: f32[32,4], index: 15, kind: input, shape index: {}]
  %s16 = inlined_call_operand.vmem [shape: f32[1,4], index: 16, kind: input, shape index: {}]
  %s17 = inlined_call_operand.hbm [shape: f32[2,1,4], index: 17, kind: output, shape index: {}]
  %s18 = sld [smem:[#allocation0]]
  $region101: #{main_model_forward.1} parent=0
    _
  %s20 = ssub.s32 1, %s18
  %s21 = scalar_select 0, %s20, %s18
  $region1: #{main_model_forward.1} parent=0
    #allocation7 [shape = 'u8[1024]{0}', space=vmem, size = 0x400, scoped, tag = 'output window, operand 0']
    #allocation8 [shape = 's32[2]{0}', space=sflag, size = 0x8, scoped, tag = 'scoped memory for main_model_forward.1']
    %22 = vsyncpa [#allocation8], 0
    %s23 = scalar_lea.sflag [#allocation8], 1
    %24 = vsyncpa %s23, 0
    loop: start=0, step=1, limit=4
    $region2: #{main_model_forward.1} parent=1 // loop_pre_header
      _
    $region3: #{main_model_forward.1} parent=1 // loop_header
      %s26 = sphi 0, %s30
      %p27 = scmp.ge.s32.totalorder %s26, 4
      %s36 = sphi 0, %s38
      %s39 = sphi 0, %s36
      %s40 = sphi 0, %s39
      %s56 = sphi 0, %s40
      %s60 = sphi 0, %s60
      %s62 = sphi 0, %s60
      %s63 = sphi 0, %s62
      %s77 = sphi 0, %s63
      %s81 = sphi 0, %s81
      %s83 = sphi 0, %s81
      %s84 = sphi 0, %s83
      %s98 = sphi 0, %s84
      %s102 = sphi 0, %s102
      %s104 = sphi 0, %s102
      %s105 = sphi 0, %s104
      %s119 = sphi 0, %s105
      %s123 = sphi 0, %s123
      %s125 = sphi 0, %s123
      %s126 = sphi 0, %s125
      %s140 = sphi 0, %s126
      %s144 = sphi 0, %s144
      %s146 = sphi 0, %s144
      %s147 = sphi 0, %s146
      %s161 = sphi 0, %s147
      %s165 = sphi 0, %s165
      %s167 = sphi 0, %s165
      %s168 = sphi 0, %s167
      %s182 = sphi 0, %s168
      %s186 = sphi 0, %s186
      %s188 = sphi 0, %s186
      %s189 = sphi 0, %s188
      %s203 = sphi 0, %s189
      %s207 = sphi 0, %s207
      %s209 = sphi 0, %s207
      %s210 = sphi 0, %s209
      %s224 = sphi 0, %s210
      %s228 = sphi 0, %s228
      %s230 = sphi 0, %s228
      %s231 = sphi 0, %s230
      %s245 = sphi 0, %s231
      %s249 = sphi 0, %s249
      %s251 = sphi 0, %s249
      %s252 = sphi 0, %s251
      %s266 = sphi 0, %s252
      %s270 = sphi 0, %s270
      %s272 = sphi 0, %s270
      %s273 = sphi 0, %s272
      %s287 = sphi 0, %s273
      %s291 = sphi 0, %s291
      %s293 = sphi 0, %s291
      %s294 = sphi 0, %s293
      %s308 = sphi 0, %s294
      %s312 = sphi 0, %s312
      %s314 = sphi 0, %s312
      %s315 = sphi 0, %s314
      %s329 = sphi 0, %s315
      %s333 = sphi 0, %s333
      %s335 = sphi 0, %s333
      %s336 = sphi 0, %s335
      %s350 = sphi 0, %s336
      %s354 = sphi 0, %s354
      %s356 = sphi 0, %s354
      %s357 = sphi 0, %s356
      %s371 = sphi 0, %s357
      %s375 = sphi 0, %s375
      %s377 = sphi 0, %s375
      %s378 = sphi 0, %s377
      %s392 = sphi 0, %s378
      %s398 = sphi 0, %s400
      %s401 = sphi 0, %s398
      %s402 = sphi 0, %s401
      %s418 = sphi 0, %s402
    $region4: #{main_model_forward.1} parent=1 // loop_header_branch
      %29 = sbr.rel (%p27) target = $region8
    $region5: #{main_model_forward.1} parent=1 // loop_body
      %s31 = ssub.s32 %s26, 1
      %s32 = ssub.s32 %s26, 2
      %s33 = sadd.s32 %s26, 1
      %s34 = ssub.s32 %s26, %s33
      %p35 = scmp.eq.s32.totalorder %s34, 0
      %s37 = sadd.s32 %s36, 1
      %s38 = scalar_select %p35, %s36, %s37
      %p41 = pneg %p35
      %p42 = scmp.eq.s32.totalorder %s26, 1
      %p43 = por %p41, %p42
      %p44 = scmp.ne.s32.totalorder %s36, %s39
      %p45 = scmp.eq.s32.totalorder %s26, 0
      %p46 = por %p44, %p45
      %p47 = scmp.ne.s32.totalorder %s36, %s39
      %p48 = scmp.eq.s32.totalorder %s31, 1
      %p49 = por %p47, %p48
      %p50 = scmp.ne.s32.totalorder %s39, %s40
      %p51 = scmp.eq.s32.totalorder %s31, 0
      %p52 = por %p50, %p51
      %p53 = scmp.ne.s32.totalorder %s39, %s40
      %p54 = scmp.eq.s32.totalorder %s32, 1
      %p55 = por %p53, %p54
      %p57 = scmp.ne.s32.totalorder %s40, %s56
      %p58 = scmp.eq.s32.totalorder %s32, 0
      %p59 = por %p57, %p58
      %s61 = sadd.s32 %s60, 1
      %p64 = scmp.eq.s32.totalorder %s26, 1
      %p65 = scmp.ne.s32.totalorder %s60, %s62
      %p66 = scmp.eq.s32.totalorder %s26, 0
      %p67 = por %p65, %p66
      %p68 = scmp.ne.s32.totalorder %s60, %s62
      %p69 = scmp.eq.s32.totalorder %s31, 1
      %p70 = por %p68, %p69
      %p71 = scmp.ne.s32.totalorder %s62, %s63
      %p72 = scmp.eq.s32.totalorder %s31, 0
      %p73 = por %p71, %p72
      %p74 = scmp.ne.s32.totalorder %s62, %s63
      %p75 = scmp.eq.s32.totalorder %s32, 1
      %p76 = por %p74, %p75
      %p78 = scmp.ne.s32.totalorder %s63, %s77
      %p79 = scmp.eq.s32.totalorder %s32, 0
      %p80 = por %p78, %p79
      %s82 = sadd.s32 %s81, 1
      %p85 = scmp.eq.s32.totalorder %s26, 1
      %p86 = scmp.ne.s32.totalorder %s81, %s83
      %p87 = scmp.eq.s32.totalorder %s26, 0
      %p88 = por %p86, %p87
      %p89 = scmp.ne.s32.totalorder %s81, %s83
      %p90 = scmp.eq.s32.totalorder %s31, 1
      %p91 = por %p89, %p90
      %p92 = scmp.ne.s32.totalorder %s83, %s84
      %p93 = scmp.eq.s32.totalorder %s31, 0
      %p94 = por %p92, %p93
      %p95 = scmp.ne.s32.totalorder %s83, %s84
      %p96 = scmp.eq.s32.totalorder %s32, 1
      %p97 = por %p95, %p96
      %p99 = scmp.ne.s32.totalorder %s84, %s98
      %p100 = scmp.eq.s32.totalorder %s32, 0
      %p101 = por %p99, %p100
      %s103 = sadd.s32 %s102, 1
      %p106 = scmp.eq.s32.totalorder %s26, 1
      %p107 = scmp.ne.s32.totalorder %s102, %s104
      %p108 = scmp.eq.s32.totalorder %s26, 0
      %p109 = por %p107, %p108
      %p110 = scmp.ne.s32.totalorder %s102, %s104
      %p111 = scmp.eq.s32.totalorder %s31, 1
      %p112 = por %p110, %p111
      %p113 = scmp.ne.s32.totalorder %s104, %s105
      %p114 = scmp.eq.s32.totalorder %s31, 0
      %p115 = por %p113, %p114
      %p116 = scmp.ne.s32.totalorder %s104, %s105
      %p117 = scmp.eq.s32.totalorder %s32, 1
      %p118 = por %p116, %p117
      %p120 = scmp.ne.s32.totalorder %s105, %s119
      %p121 = scmp.eq.s32.totalorder %s32, 0
      %p122 = por %p120, %p121
      %s124 = sadd.s32 %s123, 1
      %p127 = scmp.eq.s32.totalorder %s26, 1
      %p128 = scmp.ne.s32.totalorder %s123, %s125
      %p129 = scmp.eq.s32.totalorder %s26, 0
      %p130 = por %p128, %p129
      %p131 = scmp.ne.s32.totalorder %s123, %s125
      %p132 = scmp.eq.s32.totalorder %s31, 1
      %p133 = por %p131, %p132
      %p134 = scmp.ne.s32.totalorder %s125, %s126
      %p135 = scmp.eq.s32.totalorder %s31, 0
      %p136 = por %p134, %p135
      %p137 = scmp.ne.s32.totalorder %s125, %s126
      %p138 = scmp.eq.s32.totalorder %s32, 1
      %p139 = por %p137, %p138
      %p141 = scmp.ne.s32.totalorder %s126, %s140
      %p142 = scmp.eq.s32.totalorder %s32, 0
      %p143 = por %p141, %p142
      %s145 = sadd.s32 %s144, 1
      %p148 = scmp.eq.s32.totalorder %s26, 1
      %p149 = scmp.ne.s32.totalorder %s144, %s146
      %p150 = scmp.eq.s32.totalorder %s26, 0
      %p151 = por %p149, %p150
      %p152 = scmp.ne.s32.totalorder %s144, %s146
      %p153 = scmp.eq.s32.totalorder %s31, 1
      %p154 = por %p152, %p153
      %p155 = scmp.ne.s32.totalorder %s146, %s147
      %p156 = scmp.eq.s32.totalorder %s31, 0
      %p157 = por %p155, %p156
      %p158 = scmp.ne.s32.totalorder %s146, %s147
      %p159 = scmp.eq.s32.totalorder %s32, 1
      %p160 = por %p158, %p159
      %p162 = scmp.ne.s32.totalorder %s147, %s161
      %p163 = scmp.eq.s32.totalorder %s32, 0
      %p164 = por %p162, %p163
      %s166 = sadd.s32 %s165, 1
      %p169 = scmp.eq.s32.totalorder %s26, 1
      %p170 = scmp.ne.s32.totalorder %s165, %s167
      %p171 = scmp.eq.s32.totalorder %s26, 0
      %p172 = por %p170, %p171
      %p173 = scmp.ne.s32.totalorder %s165, %s167
      %p174 = scmp.eq.s32.totalorder %s31, 1
      %p175 = por %p173, %p174
      %p176 = scmp.ne.s32.totalorder %s167, %s168
      %p177 = scmp.eq.s32.totalorder %s31, 0
      %p178 = por %p176, %p177
      %p179 = scmp.ne.s32.totalorder %s167, %s168
      %p180 = scmp.eq.s32.totalorder %s32, 1
      %p181 = por %p179, %p180
      %p183 = scmp.ne.s32.totalorder %s168, %s182
      %p184 = scmp.eq.s32.totalorder %s32, 0
      %p185 = por %p183, %p184
      %s187 = sadd.s32 %s186, 1
      %p190 = scmp.eq.s32.totalorder %s26, 1
      %p191 = scmp.ne.s32.totalorder %s186, %s188
      %p192 = scmp.eq.s32.totalorder %s26, 0
      %p193 = por %p191, %p192
      %p194 = scmp.ne.s32.totalorder %s186, %s188
      %p195 = scmp.eq.s32.totalorder %s31, 1
      %p196 = por %p194, %p195
      %p197 = scmp.ne.s32.totalorder %s188, %s189
      %p198 = scmp.eq.s32.totalorder %s31, 0
      %p199 = por %p197, %p198
      %p200 = scmp.ne.s32.totalorder %s188, %s189
      %p201 = scmp.eq.s32.totalorder %s32, 1
      %p202 = por %p200, %p201
      %p204 = scmp.ne.s32.totalorder %s189, %s203
      %p205 = scmp.eq.s32.totalorder %s32, 0
      %p206 = por %p204, %p205
      %s208 = sadd.s32 %s207, 1
      %p211 = scmp.eq.s32.totalorder %s26, 1
      %p212 = scmp.ne.s32.totalorder %s207, %s209
      %p213 = scmp.eq.s32.totalorder %s26, 0
      %p214 = por %p212, %p213
      %p215 = scmp.ne.s32.totalorder %s207, %s209
      %p216 = scmp.eq.s32.totalorder %s31, 1
      %p217 = por %p215, %p216
      %p218 = scmp.ne.s32.totalorder %s209, %s210
      %p219 = scmp.eq.s32.totalorder %s31, 0
      %p220 = por %p218, %p219
      %p221 = scmp.ne.s32.totalorder %s209, %s210
      %p222 = scmp.eq.s32.totalorder %s32, 1
      %p223 = por %p221, %p222
      %p225 = scmp.ne.s32.totalorder %s210, %s224
      %p226 = scmp.eq.s32.totalorder %s32, 0
      %p227 = por %p225, %p226
      %s229 = sadd.s32 %s228, 1
      %p232 = scmp.eq.s32.totalorder %s26, 1
      %p233 = scmp.ne.s32.totalorder %s228, %s230
      %p234 = scmp.eq.s32.totalorder %s26, 0
      %p235 = por %p233, %p234
      %p236 = scmp.ne.s32.totalorder %s228, %s230
      %p237 = scmp.eq.s32.totalorder %s31, 1
      %p238 = por %p236, %p237
      %p239 = scmp.ne.s32.totalorder %s230, %s231
      %p240 = scmp.eq.s32.totalorder %s31, 0
      %p241 = por %p239, %p240
      %p242 = scmp.ne.s32.totalorder %s230, %s231
      %p243 = scmp.eq.s32.totalorder %s32, 1
      %p244 = por %p242, %p243
      %p246 = scmp.ne.s32.totalorder %s231, %s245
      %p247 = scmp.eq.s32.totalorder %s32, 0
      %p248 = por %p246, %p247
      %s250 = sadd.s32 %s249, 1
      %p253 = scmp.eq.s32.totalorder %s26, 1
      %p254 = scmp.ne.s32.totalorder %s249, %s251
      %p255 = scmp.eq.s32.totalorder %s26, 0
      %p256 = por %p254, %p255
      %p257 = scmp.ne.s32.totalorder %s249, %s251
      %p258 = scmp.eq.s32.totalorder %s31, 1
      %p259 = por %p257, %p258
      %p260 = scmp.ne.s32.totalorder %s251, %s252
      %p261 = scmp.eq.s32.totalorder %s31, 0
      %p262 = por %p260, %p261
      %p263 = scmp.ne.s32.totalorder %s251, %s252
      %p264 = scmp.eq.s32.totalorder %s32, 1
      %p265 = por %p263, %p264
      %p267 = scmp.ne.s32.totalorder %s252, %s266
      %p268 = scmp.eq.s32.totalorder %s32, 0
      %p269 = por %p267, %p268
      %s271 = sadd.s32 %s270, 1
      %p274 = scmp.eq.s32.totalorder %s26, 1
      %p275 = scmp.ne.s32.totalorder %s270, %s272
      %p276 = scmp.eq.s32.totalorder %s26, 0
      %p277 = por %p275, %p276
      %p278 = scmp.ne.s32.totalorder %s270, %s272
      %p279 = scmp.eq.s32.totalorder %s31, 1
      %p280 = por %p278, %p279
      %p281 = scmp.ne.s32.totalorder %s272, %s273
      %p282 = scmp.eq.s32.totalorder %s31, 0
      %p283 = por %p281, %p282
      %p284 = scmp.ne.s32.totalorder %s272, %s273
      %p285 = scmp.eq.s32.totalorder %s32, 1
      %p286 = por %p284, %p285
      %p288 = scmp.ne.s32.totalorder %s273, %s287
      %p289 = scmp.eq.s32.totalorder %s32, 0
      %p290 = por %p288, %p289
      %s292 = sadd.s32 %s291, 1
      %p295 = scmp.eq.s32.totalorder %s26, 1
      %p296 = scmp.ne.s32.totalorder %s291, %s293
      %p297 = scmp.eq.s32.totalorder %s26, 0
      %p298 = por %p296, %p297
      %p299 = scmp.ne.s32.totalorder %s291, %s293
      %p300 = scmp.eq.s32.totalorder %s31, 1
      %p301 = por %p299, %p300
      %p302 = scmp.ne.s32.totalorder %s293, %s294
      %p303 = scmp.eq.s32.totalorder %s31, 0
      %p304 = por %p302, %p303
      %p305 = scmp.ne.s32.totalorder %s293, %s294
      %p306 = scmp.eq.s32.totalorder %s32, 1
      %p307 = por %p305, %p306
      %p309 = scmp.ne.s32.totalorder %s294, %s308
      %p310 = scmp.eq.s32.totalorder %s32, 0
      %p311 = por %p309, %p310
      %s313 = sadd.s32 %s312, 1
      %p316 = scmp.eq.s32.totalorder %s26, 1
      %p317 = scmp.ne.s32.totalorder %s312, %s314
      %p318 = scmp.eq.s32.totalorder %s26, 0
      %p319 = por %p317, %p318
      %p320 = scmp.ne.s32.totalorder %s312, %s314
      %p321 = scmp.eq.s32.totalorder %s31, 1
      %p322 = por %p320, %p321
      %p323 = scmp.ne.s32.totalorder %s314, %s315
      %p324 = scmp.eq.s32.totalorder %s31, 0
      %p325 = por %p323, %p324
      %p326 = scmp.ne.s32.totalorder %s314, %s315
      %p327 = scmp.eq.s32.totalorder %s32, 1
      %p328 = por %p326, %p327
      %p330 = scmp.ne.s32.totalorder %s315, %s329
      %p331 = scmp.eq.s32.totalorder %s32, 0
      %p332 = por %p330, %p331
      %s334 = sadd.s32 %s333, 1
      %p337 = scmp.eq.s32.totalorder %s26, 1
      %p338 = scmp.ne.s32.totalorder %s333, %s335
      %p339 = scmp.eq.s32.totalorder %s26, 0
      %p340 = por %p338, %p339
      %p341 = scmp.ne.s32.totalorder %s333, %s335
      %p342 = scmp.eq.s32.totalorder %s31, 1
      %p343 = por %p341, %p342
      %p344 = scmp.ne.s32.totalorder %s335, %s336
      %p345 = scmp.eq.s32.totalorder %s31, 0
      %p346 = por %p344, %p345
      %p347 = scmp.ne.s32.totalorder %s335, %s336
      %p348 = scmp.eq.s32.totalorder %s32, 1
      %p349 = por %p347, %p348
      %p351 = scmp.ne.s32.totalorder %s336, %s350
      %p352 = scmp.eq.s32.totalorder %s32, 0
      %p353 = por %p351, %p352
      %s355 = sadd.s32 %s354, 1
      %p358 = scmp.eq.s32.totalorder %s26, 1
      %p359 = scmp.ne.s32.totalorder %s354, %s356
      %p360 = scmp.eq.s32.totalorder %s26, 0
      %p361 = por %p359, %p360
      %p362 = scmp.ne.s32.totalorder %s354, %s356
      %p363 = scmp.eq.s32.totalorder %s31, 1
      %p364 = por %p362, %p363
      %p365 = scmp.ne.s32.totalorder %s356, %s357
      %p366 = scmp.eq.s32.totalorder %s31, 0
      %p367 = por %p365, %p366
      %p368 = scmp.ne.s32.totalorder %s356, %s357
      %p369 = scmp.eq.s32.totalorder %s32, 1
      %p370 = por %p368, %p369
      %p372 = scmp.ne.s32.totalorder %s357, %s371
      %p373 = scmp.eq.s32.totalorder %s32, 0
      %p374 = por %p372, %p373
      %s376 = sadd.s32 %s375, 1
      %p379 = scmp.eq.s32.totalorder %s26, 1
      %p380 = scmp.ne.s32.totalorder %s375, %s377
      %p381 = scmp.eq.s32.totalorder %s26, 0
      %p382 = por %p380, %p381
      %p383 = scmp.ne.s32.totalorder %s375, %s377
      %p384 = scmp.eq.s32.totalorder %s31, 1
      %p385 = por %p383, %p384
      %p386 = scmp.ne.s32.totalorder %s377, %s378
      %p387 = scmp.eq.s32.totalorder %s31, 0
      %p388 = por %p386, %p387
      %p389 = scmp.ne.s32.totalorder %s377, %s378
      %p390 = scmp.eq.s32.totalorder %s32, 1
      %p391 = por %p389, %p390
      %p393 = scmp.ne.s32.totalorder %s378, %s392
      %p394 = scmp.eq.s32.totalorder %s32, 0
      %p395 = por %p393, %p394
      %s396 = ssub.s32 %s26, %s33
      %p397 = scmp.eq.s32.totalorder %s396, 0
      %s399 = sadd.s32 %s398, 1
      %s400 = scalar_select %p397, %s398, %s399
      %p403 = pneg %p397
      %p404 = scmp.eq.s32.totalorder %s26, 1
      %p405 = por %p403, %p404
      %p406 = scmp.ne.s32.totalorder %s398, %s401
      %p407 = scmp.eq.s32.totalorder %s26, 0
      %p408 = por %p406, %p407
      %p409 = scmp.ne.s32.totalorder %s398, %s401
      %p410 = scmp.eq.s32.totalorder %s31, 1
      %p411 = por %p409, %p410
      %p412 = scmp.ne.s32.totalorder %s401, %s402
      %p413 = scmp.eq.s32.totalorder %s31, 0
      %p414 = por %p412, %p413
      %p415 = scmp.ne.s32.totalorder %s401, %s402
      %p416 = scmp.eq.s32.totalorder %s32, 1
      %p417 = por %p415, %p416
      %p419 = scmp.ne.s32.totalorder %s402, %s418
      %p420 = scmp.eq.s32.totalorder %s32, 0
      %p421 = por %p419, %p420
      %p422 = scmp.le.s32.totalorder 1, %s26
      %p423 = scmp.lt.s32.totalorder %s26, 3
      %p424 = pnand %p422, %p423
      %p425 = pneg %p424
      // Predicated region
      $region9: #{main_model_forward.1} parent=5 // pred_check
        _
      $region10: #{main_model_forward.1} parent=5 // pred_check_branch
        %427 = sbr.rel (%p424) target = $region12
      $region11: #{main_model_forward.1} parent=5 // pred_region
        %s428 = ssub.s32 %s26, 1
        // Predicated region
        $region13: #{main_model_forward.1} parent=11 // pred_check
          %p429 = pneg %p73
        $region14: #{main_model_forward.1} parent=11 // pred_check_branch
          %431 = sbr.rel (%p429) target = $region16
        $region15: #{main_model_forward.1} parent=11 // pred_region
          _
        $region16: #{main_model_forward.1} parent=11 // pred_fallthru
          _
        // Predicated region
        $region17: #{main_model_forward.1} parent=11 // pred_check
          %p432 = pneg %p94
        $region18: #{main_model_forward.1} parent=11 // pred_check_branch
          %434 = sbr.rel (%p432) target = $region20
        $region19: #{main_model_forward.1} parent=11 // pred_region
          _
        $region20: #{main_model_forward.1} parent=11 // pred_fallthru
          _
        // Predicated region
        $region21: #{main_model_forward.1} parent=11 // pred_check
          %p435 = pneg %p115
        $region22: #{main_model_forward.1} parent=11 // pred_check_branch
          %437 = sbr.rel (%p435) target = $region24
        $region23: #{main_model_forward.1} parent=11 // pred_region
          _
        $region24: #{main_model_forward.1} parent=11 // pred_fallthru
          _
        // Predicated region
        $region25: #{main_model_forward.1} parent=11 // pred_check
          %p438 = pneg %p136
        $region26: #{main_model_forward.1} parent=11 // pred_check_branch
          %440 = sbr.rel (%p438) target = $region28
        $region27: #{main_model_forward.1} parent=11 // pred_region
          _
        $region28: #{main_model_forward.1} parent=11 // pred_fallthru
          _
        // Predicated region
        $region29: #{main_model_forward.1} parent=11 // pred_check
          %p441 = pneg %p157
        $region30: #{main_model_forward.1} parent=11 // pred_check_branch
          %443 = sbr.rel (%p441) target = $region32
        $region31: #{main_model_forward.1} parent=11 // pred_region
          _
        $region32: #{main_model_forward.1} parent=11 // pred_fallthru
          _
        // Predicated region
        $region33: #{main_model_forward.1} parent=11 // pred_check
          %p444 = pneg %p178
        $region34: #{main_model_forward.1} parent=11 // pred_check_branch
          %446 = sbr.rel (%p444) target = $region36
        $region35: #{main_model_forward.1} parent=11 // pred_region
          _
        $region36: #{main_model_forward.1} parent=11 // pred_fallthru
          _
        // Predicated region
        $region37: #{main_model_forward.1} parent=11 // pred_check
          %p447 = pneg %p199
        $region38: #{main_model_forward.1} parent=11 // pred_check_branch
          %449 = sbr.rel (%p447) target = $region40
        $region39: #{main_model_forward.1} parent=11 // pred_region
          _
        $region40: #{main_model_forward.1} parent=11 // pred_fallthru
          _
        // Predicated region
        $region41: #{main_model_forward.1} parent=11 // pred_check
          %p450 = pneg %p220
        $region42: #{main_model_forward.1} parent=11 // pred_check_branch
          %452 = sbr.rel (%p450) target = $region44
        $region43: #{main_model_forward.1} parent=11 // pred_region
          _
        $region44: #{main_model_forward.1} parent=11 // pred_fallthru
          _
        // Predicated region
        $region45: #{main_model_forward.1} parent=11 // pred_check
          %p453 = pneg %p241
        $region46: #{main_model_forward.1} parent=11 // pred_check_branch
          %455 = sbr.rel (%p453) target = $region48
        $region47: #{main_model_forward.1} parent=11 // pred_region
          _
        $region48: #{main_model_forward.1} parent=11 // pred_fallthru
          _
        // Predicated region
        $region49: #{main_model_forward.1} parent=11 // pred_check
          %p456 = pneg %p262
        $region50: #{main_model_forward.1} parent=11 // pred_check_branch
          %458 = sbr.rel (%p456) target = $region52
        $region51: #{main_model_forward.1} parent=11 // pred_region
          _
        $region52: #{main_model_forward.1} parent=11 // pred_fallthru
          _
        // Predicated region
        $region53: #{main_model_forward.1} parent=11 // pred_check
          %p459 = pneg %p283
        $region54: #{main_model_forward.1} parent=11 // pred_check_branch
          %461 = sbr.rel (%p459) target = $region56
        $region55: #{main_model_forward.1} parent=11 // pred_region
          _
        $region56: #{main_model_forward.1} parent=11 // pred_fallthru
          _
        // Predicated region
        $region57: #{main_model_forward.1} parent=11 // pred_check
          %p462 = pneg %p304
        $region58: #{main_model_forward.1} parent=11 // pred_check_branch
          %464 = sbr.rel (%p462) target = $region60
        $region59: #{main_model_forward.1} parent=11 // pred_region
          _
        $region60: #{main_model_forward.1} parent=11 // pred_fallthru
          _
        // Predicated region
        $region61: #{main_model_forward.1} parent=11 // pred_check
          %p465 = pneg %p325
        $region62: #{main_model_forward.1} parent=11 // pred_check_branch
          %467 = sbr.rel (%p465) target = $region64
        $region63: #{main_model_forward.1} parent=11 // pred_region
          _
        $region64: #{main_model_forward.1} parent=11 // pred_fallthru
          _
        // Predicated region
        $region65: #{main_model_forward.1} parent=11 // pred_check
          %p468 = pneg %p346
        $region66: #{main_model_forward.1} parent=11 // pred_check_branch
          %470 = sbr.rel (%p468) target = $region68
        $region67: #{main_model_forward.1} parent=11 // pred_region
          _
        $region68: #{main_model_forward.1} parent=11 // pred_fallthru
          _
        // Predicated region
        $region69: #{main_model_forward.1} parent=11 // pred_check
          %p471 = pneg %p367
        $region70: #{main_model_forward.1} parent=11 // pred_check_branch
          %473 = sbr.rel (%p471) target = $region72
        $region71: #{main_model_forward.1} parent=11 // pred_region
          _
        $region72: #{main_model_forward.1} parent=11 // pred_fallthru
          _
        // Predicated region
        $region73: #{main_model_forward.1} parent=11 // pred_check
          %p474 = pneg %p388
        $region74: #{main_model_forward.1} parent=11 // pred_check_branch
          %476 = sbr.rel (%p474) target = $region76
        $region75: #{main_model_forward.1} parent=11 // pred_region
          _
        $region76: #{main_model_forward.1} parent=11 // pred_fallthru
          _
      $region12: #{main_model_forward.1} parent=5 // pred_fallthru
        _
      %p477 = scmp.lt.s32.totalorder %s26, 2
      // Predicated region
      $region77: #{main_model_forward.1} parent=5 // pred_check
        %p478 = pneg %p477
      $region78: #{main_model_forward.1} parent=5 // pred_check_branch
        %480 = sbr.rel (%p478) target = $region80
      $region79: #{main_model_forward.1} parent=5 // pred_region
        // Predicated region
        $region81: #{main_model_forward.1} parent=79 // pred_check
          %p481 = pneg %p46
        $region82: #{main_model_forward.1} parent=79 // pred_check_branch
          %483 = sbr.rel (%p481) target = $region84
        $region83: #{main_model_forward.1} parent=79 // pred_region
          %p484 = scmp.lt.s32.totalorder %s26, 1
          %s485 = scalar_select %p484, %s26, 1
          %s486 = smul.addr %s485, 32
          %s487 = smul.addr %s486, 8
          %s488 = scalar_lea.vmem %s0, %s487
        $region84: #{main_model_forward.1} parent=79 // pred_fallthru
          _
      $region80: #{main_model_forward.1} parent=5 // pred_fallthru
        _
      %p489 = scmp.le.s32.totalorder 1, %s26
      %p490 = scmp.lt.s32.totalorder %s26, 3
      %p491 = pnand %p489, %p490
      %p492 = pneg %p491
      // Predicated region
      $region85: #{main_model_forward.1} parent=5 // pred_check
        _
      $region86: #{main_model_forward.1} parent=5 // pred_check_branch
        %494 = sbr.rel (%p491) target = $region88
      $region87: #{main_model_forward.1} parent=5 // pred_region
        %s495 = ssub.s32 %s26, 1
        %p496 = scmp.lt.s32.totalorder %s31, 1
        %s497 = scalar_select %p496, %s31, 1
        %s498 = smul.addr %s497, 32
        %s499 = smul.addr %s498, 8
        %s500 = scalar_lea.vmem %s0, %s499
        %p501 = pneg %p52
        %p502 = pneg %p49
        %p503 = pneg %p73
        %p504 = pneg %p70
        %p505 = pneg %p94
        %p506 = pneg %p91
        %p507 = pneg %p115
        %p508 = pneg %p112
        %p509 = pneg %p136
        %p510 = pneg %p133
        %p511 = pneg %p157
        %p512 = pneg %p154
        %p513 = pneg %p178
        %p514 = pneg %p175
        %p515 = pneg %p199
        %p516 = pneg %p196
        %p517 = pneg %p220
        %p518 = pneg %p217
        %p519 = pneg %p241
        %p520 = pneg %p238
        %p521 = pneg %p262
        %p522 = pneg %p259
        %p523 = pneg %p283
        %p524 = pneg %p280
        %p525 = pneg %p304
        %p526 = pneg %p301
        %p527 = pneg %p325
        %p528 = pneg %p322
        %p529 = pneg %p346
        %p530 = pneg %p343
        %p531 = pneg %p367
        %p532 = pneg %p364
        %p533 = pneg %p388
        %p534 = pneg %p385
        %p535 = pneg %p414
        %p536 = pneg %p411
        %s537 = sand.u32 %s401, 1
        %s538 = scalar_lea.sflag [#allocation8], %s537
        %s539 = sand.u32 %s401, 1
        %s540 = scalar_lea.vmem [#allocation7], %s539
        %p541 = scmp.lt.s32.totalorder %s31, 1
        %s542 = scalar_select %p541, %s31, 1
        %s543 = smul.addr %s542, 32
        %s544 = smul.addr %s543, 8
        %s545 = scalar_lea.vmem %s0, %s544
        %vm546 = vcmask 261120
        %547 = vst.msk [vmem:[#allocation4] sm:$0xff] %vm546, 0.0
        %548 = vst.msk [vmem:[#allocation4 + $0x8] sm:$0xff] %vm546, 0.0
        %549 = vst.msk [vmem:[#allocation4 + $0x10] sm:$0xff] %vm546, 0.0
        %vm550 = vcmask 253952
        %551 = vst.msk [vmem:[#allocation4 + $0x18] sm:$0x1] %vm550, 0.0
        %s552 = scalar_lea.vmem [#allocation4], 544
        %553 = vst.msk [vmem:[%s552] sm:$0xff] %vm546, 0.0
        %554 = vst.msk [vmem:[%s552 + $0x8] sm:$0xff] %vm546, 0.0
        %555 = vst.msk [vmem:[%s552 + $0x10] sm:$0xff] %vm546, 0.0
        %556 = vst.msk [vmem:[%s552 + $0x18] sm:$0x1] %vm550, 0.0
        %557 = vst.msk [vmem:[#allocation4 + $0x7] sm:$0x1] %vm550, 0.0
        %558 = vst.msk [vmem:[#allocation4 + $0x27] sm:$0x1] %vm550, 0.0
        %559 = vst.msk [vmem:[#allocation4 + $0x47] sm:$0x1] %vm550, 0.0
        %560 = vst.msk [vmem:[#allocation4 + $0x67] sm:$0x1] %vm550, 0.0
        %561 = vst.msk [vmem:[#allocation4 + $0x87] sm:$0x1] %vm550, 0.0
        %562 = vst.msk [vmem:[#allocation4 + $0xa7] sm:$0x1] %vm550, 0.0
        %563 = vst.msk [vmem:[#allocation4 + $0xc7] sm:$0x1] %vm550, 0.0
        %564 = vst.msk [vmem:[#allocation4 + $0xe7] sm:$0x1] %vm550, 0.0
        %565 = vst.msk [vmem:[#allocation4 + $0x107] sm:$0x1] %vm550, 0.0
        %566 = vst.msk [vmem:[#allocation4 + $0x127] sm:$0x1] %vm550, 0.0
        %567 = vst.msk [vmem:[#allocation4 + $0x147] sm:$0x1] %vm550, 0.0
        %568 = vst.msk [vmem:[#allocation4 + $0x167] sm:$0x1] %vm550, 0.0
        %569 = vst.msk [vmem:[#allocation4 + $0x187] sm:$0x1] %vm550, 0.0
        %570 = vst.msk [vmem:[#allocation4 + $0x1a7] sm:$0x1] %vm550, 0.0
        %571 = vst.msk [vmem:[#allocation4 + $0x1c7] sm:$0x1] %vm550, 0.0
        %572 = vst.msk [vmem:[#allocation4 + $0x1e7] sm:$0x1] %vm550, 0.0
        %573 = vst.msk [vmem:[#allocation4 + $0x207] sm:$0x1] %vm550, 0.0
        %574 = vst.msk [vmem:[#allocation4 + $0x227] sm:$0x1] %vm550, 0.0
        %575 = vst.msk [vmem:[#allocation4 + $0x18] sm:$0x1] %vm550, 0.0
        %576 = vst.msk [vmem:[#allocation4 + $0x38] sm:$0x1] %vm550, 0.0
        %577 = vst.msk [vmem:[#allocation4 + $0x58] sm:$0x1] %vm550, 0.0
        %578 = vst.msk [vmem:[#allocation4 + $0x78] sm:$0x1] %vm550, 0.0
        %579 = vst.msk [vmem:[#allocation4 + $0x98] sm:$0x1] %vm550, 0.0
        %580 = vst.msk [vmem:[#allocation4 + $0xb8] sm:$0x1] %vm550, 0.0
        %581 = vst.msk [vmem:[#allocation4 + $0xd8] sm:$0x1] %vm550, 0.0
        %582 = vst.msk [vmem:[#allocation4 + $0xf8] sm:$0x1] %vm550, 0.0
        %583 = vst.msk [vmem:[#allocation4 + $0x118] sm:$0x1] %vm550, 0.0
        %584 = vst.msk [vmem:[#allocation4 + $0x138] sm:$0x1] %vm550, 0.0
        %585 = vst.msk [vmem:[#allocation4 + $0x158] sm:$0x1] %vm550, 0.0
        %586 = vst.msk [vmem:[#allocation4 + $0x178] sm:$0x1] %vm550, 0.0
        %587 = vst.msk [vmem:[#allocation4 + $0x198] sm:$0x1] %vm550, 0.0
        %588 = vst.msk [vmem:[#allocation4 + $0x1b8] sm:$0x1] %vm550, 0.0
        %589 = vst.msk [vmem:[#allocation4 + $0x1d8] sm:$0x1] %vm550, 0.0
        %590 = vst.msk [vmem:[#allocation4 + $0x1f8] sm:$0x1] %vm550, 0.0
        %591 = vst.msk [vmem:[#allocation4 + $0x218] sm:$0x1] %vm550, 0.0
        %592 = vst.msk [vmem:[#allocation4 + $0x238] sm:$0x1] %vm550, 0.0
        %593 = vst.msk [vmem:[#allocation5] sm:$0xff] %vm546, 0.0
        %594 = vst.msk [vmem:[#allocation5 + $0x8] sm:$0xff] %vm546, 0.0
        %595 = vst.msk [vmem:[#allocation5 + $0x10] sm:$0x1] %vm550, 0.0
        %s596 = scalar_lea.vmem [#allocation5], 216
        %597 = vst.msk [vmem:[%s596] sm:$0xff] %vm546, 0.0
        %598 = vst.msk [vmem:[%s596 + $0x8] sm:$0xff] %vm546, 0.0
        %599 = vst.msk [vmem:[%s596 + $0x10] sm:$0x1] %vm550, 0.0
        %600 = vst.msk [vmem:[#allocation5 + $0x7] sm:$0x1] %vm550, 0.0
        %601 = vst.msk [vmem:[#allocation5 + $0x1f] sm:$0x1] %vm550, 0.0
        %602 = vst.msk [vmem:[#allocation5 + $0x37] sm:$0x1] %vm550, 0.0
        %603 = vst.msk [vmem:[#allocation5 + $0x4f] sm:$0x1] %vm550, 0.0
        %604 = vst.msk [vmem:[#allocation5 + $0x67] sm:$0x1] %vm550, 0.0
        %605 = vst.msk [vmem:[#allocation5 + $0x7f] sm:$0x1] %vm550, 0.0
        %606 = vst.msk [vmem:[#allocation5 + $0x97] sm:$0x1] %vm550, 0.0
        %607 = vst.msk [vmem:[#allocation5 + $0xaf] sm:$0x1] %vm550, 0.0
        %608 = vst.msk [vmem:[#allocation5 + $0xc7] sm:$0x1] %vm550, 0.0
        %609 = vst.msk [vmem:[#allocation5 + $0xdf] sm:$0x1] %vm550, 0.0
        %610 = vst.msk [vmem:[#allocation5 + $0x10] sm:$0x1] %vm550, 0.0
        %611 = vst.msk [vmem:[#allocation5 + $0x28] sm:$0x1] %vm550, 0.0
        %612 = vst.msk [vmem:[#allocation5 + $0x40] sm:$0x1] %vm550, 0.0
        %613 = vst.msk [vmem:[#allocation5 + $0x58] sm:$0x1] %vm550, 0.0
        %614 = vst.msk [vmem:[#allocation5 + $0x70] sm:$0x1] %vm550, 0.0
        %615 = vst.msk [vmem:[#allocation5 + $0x88] sm:$0x1] %vm550, 0.0
        %616 = vst.msk [vmem:[#allocation5 + $0xa0] sm:$0x1] %vm550, 0.0
        %617 = vst.msk [vmem:[#allocation5 + $0xb8] sm:$0x1] %vm550, 0.0
        %618 = vst.msk [vmem:[#allocation5 + $0xd0] sm:$0x1] %vm550, 0.0
        %619 = vst.msk [vmem:[#allocation5 + $0xe8] sm:$0x1] %vm550, 0.0
        %vm620 = vcmask 261248
        %621 = vst.msk [vmem:[#allocation2] sm:$0xff] %vm620, 0.0
        %622 = vst.msk [vmem:[#allocation2 + $0x8] sm:$0xff] %vm620, 0.0
        %623 = vst.msk [vmem:[#allocation2 + $0x10] sm:$0xff] %vm620, 0.0
        %624 = vst.msk [vmem:[#allocation2 + $0x18] sm:$0xff] %vm620, 0.0
        %625 = vst.msk [vmem:[#allocation2 + $0x20] sm:$0xff] %vm620, 0.0
        %626 = vst.msk [vmem:[#allocation2 + $0x28] sm:$0xff] %vm620, 0.0
        %627 = vst.msk [vmem:[#allocation2 + $0x30] sm:$0xff] %vm620, 0.0
        %628 = vst.msk [vmem:[#allocation2 + $0x38] sm:$0xff] %vm620, 0.0
        %629 = vst.msk [vmem:[#allocation2 + $0x40] sm:$0xff] %vm620, 0.0
        %630 = vst.msk [vmem:[#allocation2 + $0x48] sm:$0xff] %vm620, 0.0
        %631 = vst.msk [vmem:[#allocation2 + $0x50] sm:$0xff] %vm620, 0.0
        %632 = vst.msk [vmem:[#allocation2 + $0x58] sm:$0xff] %vm620, 0.0
        %633 = vst.msk [vmem:[#allocation2 + $0x60] sm:$0xff] %vm620, 0.0
        %634 = vst.msk [vmem:[#allocation2 + $0x68] sm:$0xff] %vm620, 0.0
        %635 = vst.msk [vmem:[#allocation2 + $0x70] sm:$0xff] %vm620, 0.0
        %636 = vst.msk [vmem:[#allocation2 + $0x78] sm:$0xff] %vm620, 0.0
        %637 = vst.msk [vmem:[#allocation2 + $0x80] sm:$0xff] %vm620, 0.0
        %638 = vst.msk [vmem:[#allocation2 + $0x88] sm:$0xff] %vm620, 0.0
        %639 = vst.msk [vmem:[#allocation2 + $0x90] sm:$0xff] %vm620, 0.0
        %640 = vst.msk [vmem:[#allocation2 + $0x98] sm:$0xff] %vm620, 0.0
        %641 = vst.msk [vmem:[#allocation2 + $0xa0] sm:$0xff] %vm620, 0.0
        %642 = vst.msk [vmem:[#allocation2 + $0xa8] sm:$0xff] %vm620, 0.0
        %643 = vst.msk [vmem:[#allocation2 + $0xb0] sm:$0xff] %vm620, 0.0
        %644 = vst.msk [vmem:[#allocation2 + $0xb8] sm:$0xff] %vm620, 0.0
        %645 = vst.msk [vmem:[#allocation2 + $0xc0] sm:$0xff] %vm620, 0.0
        %646 = vst.msk [vmem:[#allocation2 + $0xc8] sm:$0xff] %vm620, 0.0
        %647 = vst.msk [vmem:[#allocation2 + $0xd0] sm:$0xff] %vm620, 0.0
        %648 = vst.msk [vmem:[#allocation2 + $0xd8] sm:$0xff] %vm620, 0.0
        %649 = vst.msk [vmem:[#allocation2 + $0xe0] sm:$0xff] %vm620, 0.0
        %650 = vst.msk [vmem:[#allocation2 + $0xe8] sm:$0xff] %vm620, 0.0
        %651 = vst.msk [vmem:[#allocation2 + $0xf0] sm:$0xff] %vm620, 0.0
        %652 = vst.msk [vmem:[#allocation2 + $0xf8] sm:$0xff] %vm620, 0.0
        %653 = vst.msk [vmem:[#allocation3] sm:$0xff] %vm620, 0.0
        %654 = vst.msk [vmem:[#allocation3 + $0x8] sm:$0xff] %vm620, 0.0
        %655 = vst.msk [vmem:[#allocation3 + $0x10] sm:$0xff] %vm620, 0.0
        %656 = vst.msk [vmem:[#allocation3 + $0x18] sm:$0xff] %vm620, 0.0
        %657 = vst.msk [vmem:[#allocation3 + $0x20] sm:$0xff] %vm620, 0.0
        %658 = vst.msk [vmem:[#allocation3 + $0x28] sm:$0xff] %vm620, 0.0
        %659 = vst.msk [vmem:[#allocation3 + $0x30] sm:$0xff] %vm620, 0.0
        %660 = vst.msk [vmem:[#allocation3 + $0x38] sm:$0xff] %vm620, 0.0
        %v661 = vld [vmem:[%s545] sm:$0xff]
        %v662 = vld [vmem:[%s545 + $0x8] sm:$0xff]
        %v663 = vld [vmem:[%s545 + $0x10] sm:$0xff]
        %v664 = vld [vmem:[%s545 + $0x18] sm:$0xff]
        %v665 = vld [vmem:[%s545 + $0x20] sm:$0xff]
        %v666 = vld [vmem:[%s545 + $0x28] sm:$0xff]
        %v667 = vld [vmem:[%s545 + $0x30] sm:$0xff]
        %v668 = vld [vmem:[%s545 + $0x38] sm:$0xff]
        %v669 = vld [vmem:[%s545 + $0x40] sm:$0xff]
        %v670 = vld [vmem:[%s545 + $0x48] sm:$0xff]
        %v671 = vld [vmem:[%s545 + $0x50] sm:$0xff]
        %v672 = vld [vmem:[%s545 + $0x58] sm:$0xff]
        %v673 = vld [vmem:[%s545 + $0x60] sm:$0xff]
        %v674 = vld [vmem:[%s545 + $0x68] sm:$0xff]
        %v675 = vld [vmem:[%s545 + $0x70] sm:$0xff]
        %v676 = vld [vmem:[%s545 + $0x78] sm:$0xff]
        %v677 = vld [vmem:[%s545 + $0x80] sm:$0xff]
        %v678 = vld [vmem:[%s545 + $0x88] sm:$0xff]
        %v679 = vld [vmem:[%s545 + $0x90] sm:$0xff]
        %v680 = vld [vmem:[%s545 + $0x98] sm:$0xff]
        %v681 = vld [vmem:[%s545 + $0xa0] sm:$0xff]
        %v682 = vld [vmem:[%s545 + $0xa8] sm:$0xff]
        %v683 = vld [vmem:[%s545 + $0xb0] sm:$0xff]
        %v684 = vld [vmem:[%s545 + $0xb8] sm:$0xff]
        %v685 = vld [vmem:[%s545 + $0xc0] sm:$0xff]
        %v686 = vld [vmem:[%s545 + $0xc8] sm:$0xff]
        %v687 = vld [vmem:[%s545 + $0xd0] sm:$0xff]
        %v688 = vld [vmem:[%s545 + $0xd8] sm:$0xff]
        %v689 = vld [vmem:[%s545 + $0xe0] sm:$0xff]
        %v690 = vld [vmem:[%s545 + $0xe8] sm:$0xff]
        %v691 = vld [vmem:[%s545 + $0xf0] sm:$0xff]
        %v692 = vld [vmem:[%s545 + $0xf8] sm:$0xff]
        %s693 = scalar_lea.vmem [#allocation4], 32
        %694 = vst.msk [vmem:[%s693 + $0x8] sm:$0xff] %vm546, %v661
        %695 = vst.msk [vmem:[%s693 + $0x10] sm:$0xff] %vm546, %v662
        %696 = vst.msk [vmem:[%s693 + $0x28] sm:$0xff] %vm546, %v663
        %697 = vst.msk [vmem:[%s693 + $0x30] sm:$0xff] %vm546, %v664
        %698 = vst.msk [vmem:[%s693 + $0x48] sm:$0xff] %vm546, %v665
        %699 = vst.msk [vmem:[%s693 + $0x50] sm:$0xff] %vm546, %v666
        %700 = vst.msk [vmem:[%s693 + $0x68] sm:$0xff] %vm546, %v667
        %701 = vst.msk [vmem:[%s693 + $0x70] sm:$0xff] %vm546, %v668
        %702 = vst.msk [vmem:[%s693 + $0x88] sm:$0xff] %vm546, %v669
        %703 = vst.msk [vmem:[%s693 + $0x90] sm:$0xff] %vm546, %v670
        %704 = vst.msk [vmem:[%s693 + $0xa8] sm:$0xff] %vm546, %v671
        %705 = vst.msk [vmem:[%s693 + $0xb0] sm:$0xff] %vm546, %v672
        %706 = vst.msk [vmem:[%s693 + $0xc8] sm:$0xff] %vm546, %v673
        %707 = vst.msk [vmem:[%s693 + $0xd0] sm:$0xff] %vm546, %v674
        %708 = vst.msk [vmem:[%s693 + $0xe8] sm:$0xff] %vm546, %v675
        %709 = vst.msk [vmem:[%s693 + $0xf0] sm:$0xff] %vm546, %v676
        %710 = vst.msk [vmem:[%s693 + $0x108] sm:$0xff] %vm546, %v677
        %711 = vst.msk [vmem:[%s693 + $0x110] sm:$0xff] %vm546, %v678
        %712 = vst.msk [vmem:[%s693 + $0x128] sm:$0xff] %vm546, %v679
        %713 = vst.msk [vmem:[%s693 + $0x130] sm:$0xff] %vm546, %v680
        %714 = vst.msk [vmem:[%s693 + $0x148] sm:$0xff] %vm546, %v681
        %715 = vst.msk [vmem:[%s693 + $0x150] sm:$0xff] %vm546, %v682
        %716 = vst.msk [vmem:[%s693 + $0x168] sm:$0xff] %vm546, %v683
        %717 = vst.msk [vmem:[%s693 + $0x170] sm:$0xff] %vm546, %v684
        %718 = vst.msk [vmem:[%s693 + $0x188] sm:$0xff] %vm546, %v685
        %719 = vst.msk [vmem:[%s693 + $0x190] sm:$0xff] %vm546, %v686
        %720 = vst.msk [vmem:[%s693 + $0x1a8] sm:$0xff] %vm546, %v687
        %721 = vst.msk [vmem:[%s693 + $0x1b0] sm:$0xff] %vm546, %v688
        %722 = vst.msk [vmem:[%s693 + $0x1c8] sm:$0xff] %vm546, %v689
        %723 = vst.msk [vmem:[%s693 + $0x1d0] sm:$0xff] %vm546, %v690
        %724 = vst.msk [vmem:[%s693 + $0x1e8] sm:$0xff] %vm546, %v691
        %725 = vst.msk [vmem:[%s693 + $0x1f0] sm:$0xff] %vm546, %v692
        %v726 = vld [vmem:[%s1] sm:$0xff]
        %v727 = vld [vmem:[%s1 + $0x8] sm:$0xff]
        %v728 = vld [vmem:[%s1 + $0x10] sm:$0xff]
        %v729 = vld [vmem:[%s1 + $0x18] sm:$0xff]
        %v730 = vld [vmem:[%s1 + $0x20] sm:$0xff]
        %v731 = vld [vmem:[%s1 + $0x28] sm:$0xff]
        %v732 = vld [vmem:[%s1 + $0x30] sm:$0xff]
        %v733 = vld [vmem:[%s1 + $0x38] sm:$0xff]
        %v734 = vld [vmem:[%s1 + $0x40] sm:$0xff]
        %v735 = vld [vmem:[%s1 + $0x48] sm:$0xff]
        %v736 = vld [vmem:[%s1 + $0x50] sm:$0xff]
        %v737 = vld [vmem:[%s1 + $0x58] sm:$0xff]
        %v738 = vld [vmem:[%s1 + $0x60] sm:$0xff]
        %v739 = vld [vmem:[%s1 + $0x68] sm:$0xff]
        %v740 = vld [vmem:[%s1 + $0x70] sm:$0xff]
        %v741 = vld [vmem:[%s1 + $0x78] sm:$0xff]
        %v742 = vld [vmem:[%s1 + $0x80] sm:$0xff]
        %v743 = vld [vmem:[%s1 + $0x88] sm:$0xff]
        %v744 = vld [vmem:[%s1 + $0x90] sm:$0xff]
        %v745 = vld [vmem:[%s1 + $0x98] sm:$0xff]
        %v746 = vld [vmem:[%s1 + $0xa0] sm:$0xff]
        %v747 = vld [vmem:[%s1 + $0xa8] sm:$0xff]
        %v748 = vld [vmem:[%s1 + $0xb0] sm:$0xff]
        %v749 = vld [vmem:[%s1 + $0xb8] sm:$0xff]
        %v750 = vld [vmem:[%s1 + $0xc0] sm:$0xff]
        %v751 = vld [vmem:[%s1 + $0xc8] sm:$0xff]
        %v752 = vld [vmem:[%s1 + $0xd0] sm:$0xff]
        %v753 = vld [vmem:[%s1 + $0xd8] sm:$0xff]
        %v754 = vld [vmem:[%s1 + $0xe0] sm:$0xff]
        %v755 = vld [vmem:[%s1 + $0xe8] sm:$0xff]
        %v756 = vld [vmem:[%s1 + $0xf0] sm:$0xff]
        %v757 = vld [vmem:[%s1 + $0xf8] sm:$0xff]
        %v758 = vld [vmem:[%s1 + $0x100] sm:$0xff]
        %v759 = vld [vmem:[%s1 + $0x108] sm:$0xff]
        %v760 = vld [vmem:[%s1 + $0x110] sm:$0xff]
        %v761 = vld [vmem:[%s1 + $0x118] sm:$0xff]
        %v762 = vld [vmem:[#allocation4] sm:$0xff]
        %v763 = vld [vmem:[#allocation4 + $0x8] sm:$0xff]
        %v764 = vld [vmem:[#allocation4 + $0x10] sm:$0xff]
        %v765 = vld [vmem:[#allocation4 + $0x18] sm:$0x1]
        %v766 = vld [vmem:[#allocation4 + $0x20] sm:$0xff]
        %v767 = vld [vmem:[#allocation4 + $0x28] sm:$0xff]
        %v768 = vld [vmem:[#allocation4 + $0x30] sm:$0xff]
        %v769 = vld [vmem:[#allocation4 + $0x38] sm:$0x1]
        %v770 = vld [vmem:[#allocation4 + $0x40] sm:$0xff]
        %v771 = vld [vmem:[#allocation4 + $0x48] sm:$0xff]
        %v772 = vld [vmem:[#allocation4 + $0x50] sm:$0xff]
        %v773 = vld [vmem:[#allocation4 + $0x58] sm:$0x1]
        %v774 = vld [vmem:[#allocation4 + $0x60] sm:$0xff]
        %v775 = vld [vmem:[#allocation4 + $0x68] sm:$0xff]
        %v776 = vld [vmem:[#allocation4 + $0x70] sm:$0xff]
        %v777 = vld [vmem:[#allocation4 + $0x78] sm:$0x1]
        %v778 = vld [vmem:[#allocation4 + $0x80] sm:$0xff]
        %v779 = vld [vmem:[#allocation4 + $0x88] sm:$0xff]
        %v780 = vld [vmem:[#allocation4 + $0x90] sm:$0xff]
        %v781 = vld [vmem:[#allocation4 + $0x98] sm:$0x1]
        %v782 = vld [vmem:[#allocation4 + $0xa0] sm:$0xff]
        %v783 = vld [vmem:[#allocation4 + $0xa8] sm:$0xff]
        %v784 = vld [vmem:[#allocation4 + $0xb0] sm:$0xff]
        %v785 = vld [vmem:[#allocation4 + $0xb8] sm:$0x1]
        %v786 = vld [vmem:[#allocation4 + $0xc0] sm:$0xff]
        %v787 = vld [vmem:[#allocation4 + $0xc8] sm:$0xff]
        %v788 = vld [vmem:[#allocation4 + $0xd0] sm:$0xff]
        %v789 = vld [vmem:[#allocation4 + $0xd8] sm:$0x1]
        %v790 = vld [vmem:[#allocation4 + $0xe0] sm:$0xff]
        %v791 = vld [vmem:[#allocation4 + $0xe8] sm:$0xff]
        %v792 = vld [vmem:[#allocation4 + $0xf0] sm:$0xff]
        %v793 = vld [vmem:[#allocation4 + $0xf8] sm:$0x1]
        %v794 = vld [vmem:[#allocation4 + $0x100] sm:$0xff]
        %v795 = vld [vmem:[#allocation4 + $0x108] sm:$0xff]
        %v796 = vld [vmem:[#allocation4 + $0x110] sm:$0xff]
        %v797 = vld [vmem:[#allocation4 + $0x118] sm:$0x1]
        %v798 = vld [vmem:[#allocation4 + $0x120] sm:$0xff]
        %v799 = vld [vmem:[#allocation4 + $0x128] sm:$0xff]
        %v800 = vld [vmem:[#allocation4 + $0x130] sm:$0xff]
        %v801 = vld [vmem:[#allocation4 + $0x138] sm:$0x1]
        %v802 = vld [vmem:[#allocation4 + $0x140] sm:$0xff]
        %v803 = vld [vmem:[#allocation4 + $0x148] sm:$0xff]
        %v804 = vld [vmem:[#allocation4 + $0x150] sm:$0xff]
        %v805 = vld [vmem:[#allocation4 + $0x158] sm:$0x1]
        %v806 = vld [vmem:[#allocation4 + $0x160] sm:$0xff]
        %v807 = vld [vmem:[#allocation4 + $0x168] sm:$0xff]
        %v808 = vld [vmem:[#allocation4 + $0x170] sm:$0xff]
        %v809 = vld [vmem:[#allocation4 + $0x178] sm:$0x1]
        %v810 = vld [vmem:[#allocation4 + $0x180] sm:$0xff]
        %v811 = vld [vmem:[#allocation4 + $0x188] sm:$0xff]
        %v812 = vld [vmem:[#allocation4 + $0x190] sm:$0xff]
        %v813 = vld [vmem:[#allocation4 + $0x198] sm:$0x1]
        %v814 = vld [vmem:[#allocation4 + $0x1a0] sm:$0xff]
        %v815 = vld [vmem:[#allocation4 + $0x1a8] sm:$0xff]
        %v816 = vld [vmem:[#allocation4 + $0x1b0] sm:$0xff]
        %v817 = vld [vmem:[#allocation4 + $0x1b8] sm:$0x1]
        %v818 = vld [vmem:[#allocation4 + $0x1c0] sm:$0xff]
        %v819 = vld [vmem:[#allocation4 + $0x1c8] sm:$0xff]
        %v820 = vld [vmem:[#allocation4 + $0x1d0] sm:$0xff]
        %v821 = vld [vmem:[#allocation4 + $0x1d8] sm:$0x1]
        %v822 = vld [vmem:[#allocation4 + $0x1e0] sm:$0xff]
        %v823 = vld [vmem:[#allocation4 + $0x1e8] sm:$0xff]
        %v824 = vld [vmem:[#allocation4 + $0x1f0] sm:$0xff]
        %v825 = vld [vmem:[#allocation4 + $0x1f8] sm:$0x1]
        %v826 = vld [vmem:[#allocation4 + $0x200] sm:$0xff]
        %v827 = vld [vmem:[#allocation4 + $0x208] sm:$0xff]
        %v828 = vld [vmem:[#allocation4 + $0x210] sm:$0xff]
        %v829 = vld [vmem:[#allocation4 + $0x218] sm:$0x1]
        %v830 = vld [vmem:[#allocation4 + $0x220] sm:$0xff]
        %v831 = vld [vmem:[#allocation4 + $0x228] sm:$0xff]
        %v832 = vld [vmem:[#allocation4 + $0x230] sm:$0xff]
        %v833 = vld [vmem:[#allocation4 + $0x238] sm:$0x1]
        %vm870 = vcmask 1046528
        %v871 = vrot.slane %v763, 1
        %v872 = vrot.slane %v764, 1
        %v873 = vsel %vm870, %v871, %v872
        %v874 = vrot.slane %v767, 1
        %v875 = vrot.slane %v768, 1
        %v876 = vsel %vm870, %v874, %v875
        %v877 = vrot.slane %v771, 1
        %v878 = vrot.slane %v772, 1
        %v879 = vsel %vm870, %v877, %v878
        %v880 = vrot.slane %v775, 1
        %v881 = vrot.slane %v776, 1
        %v882 = vsel %vm870, %v880, %v881
        %v883 = vrot.slane %v779, 1
        %v884 = vrot.slane %v780, 1
        %v885 = vsel %vm870, %v883, %v884
        %v886 = vrot.slane %v783, 1
        %v887 = vrot.slane %v784, 1
        %v888 = vsel %vm870, %v886, %v887
        %v889 = vrot.slane %v787, 1
        %v890 = vrot.slane %v788, 1
        %v891 = vsel %vm870, %v889, %v890
        %v892 = vrot.slane %v791, 1
        %v893 = vrot.slane %v792, 1
        %v894 = vsel %vm870, %v892, %v893
        %v895 = vrot.slane %v795, 1
        %v896 = vrot.slane %v796, 1
        %v897 = vsel %vm870, %v895, %v896
        %v898 = vrot.slane %v799, 1
        %v899 = vrot.slane %v800, 1
        %v900 = vsel %vm870, %v898, %v899
        %v901 = vrot.slane %v803, 1
        %v902 = vrot.slane %v804, 1
        %v903 = vsel %vm870, %v901, %v902
        %v904 = vrot.slane %v807, 1
        %v905 = vrot.slane %v808, 1
        %v906 = vsel %vm870, %v904, %v905
        %v907 = vrot.slane %v811, 1
        %v908 = vrot.slane %v812, 1
        %v909 = vsel %vm870, %v907, %v908
        %v910 = vrot.slane %v815, 1
        %v911 = vrot.slane %v816, 1
        %v912 = vsel %vm870, %v910, %v911
        %v913 = vrot.slane %v819, 1
        %v914 = vrot.slane %v820, 1
        %v915 = vsel %vm870, %v913, %v914
        %v916 = vrot.slane %v823, 1
        %v917 = vrot.slane %v824, 1
        %v918 = vsel %vm870, %v916, %v917
        %v919 = vrot.slane %v827, 1
        %v920 = vrot.slane %v828, 1
        %v921 = vsel %vm870, %v919, %v920
        %v922 = vrot.slane %v831, 1
        %v923 = vrot.slane %v832, 1
        %v924 = vsel %vm870, %v922, %v923
        %925 = vrot.lane.b32.xlu0 %v871, 32
        %v926 = vpop.permute.xlu0 %925
        %927 = vrot.lane.b32.xlu0 %v873, 32
        %v928 = vpop.permute.xlu0 %927
        %929 = vrot.lane.b32.xlu0 %v872, 32
        %v930 = vpop.permute.xlu0 %929
        %931 = vrot.lane.b32.xlu0 %v874, 32
        %v932 = vpop.permute.xlu0 %931
        %933 = vrot.lane.b32.xlu0 %v876, 32
        %v934 = vpop.permute.xlu0 %933
        %935 = vrot.lane.b32.xlu0 %v875, 32
        %v936 = vpop.permute.xlu0 %935
        %937 = vrot.lane.b32.xlu0 %v877, 32
        %v938 = vpop.permute.xlu0 %937
        %939 = vrot.lane.b32.xlu0 %v879, 32
        %v940 = vpop.permute.xlu0 %939
        %941 = vrot.lane.b32.xlu0 %v878, 32
        %v942 = vpop.permute.xlu0 %941
        %943 = vrot.lane.b32.xlu0 %v880, 32
        %v944 = vpop.permute.xlu0 %943
        %945 = vrot.lane.b32.xlu0 %v882, 32
        %v946 = vpop.permute.xlu0 %945
        %947 = vrot.lane.b32.xlu0 %v881, 32
        %v948 = vpop.permute.xlu0 %947
        %949 = vrot.lane.b32.xlu0 %v883, 32
        %v950 = vpop.permute.xlu0 %949
        %951 = vrot.lane.b32.xlu0 %v885, 32
        %v952 = vpop.permute.xlu0 %951
        %953 = vrot.lane.b32.xlu0 %v884, 32
        %v954 = vpop.permute.xlu0 %953
        %955 = vrot.lane.b32.xlu0 %v886, 32
        %v956 = vpop.permute.xlu0 %955
        %957 = vrot.lane.b32.xlu0 %v888, 32
        %v958 = vpop.permute.xlu0 %957
        %959 = vrot.lane.b32.xlu0 %v887, 32
        %v960 = vpop.permute.xlu0 %959
        %961 = vrot.lane.b32.xlu0 %v889, 32
        %v962 = vpop.permute.xlu0 %961
        %963 = vrot.lane.b32.xlu0 %v891, 32
        %v964 = vpop.permute.xlu0 %963
        %965 = vrot.lane.b32.xlu0 %v890, 32
        %v966 = vpop.permute.xlu0 %965
        %967 = vrot.lane.b32.xlu0 %v892, 32
        %v968 = vpop.permute.xlu0 %967
        %969 = vrot.lane.b32.xlu0 %v894, 32
        %v970 = vpop.permute.xlu0 %969
        %971 = vrot.lane.b32.xlu0 %v893, 32
        %v972 = vpop.permute.xlu0 %971
        %973 = vrot.lane.b32.xlu0 %v895, 32
        %v974 = vpop.permute.xlu0 %973
        %975 = vrot.lane.b32.xlu0 %v897, 32
        %v976 = vpop.permute.xlu0 %975
        %977 = vrot.lane.b32.xlu0 %v896, 32
        %v978 = vpop.permute.xlu0 %977
        %979 = vrot.lane.b32.xlu0 %v898, 32
        %v980 = vpop.permute.xlu0 %979
        %981 = vrot.lane.b32.xlu0 %v900, 32
        %v982 = vpop.permute.xlu0 %981
        %983 = vrot.lane.b32.xlu0 %v899, 32
        %v984 = vpop.permute.xlu0 %983
        %985 = vrot.lane.b32.xlu0 %v901, 32
        %v986 = vpop.permute.xlu0 %985
        %987 = vrot.lane.b32.xlu0 %v903, 32
        %v988 = vpop.permute.xlu0 %987
        %989 = vrot.lane.b32.xlu0 %v902, 32
        %v990 = vpop.permute.xlu0 %989
        %991 = vrot.lane.b32.xlu0 %v904, 32
        %v992 = vpop.permute.xlu0 %991
        %993 = vrot.lane.b32.xlu0 %v906, 32
        %v994 = vpop.permute.xlu0 %993
        %995 = vrot.lane.b32.xlu0 %v905, 32
        %v996 = vpop.permute.xlu0 %995
        %997 = vrot.lane.b32.xlu0 %v907, 32
        %v998 = vpop.permute.xlu0 %997
        %999 = vrot.lane.b32.xlu0 %v909, 32
        %v1000 = vpop.permute.xlu0 %999
        %1001 = vrot.lane.b32.xlu0 %v908, 32
        %v1002 = vpop.permute.xlu0 %1001
        %1003 = vrot.lane.b32.xlu0 %v910, 32
        %v1004 = vpop.permute.xlu0 %1003
        %1005 = vrot.lane.b32.xlu0 %v912, 32
        %v1006 = vpop.permute.xlu0 %1005
        %1007 = vrot.lane.b32.xlu0 %v911, 32
        %v1008 = vpop.permute.xlu0 %1007
        %1009 = vrot.lane.b32.xlu0 %v913, 32
        %v1010 = vpop.permute.xlu0 %1009
        %1011 = vrot.lane.b32.xlu0 %v915, 32
        %v1012 = vpop.permute.xlu0 %1011
        %1013 = vrot.lane.b32.xlu0 %v914, 32
        %v1014 = vpop.permute.xlu0 %1013
        %1015 = vrot.lane.b32.xlu0 %v916, 32
        %v1016 = vpop.permute.xlu0 %1015
        %1017 = vrot.lane.b32.xlu0 %v918, 32
        %v1018 = vpop.permute.xlu0 %1017
        %1019 = vrot.lane.b32.xlu0 %v917, 32
        %v1020 = vpop.permute.xlu0 %1019
        %1021 = vrot.lane.b32.xlu0 %v919, 32
        %v1022 = vpop.permute.xlu0 %1021
        %1023 = vrot.lane.b32.xlu0 %v921, 32
        %v1024 = vpop.permute.xlu0 %1023
        %1025 = vrot.lane.b32.xlu0 %v920, 32
        %v1026 = vpop.permute.xlu0 %1025
        %1027 = vrot.lane.b32.xlu0 %v922, 32
        %v1028 = vpop.permute.xlu0 %1027
        %1029 = vrot.lane.b32.xlu0 %v924, 32
        %v1030 = vpop.permute.xlu0 %1029
        %1031 = vrot.lane.b32.xlu0 %v923, 32
        %v1032 = vpop.permute.xlu0 %1031
        %vm1105 = vcmask 1045504
        %v1106 = vrot.slane %v763, 2
        %v1107 = vrot.slane %v764, 2
        %v1108 = vsel %vm1105, %v1106, %v1107
        %v1109 = vrot.slane %v765, 2
        %v1110 = vsel %vm1105, %v1107, %v1109
        %v1111 = vrot.slane %v767, 2
        %v1112 = vrot.slane %v768, 2
        %v1113 = vsel %vm1105, %v1111, %v1112
        %v1114 = vrot.slane %v769, 2
        %v1115 = vsel %vm1105, %v1112, %v1114
        %v1116 = vrot.slane %v771, 2
        %v1117 = vrot.slane %v772, 2
        %v1118 = vsel %vm1105, %v1116, %v1117
        %v1119 = vrot.slane %v773, 2
        %v1120 = vsel %vm1105, %v1117, %v1119
        %v1121 = vrot.slane %v775, 2
        %v1122 = vrot.slane %v776, 2
        %v1123 = vsel %vm1105, %v1121, %v1122
        %v1124 = vrot.slane %v777, 2
        %v1125 = vsel %vm1105, %v1122, %v1124
        %v1126 = vrot.slane %v779, 2
        %v1127 = vrot.slane %v780, 2
        %v1128 = vsel %vm1105, %v1126, %v1127
        %v1129 = vrot.slane %v781, 2
        %v1130 = vsel %vm1105, %v1127, %v1129
        %v1131 = vrot.slane %v783, 2
        %v1132 = vrot.slane %v784, 2
        %v1133 = vsel %vm1105, %v1131, %v1132
        %v1134 = vrot.slane %v785, 2
        %v1135 = vsel %vm1105, %v1132, %v1134
        %v1136 = vrot.slane %v787, 2
        %v1137 = vrot.slane %v788, 2
        %v1138 = vsel %vm1105, %v1136, %v1137
        %v1139 = vrot.slane %v789, 2
        %v1140 = vsel %vm1105, %v1137, %v1139
        %v1141 = vrot.slane %v791, 2
        %v1142 = vrot.slane %v792, 2
        %v1143 = vsel %vm1105, %v1141, %v1142
        %v1144 = vrot.slane %v793, 2
        %v1145 = vsel %vm1105, %v1142, %v1144
        %v1146 = vrot.slane %v795, 2
        %v1147 = vrot.slane %v796, 2
        %v1148 = vsel %vm1105, %v1146, %v1147
        %v1149 = vrot.slane %v797, 2
        %v1150 = vsel %vm1105, %v1147, %v1149
        %v1151 = vrot.slane %v799, 2
        %v1152 = vrot.slane %v800, 2
        %v1153 = vsel %vm1105, %v1151, %v1152
        %v1154 = vrot.slane %v801, 2
        %v1155 = vsel %vm1105, %v1152, %v1154
        %v1156 = vrot.slane %v803, 2
        %v1157 = vrot.slane %v804, 2
        %v1158 = vsel %vm1105, %v1156, %v1157
        %v1159 = vrot.slane %v805, 2
        %v1160 = vsel %vm1105, %v1157, %v1159
        %v1161 = vrot.slane %v807, 2
        %v1162 = vrot.slane %v808, 2
        %v1163 = vsel %vm1105, %v1161, %v1162
        %v1164 = vrot.slane %v809, 2
        %v1165 = vsel %vm1105, %v1162, %v1164
        %v1166 = vrot.slane %v811, 2
        %v1167 = vrot.slane %v812, 2
        %v1168 = vsel %vm1105, %v1166, %v1167
        %v1169 = vrot.slane %v813, 2
        %v1170 = vsel %vm1105, %v1167, %v1169
        %v1171 = vrot.slane %v815, 2
        %v1172 = vrot.slane %v816, 2
        %v1173 = vsel %vm1105, %v1171, %v1172
        %v1174 = vrot.slane %v817, 2
        %v1175 = vsel %vm1105, %v1172, %v1174
        %v1176 = vrot.slane %v819, 2
        %v1177 = vrot.slane %v820, 2
        %v1178 = vsel %vm1105, %v1176, %v1177
        %v1179 = vrot.slane %v821, 2
        %v1180 = vsel %vm1105, %v1177, %v1179
        %v1181 = vrot.slane %v823, 2
        %v1182 = vrot.slane %v824, 2
        %v1183 = vsel %vm1105, %v1181, %v1182
        %v1184 = vrot.slane %v825, 2
        %v1185 = vsel %vm1105, %v1182, %v1184
        %v1186 = vrot.slane %v827, 2
        %v1187 = vrot.slane %v828, 2
        %v1188 = vsel %vm1105, %v1186, %v1187
        %v1189 = vrot.slane %v829, 2
        %v1190 = vsel %vm1105, %v1187, %v1189
        %v1191 = vrot.slane %v831, 2
        %v1192 = vrot.slane %v832, 2
        %v1193 = vsel %vm1105, %v1191, %v1192
        %v1194 = vrot.slane %v833, 2
        %v1195 = vsel %vm1105, %v1192, %v1194
        %1196 = vrot.lane.b32.xlu0 %v1106, 64
        %v1197 = vpop.permute.xlu0 %1196
        %1198 = vrot.lane.b32.xlu0 %v1108, 64
        %v1199 = vpop.permute.xlu0 %1198
        %1200 = vrot.lane.b32.xlu0 %v1110, 64
        %v1201 = vpop.permute.xlu0 %1200
        %1202 = vrot.lane.b32.xlu0 %v1111, 64
        %v1203 = vpop.permute.xlu0 %1202
        %1204 = vrot.lane.b32.xlu0 %v1113, 64
        %v1205 = vpop.permute.xlu0 %1204
        %1206 = vrot.lane.b32.xlu0 %v1115, 64
        %v1207 = vpop.permute.xlu0 %1206
        %1208 = vrot.lane.b32.xlu0 %v1116, 64
        %v1209 = vpop.permute.xlu0 %1208
        %1210 = vrot.lane.b32.xlu0 %v1118, 64
        %v1211 = vpop.permute.xlu0 %1210
        %1212 = vrot.lane.b32.xlu0 %v1120, 64
        %v1213 = vpop.permute.xlu0 %1212
        %1214 = vrot.lane.b32.xlu0 %v1121, 64
        %v1215 = vpop.permute.xlu0 %1214
        %1216 = vrot.lane.b32.xlu0 %v1123, 64
        %v1217 = vpop.permute.xlu0 %1216
        %1218 = vrot.lane.b32.xlu0 %v1125, 64
        %v1219 = vpop.permute.xlu0 %1218
        %1220 = vrot.lane.b32.xlu0 %v1126, 64
        %v1221 = vpop.permute.xlu0 %1220
        %1222 = vrot.lane.b32.xlu0 %v1128, 64
        %v1223 = vpop.permute.xlu0 %1222
        %1224 = vrot.lane.b32.xlu0 %v1130, 64
        %v1225 = vpop.permute.xlu0 %1224
        %1226 = vrot.lane.b32.xlu0 %v1131, 64
        %v1227 = vpop.permute.xlu0 %1226
        %1228 = vrot.lane.b32.xlu0 %v1133, 64
        %v1229 = vpop.permute.xlu0 %1228
        %1230 = vrot.lane.b32.xlu0 %v1135, 64
        %v1231 = vpop.permute.xlu0 %1230
        %1232 = vrot.lane.b32.xlu0 %v1136, 64
        %v1233 = vpop.permute.xlu0 %1232
        %1234 = vrot.lane.b32.xlu0 %v1138, 64
        %v1235 = vpop.permute.xlu0 %1234
        %1236 = vrot.lane.b32.xlu0 %v1140, 64
        %v1237 = vpop.permute.xlu0 %1236
        %1238 = vrot.lane.b32.xlu0 %v1141, 64
        %v1239 = vpop.permute.xlu0 %1238
        %1240 = vrot.lane.b32.xlu0 %v1143, 64
        %v1241 = vpop.permute.xlu0 %1240
        %1242 = vrot.lane.b32.xlu0 %v1145, 64
        %v1243 = vpop.permute.xlu0 %1242
        %1244 = vrot.lane.b32.xlu0 %v1146, 64
        %v1245 = vpop.permute.xlu0 %1244
        %1246 = vrot.lane.b32.xlu0 %v1148, 64
        %v1247 = vpop.permute.xlu0 %1246
        %1248 = vrot.lane.b32.xlu0 %v1150, 64
        %v1249 = vpop.permute.xlu0 %1248
        %1250 = vrot.lane.b32.xlu0 %v1151, 64
        %v1251 = vpop.permute.xlu0 %1250
        %1252 = vrot.lane.b32.xlu0 %v1153, 64
        %v1253 = vpop.permute.xlu0 %1252
        %1254 = vrot.lane.b32.xlu0 %v1155, 64
        %v1255 = vpop.permute.xlu0 %1254
        %1256 = vrot.lane.b32.xlu0 %v1156, 64
        %v1257 = vpop.permute.xlu0 %1256
        %1258 = vrot.lane.b32.xlu0 %v1158, 64
        %v1259 = vpop.permute.xlu0 %1258
        %1260 = vrot.lane.b32.xlu0 %v1160, 64
        %v1261 = vpop.permute.xlu0 %1260
        %1262 = vrot.lane.b32.xlu0 %v1161, 64
        %v1263 = vpop.permute.xlu0 %1262
        %1264 = vrot.lane.b32.xlu0 %v1163, 64
        %v1265 = vpop.permute.xlu0 %1264
        %1266 = vrot.lane.b32.xlu0 %v1165, 64
        %v1267 = vpop.permute.xlu0 %1266
        %1268 = vrot.lane.b32.xlu0 %v1166, 64
        %v1269 = vpop.permute.xlu0 %1268
        %1270 = vrot.lane.b32.xlu0 %v1168, 64
        %v1271 = vpop.permute.xlu0 %1270
        %1272 = vrot.lane.b32.xlu0 %v1170, 64
        %v1273 = vpop.permute.xlu0 %1272
        %1274 = vrot.lane.b32.xlu0 %v1171, 64
        %v1275 = vpop.permute.xlu0 %1274
        %1276 = vrot.lane.b32.xlu0 %v1173, 64
        %v1277 = vpop.permute.xlu0 %1276
        %1278 = vrot.lane.b32.xlu0 %v1175, 64
        %v1279 = vpop.permute.xlu0 %1278
        %1280 = vrot.lane.b32.xlu0 %v1176, 64
        %v1281 = vpop.permute.xlu0 %1280
        %1282 = vrot.lane.b32.xlu0 %v1178, 64
        %v1283 = vpop.permute.xlu0 %1282
        %1284 = vrot.lane.b32.xlu0 %v1180, 64
        %v1285 = vpop.permute.xlu0 %1284
        %1286 = vrot.lane.b32.xlu0 %v1181, 64
        %v1287 = vpop.permute.xlu0 %1286
        %1288 = vrot.lane.b32.xlu0 %v1183, 64
        %v1289 = vpop.permute.xlu0 %1288
        %1290 = vrot.lane.b32.xlu0 %v1185, 64
        %v1291 = vpop.permute.xlu0 %1290
        %1292 = vrot.lane.b32.xlu0 %v1186, 64
        %v1293 = vpop.permute.xlu0 %1292
        %1294 = vrot.lane.b32.xlu0 %v1188, 64
        %v1295 = vpop.permute.xlu0 %1294
        %1296 = vrot.lane.b32.xlu0 %v1190, 64
        %v1297 = vpop.permute.xlu0 %1296
        %1298 = vrot.lane.b32.xlu0 %v1191, 64
        %v1299 = vpop.permute.xlu0 %1298
        %1300 = vrot.lane.b32.xlu0 %v1193, 64
        %v1301 = vpop.permute.xlu0 %1300
        %1302 = vrot.lane.b32.xlu0 %v1195, 64
        %v1303 = vpop.permute.xlu0 %1302
        %v1358 = vsel %vm546, %v762, %v926
        %v1359 = vsel %vm546, %v763, %v928
        %v1360 = vsel %vm546, %v764, %v930
        %v1361 = vsel %vm546, %v766, %v932
        %v1362 = vsel %vm546, %v767, %v934
        %v1363 = vsel %vm546, %v768, %v936
        %v1364 = vsel %vm546, %v770, %v938
        %v1365 = vsel %vm546, %v771, %v940
        %v1366 = vsel %vm546, %v772, %v942
        %v1367 = vsel %vm546, %v774, %v944
        %v1368 = vsel %vm546, %v775, %v946
        %v1369 = vsel %vm546, %v776, %v948
        %v1370 = vsel %vm546, %v778, %v950
        %v1371 = vsel %vm546, %v779, %v952
        %v1372 = vsel %vm546, %v780, %v954
        %v1373 = vsel %vm546, %v782, %v956
        %v1374 = vsel %vm546, %v783, %v958
        %v1375 = vsel %vm546, %v784, %v960
        %v1376 = vsel %vm546, %v786, %v962
        %v1377 = vsel %vm546, %v787, %v964
        %v1378 = vsel %vm546, %v788, %v966
        %v1379 = vsel %vm546, %v790, %v968
        %v1380 = vsel %vm546, %v791, %v970
        %v1381 = vsel %vm546, %v792, %v972
        %v1382 = vsel %vm546, %v794, %v974
        %v1383 = vsel %vm546, %v795, %v976
        %v1384 = vsel %vm546, %v796, %v978
        %v1385 = vsel %vm546, %v798, %v980
        %v1386 = vsel %vm546, %v799, %v982
        %v1387 = vsel %vm546, %v800, %v984
        %v1388 = vsel %vm546, %v802, %v986
        %v1389 = vsel %vm546, %v803, %v988
        %v1390 = vsel %vm546, %v804, %v990
        %v1391 = vsel %vm546, %v806, %v992
        %v1392 = vsel %vm546, %v807, %v994
        %v1393 = vsel %vm546, %v808, %v996
        %v1394 = vsel %vm546, %v810, %v998
        %v1395 = vsel %vm546, %v811, %v1000
        %v1396 = vsel %vm546, %v812, %v1002
        %v1397 = vsel %vm546, %v814, %v1004
        %v1398 = vsel %vm546, %v815, %v1006
        %v1399 = vsel %vm546, %v816, %v1008
        %v1400 = vsel %vm546, %v818, %v1010
        %v1401 = vsel %vm546, %v819, %v1012
        %v1402 = vsel %vm546, %v820, %v1014
        %v1403 = vsel %vm546, %v822, %v1016
        %v1404 = vsel %vm546, %v823, %v1018
        %v1405 = vsel %vm546, %v824, %v1020
        %v1406 = vsel %vm546, %v826, %v1022
        %v1407 = vsel %vm546, %v827, %v1024
        %v1408 = vsel %vm546, %v828, %v1026
        %v1409 = vsel %vm546, %v830, %v1028
        %v1410 = vsel %vm546, %v831, %v1030
        %v1411 = vsel %vm546, %v832, %v1032
        %vm1412 = vcmask 523264
        %v1413 = vsel %vm1412, %v1358, %v1197
        %v1414 = vsel %vm1412, %v1359, %v1199
        %v1415 = vsel %vm1412, %v1360, %v1201
        %v1416 = vsel %vm1412, %v1361, %v1203
        %v1417 = vsel %vm1412, %v1362, %v1205
        %v1418 = vsel %vm1412, %v1363, %v1207
        %v1419 = vsel %vm1412, %v1364, %v1209
        %v1420 = vsel %vm1412, %v1365, %v1211
        %v1421 = vsel %vm1412, %v1366, %v1213
        %v1422 = vsel %vm1412, %v1367, %v1215
        %v1423 = vsel %vm1412, %v1368, %v1217
        %v1424 = vsel %vm1412, %v1369, %v1219
        %v1425 = vsel %vm1412, %v1370, %v1221
        %v1426 = vsel %vm1412, %v1371, %v1223
        %v1427 = vsel %vm1412, %v1372, %v1225
        %v1428 = vsel %vm1412, %v1373, %v1227
        %v1429 = vsel %vm1412, %v1374, %v1229
        %v1430 = vsel %vm1412, %v1375, %v1231
        %v1431 = vsel %vm1412, %v1376, %v1233
        %v1432 = vsel %vm1412, %v1377, %v1235
        %v1433 = vsel %vm1412, %v1378, %v1237
        %v1434 = vsel %vm1412, %v1379, %v1239
        %v1435 = vsel %vm1412, %v1380, %v1241
        %v1436 = vsel %vm1412, %v1381, %v1243
        %v1437 = vsel %vm1412, %v1382, %v1245
        %v1438 = vsel %vm1412, %v1383, %v1247
        %v1439 = vsel %vm1412, %v1384, %v1249
        %v1440 = vsel %vm1412, %v1385, %v1251
        %v1441 = vsel %vm1412, %v1386, %v1253
        %v1442 = vsel %vm1412, %v1387, %v1255
        %v1443 = vsel %vm1412, %v1388, %v1257
        %v1444 = vsel %vm1412, %v1389, %v1259
        %v1445 = vsel %vm1412, %v1390, %v1261
        %v1446 = vsel %vm1412, %v1391, %v1263
        %v1447 = vsel %vm1412, %v1392, %v1265
        %v1448 = vsel %vm1412, %v1393, %v1267
        %v1449 = vsel %vm1412, %v1394, %v1269
        %v1450 = vsel %vm1412, %v1395, %v1271
        %v1451 = vsel %vm1412, %v1396, %v1273
        %v1452 = vsel %vm1412, %v1397, %v1275
        %v1453 = vsel %vm1412, %v1398, %v1277
        %v1454 = vsel %vm1412, %v1399, %v1279
        %v1455 = vsel %vm1412, %v1400, %v1281
        %v1456 = vsel %vm1412, %v1401, %v1283
        %v1457 = vsel %vm1412, %v1402, %v1285
        %v1458 = vsel %vm1412, %v1403, %v1287
        %v1459 = vsel %vm1412, %v1404, %v1289
        %v1460 = vsel %vm1412, %v1405, %v1291
        %v1461 = vsel %vm1412, %v1406, %v1293
        %v1462 = vsel %vm1412, %v1407, %v1295
        %v1463 = vsel %vm1412, %v1408, %v1297
        %v1464 = vsel %vm1412, %v1409, %v1299
        %v1465 = vsel %vm1412, %v1410, %v1301
        %v1466 = vsel %vm1412, %v1411, %v1303
        %vm1515 = vcmask 1040384
        %v1516 = vrot.slane %v1413, 7
        %v1517 = vrot.slane %v1414, 7
        %v1518 = vsel %vm1515, %v1516, %v1517
        %v1519 = vrot.slane %v1415, 7
        %v1520 = vsel %vm1515, %v1517, %v1519
        %v1521 = vrot.slane %v1416, 7
        %v1522 = vrot.slane %v1417, 7
        %v1523 = vsel %vm1515, %v1521, %v1522
        %v1524 = vrot.slane %v1418, 7
        %v1525 = vsel %vm1515, %v1522, %v1524
        %v1526 = vrot.slane %v1419, 7
        %v1527 = vrot.slane %v1420, 7
        %v1528 = vsel %vm1515, %v1526, %v1527
        %v1529 = vrot.slane %v1421, 7
        %v1530 = vsel %vm1515, %v1527, %v1529
        %v1531 = vrot.slane %v1422, 7
        %v1532 = vrot.slane %v1423, 7
        %v1533 = vsel %vm1515, %v1531, %v1532
        %v1534 = vrot.slane %v1424, 7
        %v1535 = vsel %vm1515, %v1532, %v1534
        %v1536 = vrot.slane %v1425, 7
        %v1537 = vrot.slane %v1426, 7
        %v1538 = vsel %vm1515, %v1536, %v1537
        %v1539 = vrot.slane %v1427, 7
        %v1540 = vsel %vm1515, %v1537, %v1539
        %v1541 = vrot.slane %v1428, 7
        %v1542 = vrot.slane %v1429, 7
        %v1543 = vsel %vm1515, %v1541, %v1542
        %v1544 = vrot.slane %v1430, 7
        %v1545 = vsel %vm1515, %v1542, %v1544
        %v1546 = vrot.slane %v1431, 7
        %v1547 = vrot.slane %v1432, 7
        %v1548 = vsel %vm1515, %v1546, %v1547
        %v1549 = vrot.slane %v1433, 7
        %v1550 = vsel %vm1515, %v1547, %v1549
        %v1551 = vrot.slane %v1434, 7
        %v1552 = vrot.slane %v1435, 7
        %v1553 = vsel %vm1515, %v1551, %v1552
        %v1554 = vrot.slane %v1436, 7
        %v1555 = vsel %vm1515, %v1552, %v1554
        %v1556 = vrot.slane %v1437, 7
        %v1557 = vrot.slane %v1438, 7
        %v1558 = vsel %vm1515, %v1556, %v1557
        %v1559 = vrot.slane %v1439, 7
        %v1560 = vsel %vm1515, %v1557, %v1559
        %v1561 = vrot.slane %v1440, 7
        %v1562 = vrot.slane %v1441, 7
        %v1563 = vsel %vm1515, %v1561, %v1562
        %v1564 = vrot.slane %v1442, 7
        %v1565 = vsel %vm1515, %v1562, %v1564
        %v1566 = vrot.slane %v1443, 7
        %v1567 = vrot.slane %v1444, 7
        %v1568 = vsel %vm1515, %v1566, %v1567
        %v1569 = vrot.slane %v1445, 7
        %v1570 = vsel %vm1515, %v1567, %v1569
        %v1571 = vrot.slane %v1446, 7
        %v1572 = vrot.slane %v1447, 7
        %v1573 = vsel %vm1515, %v1571, %v1572
        %v1574 = vrot.slane %v1448, 7
        %v1575 = vsel %vm1515, %v1572, %v1574
        %v1576 = vrot.slane %v1449, 7
        %v1577 = vrot.slane %v1450, 7
        %v1578 = vsel %vm1515, %v1576, %v1577
        %v1579 = vrot.slane %v1451, 7
        %v1580 = vsel %vm1515, %v1577, %v1579
        %v1581 = vrot.slane %v1452, 7
        %v1582 = vrot.slane %v1453, 7
        %v1583 = vsel %vm1515, %v1581, %v1582
        %v1584 = vrot.slane %v1454, 7
        %v1585 = vsel %vm1515, %v1582, %v1584
        %v1586 = vrot.slane %v1455, 7
        %v1587 = vrot.slane %v1456, 7
        %v1588 = vsel %vm1515, %v1586, %v1587
        %v1589 = vrot.slane %v1457, 7
        %v1590 = vsel %vm1515, %v1587, %v1589
        %v1591 = vrot.slane %v1458, 7
        %v1592 = vrot.slane %v1459, 7
        %v1593 = vsel %vm1515, %v1591, %v1592
        %v1594 = vrot.slane %v1460, 7
        %v1595 = vsel %vm1515, %v1592, %v1594
        %v1599 = vrot.slane %v1461, 7
        %v1600 = vrot.slane %v1462, 7
        %v1601 = vsel %vm1515, %v1599, %v1600
        %v1602 = vrot.slane %v1463, 7
        %v1603 = vsel %vm1515, %v1600, %v1602
        %vm1604 = vcmask 785408
        %v1605 = vsel %vm1604, %v1523, 0
        %v1607 = vsel %vm1604, %v1525, 0
        %v1609 = vsel %vm1604, %v1528, 0
        %v1611 = vsel %vm1604, %v1530, 0
        %v1613 = vsel %vm1604, %v1533, 0
        %v1615 = vsel %vm1604, %v1535, 0
        %v1617 = vsel %vm1604, %v1538, 0
        %v1619 = vsel %vm1604, %v1540, 0
        %v1621 = vsel %vm1604, %v1543, 0
        %v1623 = vsel %vm1604, %v1545, 0
        %v1625 = vsel %vm1604, %v1548, 0
        %v1627 = vsel %vm1604, %v1550, 0
        %v1629 = vsel %vm1604, %v1553, 0
        %v1631 = vsel %vm1604, %v1555, 0
        %v1633 = vsel %vm1604, %v1558, 0
        %v1635 = vsel %vm1604, %v1560, 0
        %v1637 = vsel %vm1604, %v1563, 0
        %v1639 = vsel %vm1604, %v1565, 0
        %v1641 = vsel %vm1604, %v1568, 0
        %v1643 = vsel %vm1604, %v1570, 0
        %v1645 = vsel %vm1604, %v1573, 0
        %v1647 = vsel %vm1604, %v1575, 0
        %v1649 = vsel %vm1604, %v1578, 0
        %v1651 = vsel %vm1604, %v1580, 0
        %v1653 = vsel %vm1604, %v1583, 0
        %v1655 = vsel %vm1604, %v1585, 0
        %v1657 = vsel %vm1604, %v1588, 0
        %v1659 = vsel %vm1604, %v1590, 0
        %v1661 = vsel %vm1604, %v1593, 0
        %v1663 = vsel %vm1604, %v1595, 0
        %v1665 = vsel %vm1604, %v1601, 0
        %v1667 = vsel %vm1604, %v1603, 0
        %1669 = vmatpush.msra.mxu0 0.0
        %1670 = vmatpush.msra.mxu0 0.0
        %1671 = vmatpush.msra.mxu0 0.0
        %1672 = vmatpush.msra.mxu0 0.0
        %1673 = vmatpush.msra.mxu0 %v749
        %1674 = vmatpush.msra.mxu0 %v748
        %1675 = vmatpush.msra.mxu0 %v747
        %1676 = vmatpush.msra.mxu0 %v746
        %1677 = vmatpush.msra.mxu0 %v745
        %1678 = vmatpush.msra.mxu0 %v744
        %1679 = vmatpush.msra.mxu0 %v743
        %1680 = vmatpush.msra.mxu0 %v742
        %1681 = vmatpush.msra.mxu0 %v741
        %1682 = vmatpush.msra.mxu0 %v740
        %1683 = vmatpush.msra.mxu0 %v739
        %1684 = vmatpush.msra.mxu0 %v738
        %1685 = vmatmul.f32.gmra.mxu0 %v1605
        %v1686 = vpop.f32.mrf.mxu0
        %v1687 = vadd.f32 0.0, %v1686
        %1688 = vmatmul.f32.gmra.mxu0 %v1607
        %v1689 = vpop.f32.mrf.mxu0
        %v1690 = vadd.f32 0.0, %v1689
        %1691 = vmatmul.f32.gmra.mxu0 %v1609
        %v1692 = vpop.f32.mrf.mxu0
        %v1693 = vadd.f32 0.0, %v1692
        %1694 = vmatmul.f32.gmra.mxu0 %v1611
        %v1695 = vpop.f32.mrf.mxu0
        %v1696 = vadd.f32 0.0, %v1695
        %1697 = vmatmul.f32.gmra.mxu0 %v1613
        %v1698 = vpop.f32.mrf.mxu0
        %v1699 = vadd.f32 0.0, %v1698
        %1700 = vmatmul.f32.gmra.mxu0 %v1615
        %v1701 = vpop.f32.mrf.mxu0
        %v1702 = vadd.f32 0.0, %v1701
        %1703 = vmatmul.f32.gmra.mxu0 %v1617
        %v1704 = vpop.f32.mrf.mxu0
        %v1705 = vadd.f32 0.0, %v1704
        %1706 = vmatmul.f32.gmra.mxu0 %v1619
        %v1707 = vpop.f32.mrf.mxu0
        %v1708 = vadd.f32 0.0, %v1707
        %1709 = vmatmul.f32.gmra.mxu0 %v1621
        %v1710 = vpop.f32.mrf.mxu0
        %v1711 = vadd.f32 0.0, %v1710
        %1712 = vmatmul.f32.gmra.mxu0 %v1623
        %v1713 = vpop.f32.mrf.mxu0
        %v1714 = vadd.f32 0.0, %v1713
        %1715 = vmatmul.f32.gmra.mxu0 %v1625
        %v1716 = vpop.f32.mrf.mxu0
        %v1717 = vadd.f32 0.0, %v1716
        %1718 = vmatmul.f32.gmra.mxu0 %v1627
        %v1719 = vpop.f32.mrf.mxu0
        %v1720 = vadd.f32 0.0, %v1719
        %1721 = vmatmul.f32.gmra.mxu0 %v1629
        %v1722 = vpop.f32.mrf.mxu0
        %v1723 = vadd.f32 0.0, %v1722
        %1724 = vmatmul.f32.gmra.mxu0 %v1631
        %v1725 = vpop.f32.mrf.mxu0
        %v1726 = vadd.f32 0.0, %v1725
        %1727 = vmatmul.f32.gmra.mxu0 %v1633
        %v1728 = vpop.f32.mrf.mxu0
        %v1729 = vadd.f32 0.0, %v1728
        %1730 = vmatmul.f32.gmra.mxu0 %v1635
        %v1731 = vpop.f32.mrf.mxu0
        %v1732 = vadd.f32 0.0, %v1731
        %1733 = vmatmul.f32.gmra.mxu0 %v1637
        %v1734 = vpop.f32.mrf.mxu0
        %v1735 = vadd.f32 0.0, %v1734
        %1736 = vmatmul.f32.gmra.mxu0 %v1639
        %v1737 = vpop.f32.mrf.mxu0
        %v1738 = vadd.f32 0.0, %v1737
        %1739 = vmatmul.f32.gmra.mxu0 %v1641
        %v1740 = vpop.f32.mrf.mxu0
        %v1741 = vadd.f32 0.0, %v1740
        %1742 = vmatmul.f32.gmra.mxu0 %v1643
        %v1743 = vpop.f32.mrf.mxu0
        %v1744 = vadd.f32 0.0, %v1743
        %1745 = vmatmul.f32.gmra.mxu0 %v1645
        %v1746 = vpop.f32.mrf.mxu0
        %v1747 = vadd.f32 0.0, %v1746
        %1748 = vmatmul.f32.gmra.mxu0 %v1647
        %v1749 = vpop.f32.mrf.mxu0
        %v1750 = vadd.f32 0.0, %v1749
        %1751 = vmatmul.f32.gmra.mxu0 %v1649
        %v1752 = vpop.f32.mrf.mxu0
        %v1753 = vadd.f32 0.0, %v1752
        %1754 = vmatmul.f32.gmra.mxu0 %v1651
        %v1755 = vpop.f32.mrf.mxu0
        %v1756 = vadd.f32 0.0, %v1755
        %1757 = vmatmul.f32.gmra.mxu0 %v1653
        %v1758 = vpop.f32.mrf.mxu0
        %v1759 = vadd.f32 0.0, %v1758
        %1760 = vmatmul.f32.gmra.mxu0 %v1655
        %v1761 = vpop.f32.mrf.mxu0
        %v1762 = vadd.f32 0.0, %v1761
        %1763 = vmatmul.f32.gmra.mxu0 %v1657
        %v1764 = vpop.f32.mrf.mxu0
        %v1765 = vadd.f32 0.0, %v1764
        %1766 = vmatmul.f32.gmra.mxu0 %v1659
        %v1767 = vpop.f32.mrf.mxu0
        %v1768 = vadd.f32 0.0, %v1767
        %1769 = vmatmul.f32.gmra.mxu0 %v1661
        %v1770 = vpop.f32.mrf.mxu0
        %v1771 = vadd.f32 0.0, %v1770
        %1772 = vmatmul.f32.gmra.mxu0 %v1663
        %v1773 = vpop.f32.mrf.mxu0
        %v1774 = vadd.f32 0.0, %v1773
        %1775 = vmatmul.f32.gmra.mxu0 %v1665
        %v1776 = vpop.f32.mrf.mxu0
        %v1777 = vadd.f32 0.0, %v1776
        %1778 = vmatmul.f32.gmra.mxu0 %v1667
        %v1779 = vpop.f32.mrf.mxu0
        %v1780 = vadd.f32 0.0, %v1779
        %1781 = vdwg.mxu0
        %v1782 = vsel %vm1604, %v1518, 0
        %v1784 = vsel %vm1604, %v1520, 0
        %1786 = vmatpush.msra.mxu0 0.0
        %1787 = vmatpush.msra.mxu0 0.0
        %1788 = vmatpush.msra.mxu0 0.0
        %1789 = vmatpush.msra.mxu0 0.0
        %1790 = vmatpush.msra.mxu0 %v737
        %1791 = vmatpush.msra.mxu0 %v736
        %1792 = vmatpush.msra.mxu0 %v735
        %1793 = vmatpush.msra.mxu0 %v734
        %1794 = vmatpush.msra.mxu0 %v733
        %1795 = vmatpush.msra.mxu0 %v732
        %1796 = vmatpush.msra.mxu0 %v731
        %1797 = vmatpush.msra.mxu0 %v730
        %1798 = vmatpush.msra.mxu0 %v729
        %1799 = vmatpush.msra.mxu0 %v728
        %1800 = vmatpush.msra.mxu0 %v727
        %1801 = vmatpush.msra.mxu0 %v726
        %1802 = vmatmul.f32.gmra.mxu0 %v1782
        %v1803 = vpop.f32.mrf.mxu0
        %v1804 = vadd.f32 %v1687, %v1803
        %1805 = vmatmul.f32.gmra.mxu0 %v1784
        %v1806 = vpop.f32.mrf.mxu0
        %v1807 = vadd.f32 %v1690, %v1806
        %1808 = vmatmul.f32.gmra.mxu0 %v1605
        %v1809 = vpop.f32.mrf.mxu0
        %v1810 = vadd.f32 %v1693, %v1809
        %1811 = vmatmul.f32.gmra.mxu0 %v1607
        %v1812 = vpop.f32.mrf.mxu0
        %v1813 = vadd.f32 %v1696, %v1812
        %1814 = vmatmul.f32.gmra.mxu0 %v1609
        %v1815 = vpop.f32.mrf.mxu0
        %v1816 = vadd.f32 %v1699, %v1815
        %1817 = vmatmul.f32.gmra.mxu0 %v1611
        %v1818 = vpop.f32.mrf.mxu0
        %v1819 = vadd.f32 %v1702, %v1818
        %1820 = vmatmul.f32.gmra.mxu0 %v1613
        %v1821 = vpop.f32.mrf.mxu0
        %v1822 = vadd.f32 %v1705, %v1821
        %1823 = vmatmul.f32.gmra.mxu0 %v1615
        %v1824 = vpop.f32.mrf.mxu0
        %v1825 = vadd.f32 %v1708, %v1824
        %1826 = vmatmul.f32.gmra.mxu0 %v1617
        %v1827 = vpop.f32.mrf.mxu0
        %v1828 = vadd.f32 %v1711, %v1827
        %1829 = vmatmul.f32.gmra.mxu0 %v1619
        %v1830 = vpop.f32.mrf.mxu0
        %v1831 = vadd.f32 %v1714, %v1830
        %1832 = vmatmul.f32.gmra.mxu0 %v1621
        %v1833 = vpop.f32.mrf.mxu0
        %v1834 = vadd.f32 %v1717, %v1833
        %1835 = vmatmul.f32.gmra.mxu0 %v1623
        %v1836 = vpop.f32.mrf.mxu0
        %v1837 = vadd.f32 %v1720, %v1836
        %1838 = vmatmul.f32.gmra.mxu0 %v1625
        %v1839 = vpop.f32.mrf.mxu0
        %v1840 = vadd.f32 %v1723, %v1839
        %1841 = vmatmul.f32.gmra.mxu0 %v1627
        %v1842 = vpop.f32.mrf.mxu0
        %v1843 = vadd.f32 %v1726, %v1842
        %1844 = vmatmul.f32.gmra.mxu0 %v1629
        %v1845 = vpop.f32.mrf.mxu0
        %v1846 = vadd.f32 %v1729, %v1845
        %1847 = vmatmul.f32.gmra.mxu0 %v1631
        %v1848 = vpop.f32.mrf.mxu0
        %v1849 = vadd.f32 %v1732, %v1848
        %1850 = vmatmul.f32.gmra.mxu0 %v1633
        %v1851 = vpop.f32.mrf.mxu0
        %v1852 = vadd.f32 %v1735, %v1851
        %1853 = vmatmul.f32.gmra.mxu0 %v1635
        %v1854 = vpop.f32.mrf.mxu0
        %v1855 = vadd.f32 %v1738, %v1854
        %1856 = vmatmul.f32.gmra.mxu0 %v1637
        %v1857 = vpop.f32.mrf.mxu0
        %v1858 = vadd.f32 %v1741, %v1857
        %1859 = vmatmul.f32.gmra.mxu0 %v1639
        %v1860 = vpop.f32.mrf.mxu0
        %v1861 = vadd.f32 %v1744, %v1860
        %1862 = vmatmul.f32.gmra.mxu0 %v1641
        %v1863 = vpop.f32.mrf.mxu0
        %v1864 = vadd.f32 %v1747, %v1863
        %1865 = vmatmul.f32.gmra.mxu0 %v1643
        %v1866 = vpop.f32.mrf.mxu0
        %v1867 = vadd.f32 %v1750, %v1866
        %1868 = vmatmul.f32.gmra.mxu0 %v1645
        %v1869 = vpop.f32.mrf.mxu0
        %v1870 = vadd.f32 %v1753, %v1869
        %1871 = vmatmul.f32.gmra.mxu0 %v1647
        %v1872 = vpop.f32.mrf.mxu0
        %v1873 = vadd.f32 %v1756, %v1872
        %1874 = vmatmul.f32.gmra.mxu0 %v1649
        %v1875 = vpop.f32.mrf.mxu0
        %v1876 = vadd.f32 %v1759, %v1875
        %1877 = vmatmul.f32.gmra.mxu0 %v1651
        %v1878 = vpop.f32.mrf.mxu0
        %v1879 = vadd.f32 %v1762, %v1878
        %1880 = vmatmul.f32.gmra.mxu0 %v1653
        %v1881 = vpop.f32.mrf.mxu0
        %v1882 = vadd.f32 %v1765, %v1881
        %1883 = vmatmul.f32.gmra.mxu0 %v1655
        %v1884 = vpop.f32.mrf.mxu0
        %v1885 = vadd.f32 %v1768, %v1884
        %1886 = vmatmul.f32.gmra.mxu0 %v1657
        %v1887 = vpop.f32.mrf.mxu0
        %v1888 = vadd.f32 %v1771, %v1887
        %1889 = vmatmul.f32.gmra.mxu0 %v1659
        %v1890 = vpop.f32.mrf.mxu0
        %v1891 = vadd.f32 %v1774, %v1890
        %1892 = vmatmul.f32.gmra.mxu0 %v1661
        %v1893 = vpop.f32.mrf.mxu0
        %v1894 = vadd.f32 %v1777, %v1893
        %1895 = vmatmul.f32.gmra.mxu0 %v1663
        %v1896 = vpop.f32.mrf.mxu0
        %v1897 = vadd.f32 %v1780, %v1896
        %1898 = vdwg.mxu0
        %v1902 = vrot.slane %v1464, 7
        %v1903 = vrot.slane %v1465, 7
        %v1904 = vsel %vm1515, %v1902, %v1903
        %v1905 = vrot.slane %v1466, 7
        %v1906 = vsel %vm1515, %v1903, %v1905
        %v1907 = vsel %vm1604, %v1904, 0
        %v1909 = vsel %vm1604, %v1906, 0
        %1911 = vmatpush.msra.mxu0 0.0
        %1912 = vmatpush.msra.mxu0 0.0
        %1913 = vmatpush.msra.mxu0 0.0
        %1914 = vmatpush.msra.mxu0 0.0
        %1915 = vmatpush.msra.mxu0 %v761
        %1916 = vmatpush.msra.mxu0 %v760
        %1917 = vmatpush.msra.mxu0 %v759
        %1918 = vmatpush.msra.mxu0 %v758
        %1919 = vmatpush.msra.mxu0 %v757
        %1920 = vmatpush.msra.mxu0 %v756
        %1921 = vmatpush.msra.mxu0 %v755
        %1922 = vmatpush.msra.mxu0 %v754
        %1923 = vmatpush.msra.mxu0 %v753
        %1924 = vmatpush.msra.mxu0 %v752
        %1925 = vmatpush.msra.mxu0 %v751
        %1926 = vmatpush.msra.mxu0 %v750
        %1927 = vmatmul.f32.gmra.mxu0 %v1609
        %v1928 = vpop.f32.mrf.mxu0
        %v1929 = vadd.f32 0.0, %v1928
        %1930 = vmatmul.f32.gmra.mxu0 %v1611
        %v1931 = vpop.f32.mrf.mxu0
        %v1932 = vadd.f32 0.0, %v1931
        %1933 = vmatmul.f32.gmra.mxu0 %v1613
        %v1934 = vpop.f32.mrf.mxu0
        %v1935 = vadd.f32 0.0, %v1934
        %1936 = vmatmul.f32.gmra.mxu0 %v1615
        %v1937 = vpop.f32.mrf.mxu0
        %v1938 = vadd.f32 0.0, %v1937
        %1939 = vmatmul.f32.gmra.mxu0 %v1617
        %v1940 = vpop.f32.mrf.mxu0
        %v1941 = vadd.f32 0.0, %v1940
        %1942 = vmatmul.f32.gmra.mxu0 %v1619
        %v1943 = vpop.f32.mrf.mxu0
        %v1944 = vadd.f32 0.0, %v1943
        %1945 = vmatmul.f32.gmra.mxu0 %v1621
        %v1946 = vpop.f32.mrf.mxu0
        %v1947 = vadd.f32 0.0, %v1946
        %1948 = vmatmul.f32.gmra.mxu0 %v1623
        %v1949 = vpop.f32.mrf.mxu0
        %v1950 = vadd.f32 0.0, %v1949
        %1951 = vmatmul.f32.gmra.mxu0 %v1625
        %v1952 = vpop.f32.mrf.mxu0
        %v1953 = vadd.f32 0.0, %v1952
        %1954 = vmatmul.f32.gmra.mxu0 %v1627
        %v1955 = vpop.f32.mrf.mxu0
        %v1956 = vadd.f32 0.0, %v1955
        %1957 = vmatmul.f32.gmra.mxu0 %v1629
        %v1958 = vpop.f32.mrf.mxu0
        %v1959 = vadd.f32 0.0, %v1958
        %1960 = vmatmul.f32.gmra.mxu0 %v1631
        %v1961 = vpop.f32.mrf.mxu0
        %v1962 = vadd.f32 0.0, %v1961
        %1963 = vmatmul.f32.gmra.mxu0 %v1633
        %v1964 = vpop.f32.mrf.mxu0
        %v1965 = vadd.f32 0.0, %v1964
        %1966 = vmatmul.f32.gmra.mxu0 %v1635
        %v1967 = vpop.f32.mrf.mxu0
        %v1968 = vadd.f32 0.0, %v1967
        %1969 = vmatmul.f32.gmra.mxu0 %v1637
        %v1970 = vpop.f32.mrf.mxu0
        %v1971 = vadd.f32 0.0, %v1970
        %1972 = vmatmul.f32.gmra.mxu0 %v1639
        %v1973 = vpop.f32.mrf.mxu0
        %v1974 = vadd.f32 0.0, %v1973
        %1975 = vmatmul.f32.gmra.mxu0 %v1641
        %v1976 = vpop.f32.mrf.mxu0
        %v1977 = vadd.f32 0.0, %v1976
        %1978 = vmatmul.f32.gmra.mxu0 %v1643
        %v1979 = vpop.f32.mrf.mxu0
        %v1980 = vadd.f32 0.0, %v1979
        %1981 = vmatmul.f32.gmra.mxu0 %v1645
        %v1982 = vpop.f32.mrf.mxu0
        %v1983 = vadd.f32 0.0, %v1982
        %1984 = vmatmul.f32.gmra.mxu0 %v1647
        %v1985 = vpop.f32.mrf.mxu0
        %v1986 = vadd.f32 0.0, %v1985
        %1987 = vmatmul.f32.gmra.mxu0 %v1649
        %v1988 = vpop.f32.mrf.mxu0
        %v1989 = vadd.f32 0.0, %v1988
        %1990 = vmatmul.f32.gmra.mxu0 %v1651
        %v1991 = vpop.f32.mrf.mxu0
        %v1992 = vadd.f32 0.0, %v1991
        %1993 = vmatmul.f32.gmra.mxu0 %v1653
        %v1994 = vpop.f32.mrf.mxu0
        %v1995 = vadd.f32 0.0, %v1994
        %1996 = vmatmul.f32.gmra.mxu0 %v1655
        %v1997 = vpop.f32.mrf.mxu0
        %v1998 = vadd.f32 0.0, %v1997
        %1999 = vmatmul.f32.gmra.mxu0 %v1657
        %v2000 = vpop.f32.mrf.mxu0
        %v2001 = vadd.f32 0.0, %v2000
        %2002 = vmatmul.f32.gmra.mxu0 %v1659
        %v2003 = vpop.f32.mrf.mxu0
        %v2004 = vadd.f32 0.0, %v2003
        %2005 = vmatmul.f32.gmra.mxu0 %v1661
        %v2006 = vpop.f32.mrf.mxu0
        %v2007 = vadd.f32 0.0, %v2006
        %2008 = vmatmul.f32.gmra.mxu0 %v1663
        %v2009 = vpop.f32.mrf.mxu0
        %v2010 = vadd.f32 0.0, %v2009
        %2011 = vmatmul.f32.gmra.mxu0 %v1665
        %v2012 = vpop.f32.mrf.mxu0
        %v2013 = vadd.f32 0.0, %v2012
        %2014 = vmatmul.f32.gmra.mxu0 %v1667
        %v2015 = vpop.f32.mrf.mxu0
        %v2016 = vadd.f32 0.0, %v2015
        %2017 = vmatmul.f32.gmra.mxu0 %v1907
        %v2018 = vpop.f32.mrf.mxu0
        %v2019 = vadd.f32 0.0, %v2018
        %2020 = vmatmul.f32.gmra.mxu0 %v1909
        %v2021 = vpop.f32.mrf.mxu0
        %v2022 = vadd.f32 0.0, %v2021
        %2023 = vdwg.mxu0
        %v2024 = vadd.f32 %v1804, %v1929
        %v2025 = vadd.f32 %v1807, %v1932
        %v2026 = vadd.f32 %v1810, %v1935
        %v2027 = vadd.f32 %v1813, %v1938
        %v2028 = vadd.f32 %v1816, %v1941
        %v2029 = vadd.f32 %v1819, %v1944
        %v2030 = vadd.f32 %v1822, %v1947
        %v2031 = vadd.f32 %v1825, %v1950
        %v2032 = vadd.f32 %v1828, %v1953
        %v2033 = vadd.f32 %v1831, %v1956
        %v2034 = vadd.f32 %v1834, %v1959
        %v2035 = vadd.f32 %v1837, %v1962
        %v2036 = vadd.f32 %v1840, %v1965
        %v2037 = vadd.f32 %v1843, %v1968
        %v2038 = vadd.f32 %v1846, %v1971
        %v2039 = vadd.f32 %v1849, %v1974
        %v2040 = vadd.f32 %v1852, %v1977
        %v2041 = vadd.f32 %v1855, %v1980
        %v2042 = vadd.f32 %v1858, %v1983
        %v2043 = vadd.f32 %v1861, %v1986
        %v2044 = vadd.f32 %v1864, %v1989
        %v2045 = vadd.f32 %v1867, %v1992
        %v2046 = vadd.f32 %v1870, %v1995
        %v2047 = vadd.f32 %v1873, %v1998
        %v2048 = vadd.f32 %v1876, %v2001
        %v2049 = vadd.f32 %v1879, %v2004
        %v2050 = vadd.f32 %v1882, %v2007
        %v2051 = vadd.f32 %v1885, %v2010
        %v2052 = vadd.f32 %v1888, %v2013
        %v2053 = vadd.f32 %v1891, %v2016
        %v2054 = vadd.f32 %v1894, %v2019
        %v2055 = vadd.f32 %v1897, %v2022
        %v2056 = vld [vmem:[%s2] sm:$0x1]
        %v2057 = vld [vmem:[%s3] sm:$0x1]
        %v2059 = vperm.slane %v2056, 0
        %v2061 = vmul.f32 %v2024, %v2059
        %v2062 = vmul.f32 %v2025, %v2059
        %v2063 = vmul.f32 %v2026, %v2059
        %v2064 = vmul.f32 %v2027, %v2059
        %v2065 = vmul.f32 %v2028, %v2059
        %v2066 = vmul.f32 %v2029, %v2059
        %v2067 = vmul.f32 %v2030, %v2059
        %v2068 = vmul.f32 %v2031, %v2059
        %v2069 = vmul.f32 %v2032, %v2059
        %v2070 = vmul.f32 %v2033, %v2059
        %v2071 = vmul.f32 %v2034, %v2059
        %v2072 = vmul.f32 %v2035, %v2059
        %v2073 = vmul.f32 %v2036, %v2059
        %v2074 = vmul.f32 %v2037, %v2059
        %v2075 = vmul.f32 %v2038, %v2059
        %v2076 = vmul.f32 %v2039, %v2059
        %v2077 = vmul.f32 %v2040, %v2059
        %v2078 = vmul.f32 %v2041, %v2059
        %v2079 = vmul.f32 %v2042, %v2059
        %v2080 = vmul.f32 %v2043, %v2059
        %v2081 = vmul.f32 %v2044, %v2059
        %v2082 = vmul.f32 %v2045, %v2059
        %v2083 = vmul.f32 %v2046, %v2059
        %v2084 = vmul.f32 %v2047, %v2059
        %v2085 = vmul.f32 %v2048, %v2059
        %v2086 = vmul.f32 %v2049, %v2059
        %v2087 = vmul.f32 %v2050, %v2059
        %v2088 = vmul.f32 %v2051, %v2059
        %v2089 = vmul.f32 %v2052, %v2059
        %v2090 = vmul.f32 %v2053, %v2059
        %v2091 = vmul.f32 %v2054, %v2059
        %v2092 = vmul.f32 %v2055, %v2059
        %v2094 = vperm.slane %v2057, 0
        %v2096 = vadd.f32 %v2061, %v2094
        %v2097 = vadd.f32 %v2062, %v2094
        %v2098 = vadd.f32 %v2063, %v2094
        %v2099 = vadd.f32 %v2064, %v2094
        %v2100 = vadd.f32 %v2065, %v2094
        %v2101 = vadd.f32 %v2066, %v2094
        %v2102 = vadd.f32 %v2067, %v2094
        %v2103 = vadd.f32 %v2068, %v2094
        %v2104 = vadd.f32 %v2069, %v2094
        %v2105 = vadd.f32 %v2070, %v2094
        %v2106 = vadd.f32 %v2071, %v2094
        %v2107 = vadd.f32 %v2072, %v2094
        %v2108 = vadd.f32 %v2073, %v2094
        %v2109 = vadd.f32 %v2074, %v2094
        %v2110 = vadd.f32 %v2075, %v2094
        %v2111 = vadd.f32 %v2076, %v2094
        %v2112 = vadd.f32 %v2077, %v2094
        %v2113 = vadd.f32 %v2078, %v2094
        %v2114 = vadd.f32 %v2079, %v2094
        %v2115 = vadd.f32 %v2080, %v2094
        %v2116 = vadd.f32 %v2081, %v2094
        %v2117 = vadd.f32 %v2082, %v2094
        %v2118 = vadd.f32 %v2083, %v2094
        %v2119 = vadd.f32 %v2084, %v2094
        %v2120 = vadd.f32 %v2085, %v2094
        %v2121 = vadd.f32 %v2086, %v2094
        %v2122 = vadd.f32 %v2087, %v2094
        %v2123 = vadd.f32 %v2088, %v2094
        %v2124 = vadd.f32 %v2089, %v2094
        %v2125 = vadd.f32 %v2090, %v2094
        %v2126 = vadd.f32 %v2091, %v2094
        %v2127 = vadd.f32 %v2092, %v2094
        %v2128 = vmax.f32 %v2096, 0.0
        %v2129 = vmax.f32 %v2097, 0.0
        %v2130 = vmax.f32 %v2098, 0.0
        %v2131 = vmax.f32 %v2099, 0.0
        %v2132 = vmax.f32 %v2100, 0.0
        %v2133 = vmax.f32 %v2101, 0.0
        %v2134 = vmax.f32 %v2102, 0.0
        %v2135 = vmax.f32 %v2103, 0.0
        %v2136 = vmax.f32 %v2104, 0.0
        %v2137 = vmax.f32 %v2105, 0.0
        %v2138 = vmax.f32 %v2106, 0.0
        %v2139 = vmax.f32 %v2107, 0.0
        %v2140 = vmax.f32 %v2108, 0.0
        %v2141 = vmax.f32 %v2109, 0.0
        %v2142 = vmax.f32 %v2110, 0.0
        %v2143 = vmax.f32 %v2111, 0.0
        %v2144 = vmax.f32 %v2112, 0.0
        %v2145 = vmax.f32 %v2113, 0.0
        %v2146 = vmax.f32 %v2114, 0.0
        %v2147 = vmax.f32 %v2115, 0.0
        %v2148 = vmax.f32 %v2116, 0.0
        %v2149 = vmax.f32 %v2117, 0.0
        %v2150 = vmax.f32 %v2118, 0.0
        %v2151 = vmax.f32 %v2119, 0.0
        %v2152 = vmax.f32 %v2120, 0.0
        %v2153 = vmax.f32 %v2121, 0.0
        %v2154 = vmax.f32 %v2122, 0.0
        %v2155 = vmax.f32 %v2123, 0.0
        %v2156 = vmax.f32 %v2124, 0.0
        %v2157 = vmax.f32 %v2125, 0.0
        %v2158 = vmax.f32 %v2126, 0.0
        %v2159 = vmax.f32 %v2127, 0.0
        %vm2160 = vcmask 130048
        %2161 = vst.msk [vmem:[#allocation2] sm:$0xff] %vm2160, %v2128
        %2162 = vst.msk [vmem:[#allocation2 + $0x8] sm:$0xff] %vm2160, %v2129
        %2163 = vst.msk [vmem:[#allocation2 + $0x10] sm:$0xff] %vm2160, %v2130
        %2164 = vst.msk [vmem:[#allocation2 + $0x18] sm:$0xff] %vm2160, %v2131
        %2165 = vst.msk [vmem:[#allocation2 + $0x20] sm:$0xff] %vm2160, %v2132
        %2166 = vst.msk [vmem:[#allocation2 + $0x28] sm:$0xff] %vm2160, %v2133
        %2167 = vst.msk [vmem:[#allocation2 + $0x30] sm:$0xff] %vm2160, %v2134
        %2168 = vst.msk [vmem:[#allocation2 + $0x38] sm:$0xff] %vm2160, %v2135
        %2169 = vst.msk [vmem:[#allocation2 + $0x40] sm:$0xff] %vm2160, %v2136
        %2170 = vst.msk [vmem:[#allocation2 + $0x48] sm:$0xff] %vm2160, %v2137
        %2171 = vst.msk [vmem:[#allocation2 + $0x50] sm:$0xff] %vm2160, %v2138
        %2172 = vst.msk [vmem:[#allocation2 + $0x58] sm:$0xff] %vm2160, %v2139
        %2173 = vst.msk [vmem:[#allocation2 + $0x60] sm:$0xff] %vm2160, %v2140
        %2174 = vst.msk [vmem:[#allocation2 + $0x68] sm:$0xff] %vm2160, %v2141
        %2175 = vst.msk [vmem:[#allocation2 + $0x70] sm:$0xff] %vm2160, %v2142
        %2176 = vst.msk [vmem:[#allocation2 + $0x78] sm:$0xff] %vm2160, %v2143
        %2177 = vst.msk [vmem:[#allocation2 + $0x80] sm:$0xff] %vm2160, %v2144
        %2178 = vst.msk [vmem:[#allocation2 + $0x88] sm:$0xff] %vm2160, %v2145
        %2179 = vst.msk [vmem:[#allocation2 + $0x90] sm:$0xff] %vm2160, %v2146
        %2180 = vst.msk [vmem:[#allocation2 + $0x98] sm:$0xff] %vm2160, %v2147
        %2181 = vst.msk [vmem:[#allocation2 + $0xa0] sm:$0xff] %vm2160, %v2148
        %2182 = vst.msk [vmem:[#allocation2 + $0xa8] sm:$0xff] %vm2160, %v2149
        %2183 = vst.msk [vmem:[#allocation2 + $0xb0] sm:$0xff] %vm2160, %v2150
        %2184 = vst.msk [vmem:[#allocation2 + $0xb8] sm:$0xff] %vm2160, %v2151
        %2185 = vst.msk [vmem:[#allocation2 + $0xc0] sm:$0xff] %vm2160, %v2152
        %2186 = vst.msk [vmem:[#allocation2 + $0xc8] sm:$0xff] %vm2160, %v2153
        %2187 = vst.msk [vmem:[#allocation2 + $0xd0] sm:$0xff] %vm2160, %v2154
        %2188 = vst.msk [vmem:[#allocation2 + $0xd8] sm:$0xff] %vm2160, %v2155
        %2189 = vst.msk [vmem:[#allocation2 + $0xe0] sm:$0xff] %vm2160, %v2156
        %2190 = vst.msk [vmem:[#allocation2 + $0xe8] sm:$0xff] %vm2160, %v2157
        %2191 = vst.msk [vmem:[#allocation2 + $0xf0] sm:$0xff] %vm2160, %v2158
        %2192 = vst.msk [vmem:[#allocation2 + $0xf8] sm:$0xff] %vm2160, %v2159
        %v2193 = vld [vmem:[#allocation2] sm:$0xff]
        %v2194 = vld [vmem:[#allocation2 + $0x8] sm:$0xff]
        %v2195 = vld [vmem:[#allocation2 + $0x10] sm:$0xff]
        %v2196 = vld [vmem:[#allocation2 + $0x18] sm:$0xff]
        %v2197 = vld [vmem:[#allocation2 + $0x20] sm:$0xff]
        %v2198 = vld [vmem:[#allocation2 + $0x28] sm:$0xff]
        %v2199 = vld [vmem:[#allocation2 + $0x30] sm:$0xff]
        %v2200 = vld [vmem:[#allocation2 + $0x38] sm:$0xff]
        %v2201 = vld [vmem:[#allocation2 + $0x40] sm:$0xff]
        %v2202 = vld [vmem:[#allocation2 + $0x48] sm:$0xff]
        %v2203 = vld [vmem:[#allocation2 + $0x50] sm:$0xff]
        %v2204 = vld [vmem:[#allocation2 + $0x58] sm:$0xff]
        %v2205 = vld [vmem:[#allocation2 + $0x60] sm:$0xff]
        %v2206 = vld [vmem:[#allocation2 + $0x68] sm:$0xff]
        %v2207 = vld [vmem:[#allocation2 + $0x70] sm:$0xff]
        %v2208 = vld [vmem:[#allocation2 + $0x78] sm:$0xff]
        %v2209 = vld [vmem:[#allocation2 + $0x80] sm:$0xff]
        %v2210 = vld [vmem:[#allocation2 + $0x88] sm:$0xff]
        %v2211 = vld [vmem:[#allocation2 + $0x90] sm:$0xff]
        %v2212 = vld [vmem:[#allocation2 + $0x98] sm:$0xff]
        %v2213 = vld [vmem:[#allocation2 + $0xa0] sm:$0xff]
        %v2214 = vld [vmem:[#allocation2 + $0xa8] sm:$0xff]
        %v2215 = vld [vmem:[#allocation2 + $0xb0] sm:$0xff]
        %v2216 = vld [vmem:[#allocation2 + $0xb8] sm:$0xff]
        %v2217 = vld [vmem:[#allocation2 + $0xc0] sm:$0xff]
        %v2218 = vld [vmem:[#allocation2 + $0xc8] sm:$0xff]
        %v2219 = vld [vmem:[#allocation2 + $0xd0] sm:$0xff]
        %v2220 = vld [vmem:[#allocation2 + $0xd8] sm:$0xff]
        %v2221 = vld [vmem:[#allocation2 + $0xe0] sm:$0xff]
        %v2222 = vld [vmem:[#allocation2 + $0xe8] sm:$0xff]
        %v2223 = vld [vmem:[#allocation2 + $0xf0] sm:$0xff]
        %v2224 = vld [vmem:[#allocation2 + $0xf8] sm:$0xff]
        %v2225 = vld [vmem:[%s4] sm:$0x1]
        %v2226 = vld [vmem:[%s5] sm:$0x1]
        %v2228 = vperm.slane %v2225, 0
        %v2230 = vmul.f32 %v2193, %v2228
        %v2231 = vmul.f32 %v2194, %v2228
        %v2232 = vmul.f32 %v2195, %v2228
        %v2233 = vmul.f32 %v2196, %v2228
        %v2234 = vmul.f32 %v2197, %v2228
        %v2235 = vmul.f32 %v2198, %v2228
        %v2236 = vmul.f32 %v2199, %v2228
        %v2237 = vmul.f32 %v2200, %v2228
        %v2238 = vmul.f32 %v2201, %v2228
        %v2239 = vmul.f32 %v2202, %v2228
        %v2240 = vmul.f32 %v2203, %v2228
        %v2241 = vmul.f32 %v2204, %v2228
        %v2242 = vmul.f32 %v2205, %v2228
        %v2243 = vmul.f32 %v2206, %v2228
        %v2244 = vmul.f32 %v2207, %v2228
        %v2245 = vmul.f32 %v2208, %v2228
        %v2246 = vmul.f32 %v2209, %v2228
        %v2247 = vmul.f32 %v2210, %v2228
        %v2248 = vmul.f32 %v2211, %v2228
        %v2249 = vmul.f32 %v2212, %v2228
        %v2250 = vmul.f32 %v2213, %v2228
        %v2251 = vmul.f32 %v2214, %v2228
        %v2252 = vmul.f32 %v2215, %v2228
        %v2253 = vmul.f32 %v2216, %v2228
        %v2254 = vmul.f32 %v2217, %v2228
        %v2255 = vmul.f32 %v2218, %v2228
        %v2256 = vmul.f32 %v2219, %v2228
        %v2257 = vmul.f32 %v2220, %v2228
        %v2258 = vmul.f32 %v2221, %v2228
        %v2259 = vmul.f32 %v2222, %v2228
        %v2260 = vmul.f32 %v2223, %v2228
        %v2261 = vmul.f32 %v2224, %v2228
        %v2263 = vperm.slane %v2226, 0
        %v2265 = vadd.f32 %v2230, %v2263
        %v2266 = vadd.f32 %v2231, %v2263
        %v2267 = vadd.f32 %v2232, %v2263
        %v2268 = vadd.f32 %v2233, %v2263
        %v2269 = vadd.f32 %v2234, %v2263
        %v2270 = vadd.f32 %v2235, %v2263
        %v2271 = vadd.f32 %v2236, %v2263
        %v2272 = vadd.f32 %v2237, %v2263
        %v2273 = vadd.f32 %v2238, %v2263
        %v2274 = vadd.f32 %v2239, %v2263
        %v2275 = vadd.f32 %v2240, %v2263
        %v2276 = vadd.f32 %v2241, %v2263
        %v2277 = vadd.f32 %v2242, %v2263
        %v2278 = vadd.f32 %v2243, %v2263
        %v2279 = vadd.f32 %v2244, %v2263
        %v2280 = vadd.f32 %v2245, %v2263
        %v2281 = vadd.f32 %v2246, %v2263
        %v2282 = vadd.f32 %v2247, %v2263
        %v2283 = vadd.f32 %v2248, %v2263
        %v2284 = vadd.f32 %v2249, %v2263
        %v2285 = vadd.f32 %v2250, %v2263
        %v2286 = vadd.f32 %v2251, %v2263
        %v2287 = vadd.f32 %v2252, %v2263
        %v2288 = vadd.f32 %v2253, %v2263
        %v2289 = vadd.f32 %v2254, %v2263
        %v2290 = vadd.f32 %v2255, %v2263
        %v2291 = vadd.f32 %v2256, %v2263
        %v2292 = vadd.f32 %v2257, %v2263
        %v2293 = vadd.f32 %v2258, %v2263
        %v2294 = vadd.f32 %v2259, %v2263
        %v2295 = vadd.f32 %v2260, %v2263
        %v2296 = vadd.f32 %v2261, %v2263
        %v2297 = vmax.f32 %v2265, 0.0
        %v2298 = vmax.f32 %v2266, 0.0
        %v2299 = vmax.f32 %v2267, 0.0
        %v2300 = vmax.f32 %v2268, 0.0
        %v2301 = vmax.f32 %v2269, 0.0
        %v2302 = vmax.f32 %v2270, 0.0
        %v2303 = vmax.f32 %v2271, 0.0
        %v2304 = vmax.f32 %v2272, 0.0
        %v2305 = vmax.f32 %v2273, 0.0
        %v2306 = vmax.f32 %v2274, 0.0
        %v2307 = vmax.f32 %v2275, 0.0
        %v2308 = vmax.f32 %v2276, 0.0
        %v2309 = vmax.f32 %v2277, 0.0
        %v2310 = vmax.f32 %v2278, 0.0
        %v2311 = vmax.f32 %v2279, 0.0
        %v2312 = vmax.f32 %v2280, 0.0
        %v2313 = vmax.f32 %v2281, 0.0
        %v2314 = vmax.f32 %v2282, 0.0
        %v2315 = vmax.f32 %v2283, 0.0
        %v2316 = vmax.f32 %v2284, 0.0
        %v2317 = vmax.f32 %v2285, 0.0
        %v2318 = vmax.f32 %v2286, 0.0
        %v2319 = vmax.f32 %v2287, 0.0
        %v2320 = vmax.f32 %v2288, 0.0
        %v2321 = vmax.f32 %v2289, 0.0
        %v2322 = vmax.f32 %v2290, 0.0
        %v2323 = vmax.f32 %v2291, 0.0
        %v2324 = vmax.f32 %v2292, 0.0
        %v2325 = vmax.f32 %v2293, 0.0
        %v2326 = vmax.f32 %v2294, 0.0
        %v2327 = vmax.f32 %v2295, 0.0
        %v2328 = vmax.f32 %v2296, 0.0
        %v2329 = vld [vmem:[%s6] sm:$0xff]
        %v2330 = vld [vmem:[%s6 + $0x8] sm:$0xff]
        %v2331 = vld [vmem:[%s6 + $0x10] sm:$0xff]
        %v2332 = vld [vmem:[%s6 + $0x18] sm:$0xff]
        %v2334 = vsel %vm546, %v2297, 0
        %v2337 = vsel %vm546, %v2298, 0
        %v2340 = vsel %vm546, %v2299, 0
        %v2343 = vsel %vm546, %v2300, 0
        %v2346 = vsel %vm546, %v2301, 0
        %v2349 = vsel %vm546, %v2302, 0
        %v2352 = vsel %vm546, %v2303, 0
        %v2355 = vsel %vm546, %v2304, 0
        %v2358 = vsel %vm546, %v2305, 0
        %v2361 = vsel %vm546, %v2306, 0
        %v2364 = vsel %vm546, %v2307, 0
        %v2367 = vsel %vm546, %v2308, 0
        %v2370 = vsel %vm546, %v2309, 0
        %v2373 = vsel %vm546, %v2310, 0
        %v2376 = vsel %vm546, %v2311, 0
        %v2379 = vsel %vm546, %v2312, 0
        %v2382 = vsel %vm546, %v2313, 0
        %v2385 = vsel %vm546, %v2314, 0
        %v2388 = vsel %vm546, %v2315, 0
        %v2391 = vsel %vm546, %v2316, 0
        %v2394 = vsel %vm546, %v2317, 0
        %v2397 = vsel %vm546, %v2318, 0
        %v2400 = vsel %vm546, %v2319, 0
        %v2403 = vsel %vm546, %v2320, 0
        %v2406 = vsel %vm546, %v2321, 0
        %v2409 = vsel %vm546, %v2322, 0
        %v2412 = vsel %vm546, %v2323, 0
        %v2415 = vsel %vm546, %v2324, 0
        %v2418 = vsel %vm546, %v2325, 0
        %v2421 = vsel %vm546, %v2326, 0
        %v2424 = vsel %vm546, %v2327, 0
        %v2427 = vsel %vm546, %v2328, 0
        %2429 = vmatpush.msra.mxu0 0.0
        %2430 = vmatpush.msra.mxu0 0.0
        %2431 = vmatpush.msra.mxu0 0.0
        %2432 = vmatpush.msra.mxu0 0.0
        %2433 = vmatpush.msra.mxu0 0.0
        %2434 = vmatpush.msra.mxu0 0.0
        %2435 = vmatpush.msra.mxu0 0.0
        %2436 = vmatpush.msra.mxu0 0.0
        %2437 = vmatpush.msra.mxu0 0.0
        %2438 = vmatpush.msra.mxu0 0.0
        %2439 = vmatpush.msra.mxu0 0.0
        %2440 = vmatpush.msra.mxu0 0.0
        %2441 = vmatpush.msra.mxu0 %v2332
        %2442 = vmatpush.msra.mxu0 %v2331
        %2443 = vmatpush.msra.mxu0 %v2330
        %2444 = vmatpush.msra.mxu0 %v2329
        %2445 = vmatmul.f32.gmra.mxu0 %v2334
        %v2446 = vpop.f32.mrf.mxu0
        %v2447 = vadd.f32 0.0, %v2446
        %2448 = vmatmul.f32.gmra.mxu0 %v2337
        %v2449 = vpop.f32.mrf.mxu0
        %v2450 = vadd.f32 0.0, %v2449
        %2451 = vmatmul.f32.gmra.mxu0 %v2340
        %v2452 = vpop.f32.mrf.mxu0
        %v2453 = vadd.f32 0.0, %v2452
        %2454 = vmatmul.f32.gmra.mxu0 %v2343
        %v2455 = vpop.f32.mrf.mxu0
        %v2456 = vadd.f32 0.0, %v2455
        %2457 = vmatmul.f32.gmra.mxu0 %v2346
        %v2458 = vpop.f32.mrf.mxu0
        %v2459 = vadd.f32 0.0, %v2458
        %2460 = vmatmul.f32.gmra.mxu0 %v2349
        %v2461 = vpop.f32.mrf.mxu0
        %v2462 = vadd.f32 0.0, %v2461
        %2463 = vmatmul.f32.gmra.mxu0 %v2352
        %v2464 = vpop.f32.mrf.mxu0
        %v2465 = vadd.f32 0.0, %v2464
        %2466 = vmatmul.f32.gmra.mxu0 %v2355
        %v2467 = vpop.f32.mrf.mxu0
        %v2468 = vadd.f32 0.0, %v2467
        %2469 = vmatmul.f32.gmra.mxu0 %v2358
        %v2470 = vpop.f32.mrf.mxu0
        %v2471 = vadd.f32 0.0, %v2470
        %2472 = vmatmul.f32.gmra.mxu0 %v2361
        %v2473 = vpop.f32.mrf.mxu0
        %v2474 = vadd.f32 0.0, %v2473
        %2475 = vmatmul.f32.gmra.mxu0 %v2364
        %v2476 = vpop.f32.mrf.mxu0
        %v2477 = vadd.f32 0.0, %v2476
        %2478 = vmatmul.f32.gmra.mxu0 %v2367
        %v2479 = vpop.f32.mrf.mxu0
        %v2480 = vadd.f32 0.0, %v2479
        %2481 = vmatmul.f32.gmra.mxu0 %v2370
        %v2482 = vpop.f32.mrf.mxu0
        %v2483 = vadd.f32 0.0, %v2482
        %2484 = vmatmul.f32.gmra.mxu0 %v2373
        %v2485 = vpop.f32.mrf.mxu0
        %v2486 = vadd.f32 0.0, %v2485
        %2487 = vmatmul.f32.gmra.mxu0 %v2376
        %v2488 = vpop.f32.mrf.mxu0
        %v2489 = vadd.f32 0.0, %v2488
        %2490 = vmatmul.f32.gmra.mxu0 %v2379
        %v2491 = vpop.f32.mrf.mxu0
        %v2492 = vadd.f32 0.0, %v2491
        %2493 = vmatmul.f32.gmra.mxu0 %v2382
        %v2494 = vpop.f32.mrf.mxu0
        %v2495 = vadd.f32 0.0, %v2494
        %2496 = vmatmul.f32.gmra.mxu0 %v2385
        %v2497 = vpop.f32.mrf.mxu0
        %v2498 = vadd.f32 0.0, %v2497
        %2499 = vmatmul.f32.gmra.mxu0 %v2388
        %v2500 = vpop.f32.mrf.mxu0
        %v2501 = vadd.f32 0.0, %v2500
        %2502 = vmatmul.f32.gmra.mxu0 %v2391
        %v2503 = vpop.f32.mrf.mxu0
        %v2504 = vadd.f32 0.0, %v2503
        %2505 = vmatmul.f32.gmra.mxu0 %v2394
        %v2506 = vpop.f32.mrf.mxu0
        %v2507 = vadd.f32 0.0, %v2506
        %2508 = vmatmul.f32.gmra.mxu0 %v2397
        %v2509 = vpop.f32.mrf.mxu0
        %v2510 = vadd.f32 0.0, %v2509
        %2511 = vmatmul.f32.gmra.mxu0 %v2400
        %v2512 = vpop.f32.mrf.mxu0
        %v2513 = vadd.f32 0.0, %v2512
        %2514 = vmatmul.f32.gmra.mxu0 %v2403
        %v2515 = vpop.f32.mrf.mxu0
        %v2516 = vadd.f32 0.0, %v2515
        %2517 = vmatmul.f32.gmra.mxu0 %v2406
        %v2518 = vpop.f32.mrf.mxu0
        %v2519 = vadd.f32 0.0, %v2518
        %2520 = vmatmul.f32.gmra.mxu0 %v2409
        %v2521 = vpop.f32.mrf.mxu0
        %v2522 = vadd.f32 0.0, %v2521
        %2523 = vmatmul.f32.gmra.mxu0 %v2412
        %v2524 = vpop.f32.mrf.mxu0
        %v2525 = vadd.f32 0.0, %v2524
        %2526 = vmatmul.f32.gmra.mxu0 %v2415
        %v2527 = vpop.f32.mrf.mxu0
        %v2528 = vadd.f32 0.0, %v2527
        %2529 = vmatmul.f32.gmra.mxu0 %v2418
        %v2530 = vpop.f32.mrf.mxu0
        %v2531 = vadd.f32 0.0, %v2530
        %2532 = vmatmul.f32.gmra.mxu0 %v2421
        %v2533 = vpop.f32.mrf.mxu0
        %v2534 = vadd.f32 0.0, %v2533
        %2535 = vmatmul.f32.gmra.mxu0 %v2424
        %v2536 = vpop.f32.mrf.mxu0
        %v2537 = vadd.f32 0.0, %v2536
        %2538 = vmatmul.f32.gmra.mxu0 %v2427
        %v2539 = vpop.f32.mrf.mxu0
        %v2540 = vadd.f32 0.0, %v2539
        %2541 = vdwg.mxu0
        %v2542 = vld [vmem:[%s7] sm:$0x1]
        %v2543 = vld [vmem:[%s8] sm:$0x1]
        %v2545 = vperm.slane %v2542, 0
        %v2547 = vmul.f32 %v2447, %v2545
        %v2548 = vmul.f32 %v2450, %v2545
        %v2549 = vmul.f32 %v2453, %v2545
        %v2550 = vmul.f32 %v2456, %v2545
        %v2551 = vmul.f32 %v2459, %v2545
        %v2552 = vmul.f32 %v2462, %v2545
        %v2553 = vmul.f32 %v2465, %v2545
        %v2554 = vmul.f32 %v2468, %v2545
        %v2555 = vmul.f32 %v2471, %v2545
        %v2556 = vmul.f32 %v2474, %v2545
        %v2557 = vmul.f32 %v2477, %v2545
        %v2558 = vmul.f32 %v2480, %v2545
        %v2559 = vmul.f32 %v2483, %v2545
        %v2560 = vmul.f32 %v2486, %v2545
        %v2561 = vmul.f32 %v2489, %v2545
        %v2562 = vmul.f32 %v2492, %v2545
        %v2563 = vmul.f32 %v2495, %v2545
        %v2564 = vmul.f32 %v2498, %v2545
        %v2565 = vmul.f32 %v2501, %v2545
        %v2566 = vmul.f32 %v2504, %v2545
        %v2567 = vmul.f32 %v2507, %v2545
        %v2568 = vmul.f32 %v2510, %v2545
        %v2569 = vmul.f32 %v2513, %v2545
        %v2570 = vmul.f32 %v2516, %v2545
        %v2571 = vmul.f32 %v2519, %v2545
        %v2572 = vmul.f32 %v2522, %v2545
        %v2573 = vmul.f32 %v2525, %v2545
        %v2574 = vmul.f32 %v2528, %v2545
        %v2575 = vmul.f32 %v2531, %v2545
        %v2576 = vmul.f32 %v2534, %v2545
        %v2577 = vmul.f32 %v2537, %v2545
        %v2578 = vmul.f32 %v2540, %v2545
        %v2580 = vperm.slane %v2543, 0
        %v2582 = vadd.f32 %v2547, %v2580
        %v2583 = vadd.f32 %v2548, %v2580
        %v2584 = vadd.f32 %v2549, %v2580
        %v2585 = vadd.f32 %v2550, %v2580
        %v2586 = vadd.f32 %v2551, %v2580
        %v2587 = vadd.f32 %v2552, %v2580
        %v2588 = vadd.f32 %v2553, %v2580
        %v2589 = vadd.f32 %v2554, %v2580
        %v2590 = vadd.f32 %v2555, %v2580
        %v2591 = vadd.f32 %v2556, %v2580
        %v2592 = vadd.f32 %v2557, %v2580
        %v2593 = vadd.f32 %v2558, %v2580
        %v2594 = vadd.f32 %v2559, %v2580
        %v2595 = vadd.f32 %v2560, %v2580
        %v2596 = vadd.f32 %v2561, %v2580
        %v2597 = vadd.f32 %v2562, %v2580
        %v2598 = vadd.f32 %v2563, %v2580
        %v2599 = vadd.f32 %v2564, %v2580
        %v2600 = vadd.f32 %v2565, %v2580
        %v2601 = vadd.f32 %v2566, %v2580
        %v2602 = vadd.f32 %v2567, %v2580
        %v2603 = vadd.f32 %v2568, %v2580
        %v2604 = vadd.f32 %v2569, %v2580
        %v2605 = vadd.f32 %v2570, %v2580
        %v2606 = vadd.f32 %v2571, %v2580
        %v2607 = vadd.f32 %v2572, %v2580
        %v2608 = vadd.f32 %v2573, %v2580
        %v2609 = vadd.f32 %v2574, %v2580
        %v2610 = vadd.f32 %v2575, %v2580
        %v2611 = vadd.f32 %v2576, %v2580
        %v2612 = vadd.f32 %v2577, %v2580
        %v2613 = vadd.f32 %v2578, %v2580
        %v2614 = vmax.f32 %v2582, 0.0
        %v2615 = vmax.f32 %v2583, 0.0
        %v2616 = vmax.f32 %v2584, 0.0
        %v2617 = vmax.f32 %v2585, 0.0
        %v2618 = vmax.f32 %v2586, 0.0
        %v2619 = vmax.f32 %v2587, 0.0
        %v2620 = vmax.f32 %v2588, 0.0
        %v2621 = vmax.f32 %v2589, 0.0
        %v2622 = vmax.f32 %v2590, 0.0
        %v2623 = vmax.f32 %v2591, 0.0
        %v2624 = vmax.f32 %v2592, 0.0
        %v2625 = vmax.f32 %v2593, 0.0
        %v2626 = vmax.f32 %v2594, 0.0
        %v2627 = vmax.f32 %v2595, 0.0
        %v2628 = vmax.f32 %v2596, 0.0
        %v2629 = vmax.f32 %v2597, 0.0
        %v2630 = vmax.f32 %v2598, 0.0
        %v2631 = vmax.f32 %v2599, 0.0
        %v2632 = vmax.f32 %v2600, 0.0
        %v2633 = vmax.f32 %v2601, 0.0
        %v2634 = vmax.f32 %v2602, 0.0
        %v2635 = vmax.f32 %v2603, 0.0
        %v2636 = vmax.f32 %v2604, 0.0
        %v2637 = vmax.f32 %v2605, 0.0
        %v2638 = vmax.f32 %v2606, 0.0
        %v2639 = vmax.f32 %v2607, 0.0
        %v2640 = vmax.f32 %v2608, 0.0
        %v2641 = vmax.f32 %v2609, 0.0
        %v2642 = vmax.f32 %v2610, 0.0
        %v2643 = vmax.f32 %v2611, 0.0
        %v2644 = vmax.f32 %v2612, 0.0
        %v2645 = vmax.f32 %v2613, 0.0
        %2646 = vst.msk [vmem:[%s693 + $0x8] sm:$0xff] %vm546, %v2614
        %2647 = vst.msk [vmem:[%s693 + $0x10] sm:$0xff] %vm546, %v2615
        %2648 = vst.msk [vmem:[%s693 + $0x28] sm:$0xff] %vm546, %v2616
        %2649 = vst.msk [vmem:[%s693 + $0x30] sm:$0xff] %vm546, %v2617
        %2650 = vst.msk [vmem:[%s693 + $0x48] sm:$0xff] %vm546, %v2618
        %2651 = vst.msk [vmem:[%s693 + $0x50] sm:$0xff] %vm546, %v2619
        %2652 = vst.msk [vmem:[%s693 + $0x68] sm:$0xff] %vm546, %v2620
        %2653 = vst.msk [vmem:[%s693 + $0x70] sm:$0xff] %vm546, %v2621
        %2654 = vst.msk [vmem:[%s693 + $0x88] sm:$0xff] %vm546, %v2622
        %2655 = vst.msk [vmem:[%s693 + $0x90] sm:$0xff] %vm546, %v2623
        %2656 = vst.msk [vmem:[%s693 + $0xa8] sm:$0xff] %vm546, %v2624
        %2657 = vst.msk [vmem:[%s693 + $0xb0] sm:$0xff] %vm546, %v2625
        %2658 = vst.msk [vmem:[%s693 + $0xc8] sm:$0xff] %vm546, %v2626
        %2659 = vst.msk [vmem:[%s693 + $0xd0] sm:$0xff] %vm546, %v2627
        %2660 = vst.msk [vmem:[%s693 + $0xe8] sm:$0xff] %vm546, %v2628
        %2661 = vst.msk [vmem:[%s693 + $0xf0] sm:$0xff] %vm546, %v2629
        %2662 = vst.msk [vmem:[%s693 + $0x108] sm:$0xff] %vm546, %v2630
        %2663 = vst.msk [vmem:[%s693 + $0x110] sm:$0xff] %vm546, %v2631
        %2664 = vst.msk [vmem:[%s693 + $0x128] sm:$0xff] %vm546, %v2632
        %2665 = vst.msk [vmem:[%s693 + $0x130] sm:$0xff] %vm546, %v2633
        %2666 = vst.msk [vmem:[%s693 + $0x148] sm:$0xff] %vm546, %v2634
        %2667 = vst.msk [vmem:[%s693 + $0x150] sm:$0xff] %vm546, %v2635
        %2668 = vst.msk [vmem:[%s693 + $0x168] sm:$0xff] %vm546, %v2636
        %2669 = vst.msk [vmem:[%s693 + $0x170] sm:$0xff] %vm546, %v2637
        %2670 = vst.msk [vmem:[%s693 + $0x188] sm:$0xff] %vm546, %v2638
        %2671 = vst.msk [vmem:[%s693 + $0x190] sm:$0xff] %vm546, %v2639
        %2672 = vst.msk [vmem:[%s693 + $0x1a8] sm:$0xff] %vm546, %v2640
        %2673 = vst.msk [vmem:[%s693 + $0x1b0] sm:$0xff] %vm546, %v2641
        %2674 = vst.msk [vmem:[%s693 + $0x1c8] sm:$0xff] %vm546, %v2642
        %2675 = vst.msk [vmem:[%s693 + $0x1d0] sm:$0xff] %vm546, %v2643
        %2676 = vst.msk [vmem:[%s693 + $0x1e8] sm:$0xff] %vm546, %v2644
        %2677 = vst.msk [vmem:[%s693 + $0x1f0] sm:$0xff] %vm546, %v2645
        %v2678 = vld [vmem:[%s9] sm:$0xff]
        %v2679 = vld [vmem:[%s9 + $0x8] sm:$0xff]
        %v2680 = vld [vmem:[%s9 + $0x10] sm:$0xff]
        %v2681 = vld [vmem:[%s9 + $0x18] sm:$0xff]
        %v2682 = vld [vmem:[%s9 + $0x20] sm:$0xff]
        %v2683 = vld [vmem:[%s9 + $0x28] sm:$0xff]
        %v2684 = vld [vmem:[%s9 + $0x30] sm:$0xff]
        %v2685 = vld [vmem:[%s9 + $0x38] sm:$0xff]
        %v2686 = vld [vmem:[%s9 + $0x40] sm:$0xff]
        %v2687 = vld [vmem:[%s9 + $0x48] sm:$0xff]
        %v2688 = vld [vmem:[%s9 + $0x50] sm:$0xff]
        %v2689 = vld [vmem:[%s9 + $0x58] sm:$0xff]
        %v2690 = vld [vmem:[%s9 + $0x60] sm:$0xff]
        %v2691 = vld [vmem:[%s9 + $0x68] sm:$0xff]
        %v2692 = vld [vmem:[%s9 + $0x70] sm:$0xff]
        %v2693 = vld [vmem:[%s9 + $0x78] sm:$0xff]
        %v2694 = vld [vmem:[%s9 + $0x80] sm:$0xff]
        %v2695 = vld [vmem:[%s9 + $0x88] sm:$0xff]
        %v2696 = vld [vmem:[%s9 + $0x90] sm:$0xff]
        %v2697 = vld [vmem:[%s9 + $0x98] sm:$0xff]
        %v2698 = vld [vmem:[%s9 + $0xa0] sm:$0xff]
        %v2699 = vld [vmem:[%s9 + $0xa8] sm:$0xff]
        %v2700 = vld [vmem:[%s9 + $0xb0] sm:$0xff]
        %v2701 = vld [vmem:[%s9 + $0xb8] sm:$0xff]
        %v2702 = vld [vmem:[%s9 + $0xc0] sm:$0xff]
        %v2703 = vld [vmem:[%s9 + $0xc8] sm:$0xff]
        %v2704 = vld [vmem:[%s9 + $0xd0] sm:$0xff]
        %v2705 = vld [vmem:[%s9 + $0xd8] sm:$0xff]
        %v2706 = vld [vmem:[%s9 + $0xe0] sm:$0xff]
        %v2707 = vld [vmem:[%s9 + $0xe8] sm:$0xff]
        %v2708 = vld [vmem:[%s9 + $0xf0] sm:$0xff]
        %v2709 = vld [vmem:[%s9 + $0xf8] sm:$0xff]
        %v2710 = vld [vmem:[%s9 + $0x100] sm:$0xff]
        %v2711 = vld [vmem:[%s9 + $0x108] sm:$0xff]
        %v2712 = vld [vmem:[%s9 + $0x110] sm:$0xff]
        %v2713 = vld [vmem:[%s9 + $0x118] sm:$0xff]
        %v2714 = vld [vmem:[#allocation4] sm:$0xff]
        %v2715 = vld [vmem:[#allocation4 + $0x8] sm:$0xff]
        %v2716 = vld [vmem:[#allocation4 + $0x10] sm:$0xff]
        %v2717 = vld [vmem:[#allocation4 + $0x18] sm:$0x1]
        %v2718 = vld [vmem:[#allocation4 + $0x20] sm:$0xff]
        %v2719 = vld [vmem:[#allocation4 + $0x28] sm:$0xff]
        %v2720 = vld [vmem:[#allocation4 + $0x30] sm:$0xff]
        %v2721 = vld [vmem:[#allocation4 + $0x38] sm:$0x1]
        %v2722 = vld [vmem:[#allocation4 + $0x40] sm:$0xff]
        %v2723 = vld [vmem:[#allocation4 + $0x48] sm:$0xff]
        %v2724 = vld [vmem:[#allocation4 + $0x50] sm:$0xff]
        %v2725 = vld [vmem:[#allocation4 + $0x58] sm:$0x1]
        %v2726 = vld [vmem:[#allocation4 + $0x60] sm:$0xff]
        %v2727 = vld [vmem:[#allocation4 + $0x68] sm:$0xff]
        %v2728 = vld [vmem:[#allocation4 + $0x70] sm:$0xff]
        %v2729 = vld [vmem:[#allocation4 + $0x78] sm:$0x1]
        %v2730 = vld [vmem:[#allocation4 + $0x80] sm:$0xff]
        %v2731 = vld [vmem:[#allocation4 + $0x88] sm:$0xff]
        %v2732 = vld [vmem:[#allocation4 + $0x90] sm:$0xff]
        %v2733 = vld [vmem:[#allocation4 + $0x98] sm:$0x1]
        %v2734 = vld [vmem:[#allocation4 + $0xa0] sm:$0xff]
        %v2735 = vld [vmem:[#allocation4 + $0xa8] sm:$0xff]
        %v2736 = vld [vmem:[#allocation4 + $0xb0] sm:$0xff]
        %v2737 = vld [vmem:[#allocation4 + $0xb8] sm:$0x1]
        %v2738 = vld [vmem:[#allocation4 + $0xc0] sm:$0xff]
        %v2739 = vld [vmem:[#allocation4 + $0xc8] sm:$0xff]
        %v2740 = vld [vmem:[#allocation4 + $0xd0] sm:$0xff]
        %v2741 = vld [vmem:[#allocation4 + $0xd8] sm:$0x1]
        %v2742 = vld [vmem:[#allocation4 + $0xe0] sm:$0xff]
        %v2743 = vld [vmem:[#allocation4 + $0xe8] sm:$0xff]
        %v2744 = vld [vmem:[#allocation4 + $0xf0] sm:$0xff]
        %v2745 = vld [vmem:[#allocation4 + $0xf8] sm:$0x1]
        %v2746 = vld [vmem:[#allocation4 + $0x100] sm:$0xff]
        %v2747 = vld [vmem:[#allocation4 + $0x108] sm:$0xff]
        %v2748 = vld [vmem:[#allocation4 + $0x110] sm:$0xff]
        %v2749 = vld [vmem:[#allocation4 + $0x118] sm:$0x1]
        %v2750 = vld [vmem:[#allocation4 + $0x120] sm:$0xff]
        %v2751 = vld [vmem:[#allocation4 + $0x128] sm:$0xff]
        %v2752 = vld [vmem:[#allocation4 + $0x130] sm:$0xff]
        %v2753 = vld [vmem:[#allocation4 + $0x138] sm:$0x1]
        %v2754 = vld [vmem:[#allocation4 + $0x140] sm:$0xff]
        %v2755 = vld [vmem:[#allocation4 + $0x148] sm:$0xff]
        %v2756 = vld [vmem:[#allocation4 + $0x150] sm:$0xff]
        %v2757 = vld [vmem:[#allocation4 + $0x158] sm:$0x1]
        %v2758 = vld [vmem:[#allocation4 + $0x160] sm:$0xff]
        %v2759 = vld [vmem:[#allocation4 + $0x168] sm:$0xff]
        %v2760 = vld [vmem:[#allocation4 + $0x170] sm:$0xff]
        %v2761 = vld [vmem:[#allocation4 + $0x178] sm:$0x1]
        %v2762 = vld [vmem:[#allocation4 + $0x180] sm:$0xff]
        %v2763 = vld [vmem:[#allocation4 + $0x188] sm:$0xff]
        %v2764 = vld [vmem:[#allocation4 + $0x190] sm:$0xff]
        %v2765 = vld [vmem:[#allocation4 + $0x198] sm:$0x1]
        %v2766 = vld [vmem:[#allocation4 + $0x1a0] sm:$0xff]
        %v2767 = vld [vmem:[#allocation4 + $0x1a8] sm:$0xff]
        %v2768 = vld [vmem:[#allocation4 + $0x1b0] sm:$0xff]
        %v2769 = vld [vmem:[#allocation4 + $0x1b8] sm:$0x1]
        %v2770 = vld [vmem:[#allocation4 + $0x1c0] sm:$0xff]
        %v2771 = vld [vmem:[#allocation4 + $0x1c8] sm:$0xff]
        %v2772 = vld [vmem:[#allocation4 + $0x1d0] sm:$0xff]
        %v2773 = vld [vmem:[#allocation4 + $0x1d8] sm:$0x1]
        %v2774 = vld [vmem:[#allocation4 + $0x1e0] sm:$0xff]
        %v2775 = vld [vmem:[#allocation4 + $0x1e8] sm:$0xff]
        %v2776 = vld [vmem:[#allocation4 + $0x1f0] sm:$0xff]
        %v2777 = vld [vmem:[#allocation4 + $0x1f8] sm:$0x1]
        %v2778 = vld [vmem:[#allocation4 + $0x200] sm:$0xff]
        %v2779 = vld [vmem:[#allocation4 + $0x208] sm:$0xff]
        %v2780 = vld [vmem:[#allocation4 + $0x210] sm:$0xff]
        %v2781 = vld [vmem:[#allocation4 + $0x218] sm:$0x1]
        %v2782 = vld [vmem:[#allocation4 + $0x220] sm:$0xff]
        %v2783 = vld [vmem:[#allocation4 + $0x228] sm:$0xff]
        %v2784 = vld [vmem:[#allocation4 + $0x230] sm:$0xff]
        %v2785 = vld [vmem:[#allocation4 + $0x238] sm:$0x1]
        %v2822 = vrot.slane %v2715, 1
        %v2823 = vrot.slane %v2716, 1
        %v2824 = vsel %vm870, %v2822, %v2823
        %v2825 = vrot.slane %v2719, 1
        %v2826 = vrot.slane %v2720, 1
        %v2827 = vsel %vm870, %v2825, %v2826
        %v2828 = vrot.slane %v2723, 1
        %v2829 = vrot.slane %v2724, 1
        %v2830 = vsel %vm870, %v2828, %v2829
        %v2831 = vrot.slane %v2727, 1
        %v2832 = vrot.slane %v2728, 1
        %v2833 = vsel %vm870, %v2831, %v2832
        %v2834 = vrot.slane %v2731, 1
        %v2835 = vrot.slane %v2732, 1
        %v2836 = vsel %vm870, %v2834, %v2835
        %v2837 = vrot.slane %v2735, 1
        %v2838 = vrot.slane %v2736, 1
        %v2839 = vsel %vm870, %v2837, %v2838
        %v2840 = vrot.slane %v2739, 1
        %v2841 = vrot.slane %v2740, 1
        %v2842 = vsel %vm870, %v2840, %v2841
        %v2843 = vrot.slane %v2743, 1
        %v2844 = vrot.slane %v2744, 1
        %v2845 = vsel %vm870, %v2843, %v2844
        %v2846 = vrot.slane %v2747, 1
        %v2847 = vrot.slane %v2748, 1
        %v2848 = vsel %vm870, %v2846, %v2847
        %v2849 = vrot.slane %v2751, 1
        %v2850 = vrot.slane %v2752, 1
        %v2851 = vsel %vm870, %v2849, %v2850
        %v2852 = vrot.slane %v2755, 1
        %v2853 = vrot.slane %v2756, 1
        %v2854 = vsel %vm870, %v2852, %v2853
        %v2855 = vrot.slane %v2759, 1
        %v2856 = vrot.slane %v2760, 1
        %v2857 = vsel %vm870, %v2855, %v2856
        %v2858 = vrot.slane %v2763, 1
        %v2859 = vrot.slane %v2764, 1
        %v2860 = vsel %vm870, %v2858, %v2859
        %v2861 = vrot.slane %v2767, 1
        %v2862 = vrot.slane %v2768, 1
        %v2863 = vsel %vm870, %v2861, %v2862
        %v2864 = vrot.slane %v2771, 1
        %v2865 = vrot.slane %v2772, 1
        %v2866 = vsel %vm870, %v2864, %v2865
        %v2867 = vrot.slane %v2775, 1
        %v2868 = vrot.slane %v2776, 1
        %v2869 = vsel %vm870, %v2867, %v2868
        %v2870 = vrot.slane %v2779, 1
        %v2871 = vrot.slane %v2780, 1
        %v2872 = vsel %vm870, %v2870, %v2871
        %v2873 = vrot.slane %v2783, 1
        %v2874 = vrot.slane %v2784, 1
        %v2875 = vsel %vm870, %v2873, %v2874
        %2876 = vrot.lane.b32.xlu0 %v2822, 32
        %v2877 = vpop.permute.xlu0 %2876
        %2878 = vrot.lane.b32.xlu0 %v2824, 32
        %v2879 = vpop.permute.xlu0 %2878
        %2880 = vrot.lane.b32.xlu0 %v2823, 32
        %v2881 = vpop.permute.xlu0 %2880
        %2882 = vrot.lane.b32.xlu0 %v2825, 32
        %v2883 = vpop.permute.xlu0 %2882
        %2884 = vrot.lane.b32.xlu0 %v2827, 32
        %v2885 = vpop.permute.xlu0 %2884
        %2886 = vrot.lane.b32.xlu0 %v2826, 32
        %v2887 = vpop.permute.xlu0 %2886
        %2888 = vrot.lane.b32.xlu0 %v2828, 32
        %v2889 = vpop.permute.xlu0 %2888
        %2890 = vrot.lane.b32.xlu0 %v2830, 32
        %v2891 = vpop.permute.xlu0 %2890
        %2892 = vrot.lane.b32.xlu0 %v2829, 32
        %v2893 = vpop.permute.xlu0 %2892
        %2894 = vrot.lane.b32.xlu0 %v2831, 32
        %v2895 = vpop.permute.xlu0 %2894
        %2896 = vrot.lane.b32.xlu0 %v2833, 32
        %v2897 = vpop.permute.xlu0 %2896
        %2898 = vrot.lane.b32.xlu0 %v2832, 32
        %v2899 = vpop.permute.xlu0 %2898
        %2900 = vrot.lane.b32.xlu0 %v2834, 32
        %v2901 = vpop.permute.xlu0 %2900
        %2902 = vrot.lane.b32.xlu0 %v2836, 32
        %v2903 = vpop.permute.xlu0 %2902
        %2904 = vrot.lane.b32.xlu0 %v2835, 32
        %v2905 = vpop.permute.xlu0 %2904
        %2906 = vrot.lane.b32.xlu0 %v2837, 32
        %v2907 = vpop.permute.xlu0 %2906
        %2908 = vrot.lane.b32.xlu0 %v2839, 32
        %v2909 = vpop.permute.xlu0 %2908
        %2910 = vrot.lane.b32.xlu0 %v2838, 32
        %v2911 = vpop.permute.xlu0 %2910
        %2912 = vrot.lane.b32.xlu0 %v2840, 32
        %v2913 = vpop.permute.xlu0 %2912
        %2914 = vrot.lane.b32.xlu0 %v2842, 32
        %v2915 = vpop.permute.xlu0 %2914
        %2916 = vrot.lane.b32.xlu0 %v2841, 32
        %v2917 = vpop.permute.xlu0 %2916
        %2918 = vrot.lane.b32.xlu0 %v2843, 32
        %v2919 = vpop.permute.xlu0 %2918
        %2920 = vrot.lane.b32.xlu0 %v2845, 32
        %v2921 = vpop.permute.xlu0 %2920
        %2922 = vrot.lane.b32.xlu0 %v2844, 32
        %v2923 = vpop.permute.xlu0 %2922
        %2924 = vrot.lane.b32.xlu0 %v2846, 32
        %v2925 = vpop.permute.xlu0 %2924
        %2926 = vrot.lane.b32.xlu0 %v2848, 32
        %v2927 = vpop.permute.xlu0 %2926
        %2928 = vrot.lane.b32.xlu0 %v2847, 32
        %v2929 = vpop.permute.xlu0 %2928
        %2930 = vrot.lane.b32.xlu0 %v2849, 32
        %v2931 = vpop.permute.xlu0 %2930
        %2932 = vrot.lane.b32.xlu0 %v2851, 32
        %v2933 = vpop.permute.xlu0 %2932
        %2934 = vrot.lane.b32.xlu0 %v2850, 32
        %v2935 = vpop.permute.xlu0 %2934
        %2936 = vrot.lane.b32.xlu0 %v2852, 32
        %v2937 = vpop.permute.xlu0 %2936
        %2938 = vrot.lane.b32.xlu0 %v2854, 32
        %v2939 = vpop.permute.xlu0 %2938
        %2940 = vrot.lane.b32.xlu0 %v2853, 32
        %v2941 = vpop.permute.xlu0 %2940
        %2942 = vrot.lane.b32.xlu0 %v2855, 32
        %v2943 = vpop.permute.xlu0 %2942
        %2944 = vrot.lane.b32.xlu0 %v2857, 32
        %v2945 = vpop.permute.xlu0 %2944
        %2946 = vrot.lane.b32.xlu0 %v2856, 32
        %v2947 = vpop.permute.xlu0 %2946
        %2948 = vrot.lane.b32.xlu0 %v2858, 32
        %v2949 = vpop.permute.xlu0 %2948
        %2950 = vrot.lane.b32.xlu0 %v2860, 32
        %v2951 = vpop.permute.xlu0 %2950
        %2952 = vrot.lane.b32.xlu0 %v2859, 32
        %v2953 = vpop.permute.xlu0 %2952
        %2954 = vrot.lane.b32.xlu0 %v2861, 32
        %v2955 = vpop.permute.xlu0 %2954
        %2956 = vrot.lane.b32.xlu0 %v2863, 32
        %v2957 = vpop.permute.xlu0 %2956
        %2958 = vrot.lane.b32.xlu0 %v2862, 32
        %v2959 = vpop.permute.xlu0 %2958
        %2960 = vrot.lane.b32.xlu0 %v2864, 32
        %v2961 = vpop.permute.xlu0 %2960
        %2962 = vrot.lane.b32.xlu0 %v2866, 32
        %v2963 = vpop.permute.xlu0 %2962
        %2964 = vrot.lane.b32.xlu0 %v2865, 32
        %v2965 = vpop.permute.xlu0 %2964
        %2966 = vrot.lane.b32.xlu0 %v2867, 32
        %v2967 = vpop.permute.xlu0 %2966
        %2968 = vrot.lane.b32.xlu0 %v2869, 32
        %v2969 = vpop.permute.xlu0 %2968
        %2970 = vrot.lane.b32.xlu0 %v2868, 32
        %v2971 = vpop.permute.xlu0 %2970
        %2972 = vrot.lane.b32.xlu0 %v2870, 32
        %v2973 = vpop.permute.xlu0 %2972
        %2974 = vrot.lane.b32.xlu0 %v2872, 32
        %v2975 = vpop.permute.xlu0 %2974
        %2976 = vrot.lane.b32.xlu0 %v2871, 32
        %v2977 = vpop.permute.xlu0 %2976
        %2978 = vrot.lane.b32.xlu0 %v2873, 32
        %v2979 = vpop.permute.xlu0 %2978
        %2980 = vrot.lane.b32.xlu0 %v2875, 32
        %v2981 = vpop.permute.xlu0 %2980
        %2982 = vrot.lane.b32.xlu0 %v2874, 32
        %v2983 = vpop.permute.xlu0 %2982
        %v3056 = vrot.slane %v2715, 2
        %v3057 = vrot.slane %v2716, 2
        %v3058 = vsel %vm1105, %v3056, %v3057
        %v3059 = vrot.slane %v2717, 2
        %v3060 = vsel %vm1105, %v3057, %v3059
        %v3061 = vrot.slane %v2719, 2
        %v3062 = vrot.slane %v2720, 2
        %v3063 = vsel %vm1105, %v3061, %v3062
        %v3064 = vrot.slane %v2721, 2
        %v3065 = vsel %vm1105, %v3062, %v3064
        %v3066 = vrot.slane %v2723, 2
        %v3067 = vrot.slane %v2724, 2
        %v3068 = vsel %vm1105, %v3066, %v3067
        %v3069 = vrot.slane %v2725, 2
        %v3070 = vsel %vm1105, %v3067, %v3069
        %v3071 = vrot.slane %v2727, 2
        %v3072 = vrot.slane %v2728, 2
        %v3073 = vsel %vm1105, %v3071, %v3072
        %v3074 = vrot.slane %v2729, 2
        %v3075 = vsel %vm1105, %v3072, %v3074
        %v3076 = vrot.slane %v2731, 2
        %v3077 = vrot.slane %v2732, 2
        %v3078 = vsel %vm1105, %v3076, %v3077
        %v3079 = vrot.slane %v2733, 2
        %v3080 = vsel %vm1105, %v3077, %v3079
        %v3081 = vrot.slane %v2735, 2
        %v3082 = vrot.slane %v2736, 2
        %v3083 = vsel %vm1105, %v3081, %v3082
        %v3084 = vrot.slane %v2737, 2
        %v3085 = vsel %vm1105, %v3082, %v3084
        %v3086 = vrot.slane %v2739, 2
        %v3087 = vrot.slane %v2740, 2
        %v3088 = vsel %vm1105, %v3086, %v3087
        %v3089 = vrot.slane %v2741, 2
        %v3090 = vsel %vm1105, %v3087, %v3089
        %v3091 = vrot.slane %v2743, 2
        %v3092 = vrot.slane %v2744, 2
        %v3093 = vsel %vm1105, %v3091, %v3092
        %v3094 = vrot.slane %v2745, 2
        %v3095 = vsel %vm1105, %v3092, %v3094
        %v3096 = vrot.slane %v2747, 2
        %v3097 = vrot.slane %v2748, 2
        %v3098 = vsel %vm1105, %v3096, %v3097
        %v3099 = vrot.slane %v2749, 2
        %v3100 = vsel %vm1105, %v3097, %v3099
        %v3101 = vrot.slane %v2751, 2
        %v3102 = vrot.slane %v2752, 2
        %v3103 = vsel %vm1105, %v3101, %v3102
        %v3104 = vrot.slane %v2753, 2
        %v3105 = vsel %vm1105, %v3102, %v3104
        %v3106 = vrot.slane %v2755, 2
        %v3107 = vrot.slane %v2756, 2
        %v3108 = vsel %vm1105, %v3106, %v3107
        %v3109 = vrot.slane %v2757, 2
        %v3110 = vsel %vm1105, %v3107, %v3109
        %v3111 = vrot.slane %v2759, 2
        %v3112 = vrot.slane %v2760, 2
        %v3113 = vsel %vm1105, %v3111, %v3112
        %v3114 = vrot.slane %v2761, 2
        %v3115 = vsel %vm1105, %v3112, %v3114
        %v3116 = vrot.slane %v2763, 2
        %v3117 = vrot.slane %v2764, 2
        %v3118 = vsel %vm1105, %v3116, %v3117
        %v3119 = vrot.slane %v2765, 2
        %v3120 = vsel %vm1105, %v3117, %v3119
        %v3121 = vrot.slane %v2767, 2
        %v3122 = vrot.slane %v2768, 2
        %v3123 = vsel %vm1105, %v3121, %v3122
        %v3124 = vrot.slane %v2769, 2
        %v3125 = vsel %vm1105, %v3122, %v3124
        %v3126 = vrot.slane %v2771, 2
        %v3127 = vrot.slane %v2772, 2
        %v3128 = vsel %vm1105, %v3126, %v3127
        %v3129 = vrot.slane %v2773, 2
        %v3130 = vsel %vm1105, %v3127, %v3129
        %v3131 = vrot.slane %v2775, 2
        %v3132 = vrot.slane %v2776, 2
        %v3133 = vsel %vm1105, %v3131, %v3132
        %v3134 = vrot.slane %v2777, 2
        %v3135 = vsel %vm1105, %v3132, %v3134
        %v3136 = vrot.slane %v2779, 2
        %v3137 = vrot.slane %v2780, 2
        %v3138 = vsel %vm1105, %v3136, %v3137
        %v3139 = vrot.slane %v2781, 2
        %v3140 = vsel %vm1105, %v3137, %v3139
        %v3141 = vrot.slane %v2783, 2
        %v3142 = vrot.slane %v2784, 2
        %v3143 = vsel %vm1105, %v3141, %v3142
        %v3144 = vrot.slane %v2785, 2
        %v3145 = vsel %vm1105, %v3142, %v3144
        %3146 = vrot.lane.b32.xlu0 %v3056, 64
        %v3147 = vpop.permute.xlu0 %3146
        %3148 = vrot.lane.b32.xlu0 %v3058, 64
        %v3149 = vpop.permute.xlu0 %3148
        %3150 = vrot.lane.b32.xlu0 %v3060, 64
        %v3151 = vpop.permute.xlu0 %3150
        %3152 = vrot.lane.b32.xlu0 %v3061, 64
        %v3153 = vpop.permute.xlu0 %3152
        %3154 = vrot.lane.b32.xlu0 %v3063, 64
        %v3155 = vpop.permute.xlu0 %3154
        %3156 = vrot.lane.b32.xlu0 %v3065, 64
        %v3157 = vpop.permute.xlu0 %3156
        %3158 = vrot.lane.b32.xlu0 %v3066, 64
        %v3159 = vpop.permute.xlu0 %3158
        %3160 = vrot.lane.b32.xlu0 %v3068, 64
        %v3161 = vpop.permute.xlu0 %3160
        %3162 = vrot.lane.b32.xlu0 %v3070, 64
        %v3163 = vpop.permute.xlu0 %3162
        %3164 = vrot.lane.b32.xlu0 %v3071, 64
        %v3165 = vpop.permute.xlu0 %3164
        %3166 = vrot.lane.b32.xlu0 %v3073, 64
        %v3167 = vpop.permute.xlu0 %3166
        %3168 = vrot.lane.b32.xlu0 %v3075, 64
        %v3169 = vpop.permute.xlu0 %3168
        %3170 = vrot.lane.b32.xlu0 %v3076, 64
        %v3171 = vpop.permute.xlu0 %3170
        %3172 = vrot.lane.b32.xlu0 %v3078, 64
        %v3173 = vpop.permute.xlu0 %3172
        %3174 = vrot.lane.b32.xlu0 %v3080, 64
        %v3175 = vpop.permute.xlu0 %3174
        %3176 = vrot.lane.b32.xlu0 %v3081, 64
        %v3177 = vpop.permute.xlu0 %3176
        %3178 = vrot.lane.b32.xlu0 %v3083, 64
        %v3179 = vpop.permute.xlu0 %3178
        %3180 = vrot.lane.b32.xlu0 %v3085, 64
        %v3181 = vpop.permute.xlu0 %3180
        %3182 = vrot.lane.b32.xlu0 %v3086, 64
        %v3183 = vpop.permute.xlu0 %3182
        %3184 = vrot.lane.b32.xlu0 %v3088, 64
        %v3185 = vpop.permute.xlu0 %3184
        %3186 = vrot.lane.b32.xlu0 %v3090, 64
        %v3187 = vpop.permute.xlu0 %3186
        %3188 = vrot.lane.b32.xlu0 %v3091, 64
        %v3189 = vpop.permute.xlu0 %3188
        %3190 = vrot.lane.b32.xlu0 %v3093, 64
        %v3191 = vpop.permute.xlu0 %3190
        %3192 = vrot.lane.b32.xlu0 %v3095, 64
        %v3193 = vpop.permute.xlu0 %3192
        %3194 = vrot.lane.b32.xlu0 %v3096, 64
        %v3195 = vpop.permute.xlu0 %3194
        %3196 = vrot.lane.b32.xlu0 %v3098, 64
        %v3197 = vpop.permute.xlu0 %3196
        %3198 = vrot.lane.b32.xlu0 %v3100, 64
        %v3199 = vpop.permute.xlu0 %3198
        %3200 = vrot.lane.b32.xlu0 %v3101, 64
        %v3201 = vpop.permute.xlu0 %3200
        %3202 = vrot.lane.b32.xlu0 %v3103, 64
        %v3203 = vpop.permute.xlu0 %3202
        %3204 = vrot.lane.b32.xlu0 %v3105, 64
        %v3205 = vpop.permute.xlu0 %3204
        %3206 = vrot.lane.b32.xlu0 %v3106, 64
        %v3207 = vpop.permute.xlu0 %3206
        %3208 = vrot.lane.b32.xlu0 %v3108, 64
        %v3209 = vpop.permute.xlu0 %3208
        %3210 = vrot.lane.b32.xlu0 %v3110, 64
        %v3211 = vpop.permute.xlu0 %3210
        %3212 = vrot.lane.b32.xlu0 %v3111, 64
        %v3213 = vpop.permute.xlu0 %3212
        %3214 = vrot.lane.b32.xlu0 %v3113, 64
        %v3215 = vpop.permute.xlu0 %3214
        %3216 = vrot.lane.b32.xlu0 %v3115, 64
        %v3217 = vpop.permute.xlu0 %3216
        %3218 = vrot.lane.b32.xlu0 %v3116, 64
        %v3219 = vpop.permute.xlu0 %3218
        %3220 = vrot.lane.b32.xlu0 %v3118, 64
        %v3221 = vpop.permute.xlu0 %3220
        %3222 = vrot.lane.b32.xlu0 %v3120, 64
        %v3223 = vpop.permute.xlu0 %3222
        %3224 = vrot.lane.b32.xlu0 %v3121, 64
        %v3225 = vpop.permute.xlu0 %3224
        %3226 = vrot.lane.b32.xlu0 %v3123, 64
        %v3227 = vpop.permute.xlu0 %3226
        %3228 = vrot.lane.b32.xlu0 %v3125, 64
        %v3229 = vpop.permute.xlu0 %3228
        %3230 = vrot.lane.b32.xlu0 %v3126, 64
        %v3231 = vpop.permute.xlu0 %3230
        %3232 = vrot.lane.b32.xlu0 %v3128, 64
        %v3233 = vpop.permute.xlu0 %3232
        %3234 = vrot.lane.b32.xlu0 %v3130, 64
        %v3235 = vpop.permute.xlu0 %3234
        %3236 = vrot.lane.b32.xlu0 %v3131, 64
        %v3237 = vpop.permute.xlu0 %3236
        %3238 = vrot.lane.b32.xlu0 %v3133, 64
        %v3239 = vpop.permute.xlu0 %3238
        %3240 = vrot.lane.b32.xlu0 %v3135, 64
        %v3241 = vpop.permute.xlu0 %3240
        %3242 = vrot.lane.b32.xlu0 %v3136, 64
        %v3243 = vpop.permute.xlu0 %3242
        %3244 = vrot.lane.b32.xlu0 %v3138, 64
        %v3245 = vpop.permute.xlu0 %3244
        %3246 = vrot.lane.b32.xlu0 %v3140, 64
        %v3247 = vpop.permute.xlu0 %3246
        %3248 = vrot.lane.b32.xlu0 %v3141, 64
        %v3249 = vpop.permute.xlu0 %3248
        %3250 = vrot.lane.b32.xlu0 %v3143, 64
        %v3251 = vpop.permute.xlu0 %3250
        %3252 = vrot.lane.b32.xlu0 %v3145, 64
        %v3253 = vpop.permute.xlu0 %3252
        %v3308 = vsel %vm546, %v2714, %v2877
        %v3309 = vsel %vm546, %v2715, %v2879
        %v3310 = vsel %vm546, %v2716, %v2881
        %v3311 = vsel %vm546, %v2718, %v2883
        %v3312 = vsel %vm546, %v2719, %v2885
        %v3313 = vsel %vm546, %v2720, %v2887
        %v3314 = vsel %vm546, %v2722, %v2889
        %v3315 = vsel %vm546, %v2723, %v2891
        %v3316 = vsel %vm546, %v2724, %v2893
        %v3317 = vsel %vm546, %v2726, %v2895
        %v3318 = vsel %vm546, %v2727, %v2897
        %v3319 = vsel %vm546, %v2728, %v2899
        %v3320 = vsel %vm546, %v2730, %v2901
        %v3321 = vsel %vm546, %v2731, %v2903
        %v3322 = vsel %vm546, %v2732, %v2905
        %v3323 = vsel %vm546, %v2734, %v2907
        %v3324 = vsel %vm546, %v2735, %v2909
        %v3325 = vsel %vm546, %v2736, %v2911
        %v3326 = vsel %vm546, %v2738, %v2913
        %v3327 = vsel %vm546, %v2739, %v2915
        %v3328 = vsel %vm546, %v2740, %v2917
        %v3329 = vsel %vm546, %v2742, %v2919
        %v3330 = vsel %vm546, %v2743, %v2921
        %v3331 = vsel %vm546, %v2744, %v2923
        %v3332 = vsel %vm546, %v2746, %v2925
        %v3333 = vsel %vm546, %v2747, %v2927
        %v3334 = vsel %vm546, %v2748, %v2929
        %v3335 = vsel %vm546, %v2750, %v2931
        %v3336 = vsel %vm546, %v2751, %v2933
        %v3337 = vsel %vm546, %v2752, %v2935
        %v3338 = vsel %vm546, %v2754, %v2937
        %v3339 = vsel %vm546, %v2755, %v2939
        %v3340 = vsel %vm546, %v2756, %v2941
        %v3341 = vsel %vm546, %v2758, %v2943
        %v3342 = vsel %vm546, %v2759, %v2945
        %v3343 = vsel %vm546, %v2760, %v2947
        %v3344 = vsel %vm546, %v2762, %v2949
        %v3345 = vsel %vm546, %v2763, %v2951
        %v3346 = vsel %vm546, %v2764, %v2953
        %v3347 = vsel %vm546, %v2766, %v2955
        %v3348 = vsel %vm546, %v2767, %v2957
        %v3349 = vsel %vm546, %v2768, %v2959
        %v3350 = vsel %vm546, %v2770, %v2961
        %v3351 = vsel %vm546, %v2771, %v2963
        %v3352 = vsel %vm546, %v2772, %v2965
        %v3353 = vsel %vm546, %v2774, %v2967
        %v3354 = vsel %vm546, %v2775, %v2969
        %v3355 = vsel %vm546, %v2776, %v2971
        %v3356 = vsel %vm546, %v2778, %v2973
        %v3357 = vsel %vm546, %v2779, %v2975
        %v3358 = vsel %vm546, %v2780, %v2977
        %v3359 = vsel %vm546, %v2782, %v2979
        %v3360 = vsel %vm546, %v2783, %v2981
        %v3361 = vsel %vm546, %v2784, %v2983
        %v3362 = vsel %vm1412, %v3308, %v3147
        %v3363 = vsel %vm1412, %v3309, %v3149
        %v3364 = vsel %vm1412, %v3310, %v3151
        %v3365 = vsel %vm1412, %v3311, %v3153
        %v3366 = vsel %vm1412, %v3312, %v3155
        %v3367 = vsel %vm1412, %v3313, %v3157
        %v3368 = vsel %vm1412, %v3314, %v3159
        %v3369 = vsel %vm1412, %v3315, %v3161
        %v3370 = vsel %vm1412, %v3316, %v3163
        %v3371 = vsel %vm1412, %v3317, %v3165
        %v3372 = vsel %vm1412, %v3318, %v3167
        %v3373 = vsel %vm1412, %v3319, %v3169
        %v3374 = vsel %vm1412, %v3320, %v3171
        %v3375 = vsel %vm1412, %v3321, %v3173
        %v3376 = vsel %vm1412, %v3322, %v3175
        %v3377 = vsel %vm1412, %v3323, %v3177
        %v3378 = vsel %vm1412, %v3324, %v3179
        %v3379 = vsel %vm1412, %v3325, %v3181
        %v3380 = vsel %vm1412, %v3326, %v3183
        %v3381 = vsel %vm1412, %v3327, %v3185
        %v3382 = vsel %vm1412, %v3328, %v3187
        %v3383 = vsel %vm1412, %v3329, %v3189
        %v3384 = vsel %vm1412, %v3330, %v3191
        %v3385 = vsel %vm1412, %v3331, %v3193
        %v3386 = vsel %vm1412, %v3332, %v3195
        %v3387 = vsel %vm1412, %v3333, %v3197
        %v3388 = vsel %vm1412, %v3334, %v3199
        %v3389 = vsel %vm1412, %v3335, %v3201
        %v3390 = vsel %vm1412, %v3336, %v3203
        %v3391 = vsel %vm1412, %v3337, %v3205
        %v3392 = vsel %vm1412, %v3338, %v3207
        %v3393 = vsel %vm1412, %v3339, %v3209
        %v3394 = vsel %vm1412, %v3340, %v3211
        %v3395 = vsel %vm1412, %v3341, %v3213
        %v3396 = vsel %vm1412, %v3342, %v3215
        %v3397 = vsel %vm1412, %v3343, %v3217
        %v3398 = vsel %vm1412, %v3344, %v3219
        %v3399 = vsel %vm1412, %v3345, %v3221
        %v3400 = vsel %vm1412, %v3346, %v3223
        %v3401 = vsel %vm1412, %v3347, %v3225
        %v3402 = vsel %vm1412, %v3348, %v3227
        %v3403 = vsel %vm1412, %v3349, %v3229
        %v3404 = vsel %vm1412, %v3350, %v3231
        %v3405 = vsel %vm1412, %v3351, %v3233
        %v3406 = vsel %vm1412, %v3352, %v3235
        %v3407 = vsel %vm1412, %v3353, %v3237
        %v3408 = vsel %vm1412, %v3354, %v3239
        %v3409 = vsel %vm1412, %v3355, %v3241
        %v3410 = vsel %vm1412, %v3356, %v3243
        %v3411 = vsel %vm1412, %v3357, %v3245
        %v3412 = vsel %vm1412, %v3358, %v3247
        %v3413 = vsel %vm1412, %v3359, %v3249
        %v3414 = vsel %vm1412, %v3360, %v3251
        %v3415 = vsel %vm1412, %v3361, %v3253
        %v3464 = vrot.slane %v3362, 7
        %v3465 = vrot.slane %v3363, 7
        %v3466 = vsel %vm1515, %v3464, %v3465
        %v3467 = vrot.slane %v3364, 7
        %v3468 = vsel %vm1515, %v3465, %v3467
        %v3469 = vrot.slane %v3365, 7
        %v3470 = vrot.slane %v3366, 7
        %v3471 = vsel %vm1515, %v3469, %v3470
        %v3472 = vrot.slane %v3367, 7
        %v3473 = vsel %vm1515, %v3470, %v3472
        %v3474 = vrot.slane %v3368, 7
        %v3475 = vrot.slane %v3369, 7
        %v3476 = vsel %vm1515, %v3474, %v3475
        %v3477 = vrot.slane %v3370, 7
        %v3478 = vsel %vm1515, %v3475, %v3477
        %v3479 = vrot.slane %v3371, 7
        %v3480 = vrot.slane %v3372, 7
        %v3481 = vsel %vm1515, %v3479, %v3480
        %v3482 = vrot.slane %v3373, 7
        %v3483 = vsel %vm1515, %v3480, %v3482
        %v3484 = vrot.slane %v3374, 7
        %v3485 = vrot.slane %v3375, 7
        %v3486 = vsel %vm1515, %v3484, %v3485
        %v3487 = vrot.slane %v3376, 7
        %v3488 = vsel %vm1515, %v3485, %v3487
        %v3489 = vrot.slane %v3377, 7
        %v3490 = vrot.slane %v3378, 7
        %v3491 = vsel %vm1515, %v3489, %v3490
        %v3492 = vrot.slane %v3379, 7
        %v3493 = vsel %vm1515, %v3490, %v3492
        %v3494 = vrot.slane %v3380, 7
        %v3495 = vrot.slane %v3381, 7
        %v3496 = vsel %vm1515, %v3494, %v3495
        %v3497 = vrot.slane %v3382, 7
        %v3498 = vsel %vm1515, %v3495, %v3497
        %v3499 = vrot.slane %v3383, 7
        %v3500 = vrot.slane %v3384, 7
        %v3501 = vsel %vm1515, %v3499, %v3500
        %v3502 = vrot.slane %v3385, 7
        %v3503 = vsel %vm1515, %v3500, %v3502
        %v3504 = vrot.slane %v3386, 7
        %v3505 = vrot.slane %v3387, 7
        %v3506 = vsel %vm1515, %v3504, %v3505
        %v3507 = vrot.slane %v3388, 7
        %v3508 = vsel %vm1515, %v3505, %v3507
        %v3509 = vrot.slane %v3389, 7
        %v3510 = vrot.slane %v3390, 7
        %v3511 = vsel %vm1515, %v3509, %v3510
        %v3512 = vrot.slane %v3391, 7
        %v3513 = vsel %vm1515, %v3510, %v3512
        %v3514 = vrot.slane %v3392, 7
        %v3515 = vrot.slane %v3393, 7
        %v3516 = vsel %vm1515, %v3514, %v3515
        %v3517 = vrot.slane %v3394, 7
        %v3518 = vsel %vm1515, %v3515, %v3517
        %v3519 = vrot.slane %v3395, 7
        %v3520 = vrot.slane %v3396, 7
        %v3521 = vsel %vm1515, %v3519, %v3520
        %v3522 = vrot.slane %v3397, 7
        %v3523 = vsel %vm1515, %v3520, %v3522
        %v3524 = vrot.slane %v3398, 7
        %v3525 = vrot.slane %v3399, 7
        %v3526 = vsel %vm1515, %v3524, %v3525
        %v3527 = vrot.slane %v3400, 7
        %v3528 = vsel %vm1515, %v3525, %v3527
        %v3529 = vrot.slane %v3401, 7
        %v3530 = vrot.slane %v3402, 7
        %v3531 = vsel %vm1515, %v3529, %v3530
        %v3532 = vrot.slane %v3403, 7
        %v3533 = vsel %vm1515, %v3530, %v3532
        %v3534 = vrot.slane %v3404, 7
        %v3535 = vrot.slane %v3405, 7
        %v3536 = vsel %vm1515, %v3534, %v3535
        %v3537 = vrot.slane %v3406, 7
        %v3538 = vsel %vm1515, %v3535, %v3537
        %v3539 = vrot.slane %v3407, 7
        %v3540 = vrot.slane %v3408, 7
        %v3541 = vsel %vm1515, %v3539, %v3540
        %v3542 = vrot.slane %v3409, 7
        %v3543 = vsel %vm1515, %v3540, %v3542
        %v3547 = vrot.slane %v3410, 7
        %v3548 = vrot.slane %v3411, 7
        %v3549 = vsel %vm1515, %v3547, %v3548
        %v3550 = vrot.slane %v3412, 7
        %v3551 = vsel %vm1515, %v3548, %v3550
        %v3552 = vsel %vm1604, %v3471, 0
        %v3554 = vsel %vm1604, %v3473, 0
        %v3556 = vsel %vm1604, %v3476, 0
        %v3558 = vsel %vm1604, %v3478, 0
        %v3560 = vsel %vm1604, %v3481, 0
        %v3562 = vsel %vm1604, %v3483, 0
        %v3564 = vsel %vm1604, %v3486, 0
        %v3566 = vsel %vm1604, %v3488, 0
        %v3568 = vsel %vm1604, %v3491, 0
        %v3570 = vsel %vm1604, %v3493, 0
        %v3572 = vsel %vm1604, %v3496, 0
        %v3574 = vsel %vm1604, %v3498, 0
        %v3576 = vsel %vm1604, %v3501, 0
        %v3578 = vsel %vm1604, %v3503, 0
        %v3580 = vsel %vm1604, %v3506, 0
        %v3582 = vsel %vm1604, %v3508, 0
        %v3584 = vsel %vm1604, %v3511, 0
        %v3586 = vsel %vm1604, %v3513, 0
        %v3588 = vsel %vm1604, %v3516, 0
        %v3590 = vsel %vm1604, %v3518, 0
        %v3592 = vsel %vm1604, %v3521, 0
        %v3594 = vsel %vm1604, %v3523, 0
        %v3596 = vsel %vm1604, %v3526, 0
        %v3598 = vsel %vm1604, %v3528, 0
        %v3600 = vsel %vm1604, %v3531, 0
        %v3602 = vsel %vm1604, %v3533, 0
        %v3604 = vsel %vm1604, %v3536, 0
        %v3606 = vsel %vm1604, %v3538, 0
        %v3608 = vsel %vm1604, %v3541, 0
        %v3610 = vsel %vm1604, %v3543, 0
        %v3612 = vsel %vm1604, %v3549, 0
        %v3614 = vsel %vm1604, %v3551, 0
        %3616 = vmatpush.msra.mxu0 0.0
        %3617 = vmatpush.msra.mxu0 0.0
        %3618 = vmatpush.msra.mxu0 0.0
        %3619 = vmatpush.msra.mxu0 0.0
        %3620 = vmatpush.msra.mxu0 %v2701
        %3621 = vmatpush.msra.mxu0 %v2700
        %3622 = vmatpush.msra.mxu0 %v2699
        %3623 = vmatpush.msra.mxu0 %v2698
        %3624 = vmatpush.msra.mxu0 %v2697
        %3625 = vmatpush.msra.mxu0 %v2696
        %3626 = vmatpush.msra.mxu0 %v2695
        %3627 = vmatpush.msra.mxu0 %v2694
        %3628 = vmatpush.msra.mxu0 %v2693
        %3629 = vmatpush.msra.mxu0 %v2692
        %3630 = vmatpush.msra.mxu0 %v2691
        %3631 = vmatpush.msra.mxu0 %v2690
        %3632 = vmatmul.f32.gmra.mxu0 %v3552
        %v3633 = vpop.f32.mrf.mxu0
        %v3634 = vadd.f32 0.0, %v3633
        %3635 = vmatmul.f32.gmra.mxu0 %v3554
        %v3636 = vpop.f32.mrf.mxu0
        %v3637 = vadd.f32 0.0, %v3636
        %3638 = vmatmul.f32.gmra.mxu0 %v3556
        %v3639 = vpop.f32.mrf.mxu0
        %v3640 = vadd.f32 0.0, %v3639
        %3641 = vmatmul.f32.gmra.mxu0 %v3558
        %v3642 = vpop.f32.mrf.mxu0
        %v3643 = vadd.f32 0.0, %v3642
        %3644 = vmatmul.f32.gmra.mxu0 %v3560
        %v3645 = vpop.f32.mrf.mxu0
        %v3646 = vadd.f32 0.0, %v3645
        %3647 = vmatmul.f32.gmra.mxu0 %v3562
        %v3648 = vpop.f32.mrf.mxu0
        %v3649 = vadd.f32 0.0, %v3648
        %3650 = vmatmul.f32.gmra.mxu0 %v3564
        %v3651 = vpop.f32.mrf.mxu0
        %v3652 = vadd.f32 0.0, %v3651
        %3653 = vmatmul.f32.gmra.mxu0 %v3566
        %v3654 = vpop.f32.mrf.mxu0
        %v3655 = vadd.f32 0.0, %v3654
        %3656 = vmatmul.f32.gmra.mxu0 %v3568
        %v3657 = vpop.f32.mrf.mxu0
        %v3658 = vadd.f32 0.0, %v3657
        %3659 = vmatmul.f32.gmra.mxu0 %v3570
        %v3660 = vpop.f32.mrf.mxu0
        %v3661 = vadd.f32 0.0, %v3660
        %3662 = vmatmul.f32.gmra.mxu0 %v3572
        %v3663 = vpop.f32.mrf.mxu0
        %v3664 = vadd.f32 0.0, %v3663
        %3665 = vmatmul.f32.gmra.mxu0 %v3574
        %v3666 = vpop.f32.mrf.mxu0
        %v3667 = vadd.f32 0.0, %v3666
        %3668 = vmatmul.f32.gmra.mxu0 %v3576
        %v3669 = vpop.f32.mrf.mxu0
        %v3670 = vadd.f32 0.0, %v3669
        %3671 = vmatmul.f32.gmra.mxu0 %v3578
        %v3672 = vpop.f32.mrf.mxu0
        %v3673 = vadd.f32 0.0, %v3672
        %3674 = vmatmul.f32.gmra.mxu0 %v3580
        %v3675 = vpop.f32.mrf.mxu0
        %v3676 = vadd.f32 0.0, %v3675
        %3677 = vmatmul.f32.gmra.mxu0 %v3582
        %v3678 = vpop.f32.mrf.mxu0
        %v3679 = vadd.f32 0.0, %v3678
        %3680 = vmatmul.f32.gmra.mxu0 %v3584
        %v3681 = vpop.f32.mrf.mxu0
        %v3682 = vadd.f32 0.0, %v3681
        %3683 = vmatmul.f32.gmra.mxu0 %v3586
        %v3684 = vpop.f32.mrf.mxu0
        %v3685 = vadd.f32 0.0, %v3684
        %3686 = vmatmul.f32.gmra.mxu0 %v3588
        %v3687 = vpop.f32.mrf.mxu0
        %v3688 = vadd.f32 0.0, %v3687
        %3689 = vmatmul.f32.gmra.mxu0 %v3590
        %v3690 = vpop.f32.mrf.mxu0
        %v3691 = vadd.f32 0.0, %v3690
        %3692 = vmatmul.f32.gmra.mxu0 %v3592
        %v3693 = vpop.f32.mrf.mxu0
        %v3694 = vadd.f32 0.0, %v3693
        %3695 = vmatmul.f32.gmra.mxu0 %v3594
        %v3696 = vpop.f32.mrf.mxu0
        %v3697 = vadd.f32 0.0, %v3696
        %3698 = vmatmul.f32.gmra.mxu0 %v3596
        %v3699 = vpop.f32.mrf.mxu0
        %v3700 = vadd.f32 0.0, %v3699
        %3701 = vmatmul.f32.gmra.mxu0 %v3598
        %v3702 = vpop.f32.mrf.mxu0
        %v3703 = vadd.f32 0.0, %v3702
        %3704 = vmatmul.f32.gmra.mxu0 %v3600
        %v3705 = vpop.f32.mrf.mxu0
        %v3706 = vadd.f32 0.0, %v3705
        %3707 = vmatmul.f32.gmra.mxu0 %v3602
        %v3708 = vpop.f32.mrf.mxu0
        %v3709 = vadd.f32 0.0, %v3708
        %3710 = vmatmul.f32.gmra.mxu0 %v3604
        %v3711 = vpop.f32.mrf.mxu0
        %v3712 = vadd.f32 0.0, %v3711
        %3713 = vmatmul.f32.gmra.mxu0 %v3606
        %v3714 = vpop.f32.mrf.mxu0
        %v3715 = vadd.f32 0.0, %v3714
        %3716 = vmatmul.f32.gmra.mxu0 %v3608
        %v3717 = vpop.f32.mrf.mxu0
        %v3718 = vadd.f32 0.0, %v3717
        %3719 = vmatmul.f32.gmra.mxu0 %v3610
        %v3720 = vpop.f32.mrf.mxu0
        %v3721 = vadd.f32 0.0, %v3720
        %3722 = vmatmul.f32.gmra.mxu0 %v3612
        %v3723 = vpop.f32.mrf.mxu0
        %v3724 = vadd.f32 0.0, %v3723
        %3725 = vmatmul.f32.gmra.mxu0 %v3614
        %v3726 = vpop.f32.mrf.mxu0
        %v3727 = vadd.f32 0.0, %v3726
        %3728 = vdwg.mxu0
        %v3729 = vsel %vm1604, %v3466, 0
        %v3731 = vsel %vm1604, %v3468, 0
        %3733 = vmatpush.msra.mxu0 0.0
        %3734 = vmatpush.msra.mxu0 0.0
        %3735 = vmatpush.msra.mxu0 0.0
        %3736 = vmatpush.msra.mxu0 0.0
        %3737 = vmatpush.msra.mxu0 %v2689
        %3738 = vmatpush.msra.mxu0 %v2688
        %3739 = vmatpush.msra.mxu0 %v2687
        %3740 = vmatpush.msra.mxu0 %v2686
        %3741 = vmatpush.msra.mxu0 %v2685
        %3742 = vmatpush.msra.mxu0 %v2684
        %3743 = vmatpush.msra.mxu0 %v2683
        %3744 = vmatpush.msra.mxu0 %v2682
        %3745 = vmatpush.msra.mxu0 %v2681
        %3746 = vmatpush.msra.mxu0 %v2680
        %3747 = vmatpush.msra.mxu0 %v2679
        %3748 = vmatpush.msra.mxu0 %v2678
        %3749 = vmatmul.f32.gmra.mxu0 %v3729
        %v3750 = vpop.f32.mrf.mxu0
        %v3751 = vadd.f32 %v3634, %v3750
        %3752 = vmatmul.f32.gmra.mxu0 %v3731
        %v3753 = vpop.f32.mrf.mxu0
        %v3754 = vadd.f32 %v3637, %v3753
        %3755 = vmatmul.f32.gmra.mxu0 %v3552
        %v3756 = vpop.f32.mrf.mxu0
        %v3757 = vadd.f32 %v3640, %v3756
        %3758 = vmatmul.f32.gmra.mxu0 %v3554
        %v3759 = vpop.f32.mrf.mxu0
        %v3760 = vadd.f32 %v3643, %v3759
        %3761 = vmatmul.f32.gmra.mxu0 %v3556
        %v3762 = vpop.f32.mrf.mxu0
        %v3763 = vadd.f32 %v3646, %v3762
        %3764 = vmatmul.f32.gmra.mxu0 %v3558
        %v3765 = vpop.f32.mrf.mxu0
        %v3766 = vadd.f32 %v3649, %v3765
        %3767 = vmatmul.f32.gmra.mxu0 %v3560
        %v3768 = vpop.f32.mrf.mxu0
        %v3769 = vadd.f32 %v3652, %v3768
        %3770 = vmatmul.f32.gmra.mxu0 %v3562
        %v3771 = vpop.f32.mrf.mxu0
        %v3772 = vadd.f32 %v3655, %v3771
        %3773 = vmatmul.f32.gmra.mxu0 %v3564
        %v3774 = vpop.f32.mrf.mxu0
        %v3775 = vadd.f32 %v3658, %v3774
        %3776 = vmatmul.f32.gmra.mxu0 %v3566
        %v3777 = vpop.f32.mrf.mxu0
        %v3778 = vadd.f32 %v3661, %v3777
        %3779 = vmatmul.f32.gmra.mxu0 %v3568
        %v3780 = vpop.f32.mrf.mxu0
        %v3781 = vadd.f32 %v3664, %v3780
        %3782 = vmatmul.f32.gmra.mxu0 %v3570
        %v3783 = vpop.f32.mrf.mxu0
        %v3784 = vadd.f32 %v3667, %v3783
        %3785 = vmatmul.f32.gmra.mxu0 %v3572
        %v3786 = vpop.f32.mrf.mxu0
        %v3787 = vadd.f32 %v3670, %v3786
        %3788 = vmatmul.f32.gmra.mxu0 %v3574
        %v3789 = vpop.f32.mrf.mxu0
        %v3790 = vadd.f32 %v3673, %v3789
        %3791 = vmatmul.f32.gmra.mxu0 %v3576
        %v3792 = vpop.f32.mrf.mxu0
        %v3793 = vadd.f32 %v3676, %v3792
        %3794 = vmatmul.f32.gmra.mxu0 %v3578
        %v3795 = vpop.f32.mrf.mxu0
        %v3796 = vadd.f32 %v3679, %v3795
        %3797 = vmatmul.f32.gmra.mxu0 %v3580
        %v3798 = vpop.f32.mrf.mxu0
        %v3799 = vadd.f32 %v3682, %v3798
        %3800 = vmatmul.f32.gmra.mxu0 %v3582
        %v3801 = vpop.f32.mrf.mxu0
        %v3802 = vadd.f32 %v3685, %v3801
        %3803 = vmatmul.f32.gmra.mxu0 %v3584
        %v3804 = vpop.f32.mrf.mxu0
        %v3805 = vadd.f32 %v3688, %v3804
        %3806 = vmatmul.f32.gmra.mxu0 %v3586
        %v3807 = vpop.f32.mrf.mxu0
        %v3808 = vadd.f32 %v3691, %v3807
        %3809 = vmatmul.f32.gmra.mxu0 %v3588
        %v3810 = vpop.f32.mrf.mxu0
        %v3811 = vadd.f32 %v3694, %v3810
        %3812 = vmatmul.f32.gmra.mxu0 %v3590
        %v3813 = vpop.f32.mrf.mxu0
        %v3814 = vadd.f32 %v3697, %v3813
        %3815 = vmatmul.f32.gmra.mxu0 %v3592
        %v3816 = vpop.f32.mrf.mxu0
        %v3817 = vadd.f32 %v3700, %v3816
        %3818 = vmatmul.f32.gmra.mxu0 %v3594
        %v3819 = vpop.f32.mrf.mxu0
        %v3820 = vadd.f32 %v3703, %v3819
        %3821 = vmatmul.f32.gmra.mxu0 %v3596
        %v3822 = vpop.f32.mrf.mxu0
        %v3823 = vadd.f32 %v3706, %v3822
        %3824 = vmatmul.f32.gmra.mxu0 %v3598
        %v3825 = vpop.f32.mrf.mxu0
        %v3826 = vadd.f32 %v3709, %v3825
        %3827 = vmatmul.f32.gmra.mxu0 %v3600
        %v3828 = vpop.f32.mrf.mxu0
        %v3829 = vadd.f32 %v3712, %v3828
        %3830 = vmatmul.f32.gmra.mxu0 %v3602
        %v3831 = vpop.f32.mrf.mxu0
        %v3832 = vadd.f32 %v3715, %v3831
        %3833 = vmatmul.f32.gmra.mxu0 %v3604
        %v3834 = vpop.f32.mrf.mxu0
        %v3835 = vadd.f32 %v3718, %v3834
        %3836 = vmatmul.f32.gmra.mxu0 %v3606
        %v3837 = vpop.f32.mrf.mxu0
        %v3838 = vadd.f32 %v3721, %v3837
        %3839 = vmatmul.f32.gmra.mxu0 %v3608
        %v3840 = vpop.f32.mrf.mxu0
        %v3841 = vadd.f32 %v3724, %v3840
        %3842 = vmatmul.f32.gmra.mxu0 %v3610
        %v3843 = vpop.f32.mrf.mxu0
        %v3844 = vadd.f32 %v3727, %v3843
        %3845 = vdwg.mxu0
        %v3849 = vrot.slane %v3413, 7
        %v3850 = vrot.slane %v3414, 7
        %v3851 = vsel %vm1515, %v3849, %v3850
        %v3852 = vrot.slane %v3415, 7
        %v3853 = vsel %vm1515, %v3850, %v3852
        %v3854 = vsel %vm1604, %v3851, 0
        %v3856 = vsel %vm1604, %v3853, 0
        %3858 = vmatpush.msra.mxu0 0.0
        %3859 = vmatpush.msra.mxu0 0.0
        %3860 = vmatpush.msra.mxu0 0.0
        %3861 = vmatpush.msra.mxu0 0.0
        %3862 = vmatpush.msra.mxu0 %v2713
        %3863 = vmatpush.msra.mxu0 %v2712
        %3864 = vmatpush.msra.mxu0 %v2711
        %3865 = vmatpush.msra.mxu0 %v2710
        %3866 = vmatpush.msra.mxu0 %v2709
        %3867 = vmatpush.msra.mxu0 %v2708
        %3868 = vmatpush.msra.mxu0 %v2707
        %3869 = vmatpush.msra.mxu0 %v2706
        %3870 = vmatpush.msra.mxu0 %v2705
        %3871 = vmatpush.msra.mxu0 %v2704
        %3872 = vmatpush.msra.mxu0 %v2703
        %3873 = vmatpush.msra.mxu0 %v2702
        %3874 = vmatmul.f32.gmra.mxu0 %v3556
        %v3875 = vpop.f32.mrf.mxu0
        %v3876 = vadd.f32 0.0, %v3875
        %3877 = vmatmul.f32.gmra.mxu0 %v3558
        %v3878 = vpop.f32.mrf.mxu0
        %v3879 = vadd.f32 0.0, %v3878
        %3880 = vmatmul.f32.gmra.mxu0 %v3560
        %v3881 = vpop.f32.mrf.mxu0
        %v3882 = vadd.f32 0.0, %v3881
        %3883 = vmatmul.f32.gmra.mxu0 %v3562
        %v3884 = vpop.f32.mrf.mxu0
        %v3885 = vadd.f32 0.0, %v3884
        %3886 = vmatmul.f32.gmra.mxu0 %v3564
        %v3887 = vpop.f32.mrf.mxu0
        %v3888 = vadd.f32 0.0, %v3887
        %3889 = vmatmul.f32.gmra.mxu0 %v3566
        %v3890 = vpop.f32.mrf.mxu0
        %v3891 = vadd.f32 0.0, %v3890
        %3892 = vmatmul.f32.gmra.mxu0 %v3568
        %v3893 = vpop.f32.mrf.mxu0
        %v3894 = vadd.f32 0.0, %v3893
        %3895 = vmatmul.f32.gmra.mxu0 %v3570
        %v3896 = vpop.f32.mrf.mxu0
        %v3897 = vadd.f32 0.0, %v3896
        %3898 = vmatmul.f32.gmra.mxu0 %v3572
        %v3899 = vpop.f32.mrf.mxu0
        %v3900 = vadd.f32 0.0, %v3899
        %3901 = vmatmul.f32.gmra.mxu0 %v3574
        %v3902 = vpop.f32.mrf.mxu0
        %v3903 = vadd.f32 0.0, %v3902
        %3904 = vmatmul.f32.gmra.mxu0 %v3576
        %v3905 = vpop.f32.mrf.mxu0
        %v3906 = vadd.f32 0.0, %v3905
        %3907 = vmatmul.f32.gmra.mxu0 %v3578
        %v3908 = vpop.f32.mrf.mxu0
        %v3909 = vadd.f32 0.0, %v3908
        %3910 = vmatmul.f32.gmra.mxu0 %v3580
        %v3911 = vpop.f32.mrf.mxu0
        %v3912 = vadd.f32 0.0, %v3911
        %3913 = vmatmul.f32.gmra.mxu0 %v3582
        %v3914 = vpop.f32.mrf.mxu0
        %v3915 = vadd.f32 0.0, %v3914
        %3916 = vmatmul.f32.gmra.mxu0 %v3584
        %v3917 = vpop.f32.mrf.mxu0
        %v3918 = vadd.f32 0.0, %v3917
        %3919 = vmatmul.f32.gmra.mxu0 %v3586
        %v3920 = vpop.f32.mrf.mxu0
        %v3921 = vadd.f32 0.0, %v3920
        %3922 = vmatmul.f32.gmra.mxu0 %v3588
        %v3923 = vpop.f32.mrf.mxu0
        %v3924 = vadd.f32 0.0, %v3923
        %3925 = vmatmul.f32.gmra.mxu0 %v3590
        %v3926 = vpop.f32.mrf.mxu0
        %v3927 = vadd.f32 0.0, %v3926
        %3928 = vmatmul.f32.gmra.mxu0 %v3592
        %v3929 = vpop.f32.mrf.mxu0
        %v3930 = vadd.f32 0.0, %v3929
        %3931 = vmatmul.f32.gmra.mxu0 %v3594
        %v3932 = vpop.f32.mrf.mxu0
        %v3933 = vadd.f32 0.0, %v3932
        %3934 = vmatmul.f32.gmra.mxu0 %v3596
        %v3935 = vpop.f32.mrf.mxu0
        %v3936 = vadd.f32 0.0, %v3935
        %3937 = vmatmul.f32.gmra.mxu0 %v3598
        %v3938 = vpop.f32.mrf.mxu0
        %v3939 = vadd.f32 0.0, %v3938
        %3940 = vmatmul.f32.gmra.mxu0 %v3600
        %v3941 = vpop.f32.mrf.mxu0
        %v3942 = vadd.f32 0.0, %v3941
        %3943 = vmatmul.f32.gmra.mxu0 %v3602
        %v3944 = vpop.f32.mrf.mxu0
        %v3945 = vadd.f32 0.0, %v3944
        %3946 = vmatmul.f32.gmra.mxu0 %v3604
        %v3947 = vpop.f32.mrf.mxu0
        %v3948 = vadd.f32 0.0, %v3947
        %3949 = vmatmul.f32.gmra.mxu0 %v3606
        %v3950 = vpop.f32.mrf.mxu0
        %v3951 = vadd.f32 0.0, %v3950
        %3952 = vmatmul.f32.gmra.mxu0 %v3608
        %v3953 = vpop.f32.mrf.mxu0
        %v3954 = vadd.f32 0.0, %v3953
        %3955 = vmatmul.f32.gmra.mxu0 %v3610
        %v3956 = vpop.f32.mrf.mxu0
        %v3957 = vadd.f32 0.0, %v3956
        %3958 = vmatmul.f32.gmra.mxu0 %v3612
        %v3959 = vpop.f32.mrf.mxu0
        %v3960 = vadd.f32 0.0, %v3959
        %3961 = vmatmul.f32.gmra.mxu0 %v3614
        %v3962 = vpop.f32.mrf.mxu0
        %v3963 = vadd.f32 0.0, %v3962
        %3964 = vmatmul.f32.gmra.mxu0 %v3854
        %v3965 = vpop.f32.mrf.mxu0
        %v3966 = vadd.f32 0.0, %v3965
        %3967 = vmatmul.f32.gmra.mxu0 %v3856
        %v3968 = vpop.f32.mrf.mxu0
        %v3969 = vadd.f32 0.0, %v3968
        %3970 = vdwg.mxu0
        %v3971 = vadd.f32 %v3751, %v3876
        %v3972 = vadd.f32 %v3754, %v3879
        %v3973 = vadd.f32 %v3757, %v3882
        %v3974 = vadd.f32 %v3760, %v3885
        %v3975 = vadd.f32 %v3763, %v3888
        %v3976 = vadd.f32 %v3766, %v3891
        %v3977 = vadd.f32 %v3769, %v3894
        %v3978 = vadd.f32 %v3772, %v3897
        %v3979 = vadd.f32 %v3775, %v3900
        %v3980 = vadd.f32 %v3778, %v3903
        %v3981 = vadd.f32 %v3781, %v3906
        %v3982 = vadd.f32 %v3784, %v3909
        %v3983 = vadd.f32 %v3787, %v3912
        %v3984 = vadd.f32 %v3790, %v3915
        %v3985 = vadd.f32 %v3793, %v3918
        %v3986 = vadd.f32 %v3796, %v3921
        %v3987 = vadd.f32 %v3799, %v3924
        %v3988 = vadd.f32 %v3802, %v3927
        %v3989 = vadd.f32 %v3805, %v3930
        %v3990 = vadd.f32 %v3808, %v3933
        %v3991 = vadd.f32 %v3811, %v3936
        %v3992 = vadd.f32 %v3814, %v3939
        %v3993 = vadd.f32 %v3817, %v3942
        %v3994 = vadd.f32 %v3820, %v3945
        %v3995 = vadd.f32 %v3823, %v3948
        %v3996 = vadd.f32 %v3826, %v3951
        %v3997 = vadd.f32 %v3829, %v3954
        %v3998 = vadd.f32 %v3832, %v3957
        %v3999 = vadd.f32 %v3835, %v3960
        %v4000 = vadd.f32 %v3838, %v3963
        %v4001 = vadd.f32 %v3841, %v3966
        %v4002 = vadd.f32 %v3844, %v3969
        %4035 = vrot.lane.b32.xlu0 %v3971, 16
        %v4036 = vpop.permute.xlu0 %4035
        %4037 = vrot.lane.b32.xlu0 %v3972, 16
        %v4038 = vpop.permute.xlu0 %4037
        %4039 = vrot.lane.b32.xlu0 %v3973, 16
        %v4040 = vpop.permute.xlu0 %4039
        %4041 = vrot.lane.b32.xlu0 %v3974, 16
        %v4042 = vpop.permute.xlu0 %4041
        %4043 = vrot.lane.b32.xlu0 %v3975, 16
        %v4044 = vpop.permute.xlu0 %4043
        %4045 = vrot.lane.b32.xlu0 %v3976, 16
        %v4046 = vpop.permute.xlu0 %4045
        %4047 = vrot.lane.b32.xlu0 %v3977, 16
        %v4048 = vpop.permute.xlu0 %4047
        %4049 = vrot.lane.b32.xlu0 %v3978, 16
        %v4050 = vpop.permute.xlu0 %4049
        %4051 = vrot.lane.b32.xlu0 %v3979, 16
        %v4052 = vpop.permute.xlu0 %4051
        %4053 = vrot.lane.b32.xlu0 %v3980, 16
        %v4054 = vpop.permute.xlu0 %4053
        %4055 = vrot.lane.b32.xlu0 %v3981, 16
        %v4056 = vpop.permute.xlu0 %4055
        %4057 = vrot.lane.b32.xlu0 %v3982, 16
        %v4058 = vpop.permute.xlu0 %4057
        %4059 = vrot.lane.b32.xlu0 %v3983, 16
        %v4060 = vpop.permute.xlu0 %4059
        %4061 = vrot.lane.b32.xlu0 %v3984, 16
        %v4062 = vpop.permute.xlu0 %4061
        %4063 = vrot.lane.b32.xlu0 %v3985, 16
        %v4064 = vpop.permute.xlu0 %4063
        %4065 = vrot.lane.b32.xlu0 %v3986, 16
        %v4066 = vpop.permute.xlu0 %4065
        %4067 = vrot.lane.b32.xlu0 %v3987, 16
        %v4068 = vpop.permute.xlu0 %4067
        %4069 = vrot.lane.b32.xlu0 %v3988, 16
        %v4070 = vpop.permute.xlu0 %4069
        %4071 = vrot.lane.b32.xlu0 %v3989, 16
        %v4072 = vpop.permute.xlu0 %4071
        %4073 = vrot.lane.b32.xlu0 %v3990, 16
        %v4074 = vpop.permute.xlu0 %4073
        %4075 = vrot.lane.b32.xlu0 %v3991, 16
        %v4076 = vpop.permute.xlu0 %4075
        %4077 = vrot.lane.b32.xlu0 %v3992, 16
        %v4078 = vpop.permute.xlu0 %4077
        %4079 = vrot.lane.b32.xlu0 %v3993, 16
        %v4080 = vpop.permute.xlu0 %4079
        %4081 = vrot.lane.b32.xlu0 %v3994, 16
        %v4082 = vpop.permute.xlu0 %4081
        %4083 = vrot.lane.b32.xlu0 %v3995, 16
        %v4084 = vpop.permute.xlu0 %4083
        %4085 = vrot.lane.b32.xlu0 %v3996, 16
        %v4086 = vpop.permute.xlu0 %4085
        %4087 = vrot.lane.b32.xlu0 %v3997, 16
        %v4088 = vpop.permute.xlu0 %4087
        %4089 = vrot.lane.b32.xlu0 %v3998, 16
        %v4090 = vpop.permute.xlu0 %4089
        %4091 = vrot.lane.b32.xlu0 %v3999, 16
        %v4092 = vpop.permute.xlu0 %4091
        %4093 = vrot.lane.b32.xlu0 %v4000, 16
        %v4094 = vpop.permute.xlu0 %4093
        %4095 = vrot.lane.b32.xlu0 %v4001, 16
        %v4096 = vpop.permute.xlu0 %4095
        %4097 = vrot.lane.b32.xlu0 %v4002, 16
        %v4098 = vpop.permute.xlu0 %4097
        %vm4131 = vcmask 195712
        %4132 = vst.msk [vmem:[#allocation2] sm:$0xff] %vm4131, %v4036
        %4133 = vst.msk [vmem:[#allocation2 + $0x8] sm:$0xff] %vm4131, %v4038
        %4134 = vst.msk [vmem:[#allocation2 + $0x10] sm:$0xff] %vm4131, %v4040
        %4135 = vst.msk [vmem:[#allocation2 + $0x18] sm:$0xff] %vm4131, %v4042
        %4136 = vst.msk [vmem:[#allocation2 + $0x20] sm:$0xff] %vm4131, %v4044
        %4137 = vst.msk [vmem:[#allocation2 + $0x28] sm:$0xff] %vm4131, %v4046
        %4138 = vst.msk [vmem:[#allocation2 + $0x30] sm:$0xff] %vm4131, %v4048
        %4139 = vst.msk [vmem:[#allocation2 + $0x38] sm:$0xff] %vm4131, %v4050
        %4140 = vst.msk [vmem:[#allocation2 + $0x40] sm:$0xff] %vm4131, %v4052
        %4141 = vst.msk [vmem:[#allocation2 + $0x48] sm:$0xff] %vm4131, %v4054
        %4142 = vst.msk [vmem:[#allocation2 + $0x50] sm:$0xff] %vm4131, %v4056
        %4143 = vst.msk [vmem:[#allocation2 + $0x58] sm:$0xff] %vm4131, %v4058
        %4144 = vst.msk [vmem:[#allocation2 + $0x60] sm:$0xff] %vm4131, %v4060
        %4145 = vst.msk [vmem:[#allocation2 + $0x68] sm:$0xff] %vm4131, %v4062
        %4146 = vst.msk [vmem:[#allocation2 + $0x70] sm:$0xff] %vm4131, %v4064
        %4147 = vst.msk [vmem:[#allocation2 + $0x78] sm:$0xff] %vm4131, %v4066
        %4148 = vst.msk [vmem:[#allocation2 + $0x80] sm:$0xff] %vm4131, %v4068
        %4149 = vst.msk [vmem:[#allocation2 + $0x88] sm:$0xff] %vm4131, %v4070
        %4150 = vst.msk [vmem:[#allocation2 + $0x90] sm:$0xff] %vm4131, %v4072
        %4151 = vst.msk [vmem:[#allocation2 + $0x98] sm:$0xff] %vm4131, %v4074
        %4152 = vst.msk [vmem:[#allocation2 + $0xa0] sm:$0xff] %vm4131, %v4076
        %4153 = vst.msk [vmem:[#allocation2 + $0xa8] sm:$0xff] %vm4131, %v4078
        %4154 = vst.msk [vmem:[#allocation2 + $0xb0] sm:$0xff] %vm4131, %v4080
        %4155 = vst.msk [vmem:[#allocation2 + $0xb8] sm:$0xff] %vm4131, %v4082
        %4156 = vst.msk [vmem:[#allocation2 + $0xc0] sm:$0xff] %vm4131, %v4084
        %4157 = vst.msk [vmem:[#allocation2 + $0xc8] sm:$0xff] %vm4131, %v4086
        %4158 = vst.msk [vmem:[#allocation2 + $0xd0] sm:$0xff] %vm4131, %v4088
        %4159 = vst.msk [vmem:[#allocation2 + $0xd8] sm:$0xff] %vm4131, %v4090
        %4160 = vst.msk [vmem:[#allocation2 + $0xe0] sm:$0xff] %vm4131, %v4092
        %4161 = vst.msk [vmem:[#allocation2 + $0xe8] sm:$0xff] %vm4131, %v4094
        %4162 = vst.msk [vmem:[#allocation2 + $0xf0] sm:$0xff] %vm4131, %v4096
        %4163 = vst.msk [vmem:[#allocation2 + $0xf8] sm:$0xff] %vm4131, %v4098
        %v4164 = vld [vmem:[#allocation2] sm:$0xff]
        %v4165 = vld [vmem:[#allocation2 + $0x8] sm:$0xff]
        %v4166 = vld [vmem:[#allocation2 + $0x10] sm:$0xff]
        %v4167 = vld [vmem:[#allocation2 + $0x18] sm:$0xff]
        %v4168 = vld [vmem:[#allocation2 + $0x20] sm:$0xff]
        %v4169 = vld [vmem:[#allocation2 + $0x28] sm:$0xff]
        %v4170 = vld [vmem:[#allocation2 + $0x30] sm:$0xff]
        %v4171 = vld [vmem:[#allocation2 + $0x38] sm:$0xff]
        %v4172 = vld [vmem:[#allocation2 + $0x40] sm:$0xff]
        %v4173 = vld [vmem:[#allocation2 + $0x48] sm:$0xff]
        %v4174 = vld [vmem:[#allocation2 + $0x50] sm:$0xff]
        %v4175 = vld [vmem:[#allocation2 + $0x58] sm:$0xff]
        %v4176 = vld [vmem:[#allocation2 + $0x60] sm:$0xff]
        %v4177 = vld [vmem:[#allocation2 + $0x68] sm:$0xff]
        %v4178 = vld [vmem:[#allocation2 + $0x70] sm:$0xff]
        %v4179 = vld [vmem:[#allocation2 + $0x78] sm:$0xff]
        %v4180 = vld [vmem:[#allocation2 + $0x80] sm:$0xff]
        %v4181 = vld [vmem:[#allocation2 + $0x88] sm:$0xff]
        %v4182 = vld [vmem:[#allocation2 + $0x90] sm:$0xff]
        %v4183 = vld [vmem:[#allocation2 + $0x98] sm:$0xff]
        %v4184 = vld [vmem:[#allocation2 + $0xa0] sm:$0xff]
        %v4185 = vld [vmem:[#allocation2 + $0xa8] sm:$0xff]
        %v4186 = vld [vmem:[#allocation2 + $0xb0] sm:$0xff]
        %v4187 = vld [vmem:[#allocation2 + $0xb8] sm:$0xff]
        %v4188 = vld [vmem:[#allocation2 + $0xc0] sm:$0xff]
        %v4189 = vld [vmem:[#allocation2 + $0xc8] sm:$0xff]
        %v4190 = vld [vmem:[#allocation2 + $0xd0] sm:$0xff]
        %v4191 = vld [vmem:[#allocation2 + $0xd8] sm:$0xff]
        %v4192 = vld [vmem:[#allocation2 + $0xe0] sm:$0xff]
        %v4193 = vld [vmem:[#allocation2 + $0xe8] sm:$0xff]
        %v4194 = vld [vmem:[#allocation2 + $0xf0] sm:$0xff]
        %v4195 = vld [vmem:[#allocation2 + $0xf8] sm:$0xff]
        %s4196 = scalar_lea.vmem %s4, 1
        %v4197 = vld [vmem:[%s4196] sm:$0x1]
        %s4198 = scalar_lea.vmem %s5, 1
        %v4199 = vld [vmem:[%s4198] sm:$0x1]
        %v4201 = vperm.slane %v4197, 0
        %v4203 = vmul.f32 %v4164, %v4201
        %v4204 = vmul.f32 %v4165, %v4201
        %v4205 = vmul.f32 %v4166, %v4201
        %v4206 = vmul.f32 %v4167, %v4201
        %v4207 = vmul.f32 %v4168, %v4201
        %v4208 = vmul.f32 %v4169, %v4201
        %v4209 = vmul.f32 %v4170, %v4201
        %v4210 = vmul.f32 %v4171, %v4201
        %v4211 = vmul.f32 %v4172, %v4201
        %v4212 = vmul.f32 %v4173, %v4201
        %v4213 = vmul.f32 %v4174, %v4201
        %v4214 = vmul.f32 %v4175, %v4201
        %v4215 = vmul.f32 %v4176, %v4201
        %v4216 = vmul.f32 %v4177, %v4201
        %v4217 = vmul.f32 %v4178, %v4201
        %v4218 = vmul.f32 %v4179, %v4201
        %v4219 = vmul.f32 %v4180, %v4201
        %v4220 = vmul.f32 %v4181, %v4201
        %v4221 = vmul.f32 %v4182, %v4201
        %v4222 = vmul.f32 %v4183, %v4201
        %v4223 = vmul.f32 %v4184, %v4201
        %v4224 = vmul.f32 %v4185, %v4201
        %v4225 = vmul.f32 %v4186, %v4201
        %v4226 = vmul.f32 %v4187, %v4201
        %v4227 = vmul.f32 %v4188, %v4201
        %v4228 = vmul.f32 %v4189, %v4201
        %v4229 = vmul.f32 %v4190, %v4201
        %v4230 = vmul.f32 %v4191, %v4201
        %v4231 = vmul.f32 %v4192, %v4201
        %v4232 = vmul.f32 %v4193, %v4201
        %v4233 = vmul.f32 %v4194, %v4201
        %v4234 = vmul.f32 %v4195, %v4201
        %v4236 = vperm.slane %v4199, 0
        %v4238 = vadd.f32 %v4203, %v4236
        %v4239 = vadd.f32 %v4204, %v4236
        %v4240 = vadd.f32 %v4205, %v4236
        %v4241 = vadd.f32 %v4206, %v4236
        %v4242 = vadd.f32 %v4207, %v4236
        %v4243 = vadd.f32 %v4208, %v4236
        %v4244 = vadd.f32 %v4209, %v4236
        %v4245 = vadd.f32 %v4210, %v4236
        %v4246 = vadd.f32 %v4211, %v4236
        %v4247 = vadd.f32 %v4212, %v4236
        %v4248 = vadd.f32 %v4213, %v4236
        %v4249 = vadd.f32 %v4214, %v4236
        %v4250 = vadd.f32 %v4215, %v4236
        %v4251 = vadd.f32 %v4216, %v4236
        %v4252 = vadd.f32 %v4217, %v4236
        %v4253 = vadd.f32 %v4218, %v4236
        %v4254 = vadd.f32 %v4219, %v4236
        %v4255 = vadd.f32 %v4220, %v4236
        %v4256 = vadd.f32 %v4221, %v4236
        %v4257 = vadd.f32 %v4222, %v4236
        %v4258 = vadd.f32 %v4223, %v4236
        %v4259 = vadd.f32 %v4224, %v4236
        %v4260 = vadd.f32 %v4225, %v4236
        %v4261 = vadd.f32 %v4226, %v4236
        %v4262 = vadd.f32 %v4227, %v4236
        %v4263 = vadd.f32 %v4228, %v4236
        %v4264 = vadd.f32 %v4229, %v4236
        %v4265 = vadd.f32 %v4230, %v4236
        %v4266 = vadd.f32 %v4231, %v4236
        %v4267 = vadd.f32 %v4232, %v4236
        %v4268 = vadd.f32 %v4233, %v4236
        %v4269 = vadd.f32 %v4234, %v4236
        %v4270 = vmax.f32 %v4238, 0.0
        %v4271 = vmax.f32 %v4239, 0.0
        %v4272 = vmax.f32 %v4240, 0.0
        %v4273 = vmax.f32 %v4241, 0.0
        %v4274 = vmax.f32 %v4242, 0.0
        %v4275 = vmax.f32 %v4243, 0.0
        %v4276 = vmax.f32 %v4244, 0.0
        %v4277 = vmax.f32 %v4245, 0.0
        %v4278 = vmax.f32 %v4246, 0.0
        %v4279 = vmax.f32 %v4247, 0.0
        %v4280 = vmax.f32 %v4248, 0.0
        %v4281 = vmax.f32 %v4249, 0.0
        %v4282 = vmax.f32 %v4250, 0.0
        %v4283 = vmax.f32 %v4251, 0.0
        %v4284 = vmax.f32 %v4252, 0.0
        %v4285 = vmax.f32 %v4253, 0.0
        %v4286 = vmax.f32 %v4254, 0.0
        %v4287 = vmax.f32 %v4255, 0.0
        %v4288 = vmax.f32 %v4256, 0.0
        %v4289 = vmax.f32 %v4257, 0.0
        %v4290 = vmax.f32 %v4258, 0.0
        %v4291 = vmax.f32 %v4259, 0.0
        %v4292 = vmax.f32 %v4260, 0.0
        %v4293 = vmax.f32 %v4261, 0.0
        %v4294 = vmax.f32 %v4262, 0.0
        %v4295 = vmax.f32 %v4263, 0.0
        %v4296 = vmax.f32 %v4264, 0.0
        %v4297 = vmax.f32 %v4265, 0.0
        %v4298 = vmax.f32 %v4266, 0.0
        %v4299 = vmax.f32 %v4267, 0.0
        %v4300 = vmax.f32 %v4268, 0.0
        %v4301 = vmax.f32 %v4269, 0.0
        %s4302 = scalar_lea.vmem %s6, 32
        %v4303 = vld [vmem:[%s4302] sm:$0xff]
        %v4304 = vld [vmem:[%s4302 + $0x8] sm:$0xff]
        %v4305 = vld [vmem:[%s4302 + $0x10] sm:$0xff]
        %v4306 = vld [vmem:[%s4302 + $0x18] sm:$0xff]
        %v4308 = vsel %vm546, %v4270, 0
        %v4311 = vsel %vm546, %v4271, 0
        %v4314 = vsel %vm546, %v4272, 0
        %v4317 = vsel %vm546, %v4273, 0
        %v4320 = vsel %vm546, %v4274, 0
        %v4323 = vsel %vm546, %v4275, 0
        %v4326 = vsel %vm546, %v4276, 0
        %v4329 = vsel %vm546, %v4277, 0
        %v4332 = vsel %vm546, %v4278, 0
        %v4335 = vsel %vm546, %v4279, 0
        %v4338 = vsel %vm546, %v4280, 0
        %v4341 = vsel %vm546, %v4281, 0
        %v4344 = vsel %vm546, %v4282, 0
        %v4347 = vsel %vm546, %v4283, 0
        %v4350 = vsel %vm546, %v4284, 0
        %v4353 = vsel %vm546, %v4285, 0
        %v4356 = vsel %vm546, %v4286, 0
        %v4359 = vsel %vm546, %v4287, 0
        %v4362 = vsel %vm546, %v4288, 0
        %v4365 = vsel %vm546, %v4289, 0
        %v4368 = vsel %vm546, %v4290, 0
        %v4371 = vsel %vm546, %v4291, 0
        %v4374 = vsel %vm546, %v4292, 0
        %v4377 = vsel %vm546, %v4293, 0
        %v4380 = vsel %vm546, %v4294, 0
        %v4383 = vsel %vm546, %v4295, 0
        %v4386 = vsel %vm546, %v4296, 0
        %v4389 = vsel %vm546, %v4297, 0
        %v4392 = vsel %vm546, %v4298, 0
        %v4395 = vsel %vm546, %v4299, 0
        %v4398 = vsel %vm546, %v4300, 0
        %v4401 = vsel %vm546, %v4301, 0
        %4403 = vmatpush.msra.mxu0 0.0
        %4404 = vmatpush.msra.mxu0 0.0
        %4405 = vmatpush.msra.mxu0 0.0
        %4406 = vmatpush.msra.mxu0 0.0
        %4407 = vmatpush.msra.mxu0 0.0
        %4408 = vmatpush.msra.mxu0 0.0
        %4409 = vmatpush.msra.mxu0 0.0
        %4410 = vmatpush.msra.mxu0 0.0
        %4411 = vmatpush.msra.mxu0 0.0
        %4412 = vmatpush.msra.mxu0 0.0
        %4413 = vmatpush.msra.mxu0 0.0
        %4414 = vmatpush.msra.mxu0 0.0
        %4415 = vmatpush.msra.mxu0 %v4306
        %4416 = vmatpush.msra.mxu0 %v4305
        %4417 = vmatpush.msra.mxu0 %v4304
        %4418 = vmatpush.msra.mxu0 %v4303
        %4419 = vmatmul.f32.gmra.mxu0 %v4308
        %v4420 = vpop.f32.mrf.mxu0
        %v4421 = vadd.f32 0.0, %v4420
        %4422 = vmatmul.f32.gmra.mxu0 %v4311
        %v4423 = vpop.f32.mrf.mxu0
        %v4424 = vadd.f32 0.0, %v4423
        %4425 = vmatmul.f32.gmra.mxu0 %v4314
        %v4426 = vpop.f32.mrf.mxu0
        %v4427 = vadd.f32 0.0, %v4426
        %4428 = vmatmul.f32.gmra.mxu0 %v4317
        %v4429 = vpop.f32.mrf.mxu0
        %v4430 = vadd.f32 0.0, %v4429
        %4431 = vmatmul.f32.gmra.mxu0 %v4320
        %v4432 = vpop.f32.mrf.mxu0
        %v4433 = vadd.f32 0.0, %v4432
        %4434 = vmatmul.f32.gmra.mxu0 %v4323
        %v4435 = vpop.f32.mrf.mxu0
        %v4436 = vadd.f32 0.0, %v4435
        %4437 = vmatmul.f32.gmra.mxu0 %v4326
        %v4438 = vpop.f32.mrf.mxu0
        %v4439 = vadd.f32 0.0, %v4438
        %4440 = vmatmul.f32.gmra.mxu0 %v4329
        %v4441 = vpop.f32.mrf.mxu0
        %v4442 = vadd.f32 0.0, %v4441
        %4443 = vmatmul.f32.gmra.mxu0 %v4332
        %v4444 = vpop.f32.mrf.mxu0
        %v4445 = vadd.f32 0.0, %v4444
        %4446 = vmatmul.f32.gmra.mxu0 %v4335
        %v4447 = vpop.f32.mrf.mxu0
        %v4448 = vadd.f32 0.0, %v4447
        %4449 = vmatmul.f32.gmra.mxu0 %v4338
        %v4450 = vpop.f32.mrf.mxu0
        %v4451 = vadd.f32 0.0, %v4450
        %4452 = vmatmul.f32.gmra.mxu0 %v4341
        %v4453 = vpop.f32.mrf.mxu0
        %v4454 = vadd.f32 0.0, %v4453
        %4455 = vmatmul.f32.gmra.mxu0 %v4344
        %v4456 = vpop.f32.mrf.mxu0
        %v4457 = vadd.f32 0.0, %v4456
        %4458 = vmatmul.f32.gmra.mxu0 %v4347
        %v4459 = vpop.f32.mrf.mxu0
        %v4460 = vadd.f32 0.0, %v4459
        %4461 = vmatmul.f32.gmra.mxu0 %v4350
        %v4462 = vpop.f32.mrf.mxu0
        %v4463 = vadd.f32 0.0, %v4462
        %4464 = vmatmul.f32.gmra.mxu0 %v4353
        %v4465 = vpop.f32.mrf.mxu0
        %v4466 = vadd.f32 0.0, %v4465
        %4467 = vmatmul.f32.gmra.mxu0 %v4356
        %v4468 = vpop.f32.mrf.mxu0
        %v4469 = vadd.f32 0.0, %v4468
        %4470 = vmatmul.f32.gmra.mxu0 %v4359
        %v4471 = vpop.f32.mrf.mxu0
        %v4472 = vadd.f32 0.0, %v4471
        %4473 = vmatmul.f32.gmra.mxu0 %v4362
        %v4474 = vpop.f32.mrf.mxu0
        %v4475 = vadd.f32 0.0, %v4474
        %4476 = vmatmul.f32.gmra.mxu0 %v4365
        %v4477 = vpop.f32.mrf.mxu0
        %v4478 = vadd.f32 0.0, %v4477
        %4479 = vmatmul.f32.gmra.mxu0 %v4368
        %v4480 = vpop.f32.mrf.mxu0
        %v4481 = vadd.f32 0.0, %v4480
        %4482 = vmatmul.f32.gmra.mxu0 %v4371
        %v4483 = vpop.f32.mrf.mxu0
        %v4484 = vadd.f32 0.0, %v4483
        %4485 = vmatmul.f32.gmra.mxu0 %v4374
        %v4486 = vpop.f32.mrf.mxu0
        %v4487 = vadd.f32 0.0, %v4486
        %4488 = vmatmul.f32.gmra.mxu0 %v4377
        %v4489 = vpop.f32.mrf.mxu0
        %v4490 = vadd.f32 0.0, %v4489
        %4491 = vmatmul.f32.gmra.mxu0 %v4380
        %v4492 = vpop.f32.mrf.mxu0
        %v4493 = vadd.f32 0.0, %v4492
        %4494 = vmatmul.f32.gmra.mxu0 %v4383
        %v4495 = vpop.f32.mrf.mxu0
        %v4496 = vadd.f32 0.0, %v4495
        %4497 = vmatmul.f32.gmra.mxu0 %v4386
        %v4498 = vpop.f32.mrf.mxu0
        %v4499 = vadd.f32 0.0, %v4498
        %4500 = vmatmul.f32.gmra.mxu0 %v4389
        %v4501 = vpop.f32.mrf.mxu0
        %v4502 = vadd.f32 0.0, %v4501
        %4503 = vmatmul.f32.gmra.mxu0 %v4392
        %v4504 = vpop.f32.mrf.mxu0
        %v4505 = vadd.f32 0.0, %v4504
        %4506 = vmatmul.f32.gmra.mxu0 %v4395
        %v4507 = vpop.f32.mrf.mxu0
        %v4508 = vadd.f32 0.0, %v4507
        %4509 = vmatmul.f32.gmra.mxu0 %v4398
        %v4510 = vpop.f32.mrf.mxu0
        %v4511 = vadd.f32 0.0, %v4510
        %4512 = vmatmul.f32.gmra.mxu0 %v4401
        %v4513 = vpop.f32.mrf.mxu0
        %v4514 = vadd.f32 0.0, %v4513
        %4515 = vdwg.mxu0
        %s4516 = scalar_lea.vmem %s7, 1
        %v4517 = vld [vmem:[%s4516] sm:$0x1]
        %s4518 = scalar_lea.vmem %s8, 1
        %v4519 = vld [vmem:[%s4518] sm:$0x1]
        %v4521 = vperm.slane %v4517, 0
        %v4523 = vmul.f32 %v4421, %v4521
        %v4524 = vmul.f32 %v4424, %v4521
        %v4525 = vmul.f32 %v4427, %v4521
        %v4526 = vmul.f32 %v4430, %v4521
        %v4527 = vmul.f32 %v4433, %v4521
        %v4528 = vmul.f32 %v4436, %v4521
        %v4529 = vmul.f32 %v4439, %v4521
        %v4530 = vmul.f32 %v4442, %v4521
        %v4531 = vmul.f32 %v4445, %v4521
        %v4532 = vmul.f32 %v4448, %v4521
        %v4533 = vmul.f32 %v4451, %v4521
        %v4534 = vmul.f32 %v4454, %v4521
        %v4535 = vmul.f32 %v4457, %v4521
        %v4536 = vmul.f32 %v4460, %v4521
        %v4537 = vmul.f32 %v4463, %v4521
        %v4538 = vmul.f32 %v4466, %v4521
        %v4539 = vmul.f32 %v4469, %v4521
        %v4540 = vmul.f32 %v4472, %v4521
        %v4541 = vmul.f32 %v4475, %v4521
        %v4542 = vmul.f32 %v4478, %v4521
        %v4543 = vmul.f32 %v4481, %v4521
        %v4544 = vmul.f32 %v4484, %v4521
        %v4545 = vmul.f32 %v4487, %v4521
        %v4546 = vmul.f32 %v4490, %v4521
        %v4547 = vmul.f32 %v4493, %v4521
        %v4548 = vmul.f32 %v4496, %v4521
        %v4549 = vmul.f32 %v4499, %v4521
        %v4550 = vmul.f32 %v4502, %v4521
        %v4551 = vmul.f32 %v4505, %v4521
        %v4552 = vmul.f32 %v4508, %v4521
        %v4553 = vmul.f32 %v4511, %v4521
        %v4554 = vmul.f32 %v4514, %v4521
        %v4556 = vperm.slane %v4519, 0
        %v4558 = vadd.f32 %v4523, %v4556
        %v4559 = vadd.f32 %v4524, %v4556
        %v4560 = vadd.f32 %v4525, %v4556
        %v4561 = vadd.f32 %v4526, %v4556
        %v4562 = vadd.f32 %v4527, %v4556
        %v4563 = vadd.f32 %v4528, %v4556
        %v4564 = vadd.f32 %v4529, %v4556
        %v4565 = vadd.f32 %v4530, %v4556
        %v4566 = vadd.f32 %v4531, %v4556
        %v4567 = vadd.f32 %v4532, %v4556
        %v4568 = vadd.f32 %v4533, %v4556
        %v4569 = vadd.f32 %v4534, %v4556
        %v4570 = vadd.f32 %v4535, %v4556
        %v4571 = vadd.f32 %v4536, %v4556
        %v4572 = vadd.f32 %v4537, %v4556
        %v4573 = vadd.f32 %v4538, %v4556
        %v4574 = vadd.f32 %v4539, %v4556
        %v4575 = vadd.f32 %v4540, %v4556
        %v4576 = vadd.f32 %v4541, %v4556
        %v4577 = vadd.f32 %v4542, %v4556
        %v4578 = vadd.f32 %v4543, %v4556
        %v4579 = vadd.f32 %v4544, %v4556
        %v4580 = vadd.f32 %v4545, %v4556
        %v4581 = vadd.f32 %v4546, %v4556
        %v4582 = vadd.f32 %v4547, %v4556
        %v4583 = vadd.f32 %v4548, %v4556
        %v4584 = vadd.f32 %v4549, %v4556
        %v4585 = vadd.f32 %v4550, %v4556
        %v4586 = vadd.f32 %v4551, %v4556
        %v4587 = vadd.f32 %v4552, %v4556
        %v4588 = vadd.f32 %v4553, %v4556
        %v4589 = vadd.f32 %v4554, %v4556
        %v4590 = vmax.f32 %v4558, 0.0
        %v4591 = vmax.f32 %v4559, 0.0
        %v4592 = vmax.f32 %v4560, 0.0
        %v4593 = vmax.f32 %v4561, 0.0
        %v4594 = vmax.f32 %v4562, 0.0
        %v4595 = vmax.f32 %v4563, 0.0
        %v4596 = vmax.f32 %v4564, 0.0
        %v4597 = vmax.f32 %v4565, 0.0
        %v4598 = vmax.f32 %v4566, 0.0
        %v4599 = vmax.f32 %v4567, 0.0
        %v4600 = vmax.f32 %v4568, 0.0
        %v4601 = vmax.f32 %v4569, 0.0
        %v4602 = vmax.f32 %v4570, 0.0
        %v4603 = vmax.f32 %v4571, 0.0
        %v4604 = vmax.f32 %v4572, 0.0
        %v4605 = vmax.f32 %v4573, 0.0
        %v4606 = vmax.f32 %v4574, 0.0
        %v4607 = vmax.f32 %v4575, 0.0
        %v4608 = vmax.f32 %v4576, 0.0
        %v4609 = vmax.f32 %v4577, 0.0
        %v4610 = vmax.f32 %v4578, 0.0
        %v4611 = vmax.f32 %v4579, 0.0
        %v4612 = vmax.f32 %v4580, 0.0
        %v4613 = vmax.f32 %v4581, 0.0
        %v4614 = vmax.f32 %v4582, 0.0
        %v4615 = vmax.f32 %v4583, 0.0
        %v4616 = vmax.f32 %v4584, 0.0
        %v4617 = vmax.f32 %v4585, 0.0
        %v4618 = vmax.f32 %v4586, 0.0
        %v4619 = vmax.f32 %v4587, 0.0
        %v4620 = vmax.f32 %v4588, 0.0
        %v4621 = vmax.f32 %v4589, 0.0
        %4622 = vst.msk [vmem:[%s693 + $0x8] sm:$0xff] %vm546, %v4590
        %4623 = vst.msk [vmem:[%s693 + $0x10] sm:$0xff] %vm546, %v4591
        %4624 = vst.msk [vmem:[%s693 + $0x28] sm:$0xff] %vm546, %v4592
        %4625 = vst.msk [vmem:[%s693 + $0x30] sm:$0xff] %vm546, %v4593
        %4626 = vst.msk [vmem:[%s693 + $0x48] sm:$0xff] %vm546, %v4594
        %4627 = vst.msk [vmem:[%s693 + $0x50] sm:$0xff] %vm546, %v4595
        %4628 = vst.msk [vmem:[%s693 + $0x68] sm:$0xff] %vm546, %v4596
        %4629 = vst.msk [vmem:[%s693 + $0x70] sm:$0xff] %vm546, %v4597
        %4630 = vst.msk [vmem:[%s693 + $0x88] sm:$0xff] %vm546, %v4598
        %4631 = vst.msk [vmem:[%s693 + $0x90] sm:$0xff] %vm546, %v4599
        %4632 = vst.msk [vmem:[%s693 + $0xa8] sm:$0xff] %vm546, %v4600
        %4633 = vst.msk [vmem:[%s693 + $0xb0] sm:$0xff] %vm546, %v4601
        %4634 = vst.msk [vmem:[%s693 + $0xc8] sm:$0xff] %vm546, %v4602
        %4635 = vst.msk [vmem:[%s693 + $0xd0] sm:$0xff] %vm546, %v4603
        %4636 = vst.msk [vmem:[%s693 + $0xe8] sm:$0xff] %vm546, %v4604
        %4637 = vst.msk [vmem:[%s693 + $0xf0] sm:$0xff] %vm546, %v4605
        %4638 = vst.msk [vmem:[%s693 + $0x108] sm:$0xff] %vm546, %v4606
        %4639 = vst.msk [vmem:[%s693 + $0x110] sm:$0xff] %vm546, %v4607
        %4640 = vst.msk [vmem:[%s693 + $0x128] sm:$0xff] %vm546, %v4608
        %4641 = vst.msk [vmem:[%s693 + $0x130] sm:$0xff] %vm546, %v4609
        %4642 = vst.msk [vmem:[%s693 + $0x148] sm:$0xff] %vm546, %v4610
        %4643 = vst.msk [vmem:[%s693 + $0x150] sm:$0xff] %vm546, %v4611
        %4644 = vst.msk [vmem:[%s693 + $0x168] sm:$0xff] %vm546, %v4612
        %4645 = vst.msk [vmem:[%s693 + $0x170] sm:$0xff] %vm546, %v4613
        %4646 = vst.msk [vmem:[%s693 + $0x188] sm:$0xff] %vm546, %v4614
        %4647 = vst.msk [vmem:[%s693 + $0x190] sm:$0xff] %vm546, %v4615
        %4648 = vst.msk [vmem:[%s693 + $0x1a8] sm:$0xff] %vm546, %v4616
        %4649 = vst.msk [vmem:[%s693 + $0x1b0] sm:$0xff] %vm546, %v4617
        %4650 = vst.msk [vmem:[%s693 + $0x1c8] sm:$0xff] %vm546, %v4618
        %4651 = vst.msk [vmem:[%s693 + $0x1d0] sm:$0xff] %vm546, %v4619
        %4652 = vst.msk [vmem:[%s693 + $0x1e8] sm:$0xff] %vm546, %v4620
        %4653 = vst.msk [vmem:[%s693 + $0x1f0] sm:$0xff] %vm546, %v4621
        %s4654 = scalar_lea.vmem %s9, 288
        %v4655 = vld [vmem:[%s4654] sm:$0xff]
        %v4656 = vld [vmem:[%s4654 + $0x8] sm:$0xff]
        %v4657 = vld [vmem:[%s4654 + $0x10] sm:$0xff]
        %v4658 = vld [vmem:[%s4654 + $0x18] sm:$0xff]
        %v4659 = vld [vmem:[%s4654 + $0x20] sm:$0xff]
        %v4660 = vld [vmem:[%s4654 + $0x28] sm:$0xff]
        %v4661 = vld [vmem:[%s4654 + $0x30] sm:$0xff]
        %v4662 = vld [vmem:[%s4654 + $0x38] sm:$0xff]
        %v4663 = vld [vmem:[%s4654 + $0x40] sm:$0xff]
        %v4664 = vld [vmem:[%s4654 + $0x48] sm:$0xff]
        %v4665 = vld [vmem:[%s4654 + $0x50] sm:$0xff]
        %v4666 = vld [vmem:[%s4654 + $0x58] sm:$0xff]
        %v4667 = vld [vmem:[%s4654 + $0x60] sm:$0xff]
        %v4668 = vld [vmem:[%s4654 + $0x68] sm:$0xff]
        %v4669 = vld [vmem:[%s4654 + $0x70] sm:$0xff]
        %v4670 = vld [vmem:[%s4654 + $0x78] sm:$0xff]
        %v4671 = vld [vmem:[%s4654 + $0x80] sm:$0xff]
        %v4672 = vld [vmem:[%s4654 + $0x88] sm:$0xff]
        %v4673 = vld [vmem:[%s4654 + $0x90] sm:$0xff]
        %v4674 = vld [vmem:[%s4654 + $0x98] sm:$0xff]
        %v4675 = vld [vmem:[%s4654 + $0xa0] sm:$0xff]
        %v4676 = vld [vmem:[%s4654 + $0xa8] sm:$0xff]
        %v4677 = vld [vmem:[%s4654 + $0xb0] sm:$0xff]
        %v4678 = vld [vmem:[%s4654 + $0xb8] sm:$0xff]
        %v4679 = vld [vmem:[%s4654 + $0xc0] sm:$0xff]
        %v4680 = vld [vmem:[%s4654 + $0xc8] sm:$0xff]
        %v4681 = vld [vmem:[%s4654 + $0xd0] sm:$0xff]
        %v4682 = vld [vmem:[%s4654 + $0xd8] sm:$0xff]
        %v4683 = vld [vmem:[%s4654 + $0xe0] sm:$0xff]
        %v4684 = vld [vmem:[%s4654 + $0xe8] sm:$0xff]
        %v4685 = vld [vmem:[%s4654 + $0xf0] sm:$0xff]
        %v4686 = vld [vmem:[%s4654 + $0xf8] sm:$0xff]
        %v4687 = vld [vmem:[%s4654 + $0x100] sm:$0xff]
        %v4688 = vld [vmem:[%s4654 + $0x108] sm:$0xff]
        %v4689 = vld [vmem:[%s4654 + $0x110] sm:$0xff]
        %v4690 = vld [vmem:[%s4654 + $0x118] sm:$0xff]
        %v4691 = vld [vmem:[#allocation4] sm:$0xff]
        %v4692 = vld [vmem:[#allocation4 + $0x8] sm:$0xff]
        %v4693 = vld [vmem:[#allocation4 + $0x10] sm:$0xff]
        %v4694 = vld [vmem:[#allocation4 + $0x18] sm:$0x1]
        %v4695 = vld [vmem:[#allocation4 + $0x20] sm:$0xff]
        %v4696 = vld [vmem:[#allocation4 + $0x28] sm:$0xff]
        %v4697 = vld [vmem:[#allocation4 + $0x30] sm:$0xff]
        %v4698 = vld [vmem:[#allocation4 + $0x38] sm:$0x1]
        %v4699 = vld [vmem:[#allocation4 + $0x40] sm:$0xff]
        %v4700 = vld [vmem:[#allocation4 + $0x48] sm:$0xff]
        %v4701 = vld [vmem:[#allocation4 + $0x50] sm:$0xff]
        %v4702 = vld [vmem:[#allocation4 + $0x58] sm:$0x1]
        %v4703 = vld [vmem:[#allocation4 + $0x60] sm:$0xff]
        %v4704 = vld [vmem:[#allocation4 + $0x68] sm:$0xff]
        %v4705 = vld [vmem:[#allocation4 + $0x70] sm:$0xff]
        %v4706 = vld [vmem:[#allocation4 + $0x78] sm:$0x1]
        %v4707 = vld [vmem:[#allocation4 + $0x80] sm:$0xff]
        %v4708 = vld [vmem:[#allocation4 + $0x88] sm:$0xff]
        %v4709 = vld [vmem:[#allocation4 + $0x90] sm:$0xff]
        %v4710 = vld [vmem:[#allocation4 + $0x98] sm:$0x1]
        %v4711 = vld [vmem:[#allocation4 + $0xa0] sm:$0xff]
        %v4712 = vld [vmem:[#allocation4 + $0xa8] sm:$0xff]
        %v4713 = vld [vmem:[#allocation4 + $0xb0] sm:$0xff]
        %v4714 = vld [vmem:[#allocation4 + $0xb8] sm:$0x1]
        %v4715 = vld [vmem:[#allocation4 + $0xc0] sm:$0xff]
        %v4716 = vld [vmem:[#allocation4 + $0xc8] sm:$0xff]
        %v4717 = vld [vmem:[#allocation4 + $0xd0] sm:$0xff]
        %v4718 = vld [vmem:[#allocation4 + $0xd8] sm:$0x1]
        %v4719 = vld [vmem:[#allocation4 + $0xe0] sm:$0xff]
        %v4720 = vld [vmem:[#allocation4 + $0xe8] sm:$0xff]
        %v4721 = vld [vmem:[#allocation4 + $0xf0] sm:$0xff]
        %v4722 = vld [vmem:[#allocation4 + $0xf8] sm:$0x1]
        %v4723 = vld [vmem:[#allocation4 + $0x100] sm:$0xff]
        %v4724 = vld [vmem:[#allocation4 + $0x108] sm:$0xff]
        %v4725 = vld [vmem:[#allocation4 + $0x110] sm:$0xff]
        %v4726 = vld [vmem:[#allocation4 + $0x118] sm:$0x1]
        %v4727 = vld [vmem:[#allocation4 + $0x120] sm:$0xff]
        %v4728 = vld [vmem:[#allocation4 + $0x128] sm:$0xff]
        %v4729 = vld [vmem:[#allocation4 + $0x130] sm:$0xff]
        %v4730 = vld [vmem:[#allocation4 + $0x138] sm:$0x1]
        %v4731 = vld [vmem:[#allocation4 + $0x140] sm:$0xff]
        %v4732 = vld [vmem:[#allocation4 + $0x148] sm:$0xff]
        %v4733 = vld [vmem:[#allocation4 + $0x150] sm:$0xff]
        %v4734 = vld [vmem:[#allocation4 + $0x158] sm:$0x1]
        %v4735 = vld [vmem:[#allocation4 + $0x160] sm:$0xff]
        %v4736 = vld [vmem:[#allocation4 + $0x168] sm:$0xff]
        %v4737 = vld [vmem:[#allocation4 + $0x170] sm:$0xff]
        %v4738 = vld [vmem:[#allocation4 + $0x178] sm:$0x1]
        %v4739 = vld [vmem:[#allocation4 + $0x180] sm:$0xff]
        %v4740 = vld [vmem:[#allocation4 + $0x188] sm:$0xff]
        %v4741 = vld [vmem:[#allocation4 + $0x190] sm:$0xff]
        %v4742 = vld [vmem:[#allocation4 + $0x198] sm:$0x1]
        %v4743 = vld [vmem:[#allocation4 + $0x1a0] sm:$0xff]
        %v4744 = vld [vmem:[#allocation4 + $0x1a8] sm:$0xff]
        %v4745 = vld [vmem:[#allocation4 + $0x1b0] sm:$0xff]
        %v4746 = vld [vmem:[#allocation4 + $0x1b8] sm:$0x1]
        %v4747 = vld [vmem:[#allocation4 + $0x1c0] sm:$0xff]
        %v4748 = vld [vmem:[#allocation4 + $0x1c8] sm:$0xff]
        %v4749 = vld [vmem:[#allocation4 + $0x1d0] sm:$0xff]
        %v4750 = vld [vmem:[#allocation4 + $0x1d8] sm:$0x1]
        %v4751 = vld [vmem:[#allocation4 + $0x1e0] sm:$0xff]
        %v4752 = vld [vmem:[#allocation4 + $0x1e8] sm:$0xff]
        %v4753 = vld [vmem:[#allocation4 + $0x1f0] sm:$0xff]
        %v4754 = vld [vmem:[#allocation4 + $0x1f8] sm:$0x1]
        %v4755 = vld [vmem:[#allocation4 + $0x200] sm:$0xff]
        %v4756 = vld [vmem:[#allocation4 + $0x208] sm:$0xff]
        %v4757 = vld [vmem:[#allocation4 + $0x210] sm:$0xff]
        %v4758 = vld [vmem:[#allocation4 + $0x218] sm:$0x1]
        %v4759 = vld [vmem:[#allocation4 + $0x220] sm:$0xff]
        %v4760 = vld [vmem:[#allocation4 + $0x228] sm:$0xff]
        %v4761 = vld [vmem:[#allocation4 + $0x230] sm:$0xff]
        %v4762 = vld [vmem:[#allocation4 + $0x238] sm:$0x1]
        %v4799 = vrot.slane %v4692, 1
        %v4800 = vrot.slane %v4693, 1
        %v4801 = vsel %vm870, %v4799, %v4800
        %v4802 = vrot.slane %v4696, 1
        %v4803 = vrot.slane %v4697, 1
        %v4804 = vsel %vm870, %v4802, %v4803
        %v4805 = vrot.slane %v4700, 1
        %v4806 = vrot.slane %v4701, 1
        %v4807 = vsel %vm870, %v4805, %v4806
        %v4808 = vrot.slane %v4704, 1
        %v4809 = vrot.slane %v4705, 1
        %v4810 = vsel %vm870, %v4808, %v4809
        %v4811 = vrot.slane %v4708, 1
        %v4812 = vrot.slane %v4709, 1
        %v4813 = vsel %vm870, %v4811, %v4812
        %v4814 = vrot.slane %v4712, 1
        %v4815 = vrot.slane %v4713, 1
        %v4816 = vsel %vm870, %v4814, %v4815
        %v4817 = vrot.slane %v4716, 1
        %v4818 = vrot.slane %v4717, 1
        %v4819 = vsel %vm870, %v4817, %v4818
        %v4820 = vrot.slane %v4720, 1
        %v4821 = vrot.slane %v4721, 1
        %v4822 = vsel %vm870, %v4820, %v4821
        %v4823 = vrot.slane %v4724, 1
        %v4824 = vrot.slane %v4725, 1
        %v4825 = vsel %vm870, %v4823, %v4824
        %v4826 = vrot.slane %v4728, 1
        %v4827 = vrot.slane %v4729, 1
        %v4828 = vsel %vm870, %v4826, %v4827
        %v4829 = vrot.slane %v4732, 1
        %v4830 = vrot.slane %v4733, 1
        %v4831 = vsel %vm870, %v4829, %v4830
        %v4832 = vrot.slane %v4736, 1
        %v4833 = vrot.slane %v4737, 1
        %v4834 = vsel %vm870, %v4832, %v4833
        %v4835 = vrot.slane %v4740, 1
        %v4836 = vrot.slane %v4741, 1
        %v4837 = vsel %vm870, %v4835, %v4836
        %v4838 = vrot.slane %v4744, 1
        %v4839 = vrot.slane %v4745, 1
        %v4840 = vsel %vm870, %v4838, %v4839
        %v4841 = vrot.slane %v4748, 1
        %v4842 = vrot.slane %v4749, 1
        %v4843 = vsel %vm870, %v4841, %v4842
        %v4844 = vrot.slane %v4752, 1
        %v4845 = vrot.slane %v4753, 1
        %v4846 = vsel %vm870, %v4844, %v4845
        %v4847 = vrot.slane %v4756, 1
        %v4848 = vrot.slane %v4757, 1
        %v4849 = vsel %vm870, %v4847, %v4848
        %v4850 = vrot.slane %v4760, 1
        %v4851 = vrot.slane %v4761, 1
        %v4852 = vsel %vm870, %v4850, %v4851
        %4853 = vrot.lane.b32.xlu0 %v4799, 32
        %v4854 = vpop.permute.xlu0 %4853
        %4855 = vrot.lane.b32.xlu0 %v4801, 32
        %v4856 = vpop.permute.xlu0 %4855
        %4857 = vrot.lane.b32.xlu0 %v4800, 32
        %v4858 = vpop.permute.xlu0 %4857
        %4859 = vrot.lane.b32.xlu0 %v4802, 32
        %v4860 = vpop.permute.xlu0 %4859
        %4861 = vrot.lane.b32.xlu0 %v4804, 32
        %v4862 = vpop.permute.xlu0 %4861
        %4863 = vrot.lane.b32.xlu0 %v4803, 32
        %v4864 = vpop.permute.xlu0 %4863
        %4865 = vrot.lane.b32.xlu0 %v4805, 32
        %v4866 = vpop.permute.xlu0 %4865
        %4867 = vrot.lane.b32.xlu0 %v4807, 32
        %v4868 = vpop.permute.xlu0 %4867
        %4869 = vrot.lane.b32.xlu0 %v4806, 32
        %v4870 = vpop.permute.xlu0 %4869
        %4871 = vrot.lane.b32.xlu0 %v4808, 32
        %v4872 = vpop.permute.xlu0 %4871
        %4873 = vrot.lane.b32.xlu0 %v4810, 32
        %v4874 = vpop.permute.xlu0 %4873
        %4875 = vrot.lane.b32.xlu0 %v4809, 32
        %v4876 = vpop.permute.xlu0 %4875
        %4877 = vrot.lane.b32.xlu0 %v4811, 32
        %v4878 = vpop.permute.xlu0 %4877
        %4879 = vrot.lane.b32.xlu0 %v4813, 32
        %v4880 = vpop.permute.xlu0 %4879
        %4881 = vrot.lane.b32.xlu0 %v4812, 32
        %v4882 = vpop.permute.xlu0 %4881
        %4883 = vrot.lane.b32.xlu0 %v4814, 32
        %v4884 = vpop.permute.xlu0 %4883
        %4885 = vrot.lane.b32.xlu0 %v4816, 32
        %v4886 = vpop.permute.xlu0 %4885
        %4887 = vrot.lane.b32.xlu0 %v4815, 32
        %v4888 = vpop.permute.xlu0 %4887
        %4889 = vrot.lane.b32.xlu0 %v4817, 32
        %v4890 = vpop.permute.xlu0 %4889
        %4891 = vrot.lane.b32.xlu0 %v4819, 32
        %v4892 = vpop.permute.xlu0 %4891
        %4893 = vrot.lane.b32.xlu0 %v4818, 32
        %v4894 = vpop.permute.xlu0 %4893
        %4895 = vrot.lane.b32.xlu0 %v4820, 32
        %v4896 = vpop.permute.xlu0 %4895
        %4897 = vrot.lane.b32.xlu0 %v4822, 32
        %v4898 = vpop.permute.xlu0 %4897
        %4899 = vrot.lane.b32.xlu0 %v4821, 32
        %v4900 = vpop.permute.xlu0 %4899
        %4901 = vrot.lane.b32.xlu0 %v4823, 32
        %v4902 = vpop.permute.xlu0 %4901
        %4903 = vrot.lane.b32.xlu0 %v4825, 32
        %v4904 = vpop.permute.xlu0 %4903
        %4905 = vrot.lane.b32.xlu0 %v4824, 32
        %v4906 = vpop.permute.xlu0 %4905
        %4907 = vrot.lane.b32.xlu0 %v4826, 32
        %v4908 = vpop.permute.xlu0 %4907
        %4909 = vrot.lane.b32.xlu0 %v4828, 32
        %v4910 = vpop.permute.xlu0 %4909
        %4911 = vrot.lane.b32.xlu0 %v4827, 32
        %v4912 = vpop.permute.xlu0 %4911
        %4913 = vrot.lane.b32.xlu0 %v4829, 32
        %v4914 = vpop.permute.xlu0 %4913
        %4915 = vrot.lane.b32.xlu0 %v4831, 32
        %v4916 = vpop.permute.xlu0 %4915
        %4917 = vrot.lane.b32.xlu0 %v4830, 32
        %v4918 = vpop.permute.xlu0 %4917
        %4919 = vrot.lane.b32.xlu0 %v4832, 32
        %v4920 = vpop.permute.xlu0 %4919
        %4921 = vrot.lane.b32.xlu0 %v4834, 32
        %v4922 = vpop.permute.xlu0 %4921
        %4923 = vrot.lane.b32.xlu0 %v4833, 32
        %v4924 = vpop.permute.xlu0 %4923
        %4925 = vrot.lane.b32.xlu0 %v4835, 32
        %v4926 = vpop.permute.xlu0 %4925
        %4927 = vrot.lane.b32.xlu0 %v4837, 32
        %v4928 = vpop.permute.xlu0 %4927
        %4929 = vrot.lane.b32.xlu0 %v4836, 32
        %v4930 = vpop.permute.xlu0 %4929
        %4931 = vrot.lane.b32.xlu0 %v4838, 32
        %v4932 = vpop.permute.xlu0 %4931
        %4933 = vrot.lane.b32.xlu0 %v4840, 32
        %v4934 = vpop.permute.xlu0 %4933
        %4935 = vrot.lane.b32.xlu0 %v4839, 32
        %v4936 = vpop.permute.xlu0 %4935
        %4937 = vrot.lane.b32.xlu0 %v4841, 32
        %v4938 = vpop.permute.xlu0 %4937
        %4939 = vrot.lane.b32.xlu0 %v4843, 32
        %v4940 = vpop.permute.xlu0 %4939
        %4941 = vrot.lane.b32.xlu0 %v4842, 32
        %v4942 = vpop.permute.xlu0 %4941
        %4943 = vrot.lane.b32.xlu0 %v4844, 32
        %v4944 = vpop.permute.xlu0 %4943
        %4945 = vrot.lane.b32.xlu0 %v4846, 32
        %v4946 = vpop.permute.xlu0 %4945
        %4947 = vrot.lane.b32.xlu0 %v4845, 32
        %v4948 = vpop.permute.xlu0 %4947
        %4949 = vrot.lane.b32.xlu0 %v4847, 32
        %v4950 = vpop.permute.xlu0 %4949
        %4951 = vrot.lane.b32.xlu0 %v4849, 32
        %v4952 = vpop.permute.xlu0 %4951
        %4953 = vrot.lane.b32.xlu0 %v4848, 32
        %v4954 = vpop.permute.xlu0 %4953
        %4955 = vrot.lane.b32.xlu0 %v4850, 32
        %v4956 = vpop.permute.xlu0 %4955
        %4957 = vrot.lane.b32.xlu0 %v4852, 32
        %v4958 = vpop.permute.xlu0 %4957
        %4959 = vrot.lane.b32.xlu0 %v4851, 32
        %v4960 = vpop.permute.xlu0 %4959
        %v5033 = vrot.slane %v4692, 2
        %v5034 = vrot.slane %v4693, 2
        %v5035 = vsel %vm1105, %v5033, %v5034
        %v5036 = vrot.slane %v4694, 2
        %v5037 = vsel %vm1105, %v5034, %v5036
        %v5038 = vrot.slane %v4696, 2
        %v5039 = vrot.slane %v4697, 2
        %v5040 = vsel %vm1105, %v5038, %v5039
        %v5041 = vrot.slane %v4698, 2
        %v5042 = vsel %vm1105, %v5039, %v5041
        %v5043 = vrot.slane %v4700, 2
        %v5044 = vrot.slane %v4701, 2
        %v5045 = vsel %vm1105, %v5043, %v5044
        %v5046 = vrot.slane %v4702, 2
        %v5047 = vsel %vm1105, %v5044, %v5046
        %v5048 = vrot.slane %v4704, 2
        %v5049 = vrot.slane %v4705, 2
        %v5050 = vsel %vm1105, %v5048, %v5049
        %v5051 = vrot.slane %v4706, 2
        %v5052 = vsel %vm1105, %v5049, %v5051
        %v5053 = vrot.slane %v4708, 2
        %v5054 = vrot.slane %v4709, 2
        %v5055 = vsel %vm1105, %v5053, %v5054
        %v5056 = vrot.slane %v4710, 2
        %v5057 = vsel %vm1105, %v5054, %v5056
        %v5058 = vrot.slane %v4712, 2
        %v5059 = vrot.slane %v4713, 2
        %v5060 = vsel %vm1105, %v5058, %v5059
        %v5061 = vrot.slane %v4714, 2
        %v5062 = vsel %vm1105, %v5059, %v5061
        %v5063 = vrot.slane %v4716, 2
        %v5064 = vrot.slane %v4717, 2
        %v5065 = vsel %vm1105, %v5063, %v5064
        %v5066 = vrot.slane %v4718, 2
        %v5067 = vsel %vm1105, %v5064, %v5066
        %v5068 = vrot.slane %v4720, 2
        %v5069 = vrot.slane %v4721, 2
        %v5070 = vsel %vm1105, %v5068, %v5069
        %v5071 = vrot.slane %v4722, 2
        %v5072 = vsel %vm1105, %v5069, %v5071
        %v5073 = vrot.slane %v4724, 2
        %v5074 = vrot.slane %v4725, 2
        %v5075 = vsel %vm1105, %v5073, %v5074
        %v5076 = vrot.slane %v4726, 2
        %v5077 = vsel %vm1105, %v5074, %v5076
        %v5078 = vrot.slane %v4728, 2
        %v5079 = vrot.slane %v4729, 2
        %v5080 = vsel %vm1105, %v5078, %v5079
        %v5081 = vrot.slane %v4730, 2
        %v5082 = vsel %vm1105, %v5079, %v5081
        %v5083 = vrot.slane %v4732, 2
        %v5084 = vrot.slane %v4733, 2
        %v5085 = vsel %vm1105, %v5083, %v5084
        %v5086 = vrot.slane %v4734, 2
        %v5087 = vsel %vm1105, %v5084, %v5086
        %v5088 = vrot.slane %v4736, 2
        %v5089 = vrot.slane %v4737, 2
        %v5090 = vsel %vm1105, %v5088, %v5089
        %v5091 = vrot.slane %v4738, 2
        %v5092 = vsel %vm1105, %v5089, %v5091
        %v5093 = vrot.slane %v4740, 2
        %v5094 = vrot.slane %v4741, 2
        %v5095 = vsel %vm1105, %v5093, %v5094
        %v5096 = vrot.slane %v4742, 2
        %v5097 = vsel %vm1105, %v5094, %v5096
        %v5098 = vrot.slane %v4744, 2
        %v5099 = vrot.slane %v4745, 2
        %v5100 = vsel %vm1105, %v5098, %v5099
        %v5101 = vrot.slane %v4746, 2
        %v5102 = vsel %vm1105, %v5099, %v5101
        %v5103 = vrot.slane %v4748, 2
        %v5104 = vrot.slane %v4749, 2
        %v5105 = vsel %vm1105, %v5103, %v5104
        %v5106 = vrot.slane %v4750, 2
        %v5107 = vsel %vm1105, %v5104, %v5106
        %v5108 = vrot.slane %v4752, 2
        %v5109 = vrot.slane %v4753, 2
        %v5110 = vsel %vm1105, %v5108, %v5109
        %v5111 = vrot.slane %v4754, 2
        %v5112 = vsel %vm1105, %v5109, %v5111
        %v5113 = vrot.slane %v4756, 2
        %v5114 = vrot.slane %v4757, 2
        %v5115 = vsel %vm1105, %v5113, %v5114
        %v5116 = vrot.slane %v4758, 2
        %v5117 = vsel %vm1105, %v5114, %v5116
        %v5118 = vrot.slane %v4760, 2
        %v5119 = vrot.slane %v4761, 2
        %v5120 = vsel %vm1105, %v5118, %v5119
        %v5121 = vrot.slane %v4762, 2
        %v5122 = vsel %vm1105, %v5119, %v5121
        %5123 = vrot.lane.b32.xlu0 %v5033, 64
        %v5124 = vpop.permute.xlu0 %5123
        %5125 = vrot.lane.b32.xlu0 %v5035, 64
        %v5126 = vpop.permute.xlu0 %5125
        %5127 = vrot.lane.b32.xlu0 %v5037, 64
        %v5128 = vpop.permute.xlu0 %5127
        %5129 = vrot.lane.b32.xlu0 %v5038, 64
        %v5130 = vpop.permute.xlu0 %5129
        %5131 = vrot.lane.b32.xlu0 %v5040, 64
        %v5132 = vpop.permute.xlu0 %5131
        %5133 = vrot.lane.b32.xlu0 %v5042, 64
        %v5134 = vpop.permute.xlu0 %5133
        %5135 = vrot.lane.b32.xlu0 %v5043, 64
        %v5136 = vpop.permute.xlu0 %5135
        %5137 = vrot.lane.b32.xlu0 %v5045, 64
        %v5138 = vpop.permute.xlu0 %5137
        %5139 = vrot.lane.b32.xlu0 %v5047, 64
        %v5140 = vpop.permute.xlu0 %5139
        %5141 = vrot.lane.b32.xlu0 %v5048, 64
        %v5142 = vpop.permute.xlu0 %5141
        %5143 = vrot.lane.b32.xlu0 %v5050, 64
        %v5144 = vpop.permute.xlu0 %5143
        %5145 = vrot.lane.b32.xlu0 %v5052, 64
        %v5146 = vpop.permute.xlu0 %5145
        %5147 = vrot.lane.b32.xlu0 %v5053, 64
        %v5148 = vpop.permute.xlu0 %5147
        %5149 = vrot.lane.b32.xlu0 %v5055, 64
        %v5150 = vpop.permute.xlu0 %5149
        %5151 = vrot.lane.b32.xlu0 %v5057, 64
        %v5152 = vpop.permute.xlu0 %5151
        %5153 = vrot.lane.b32.xlu0 %v5058, 64
        %v5154 = vpop.permute.xlu0 %5153
        %5155 = vrot.lane.b32.xlu0 %v5060, 64
        %v5156 = vpop.permute.xlu0 %5155
        %5157 = vrot.lane.b32.xlu0 %v5062, 64
        %v5158 = vpop.permute.xlu0 %5157
        %5159 = vrot.lane.b32.xlu0 %v5063, 64
        %v5160 = vpop.permute.xlu0 %5159
        %5161 = vrot.lane.b32.xlu0 %v5065, 64
        %v5162 = vpop.permute.xlu0 %5161
        %5163 = vrot.lane.b32.xlu0 %v5067, 64
        %v5164 = vpop.permute.xlu0 %5163
        %5165 = vrot.lane.b32.xlu0 %v5068, 64
        %v5166 = vpop.permute.xlu0 %5165
        %5167 = vrot.lane.b32.xlu0 %v5070, 64
        %v5168 = vpop.permute.xlu0 %5167
        %5169 = vrot.lane.b32.xlu0 %v5072, 64
        %v5170 = vpop.permute.xlu0 %5169
        %5171 = vrot.lane.b32.xlu0 %v5073, 64
        %v5172 = vpop.permute.xlu0 %5171
        %5173 = vrot.lane.b32.xlu0 %v5075, 64
        %v5174 = vpop.permute.xlu0 %5173
        %5175 = vrot.lane.b32.xlu0 %v5077, 64
        %v5176 = vpop.permute.xlu0 %5175
        %5177 = vrot.lane.b32.xlu0 %v5078, 64
        %v5178 = vpop.permute.xlu0 %5177
        %5179 = vrot.lane.b32.xlu0 %v5080, 64
        %v5180 = vpop.permute.xlu0 %5179
        %5181 = vrot.lane.b32.xlu0 %v5082, 64
        %v5182 = vpop.permute.xlu0 %5181
        %5183 = vrot.lane.b32.xlu0 %v5083, 64
        %v5184 = vpop.permute.xlu0 %5183
        %5185 = vrot.lane.b32.xlu0 %v5085, 64
        %v5186 = vpop.permute.xlu0 %5185
        %5187 = vrot.lane.b32.xlu0 %v5087, 64
        %v5188 = vpop.permute.xlu0 %5187
        %5189 = vrot.lane.b32.xlu0 %v5088, 64
        %v5190 = vpop.permute.xlu0 %5189
        %5191 = vrot.lane.b32.xlu0 %v5090, 64
        %v5192 = vpop.permute.xlu0 %5191
        %5193 = vrot.lane.b32.xlu0 %v5092, 64
        %v5194 = vpop.permute.xlu0 %5193
        %5195 = vrot.lane.b32.xlu0 %v5093, 64
        %v5196 = vpop.permute.xlu0 %5195
        %5197 = vrot.lane.b32.xlu0 %v5095, 64
        %v5198 = vpop.permute.xlu0 %5197
        %5199 = vrot.lane.b32.xlu0 %v5097, 64
        %v5200 = vpop.permute.xlu0 %5199
        %5201 = vrot.lane.b32.xlu0 %v5098, 64
        %v5202 = vpop.permute.xlu0 %5201
        %5203 = vrot.lane.b32.xlu0 %v5100, 64
        %v5204 = vpop.permute.xlu0 %5203
        %5205 = vrot.lane.b32.xlu0 %v5102, 64
        %v5206 = vpop.permute.xlu0 %5205
        %5207 = vrot.lane.b32.xlu0 %v5103, 64
        %v5208 = vpop.permute.xlu0 %5207
        %5209 = vrot.lane.b32.xlu0 %v5105, 64
        %v5210 = vpop.permute.xlu0 %5209
        %5211 = vrot.lane.b32.xlu0 %v5107, 64
        %v5212 = vpop.permute.xlu0 %5211
        %5213 = vrot.lane.b32.xlu0 %v5108, 64
        %v5214 = vpop.permute.xlu0 %5213
        %5215 = vrot.lane.b32.xlu0 %v5110, 64
        %v5216 = vpop.permute.xlu0 %5215
        %5217 = vrot.lane.b32.xlu0 %v5112, 64
        %v5218 = vpop.permute.xlu0 %5217
        %5219 = vrot.lane.b32.xlu0 %v5113, 64
        %v5220 = vpop.permute.xlu0 %5219
        %5221 = vrot.lane.b32.xlu0 %v5115, 64
        %v5222 = vpop.permute.xlu0 %5221
        %5223 = vrot.lane.b32.xlu0 %v5117, 64
        %v5224 = vpop.permute.xlu0 %5223
        %5225 = vrot.lane.b32.xlu0 %v5118, 64
        %v5226 = vpop.permute.xlu0 %5225
        %5227 = vrot.lane.b32.xlu0 %v5120, 64
        %v5228 = vpop.permute.xlu0 %5227
        %5229 = vrot.lane.b32.xlu0 %v5122, 64
        %v5230 = vpop.permute.xlu0 %5229
        %v5285 = vsel %vm546, %v4691, %v4854
        %v5286 = vsel %vm546, %v4692, %v4856
        %v5287 = vsel %vm546, %v4693, %v4858
        %v5288 = vsel %vm546, %v4695, %v4860
        %v5289 = vsel %vm546, %v4696, %v4862
        %v5290 = vsel %vm546, %v4697, %v4864
        %v5291 = vsel %vm546, %v4699, %v4866
        %v5292 = vsel %vm546, %v4700, %v4868
        %v5293 = vsel %vm546, %v4701, %v4870
        %v5294 = vsel %vm546, %v4703, %v4872
        %v5295 = vsel %vm546, %v4704, %v4874
        %v5296 = vsel %vm546, %v4705, %v4876
        %v5297 = vsel %vm546, %v4707, %v4878
        %v5298 = vsel %vm546, %v4708, %v4880
        %v5299 = vsel %vm546, %v4709, %v4882
        %v5300 = vsel %vm546, %v4711, %v4884
        %v5301 = vsel %vm546, %v4712, %v4886
        %v5302 = vsel %vm546, %v4713, %v4888
        %v5303 = vsel %vm546, %v4715, %v4890
        %v5304 = vsel %vm546, %v4716, %v4892
        %v5305 = vsel %vm546, %v4717, %v4894
        %v5306 = vsel %vm546, %v4719, %v4896
        %v5307 = vsel %vm546, %v4720, %v4898
        %v5308 = vsel %vm546, %v4721, %v4900
        %v5309 = vsel %vm546, %v4723, %v4902
        %v5310 = vsel %vm546, %v4724, %v4904
        %v5311 = vsel %vm546, %v4725, %v4906
        %v5312 = vsel %vm546, %v4727, %v4908
        %v5313 = vsel %vm546, %v4728, %v4910
        %v5314 = vsel %vm546, %v4729, %v4912
        %v5315 = vsel %vm546, %v4731, %v4914
        %v5316 = vsel %vm546, %v4732, %v4916
        %v5317 = vsel %vm546, %v4733, %v4918
        %v5318 = vsel %vm546, %v4735, %v4920
        %v5319 = vsel %vm546, %v4736, %v4922
        %v5320 = vsel %vm546, %v4737, %v4924
        %v5321 = vsel %vm546, %v4739, %v4926
        %v5322 = vsel %vm546, %v4740, %v4928
        %v5323 = vsel %vm546, %v4741, %v4930
        %v5324 = vsel %vm546, %v4743, %v4932
        %v5325 = vsel %vm546, %v4744, %v4934
        %v5326 = vsel %vm546, %v4745, %v4936
        %v5327 = vsel %vm546, %v4747, %v4938
        %v5328 = vsel %vm546, %v4748, %v4940
        %v5329 = vsel %vm546, %v4749, %v4942
        %v5330 = vsel %vm546, %v4751, %v4944
        %v5331 = vsel %vm546, %v4752, %v4946
        %v5332 = vsel %vm546, %v4753, %v4948
        %v5333 = vsel %vm546, %v4755, %v4950
        %v5334 = vsel %vm546, %v4756, %v4952
        %v5335 = vsel %vm546, %v4757, %v4954
        %v5336 = vsel %vm546, %v4759, %v4956
        %v5337 = vsel %vm546, %v4760, %v4958
        %v5338 = vsel %vm546, %v4761, %v4960
        %v5339 = vsel %vm1412, %v5285, %v5124
        %v5340 = vsel %vm1412, %v5286, %v5126
        %v5341 = vsel %vm1412, %v5287, %v5128
        %v5342 = vsel %vm1412, %v5288, %v5130
        %v5343 = vsel %vm1412, %v5289, %v5132
        %v5344 = vsel %vm1412, %v5290, %v5134
        %v5345 = vsel %vm1412, %v5291, %v5136
        %v5346 = vsel %vm1412, %v5292, %v5138
        %v5347 = vsel %vm1412, %v5293, %v5140
        %v5348 = vsel %vm1412, %v5294, %v5142
        %v5349 = vsel %vm1412, %v5295, %v5144
        %v5350 = vsel %vm1412, %v5296, %v5146
        %v5351 = vsel %vm1412, %v5297, %v5148
        %v5352 = vsel %vm1412, %v5298, %v5150
        %v5353 = vsel %vm1412, %v5299, %v5152
        %v5354 = vsel %vm1412, %v5300, %v5154
        %v5355 = vsel %vm1412, %v5301, %v5156
        %v5356 = vsel %vm1412, %v5302, %v5158
        %v5357 = vsel %vm1412, %v5303, %v5160
        %v5358 = vsel %vm1412, %v5304, %v5162
        %v5359 = vsel %vm1412, %v5305, %v5164
        %v5360 = vsel %vm1412, %v5306, %v5166
        %v5361 = vsel %vm1412, %v5307, %v5168
        %v5362 = vsel %vm1412, %v5308, %v5170
        %v5363 = vsel %vm1412, %v5309, %v5172
        %v5364 = vsel %vm1412, %v5310, %v5174
        %v5365 = vsel %vm1412, %v5311, %v5176
        %v5366 = vsel %vm1412, %v5312, %v5178
        %v5367 = vsel %vm1412, %v5313, %v5180
        %v5368 = vsel %vm1412, %v5314, %v5182
        %v5369 = vsel %vm1412, %v5315, %v5184
        %v5370 = vsel %vm1412, %v5316, %v5186
        %v5371 = vsel %vm1412, %v5317, %v5188
        %v5372 = vsel %vm1412, %v5318, %v5190
        %v5373 = vsel %vm1412, %v5319, %v5192
        %v5374 = vsel %vm1412, %v5320, %v5194
        %v5375 = vsel %vm1412, %v5321, %v5196
        %v5376 = vsel %vm1412, %v5322, %v5198
        %v5377 = vsel %vm1412, %v5323, %v5200
        %v5378 = vsel %vm1412, %v5324, %v5202
        %v5379 = vsel %vm1412, %v5325, %v5204
        %v5380 = vsel %vm1412, %v5326, %v5206
        %v5381 = vsel %vm1412, %v5327, %v5208
        %v5382 = vsel %vm1412, %v5328, %v5210
        %v5383 = vsel %vm1412, %v5329, %v5212
        %v5384 = vsel %vm1412, %v5330, %v5214
        %v5385 = vsel %vm1412, %v5331, %v5216
        %v5386 = vsel %vm1412, %v5332, %v5218
        %v5387 = vsel %vm1412, %v5333, %v5220
        %v5388 = vsel %vm1412, %v5334, %v5222
        %v5389 = vsel %vm1412, %v5335, %v5224
        %v5390 = vsel %vm1412, %v5336, %v5226
        %v5391 = vsel %vm1412, %v5337, %v5228
        %v5392 = vsel %vm1412, %v5338, %v5230
        %v5441 = vrot.slane %v5339, 7
        %v5442 = vrot.slane %v5340, 7
        %v5443 = vsel %vm1515, %v5441, %v5442
        %v5444 = vrot.slane %v5341, 7
        %v5445 = vsel %vm1515, %v5442, %v5444
        %v5446 = vrot.slane %v5342, 7
        %v5447 = vrot.slane %v5343, 7
        %v5448 = vsel %vm1515, %v5446, %v5447
        %v5449 = vrot.slane %v5344, 7
        %v5450 = vsel %vm1515, %v5447, %v5449
        %v5451 = vrot.slane %v5345, 7
        %v5452 = vrot.slane %v5346, 7
        %v5453 = vsel %vm1515, %v5451, %v5452
        %v5454 = vrot.slane %v5347, 7
        %v5455 = vsel %vm1515, %v5452, %v5454
        %v5456 = vrot.slane %v5348, 7
        %v5457 = vrot.slane %v5349, 7
        %v5458 = vsel %vm1515, %v5456, %v5457
        %v5459 = vrot.slane %v5350, 7
        %v5460 = vsel %vm1515, %v5457, %v5459
        %v5461 = vrot.slane %v5351, 7
        %v5462 = vrot.slane %v5352, 7
        %v5463 = vsel %vm1515, %v5461, %v5462
        %v5464 = vrot.slane %v5353, 7
        %v5465 = vsel %vm1515, %v5462, %v5464
        %v5466 = vrot.slane %v5354, 7
        %v5467 = vrot.slane %v5355, 7
        %v5468 = vsel %vm1515, %v5466, %v5467
        %v5469 = vrot.slane %v5356, 7
        %v5470 = vsel %vm1515, %v5467, %v5469
        %v5471 = vrot.slane %v5357, 7
        %v5472 = vrot.slane %v5358, 7
        %v5473 = vsel %vm1515, %v5471, %v5472
        %v5474 = vrot.slane %v5359, 7
        %v5475 = vsel %vm1515, %v5472, %v5474
        %v5476 = vrot.slane %v5360, 7
        %v5477 = vrot.slane %v5361, 7
        %v5478 = vsel %vm1515, %v5476, %v5477
        %v5479 = vrot.slane %v5362, 7
        %v5480 = vsel %vm1515, %v5477, %v5479
        %v5481 = vrot.slane %v5363, 7
        %v5482 = vrot.slane %v5364, 7
        %v5483 = vsel %vm1515, %v5481, %v5482
        %v5484 = vrot.slane %v5365, 7
        %v5485 = vsel %vm1515, %v5482, %v5484
        %v5486 = vrot.slane %v5366, 7
        %v5487 = vrot.slane %v5367, 7
        %v5488 = vsel %vm1515, %v5486, %v5487
        %v5489 = vrot.slane %v5368, 7
        %v5490 = vsel %vm1515, %v5487, %v5489
        %v5491 = vrot.slane %v5369, 7
        %v5492 = vrot.slane %v5370, 7
        %v5493 = vsel %vm1515, %v5491, %v5492
        %v5494 = vrot.slane %v5371, 7
        %v5495 = vsel %vm1515, %v5492, %v5494
        %v5496 = vrot.slane %v5372, 7
        %v5497 = vrot.slane %v5373, 7
        %v5498 = vsel %vm1515, %v5496, %v5497
        %v5499 = vrot.slane %v5374, 7
        %v5500 = vsel %vm1515, %v5497, %v5499
        %v5501 = vrot.slane %v5375, 7
        %v5502 = vrot.slane %v5376, 7
        %v5503 = vsel %vm1515, %v5501, %v5502
        %v5504 = vrot.slane %v5377, 7
        %v5505 = vsel %vm1515, %v5502, %v5504
        %v5506 = vrot.slane %v5378, 7
        %v5507 = vrot.slane %v5379, 7
        %v5508 = vsel %vm1515, %v5506, %v5507
        %v5509 = vrot.slane %v5380, 7
        %v5510 = vsel %vm1515, %v5507, %v5509
        %v5511 = vrot.slane %v5381, 7
        %v5512 = vrot.slane %v5382, 7
        %v5513 = vsel %vm1515, %v5511, %v5512
        %v5514 = vrot.slane %v5383, 7
        %v5515 = vsel %vm1515, %v5512, %v5514
        %v5516 = vrot.slane %v5384, 7
        %v5517 = vrot.slane %v5385, 7
        %v5518 = vsel %vm1515, %v5516, %v5517
        %v5519 = vrot.slane %v5386, 7
        %v5520 = vsel %vm1515, %v5517, %v5519
        %v5524 = vrot.slane %v5387, 7
        %v5525 = vrot.slane %v5388, 7
        %v5526 = vsel %vm1515, %v5524, %v5525
        %v5527 = vrot.slane %v5389, 7
        %v5528 = vsel %vm1515, %v5525, %v5527
        %v5529 = vsel %vm1604, %v5448, 0
        %v5531 = vsel %vm1604, %v5450, 0
        %v5533 = vsel %vm1604, %v5453, 0
        %v5535 = vsel %vm1604, %v5455, 0
        %v5537 = vsel %vm1604, %v5458, 0
        %v5539 = vsel %vm1604, %v5460, 0
        %v5541 = vsel %vm1604, %v5463, 0
        %v5543 = vsel %vm1604, %v5465, 0
        %v5545 = vsel %vm1604, %v5468, 0
        %v5547 = vsel %vm1604, %v5470, 0
        %v5549 = vsel %vm1604, %v5473, 0
        %v5551 = vsel %vm1604, %v5475, 0
        %v5553 = vsel %vm1604, %v5478, 0
        %v5555 = vsel %vm1604, %v5480, 0
        %v5557 = vsel %vm1604, %v5483, 0
        %v5559 = vsel %vm1604, %v5485, 0
        %v5561 = vsel %vm1604, %v5488, 0
        %v5563 = vsel %vm1604, %v5490, 0
        %v5565 = vsel %vm1604, %v5493, 0
        %v5567 = vsel %vm1604, %v5495, 0
        %v5569 = vsel %vm1604, %v5498, 0
        %v5571 = vsel %vm1604, %v5500, 0
        %v5573 = vsel %vm1604, %v5503, 0
        %v5575 = vsel %vm1604, %v5505, 0
        %v5577 = vsel %vm1604, %v5508, 0
        %v5579 = vsel %vm1604, %v5510, 0
        %v5581 = vsel %vm1604, %v5513, 0
        %v5583 = vsel %vm1604, %v5515, 0
        %v5585 = vsel %vm1604, %v5518, 0
        %v5587 = vsel %vm1604, %v5520, 0
        %v5589 = vsel %vm1604, %v5526, 0
        %v5591 = vsel %vm1604, %v5528, 0
        %5593 = vmatpush.msra.mxu0 0.0
        %5594 = vmatpush.msra.mxu0 0.0
        %5595 = vmatpush.msra.mxu0 0.0
        %5596 = vmatpush.msra.mxu0 0.0
        %5597 = vmatpush.msra.mxu0 %v4678
        %5598 = vmatpush.msra.mxu0 %v4677
        %5599 = vmatpush.msra.mxu0 %v4676
        %5600 = vmatpush.msra.mxu0 %v4675
        %5601 = vmatpush.msra.mxu0 %v4674
        %5602 = vmatpush.msra.mxu0 %v4673
        %5603 = vmatpush.msra.mxu0 %v4672
        %5604 = vmatpush.msra.mxu0 %v4671
        %5605 = vmatpush.msra.mxu0 %v4670
        %5606 = vmatpush.msra.mxu0 %v4669
        %5607 = vmatpush.msra.mxu0 %v4668
        %5608 = vmatpush.msra.mxu0 %v4667
        %5609 = vmatmul.f32.gmra.mxu0 %v5529
        %v5610 = vpop.f32.mrf.mxu0
        %v5611 = vadd.f32 0.0, %v5610
        %5612 = vmatmul.f32.gmra.mxu0 %v5531
        %v5613 = vpop.f32.mrf.mxu0
        %v5614 = vadd.f32 0.0, %v5613
        %5615 = vmatmul.f32.gmra.mxu0 %v5533
        %v5616 = vpop.f32.mrf.mxu0
        %v5617 = vadd.f32 0.0, %v5616
        %5618 = vmatmul.f32.gmra.mxu0 %v5535
        %v5619 = vpop.f32.mrf.mxu0
        %v5620 = vadd.f32 0.0, %v5619
        %5621 = vmatmul.f32.gmra.mxu0 %v5537
        %v5622 = vpop.f32.mrf.mxu0
        %v5623 = vadd.f32 0.0, %v5622
        %5624 = vmatmul.f32.gmra.mxu0 %v5539
        %v5625 = vpop.f32.mrf.mxu0
        %v5626 = vadd.f32 0.0, %v5625
        %5627 = vmatmul.f32.gmra.mxu0 %v5541
        %v5628 = vpop.f32.mrf.mxu0
        %v5629 = vadd.f32 0.0, %v5628
        %5630 = vmatmul.f32.gmra.mxu0 %v5543
        %v5631 = vpop.f32.mrf.mxu0
        %v5632 = vadd.f32 0.0, %v5631
        %5633 = vmatmul.f32.gmra.mxu0 %v5545
        %v5634 = vpop.f32.mrf.mxu0
        %v5635 = vadd.f32 0.0, %v5634
        %5636 = vmatmul.f32.gmra.mxu0 %v5547
        %v5637 = vpop.f32.mrf.mxu0
        %v5638 = vadd.f32 0.0, %v5637
        %5639 = vmatmul.f32.gmra.mxu0 %v5549
        %v5640 = vpop.f32.mrf.mxu0
        %v5641 = vadd.f32 0.0, %v5640
        %5642 = vmatmul.f32.gmra.mxu0 %v5551
        %v5643 = vpop.f32.mrf.mxu0
        %v5644 = vadd.f32 0.0, %v5643
        %5645 = vmatmul.f32.gmra.mxu0 %v5553
        %v5646 = vpop.f32.mrf.mxu0
        %v5647 = vadd.f32 0.0, %v5646
        %5648 = vmatmul.f32.gmra.mxu0 %v5555
        %v5649 = vpop.f32.mrf.mxu0
        %v5650 = vadd.f32 0.0, %v5649
        %5651 = vmatmul.f32.gmra.mxu0 %v5557
        %v5652 = vpop.f32.mrf.mxu0
        %v5653 = vadd.f32 0.0, %v5652
        %5654 = vmatmul.f32.gmra.mxu0 %v5559
        %v5655 = vpop.f32.mrf.mxu0
        %v5656 = vadd.f32 0.0, %v5655
        %5657 = vmatmul.f32.gmra.mxu0 %v5561
        %v5658 = vpop.f32.mrf.mxu0
        %v5659 = vadd.f32 0.0, %v5658
        %5660 = vmatmul.f32.gmra.mxu0 %v5563
        %v5661 = vpop.f32.mrf.mxu0
        %v5662 = vadd.f32 0.0, %v5661
        %5663 = vmatmul.f32.gmra.mxu0 %v5565
        %v5664 = vpop.f32.mrf.mxu0
        %v5665 = vadd.f32 0.0, %v5664
        %5666 = vmatmul.f32.gmra.mxu0 %v5567
        %v5667 = vpop.f32.mrf.mxu0
        %v5668 = vadd.f32 0.0, %v5667
        %5669 = vmatmul.f32.gmra.mxu0 %v5569
        %v5670 = vpop.f32.mrf.mxu0
        %v5671 = vadd.f32 0.0, %v5670
        %5672 = vmatmul.f32.gmra.mxu0 %v5571
        %v5673 = vpop.f32.mrf.mxu0
        %v5674 = vadd.f32 0.0, %v5673
        %5675 = vmatmul.f32.gmra.mxu0 %v5573
        %v5676 = vpop.f32.mrf.mxu0
        %v5677 = vadd.f32 0.0, %v5676
        %5678 = vmatmul.f32.gmra.mxu0 %v5575
        %v5679 = vpop.f32.mrf.mxu0
        %v5680 = vadd.f32 0.0, %v5679
        %5681 = vmatmul.f32.gmra.mxu0 %v5577
        %v5682 = vpop.f32.mrf.mxu0
        %v5683 = vadd.f32 0.0, %v5682
        %5684 = vmatmul.f32.gmra.mxu0 %v5579
        %v5685 = vpop.f32.mrf.mxu0
        %v5686 = vadd.f32 0.0, %v5685
        %5687 = vmatmul.f32.gmra.mxu0 %v5581
        %v5688 = vpop.f32.mrf.mxu0
        %v5689 = vadd.f32 0.0, %v5688
        %5690 = vmatmul.f32.gmra.mxu0 %v5583
        %v5691 = vpop.f32.mrf.mxu0
        %v5692 = vadd.f32 0.0, %v5691
        %5693 = vmatmul.f32.gmra.mxu0 %v5585
        %v5694 = vpop.f32.mrf.mxu0
        %v5695 = vadd.f32 0.0, %v5694
        %5696 = vmatmul.f32.gmra.mxu0 %v5587
        %v5697 = vpop.f32.mrf.mxu0
        %v5698 = vadd.f32 0.0, %v5697
        %5699 = vmatmul.f32.gmra.mxu0 %v5589
        %v5700 = vpop.f32.mrf.mxu0
        %v5701 = vadd.f32 0.0, %v5700
        %5702 = vmatmul.f32.gmra.mxu0 %v5591
        %v5703 = vpop.f32.mrf.mxu0
        %v5704 = vadd.f32 0.0, %v5703
        %5705 = vdwg.mxu0
        %v5706 = vsel %vm1604, %v5443, 0
        %v5708 = vsel %vm1604, %v5445, 0
        %5710 = vmatpush.msra.mxu0 0.0
        %5711 = vmatpush.msra.mxu0 0.0
        %5712 = vmatpush.msra.mxu0 0.0
        %5713 = vmatpush.msra.mxu0 0.0
        %5714 = vmatpush.msra.mxu0 %v4666
        %5715 = vmatpush.msra.mxu0 %v4665
        %5716 = vmatpush.msra.mxu0 %v4664
        %5717 = vmatpush.msra.mxu0 %v4663
        %5718 = vmatpush.msra.mxu0 %v4662
        %5719 = vmatpush.msra.mxu0 %v4661
        %5720 = vmatpush.msra.mxu0 %v4660
        %5721 = vmatpush.msra.mxu0 %v4659
        %5722 = vmatpush.msra.mxu0 %v4658
        %5723 = vmatpush.msra.mxu0 %v4657
        %5724 = vmatpush.msra.mxu0 %v4656
        %5725 = vmatpush.msra.mxu0 %v4655
        %5726 = vmatmul.f32.gmra.mxu0 %v5706
        %v5727 = vpop.f32.mrf.mxu0
        %v5728 = vadd.f32 %v5611, %v5727
        %5729 = vmatmul.f32.gmra.mxu0 %v5708
        %v5730 = vpop.f32.mrf.mxu0
        %v5731 = vadd.f32 %v5614, %v5730
        %5732 = vmatmul.f32.gmra.mxu0 %v5529
        %v5733 = vpop.f32.mrf.mxu0
        %v5734 = vadd.f32 %v5617, %v5733
        %5735 = vmatmul.f32.gmra.mxu0 %v5531
        %v5736 = vpop.f32.mrf.mxu0
        %v5737 = vadd.f32 %v5620, %v5736
        %5738 = vmatmul.f32.gmra.mxu0 %v5533
        %v5739 = vpop.f32.mrf.mxu0
        %v5740 = vadd.f32 %v5623, %v5739
        %5741 = vmatmul.f32.gmra.mxu0 %v5535
        %v5742 = vpop.f32.mrf.mxu0
        %v5743 = vadd.f32 %v5626, %v5742
        %5744 = vmatmul.f32.gmra.mxu0 %v5537
        %v5745 = vpop.f32.mrf.mxu0
        %v5746 = vadd.f32 %v5629, %v5745
        %5747 = vmatmul.f32.gmra.mxu0 %v5539
        %v5748 = vpop.f32.mrf.mxu0
        %v5749 = vadd.f32 %v5632, %v5748
        %5750 = vmatmul.f32.gmra.mxu0 %v5541
        %v5751 = vpop.f32.mrf.mxu0
        %v5752 = vadd.f32 %v5635, %v5751
        %5753 = vmatmul.f32.gmra.mxu0 %v5543
        %v5754 = vpop.f32.mrf.mxu0
        %v5755 = vadd.f32 %v5638, %v5754
        %5756 = vmatmul.f32.gmra.mxu0 %v5545
        %v5757 = vpop.f32.mrf.mxu0
        %v5758 = vadd.f32 %v5641, %v5757
        %5759 = vmatmul.f32.gmra.mxu0 %v5547
        %v5760 = vpop.f32.mrf.mxu0
        %v5761 = vadd.f32 %v5644, %v5760
        %5762 = vmatmul.f32.gmra.mxu0 %v5549
        %v5763 = vpop.f32.mrf.mxu0
        %v5764 = vadd.f32 %v5647, %v5763
        %5765 = vmatmul.f32.gmra.mxu0 %v5551
        %v5766 = vpop.f32.mrf.mxu0
        %v5767 = vadd.f32 %v5650, %v5766
        %5768 = vmatmul.f32.gmra.mxu0 %v5553
        %v5769 = vpop.f32.mrf.mxu0
        %v5770 = vadd.f32 %v5653, %v5769
        %5771 = vmatmul.f32.gmra.mxu0 %v5555
        %v5772 = vpop.f32.mrf.mxu0
        %v5773 = vadd.f32 %v5656, %v5772
        %5774 = vmatmul.f32.gmra.mxu0 %v5557
        %v5775 = vpop.f32.mrf.mxu0
        %v5776 = vadd.f32 %v5659, %v5775
        %5777 = vmatmul.f32.gmra.mxu0 %v5559
        %v5778 = vpop.f32.mrf.mxu0
        %v5779 = vadd.f32 %v5662, %v5778
        %5780 = vmatmul.f32.gmra.mxu0 %v5561
        %v5781 = vpop.f32.mrf.mxu0
        %v5782 = vadd.f32 %v5665, %v5781
        %5783 = vmatmul.f32.gmra.mxu0 %v5563
        %v5784 = vpop.f32.mrf.mxu0
        %v5785 = vadd.f32 %v5668, %v5784
        %5786 = vmatmul.f32.gmra.mxu0 %v5565
        %v5787 = vpop.f32.mrf.mxu0
        %v5788 = vadd.f32 %v5671, %v5787
        %5789 = vmatmul.f32.gmra.mxu0 %v5567
        %v5790 = vpop.f32.mrf.mxu0
        %v5791 = vadd.f32 %v5674, %v5790
        %5792 = vmatmul.f32.gmra.mxu0 %v5569
        %v5793 = vpop.f32.mrf.mxu0
        %v5794 = vadd.f32 %v5677, %v5793
        %5795 = vmatmul.f32.gmra.mxu0 %v5571
        %v5796 = vpop.f32.mrf.mxu0
        %v5797 = vadd.f32 %v5680, %v5796
        %5798 = vmatmul.f32.gmra.mxu0 %v5573
        %v5799 = vpop.f32.mrf.mxu0
        %v5800 = vadd.f32 %v5683, %v5799
        %5801 = vmatmul.f32.gmra.mxu0 %v5575
        %v5802 = vpop.f32.mrf.mxu0
        %v5803 = vadd.f32 %v5686, %v5802
        %5804 = vmatmul.f32.gmra.mxu0 %v5577
        %v5805 = vpop.f32.mrf.mxu0
        %v5806 = vadd.f32 %v5689, %v5805
        %5807 = vmatmul.f32.gmra.mxu0 %v5579
        %v5808 = vpop.f32.mrf.mxu0
        %v5809 = vadd.f32 %v5692, %v5808
        %5810 = vmatmul.f32.gmra.mxu0 %v5581
        %v5811 = vpop.f32.mrf.mxu0
        %v5812 = vadd.f32 %v5695, %v5811
        %5813 = vmatmul.f32.gmra.mxu0 %v5583
        %v5814 = vpop.f32.mrf.mxu0
        %v5815 = vadd.f32 %v5698, %v5814
        %5816 = vmatmul.f32.gmra.mxu0 %v5585
        %v5817 = vpop.f32.mrf.mxu0
        %v5818 = vadd.f32 %v5701, %v5817
        %5819 = vmatmul.f32.gmra.mxu0 %v5587
        %v5820 = vpop.f32.mrf.mxu0
        %v5821 = vadd.f32 %v5704, %v5820
        %5822 = vdwg.mxu0
        %v5826 = vrot.slane %v5390, 7
        %v5827 = vrot.slane %v5391, 7
        %v5828 = vsel %vm1515, %v5826, %v5827
        %v5829 = vrot.slane %v5392, 7
        %v5830 = vsel %vm1515, %v5827, %v5829
        %v5831 = vsel %vm1604, %v5828, 0
        %v5833 = vsel %vm1604, %v5830, 0
        %5835 = vmatpush.msra.mxu0 0.0
        %5836 = vmatpush.msra.mxu0 0.0
        %5837 = vmatpush.msra.mxu0 0.0
        %5838 = vmatpush.msra.mxu0 0.0
        %5839 = vmatpush.msra.mxu0 %v4690
        %5840 = vmatpush.msra.mxu0 %v4689
        %5841 = vmatpush.msra.mxu0 %v4688
        %5842 = vmatpush.msra.mxu0 %v4687
        %5843 = vmatpush.msra.mxu0 %v4686
        %5844 = vmatpush.msra.mxu0 %v4685
        %5845 = vmatpush.msra.mxu0 %v4684
        %5846 = vmatpush.msra.mxu0 %v4683
        %5847 = vmatpush.msra.mxu0 %v4682
        %5848 = vmatpush.msra.mxu0 %v4681
        %5849 = vmatpush.msra.mxu0 %v4680
        %5850 = vmatpush.msra.mxu0 %v4679
        %5851 = vmatmul.f32.gmra.mxu0 %v5533
        %v5852 = vpop.f32.mrf.mxu0
        %v5853 = vadd.f32 0.0, %v5852
        %5854 = vmatmul.f32.gmra.mxu0 %v5535
        %v5855 = vpop.f32.mrf.mxu0
        %v5856 = vadd.f32 0.0, %v5855
        %5857 = vmatmul.f32.gmra.mxu0 %v5537
        %v5858 = vpop.f32.mrf.mxu0
        %v5859 = vadd.f32 0.0, %v5858
        %5860 = vmatmul.f32.gmra.mxu0 %v5539
        %v5861 = vpop.f32.mrf.mxu0
        %v5862 = vadd.f32 0.0, %v5861
        %5863 = vmatmul.f32.gmra.mxu0 %v5541
        %v5864 = vpop.f32.mrf.mxu0
        %v5865 = vadd.f32 0.0, %v5864
        %5866 = vmatmul.f32.gmra.mxu0 %v5543
        %v5867 = vpop.f32.mrf.mxu0
        %v5868 = vadd.f32 0.0, %v5867
        %5869 = vmatmul.f32.gmra.mxu0 %v5545
        %v5870 = vpop.f32.mrf.mxu0
        %v5871 = vadd.f32 0.0, %v5870
        %5872 = vmatmul.f32.gmra.mxu0 %v5547
        %v5873 = vpop.f32.mrf.mxu0
        %v5874 = vadd.f32 0.0, %v5873
        %5875 = vmatmul.f32.gmra.mxu0 %v5549
        %v5876 = vpop.f32.mrf.mxu0
        %v5877 = vadd.f32 0.0, %v5876
        %5878 = vmatmul.f32.gmra.mxu0 %v5551
        %v5879 = vpop.f32.mrf.mxu0
        %v5880 = vadd.f32 0.0, %v5879
        %5881 = vmatmul.f32.gmra.mxu0 %v5553
        %v5882 = vpop.f32.mrf.mxu0
        %v5883 = vadd.f32 0.0, %v5882
        %5884 = vmatmul.f32.gmra.mxu0 %v5555
        %v5885 = vpop.f32.mrf.mxu0
        %v5886 = vadd.f32 0.0, %v5885
        %5887 = vmatmul.f32.gmra.mxu0 %v5557
        %v5888 = vpop.f32.mrf.mxu0
        %v5889 = vadd.f32 0.0, %v5888
        %5890 = vmatmul.f32.gmra.mxu0 %v5559
        %v5891 = vpop.f32.mrf.mxu0
        %v5892 = vadd.f32 0.0, %v5891
        %5893 = vmatmul.f32.gmra.mxu0 %v5561
        %v5894 = vpop.f32.mrf.mxu0
        %v5895 = vadd.f32 0.0, %v5894
        %5896 = vmatmul.f32.gmra.mxu0 %v5563
        %v5897 = vpop.f32.mrf.mxu0
        %v5898 = vadd.f32 0.0, %v5897
        %5899 = vmatmul.f32.gmra.mxu0 %v5565
        %v5900 = vpop.f32.mrf.mxu0
        %v5901 = vadd.f32 0.0, %v5900
        %5902 = vmatmul.f32.gmra.mxu0 %v5567
        %v5903 = vpop.f32.mrf.mxu0
        %v5904 = vadd.f32 0.0, %v5903
        %5905 = vmatmul.f32.gmra.mxu0 %v5569
        %v5906 = vpop.f32.mrf.mxu0
        %v5907 = vadd.f32 0.0, %v5906
        %5908 = vmatmul.f32.gmra.mxu0 %v5571
        %v5909 = vpop.f32.mrf.mxu0
        %v5910 = vadd.f32 0.0, %v5909
        %5911 = vmatmul.f32.gmra.mxu0 %v5573
        %v5912 = vpop.f32.mrf.mxu0
        %v5913 = vadd.f32 0.0, %v5912
        %5914 = vmatmul.f32.gmra.mxu0 %v5575
        %v5915 = vpop.f32.mrf.mxu0
        %v5916 = vadd.f32 0.0, %v5915
        %5917 = vmatmul.f32.gmra.mxu0 %v5577
        %v5918 = vpop.f32.mrf.mxu0
        %v5919 = vadd.f32 0.0, %v5918
        %5920 = vmatmul.f32.gmra.mxu0 %v5579
        %v5921 = vpop.f32.mrf.mxu0
        %v5922 = vadd.f32 0.0, %v5921
        %5923 = vmatmul.f32.gmra.mxu0 %v5581
        %v5924 = vpop.f32.mrf.mxu0
        %v5925 = vadd.f32 0.0, %v5924
        %5926 = vmatmul.f32.gmra.mxu0 %v5583
        %v5927 = vpop.f32.mrf.mxu0
        %v5928 = vadd.f32 0.0, %v5927
        %5929 = vmatmul.f32.gmra.mxu0 %v5585
        %v5930 = vpop.f32.mrf.mxu0
        %v5931 = vadd.f32 0.0, %v5930
        %5932 = vmatmul.f32.gmra.mxu0 %v5587
        %v5933 = vpop.f32.mrf.mxu0
        %v5934 = vadd.f32 0.0, %v5933
        %5935 = vmatmul.f32.gmra.mxu0 %v5589
        %v5936 = vpop.f32.mrf.mxu0
        %v5937 = vadd.f32 0.0, %v5936
        %5938 = vmatmul.f32.gmra.mxu0 %v5591
        %v5939 = vpop.f32.mrf.mxu0
        %v5940 = vadd.f32 0.0, %v5939
        %5941 = vmatmul.f32.gmra.mxu0 %v5831
        %v5942 = vpop.f32.mrf.mxu0
        %v5943 = vadd.f32 0.0, %v5942
        %5944 = vmatmul.f32.gmra.mxu0 %v5833
        %v5945 = vpop.f32.mrf.mxu0
        %v5946 = vadd.f32 0.0, %v5945
        %5947 = vdwg.mxu0
        %v5948 = vadd.f32 %v5728, %v5853
        %v5949 = vadd.f32 %v5731, %v5856
        %v5950 = vadd.f32 %v5734, %v5859
        %v5951 = vadd.f32 %v5737, %v5862
        %v5952 = vadd.f32 %v5740, %v5865
        %v5953 = vadd.f32 %v5743, %v5868
        %v5954 = vadd.f32 %v5746, %v5871
        %v5955 = vadd.f32 %v5749, %v5874
        %v5956 = vadd.f32 %v5752, %v5877
        %v5957 = vadd.f32 %v5755, %v5880
        %v5958 = vadd.f32 %v5758, %v5883
        %v5959 = vadd.f32 %v5761, %v5886
        %v5960 = vadd.f32 %v5764, %v5889
        %v5961 = vadd.f32 %v5767, %v5892
        %v5962 = vadd.f32 %v5770, %v5895
        %v5963 = vadd.f32 %v5773, %v5898
        %v5964 = vadd.f32 %v5776, %v5901
        %v5965 = vadd.f32 %v5779, %v5904
        %v5966 = vadd.f32 %v5782, %v5907
        %v5967 = vadd.f32 %v5785, %v5910
        %v5968 = vadd.f32 %v5788, %v5913
        %v5969 = vadd.f32 %v5791, %v5916
        %v5970 = vadd.f32 %v5794, %v5919
        %v5971 = vadd.f32 %v5797, %v5922
        %v5972 = vadd.f32 %v5800, %v5925
        %v5973 = vadd.f32 %v5803, %v5928
        %v5974 = vadd.f32 %v5806, %v5931
        %v5975 = vadd.f32 %v5809, %v5934
        %v5976 = vadd.f32 %v5812, %v5937
        %v5977 = vadd.f32 %v5815, %v5940
        %v5978 = vadd.f32 %v5818, %v5943
        %v5979 = vadd.f32 %v5821, %v5946
        %6012 = vrot.lane.b32.xlu0 %v5948, 24
        %v6013 = vpop.permute.xlu0 %6012
        %6014 = vrot.lane.b32.xlu0 %v5949, 24
        %v6015 = vpop.permute.xlu0 %6014
        %6016 = vrot.lane.b32.xlu0 %v5950, 24
        %v6017 = vpop.permute.xlu0 %6016
        %6018 = vrot.lane.b32.xlu0 %v5951, 24
        %v6019 = vpop.permute.xlu0 %6018
        %6020 = vrot.lane.b32.xlu0 %v5952, 24
        %v6021 = vpop.permute.xlu0 %6020
        %6022 = vrot.lane.b32.xlu0 %v5953, 24
        %v6023 = vpop.permute.xlu0 %6022
        %6024 = vrot.lane.b32.xlu0 %v5954, 24
        %v6025 = vpop.permute.xlu0 %6024
        %6026 = vrot.lane.b32.xlu0 %v5955, 24
        %v6027 = vpop.permute.xlu0 %6026
        %6028 = vrot.lane.b32.xlu0 %v5956, 24
        %v6029 = vpop.permute.xlu0 %6028
        %6030 = vrot.lane.b32.xlu0 %v5957, 24
        %v6031 = vpop.permute.xlu0 %6030
        %6032 = vrot.lane.b32.xlu0 %v5958, 24
        %v6033 = vpop.permute.xlu0 %6032
        %6034 = vrot.lane.b32.xlu0 %v5959, 24
        %v6035 = vpop.permute.xlu0 %6034
        %6036 = vrot.lane.b32.xlu0 %v5960, 24
        %v6037 = vpop.permute.xlu0 %6036
        %6038 = vrot.lane.b32.xlu0 %v5961, 24
        %v6039 = vpop.permute.xlu0 %6038
        %6040 = vrot.lane.b32.xlu0 %v5962, 24
        %v6041 = vpop.permute.xlu0 %6040
        %6042 = vrot.lane.b32.xlu0 %v5963, 24
        %v6043 = vpop.permute.xlu0 %6042
        %6044 = vrot.lane.b32.xlu0 %v5964, 24
        %v6045 = vpop.permute.xlu0 %6044
        %6046 = vrot.lane.b32.xlu0 %v5965, 24
        %v6047 = vpop.permute.xlu0 %6046
        %6048 = vrot.lane.b32.xlu0 %v5966, 24
        %v6049 = vpop.permute.xlu0 %6048
        %6050 = vrot.lane.b32.xlu0 %v5967, 24
        %v6051 = vpop.permute.xlu0 %6050
        %6052 = vrot.lane.b32.xlu0 %v5968, 24
        %v6053 = vpop.permute.xlu0 %6052
        %6054 = vrot.lane.b32.xlu0 %v5969, 24
        %v6055 = vpop.permute.xlu0 %6054
        %6056 = vrot.lane.b32.xlu0 %v5970, 24
        %v6057 = vpop.permute.xlu0 %6056
        %6058 = vrot.lane.b32.xlu0 %v5971, 24
        %v6059 = vpop.permute.xlu0 %6058
        %6060 = vrot.lane.b32.xlu0 %v5972, 24
        %v6061 = vpop.permute.xlu0 %6060
        %6062 = vrot.lane.b32.xlu0 %v5973, 24
        %v6063 = vpop.permute.xlu0 %6062
        %6064 = vrot.lane.b32.xlu0 %v5974, 24
        %v6065 = vpop.permute.xlu0 %6064
        %6066 = vrot.lane.b32.xlu0 %v5975, 24
        %v6067 = vpop.permute.xlu0 %6066
        %6068 = vrot.lane.b32.xlu0 %v5976, 24
        %v6069 = vpop.permute.xlu0 %6068
        %6070 = vrot.lane.b32.xlu0 %v5977, 24
        %v6071 = vpop.permute.xlu0 %6070
        %6072 = vrot.lane.b32.xlu0 %v5978, 24
        %v6073 = vpop.permute.xlu0 %6072
        %6074 = vrot.lane.b32.xlu0 %v5979, 24
        %v6075 = vpop.permute.xlu0 %6074
        %vm6108 = vcmask 261312
        %6109 = vst.msk [vmem:[#allocation2] sm:$0xff] %vm6108, %v6013
        %6110 = vst.msk [vmem:[#allocation2 + $0x8] sm:$0xff] %vm6108, %v6015
        %6111 = vst.msk [vmem:[#allocation2 + $0x10] sm:$0xff] %vm6108, %v6017
        %6112 = vst.msk [vmem:[#allocation2 + $0x18] sm:$0xff] %vm6108, %v6019
        %6113 = vst.msk [vmem:[#allocation2 + $0x20] sm:$0xff] %vm6108, %v6021
        %6114 = vst.msk [vmem:[#allocation2 + $0x28] sm:$0xff] %vm6108, %v6023
        %6115 = vst.msk [vmem:[#allocation2 + $0x30] sm:$0xff] %vm6108, %v6025
        %6116 = vst.msk [vmem:[#allocation2 + $0x38] sm:$0xff] %vm6108, %v6027
        %6117 = vst.msk [vmem:[#allocation2 + $0x40] sm:$0xff] %vm6108, %v6029
        %6118 = vst.msk [vmem:[#allocation2 + $0x48] sm:$0xff] %vm6108, %v6031
        %6119 = vst.msk [vmem:[#allocation2 + $0x50] sm:$0xff] %vm6108, %v6033
        %6120 = vst.msk [vmem:[#allocation2 + $0x58] sm:$0xff] %vm6108, %v6035
        %6121 = vst.msk [vmem:[#allocation2 + $0x60] sm:$0xff] %vm6108, %v6037
        %6122 = vst.msk [vmem:[#allocation2 + $0x68] sm:$0xff] %vm6108, %v6039
        %6123 = vst.msk [vmem:[#allocation2 + $0x70] sm:$0xff] %vm6108, %v6041
        %6124 = vst.msk [vmem:[#allocation2 + $0x78] sm:$0xff] %vm6108, %v6043
        %6125 = vst.msk [vmem:[#allocation2 + $0x80] sm:$0xff] %vm6108, %v6045
        %6126 = vst.msk [vmem:[#allocation2 + $0x88] sm:$0xff] %vm6108, %v6047
        %6127 = vst.msk [vmem:[#allocation2 + $0x90] sm:$0xff] %vm6108, %v6049
        %6128 = vst.msk [vmem:[#allocation2 + $0x98] sm:$0xff] %vm6108, %v6051
        %6129 = vst.msk [vmem:[#allocation2 + $0xa0] sm:$0xff] %vm6108, %v6053
        %6130 = vst.msk [vmem:[#allocation2 + $0xa8] sm:$0xff] %vm6108, %v6055
        %6131 = vst.msk [vmem:[#allocation2 + $0xb0] sm:$0xff] %vm6108, %v6057
        %6132 = vst.msk [vmem:[#allocation2 + $0xb8] sm:$0xff] %vm6108, %v6059
        %6133 = vst.msk [vmem:[#allocation2 + $0xc0] sm:$0xff] %vm6108, %v6061
        %6134 = vst.msk [vmem:[#allocation2 + $0xc8] sm:$0xff] %vm6108, %v6063
        %6135 = vst.msk [vmem:[#allocation2 + $0xd0] sm:$0xff] %vm6108, %v6065
        %6136 = vst.msk [vmem:[#allocation2 + $0xd8] sm:$0xff] %vm6108, %v6067
        %6137 = vst.msk [vmem:[#allocation2 + $0xe0] sm:$0xff] %vm6108, %v6069
        %6138 = vst.msk [vmem:[#allocation2 + $0xe8] sm:$0xff] %vm6108, %v6071
        %6139 = vst.msk [vmem:[#allocation2 + $0xf0] sm:$0xff] %vm6108, %v6073
        %6140 = vst.msk [vmem:[#allocation2 + $0xf8] sm:$0xff] %vm6108, %v6075
        %v6141 = vld [vmem:[#allocation2] sm:$0xff]
        %v6142 = vld [vmem:[#allocation2 + $0x8] sm:$0xff]
        %v6143 = vld [vmem:[#allocation2 + $0x10] sm:$0xff]
        %v6144 = vld [vmem:[#allocation2 + $0x18] sm:$0xff]
        %v6145 = vld [vmem:[#allocation2 + $0x20] sm:$0xff]
        %v6146 = vld [vmem:[#allocation2 + $0x28] sm:$0xff]
        %v6147 = vld [vmem:[#allocation2 + $0x30] sm:$0xff]
        %v6148 = vld [vmem:[#allocation2 + $0x38] sm:$0xff]
        %v6149 = vld [vmem:[#allocation2 + $0x40] sm:$0xff]
        %v6150 = vld [vmem:[#allocation2 + $0x48] sm:$0xff]
        %v6151 = vld [vmem:[#allocation2 + $0x50] sm:$0xff]
        %v6152 = vld [vmem:[#allocation2 + $0x58] sm:$0xff]
        %v6153 = vld [vmem:[#allocation2 + $0x60] sm:$0xff]
        %v6154 = vld [vmem:[#allocation2 + $0x68] sm:$0xff]
        %v6155 = vld [vmem:[#allocation2 + $0x70] sm:$0xff]
        %v6156 = vld [vmem:[#allocation2 + $0x78] sm:$0xff]
        %v6157 = vld [vmem:[#allocation2 + $0x80] sm:$0xff]
        %v6158 = vld [vmem:[#allocation2 + $0x88] sm:$0xff]
        %v6159 = vld [vmem:[#allocation2 + $0x90] sm:$0xff]
        %v6160 = vld [vmem:[#allocation2 + $0x98] sm:$0xff]
        %v6161 = vld [vmem:[#allocation2 + $0xa0] sm:$0xff]
        %v6162 = vld [vmem:[#allocation2 + $0xa8] sm:$0xff]
        %v6163 = vld [vmem:[#allocation2 + $0xb0] sm:$0xff]
        %v6164 = vld [vmem:[#allocation2 + $0xb8] sm:$0xff]
        %v6165 = vld [vmem:[#allocation2 + $0xc0] sm:$0xff]
        %v6166 = vld [vmem:[#allocation2 + $0xc8] sm:$0xff]
        %v6167 = vld [vmem:[#allocation2 + $0xd0] sm:$0xff]
        %v6168 = vld [vmem:[#allocation2 + $0xd8] sm:$0xff]
        %v6169 = vld [vmem:[#allocation2 + $0xe0] sm:$0xff]
        %v6170 = vld [vmem:[#allocation2 + $0xe8] sm:$0xff]
        %v6171 = vld [vmem:[#allocation2 + $0xf0] sm:$0xff]
        %v6172 = vld [vmem:[#allocation2 + $0xf8] sm:$0xff]
        %v6173 = vld [vmem:[%s10] sm:$0x1]
        %v6174 = vld [vmem:[%s11] sm:$0x1]
        %v6176 = vperm.slane %v6173, 0
        %v6178 = vmul.f32 %v6141, %v6176
        %v6179 = vmul.f32 %v6142, %v6176
        %v6180 = vmul.f32 %v6143, %v6176
        %v6181 = vmul.f32 %v6144, %v6176
        %v6182 = vmul.f32 %v6145, %v6176
        %v6183 = vmul.f32 %v6146, %v6176
        %v6184 = vmul.f32 %v6147, %v6176
        %v6185 = vmul.f32 %v6148, %v6176
        %v6186 = vmul.f32 %v6149, %v6176
        %v6187 = vmul.f32 %v6150, %v6176
        %v6188 = vmul.f32 %v6151, %v6176
        %v6189 = vmul.f32 %v6152, %v6176
        %v6190 = vmul.f32 %v6153, %v6176
        %v6191 = vmul.f32 %v6154, %v6176
        %v6192 = vmul.f32 %v6155, %v6176
        %v6193 = vmul.f32 %v6156, %v6176
        %v6194 = vmul.f32 %v6157, %v6176
        %v6195 = vmul.f32 %v6158, %v6176
        %v6196 = vmul.f32 %v6159, %v6176
        %v6197 = vmul.f32 %v6160, %v6176
        %v6198 = vmul.f32 %v6161, %v6176
        %v6199 = vmul.f32 %v6162, %v6176
        %v6200 = vmul.f32 %v6163, %v6176
        %v6201 = vmul.f32 %v6164, %v6176
        %v6202 = vmul.f32 %v6165, %v6176
        %v6203 = vmul.f32 %v6166, %v6176
        %v6204 = vmul.f32 %v6167, %v6176
        %v6205 = vmul.f32 %v6168, %v6176
        %v6206 = vmul.f32 %v6169, %v6176
        %v6207 = vmul.f32 %v6170, %v6176
        %v6208 = vmul.f32 %v6171, %v6176
        %v6209 = vmul.f32 %v6172, %v6176
        %v6211 = vperm.slane %v6174, 0
        %v6213 = vadd.f32 %v6178, %v6211
        %v6214 = vadd.f32 %v6179, %v6211
        %v6215 = vadd.f32 %v6180, %v6211
        %v6216 = vadd.f32 %v6181, %v6211
        %v6217 = vadd.f32 %v6182, %v6211
        %v6218 = vadd.f32 %v6183, %v6211
        %v6219 = vadd.f32 %v6184, %v6211
        %v6220 = vadd.f32 %v6185, %v6211
        %v6221 = vadd.f32 %v6186, %v6211
        %v6222 = vadd.f32 %v6187, %v6211
        %v6223 = vadd.f32 %v6188, %v6211
        %v6224 = vadd.f32 %v6189, %v6211
        %v6225 = vadd.f32 %v6190, %v6211
        %v6226 = vadd.f32 %v6191, %v6211
        %v6227 = vadd.f32 %v6192, %v6211
        %v6228 = vadd.f32 %v6193, %v6211
        %v6229 = vadd.f32 %v6194, %v6211
        %v6230 = vadd.f32 %v6195, %v6211
        %v6231 = vadd.f32 %v6196, %v6211
        %v6232 = vadd.f32 %v6197, %v6211
        %v6233 = vadd.f32 %v6198, %v6211
        %v6234 = vadd.f32 %v6199, %v6211
        %v6235 = vadd.f32 %v6200, %v6211
        %v6236 = vadd.f32 %v6201, %v6211
        %v6237 = vadd.f32 %v6202, %v6211
        %v6238 = vadd.f32 %v6203, %v6211
        %v6239 = vadd.f32 %v6204, %v6211
        %v6240 = vadd.f32 %v6205, %v6211
        %v6241 = vadd.f32 %v6206, %v6211
        %v6242 = vadd.f32 %v6207, %v6211
        %v6243 = vadd.f32 %v6208, %v6211
        %v6244 = vadd.f32 %v6209, %v6211
        %v6245 = vmax.f32 %v6213, 0.0
        %v6246 = vmax.f32 %v6214, 0.0
        %v6247 = vmax.f32 %v6215, 0.0
        %v6248 = vmax.f32 %v6216, 0.0
        %v6249 = vmax.f32 %v6217, 0.0
        %v6250 = vmax.f32 %v6218, 0.0
        %v6251 = vmax.f32 %v6219, 0.0
        %v6252 = vmax.f32 %v6220, 0.0
        %v6253 = vmax.f32 %v6221, 0.0
        %v6254 = vmax.f32 %v6222, 0.0
        %v6255 = vmax.f32 %v6223, 0.0
        %v6256 = vmax.f32 %v6224, 0.0
        %v6257 = vmax.f32 %v6225, 0.0
        %v6258 = vmax.f32 %v6226, 0.0
        %v6259 = vmax.f32 %v6227, 0.0
        %v6260 = vmax.f32 %v6228, 0.0
        %v6261 = vmax.f32 %v6229, 0.0
        %v6262 = vmax.f32 %v6230, 0.0
        %v6263 = vmax.f32 %v6231, 0.0
        %v6264 = vmax.f32 %v6232, 0.0
        %v6265 = vmax.f32 %v6233, 0.0
        %v6266 = vmax.f32 %v6234, 0.0
        %v6267 = vmax.f32 %v6235, 0.0
        %v6268 = vmax.f32 %v6236, 0.0
        %v6269 = vmax.f32 %v6237, 0.0
        %v6270 = vmax.f32 %v6238, 0.0
        %v6271 = vmax.f32 %v6239, 0.0
        %v6272 = vmax.f32 %v6240, 0.0
        %v6273 = vmax.f32 %v6241, 0.0
        %v6274 = vmax.f32 %v6242, 0.0
        %v6275 = vmax.f32 %v6243, 0.0
        %v6276 = vmax.f32 %v6244, 0.0
        %v6277 = vld [vmem:[%s12] sm:$0xff]
        %v6278 = vld [vmem:[%s12 + $0x8] sm:$0xff]
        %v6279 = vld [vmem:[%s12 + $0x10] sm:$0xff]
        %v6280 = vld [vmem:[%s12 + $0x18] sm:$0xff]
        %v6282 = vsel %vm546, %v6245, 0
        %v6285 = vsel %vm546, %v6246, 0
        %v6288 = vsel %vm546, %v6247, 0
        %v6291 = vsel %vm546, %v6248, 0
        %v6294 = vsel %vm546, %v6249, 0
        %v6297 = vsel %vm546, %v6250, 0
        %v6300 = vsel %vm546, %v6251, 0
        %v6303 = vsel %vm546, %v6252, 0
        %v6306 = vsel %vm546, %v6253, 0
        %v6309 = vsel %vm546, %v6254, 0
        %v6312 = vsel %vm546, %v6255, 0
        %v6315 = vsel %vm546, %v6256, 0
        %v6318 = vsel %vm546, %v6257, 0
        %v6321 = vsel %vm546, %v6258, 0
        %v6324 = vsel %vm546, %v6259, 0
        %v6327 = vsel %vm546, %v6260, 0
        %v6330 = vsel %vm546, %v6261, 0
        %v6333 = vsel %vm546, %v6262, 0
        %v6336 = vsel %vm546, %v6263, 0
        %v6339 = vsel %vm546, %v6264, 0
        %v6342 = vsel %vm546, %v6265, 0
        %v6345 = vsel %vm546, %v6266, 0
        %v6348 = vsel %vm546, %v6267, 0
        %v6351 = vsel %vm546, %v6268, 0
        %v6354 = vsel %vm546, %v6269, 0
        %v6357 = vsel %vm546, %v6270, 0
        %v6360 = vsel %vm546, %v6271, 0
        %v6363 = vsel %vm546, %v6272, 0
        %v6366 = vsel %vm546, %v6273, 0
        %v6369 = vsel %vm546, %v6274, 0
        %v6372 = vsel %vm546, %v6275, 0
        %v6375 = vsel %vm546, %v6276, 0
        %6377 = vmatpush.msra.mxu0 0.0
        %6378 = vmatpush.msra.mxu0 0.0
        %6379 = vmatpush.msra.mxu0 0.0
        %6380 = vmatpush.msra.mxu0 0.0
        %6381 = vmatpush.msra.mxu0 0.0
        %6382 = vmatpush.msra.mxu0 0.0
        %6383 = vmatpush.msra.mxu0 0.0
        %6384 = vmatpush.msra.mxu0 0.0
        %6385 = vmatpush.msra.mxu0 0.0
        %6386 = vmatpush.msra.mxu0 0.0
        %6387 = vmatpush.msra.mxu0 0.0
        %6388 = vmatpush.msra.mxu0 0.0
        %6389 = vmatpush.msra.mxu0 %v6280
        %6390 = vmatpush.msra.mxu0 %v6279
        %6391 = vmatpush.msra.mxu0 %v6278
        %6392 = vmatpush.msra.mxu0 %v6277
        %6393 = vmatmul.f32.gmra.mxu0 %v6282
        %v6394 = vpop.f32.mrf.mxu0
        %v6395 = vadd.f32 0.0, %v6394
        %6396 = vmatmul.f32.gmra.mxu0 %v6285
        %v6397 = vpop.f32.mrf.mxu0
        %v6398 = vadd.f32 0.0, %v6397
        %6399 = vmatmul.f32.gmra.mxu0 %v6288
        %v6400 = vpop.f32.mrf.mxu0
        %v6401 = vadd.f32 0.0, %v6400
        %6402 = vmatmul.f32.gmra.mxu0 %v6291
        %v6403 = vpop.f32.mrf.mxu0
        %v6404 = vadd.f32 0.0, %v6403
        %6405 = vmatmul.f32.gmra.mxu0 %v6294
        %v6406 = vpop.f32.mrf.mxu0
        %v6407 = vadd.f32 0.0, %v6406
        %6408 = vmatmul.f32.gmra.mxu0 %v6297
        %v6409 = vpop.f32.mrf.mxu0
        %v6410 = vadd.f32 0.0, %v6409
        %6411 = vmatmul.f32.gmra.mxu0 %v6300
        %v6412 = vpop.f32.mrf.mxu0
        %v6413 = vadd.f32 0.0, %v6412
        %6414 = vmatmul.f32.gmra.mxu0 %v6303
        %v6415 = vpop.f32.mrf.mxu0
        %v6416 = vadd.f32 0.0, %v6415
        %6417 = vmatmul.f32.gmra.mxu0 %v6306
        %v6418 = vpop.f32.mrf.mxu0
        %v6419 = vadd.f32 0.0, %v6418
        %6420 = vmatmul.f32.gmra.mxu0 %v6309
        %v6421 = vpop.f32.mrf.mxu0
        %v6422 = vadd.f32 0.0, %v6421
        %6423 = vmatmul.f32.gmra.mxu0 %v6312
        %v6424 = vpop.f32.mrf.mxu0
        %v6425 = vadd.f32 0.0, %v6424
        %6426 = vmatmul.f32.gmra.mxu0 %v6315
        %v6427 = vpop.f32.mrf.mxu0
        %v6428 = vadd.f32 0.0, %v6427
        %6429 = vmatmul.f32.gmra.mxu0 %v6318
        %v6430 = vpop.f32.mrf.mxu0
        %v6431 = vadd.f32 0.0, %v6430
        %6432 = vmatmul.f32.gmra.mxu0 %v6321
        %v6433 = vpop.f32.mrf.mxu0
        %v6434 = vadd.f32 0.0, %v6433
        %6435 = vmatmul.f32.gmra.mxu0 %v6324
        %v6436 = vpop.f32.mrf.mxu0
        %v6437 = vadd.f32 0.0, %v6436
        %6438 = vmatmul.f32.gmra.mxu0 %v6327
        %v6439 = vpop.f32.mrf.mxu0
        %v6440 = vadd.f32 0.0, %v6439
        %6441 = vmatmul.f32.gmra.mxu0 %v6330
        %v6442 = vpop.f32.mrf.mxu0
        %v6443 = vadd.f32 0.0, %v6442
        %6444 = vmatmul.f32.gmra.mxu0 %v6333
        %v6445 = vpop.f32.mrf.mxu0
        %v6446 = vadd.f32 0.0, %v6445
        %6447 = vmatmul.f32.gmra.mxu0 %v6336
        %v6448 = vpop.f32.mrf.mxu0
        %v6449 = vadd.f32 0.0, %v6448
        %6450 = vmatmul.f32.gmra.mxu0 %v6339
        %v6451 = vpop.f32.mrf.mxu0
        %v6452 = vadd.f32 0.0, %v6451
        %6453 = vmatmul.f32.gmra.mxu0 %v6342
        %v6454 = vpop.f32.mrf.mxu0
        %v6455 = vadd.f32 0.0, %v6454
        %6456 = vmatmul.f32.gmra.mxu0 %v6345
        %v6457 = vpop.f32.mrf.mxu0
        %v6458 = vadd.f32 0.0, %v6457
        %6459 = vmatmul.f32.gmra.mxu0 %v6348
        %v6460 = vpop.f32.mrf.mxu0
        %v6461 = vadd.f32 0.0, %v6460
        %6462 = vmatmul.f32.gmra.mxu0 %v6351
        %v6463 = vpop.f32.mrf.mxu0
        %v6464 = vadd.f32 0.0, %v6463
        %6465 = vmatmul.f32.gmra.mxu0 %v6354
        %v6466 = vpop.f32.mrf.mxu0
        %v6467 = vadd.f32 0.0, %v6466
        %6468 = vmatmul.f32.gmra.mxu0 %v6357
        %v6469 = vpop.f32.mrf.mxu0
        %v6470 = vadd.f32 0.0, %v6469
        %6471 = vmatmul.f32.gmra.mxu0 %v6360
        %v6472 = vpop.f32.mrf.mxu0
        %v6473 = vadd.f32 0.0, %v6472
        %6474 = vmatmul.f32.gmra.mxu0 %v6363
        %v6475 = vpop.f32.mrf.mxu0
        %v6476 = vadd.f32 0.0, %v6475
        %6477 = vmatmul.f32.gmra.mxu0 %v6366
        %v6478 = vpop.f32.mrf.mxu0
        %v6479 = vadd.f32 0.0, %v6478
        %6480 = vmatmul.f32.gmra.mxu0 %v6369
        %v6481 = vpop.f32.mrf.mxu0
        %v6482 = vadd.f32 0.0, %v6481
        %6483 = vmatmul.f32.gmra.mxu0 %v6372
        %v6484 = vpop.f32.mrf.mxu0
        %v6485 = vadd.f32 0.0, %v6484
        %6486 = vmatmul.f32.gmra.mxu0 %v6375
        %v6487 = vpop.f32.mrf.mxu0
        %v6488 = vadd.f32 0.0, %v6487
        %6489 = vdwg.mxu0
        %v6490 = vadd.f32 %v6395, %v6401
        %v6491 = vadd.f32 %v6398, %v6404
        %v6492 = vadd.f32 %v6407, %v6413
        %v6493 = vadd.f32 %v6410, %v6416
        %v6494 = vadd.f32 %v6419, %v6425
        %v6495 = vadd.f32 %v6422, %v6428
        %v6496 = vadd.f32 %v6431, %v6437
        %v6497 = vadd.f32 %v6434, %v6440
        %v6498 = vadd.f32 %v6443, %v6449
        %v6499 = vadd.f32 %v6446, %v6452
        %v6500 = vadd.f32 %v6455, %v6461
        %v6501 = vadd.f32 %v6458, %v6464
        %v6502 = vadd.f32 %v6467, %v6473
        %v6503 = vadd.f32 %v6470, %v6476
        %v6504 = vadd.f32 %v6479, %v6485
        %v6505 = vadd.f32 %v6482, %v6488
        %6506 = vst.msk [vmem:[#allocation6] sm:$0xff] %vm2160, %v6490
        %6507 = vst.msk [vmem:[#allocation6 + $0x8] sm:$0xff] %vm2160, %v6491
        %6508 = vst.msk [vmem:[#allocation6 + $0x10] sm:$0xff] %vm2160, %v6492
        %6509 = vst.msk [vmem:[#allocation6 + $0x18] sm:$0xff] %vm2160, %v6493
        %6510 = vst.msk [vmem:[#allocation6 + $0x20] sm:$0xff] %vm2160, %v6494
        %6511 = vst.msk [vmem:[#allocation6 + $0x28] sm:$0xff] %vm2160, %v6495
        %6512 = vst.msk [vmem:[#allocation6 + $0x30] sm:$0xff] %vm2160, %v6496
        %6513 = vst.msk [vmem:[#allocation6 + $0x38] sm:$0xff] %vm2160, %v6497
        %6514 = vst.msk [vmem:[#allocation6 + $0x40] sm:$0xff] %vm2160, %v6498
        %6515 = vst.msk [vmem:[#allocation6 + $0x48] sm:$0xff] %vm2160, %v6499
        %6516 = vst.msk [vmem:[#allocation6 + $0x50] sm:$0xff] %vm2160, %v6500
        %6517 = vst.msk [vmem:[#allocation6 + $0x58] sm:$0xff] %vm2160, %v6501
        %6518 = vst.msk [vmem:[#allocation6 + $0x60] sm:$0xff] %vm2160, %v6502
        %6519 = vst.msk [vmem:[#allocation6 + $0x68] sm:$0xff] %vm2160, %v6503
        %6520 = vst.msk [vmem:[#allocation6 + $0x70] sm:$0xff] %vm2160, %v6504
        %6521 = vst.msk [vmem:[#allocation6 + $0x78] sm:$0xff] %vm2160, %v6505
        %v6522 = vld [vmem:[#allocation6] ss:$2 sm:$0xff]
        %s6523 = scalar_lea.vmem [#allocation6], 16
        %v6524 = vld [vmem:[%s6523] ss:$2 sm:$0xff]
        %s6525 = scalar_lea.vmem [#allocation6], 32
        %v6526 = vld [vmem:[%s6525] ss:$2 sm:$0xff]
        %s6527 = scalar_lea.vmem [#allocation6], 48
        %v6528 = vld [vmem:[%s6527] ss:$2 sm:$0xff]
        %s6529 = scalar_lea.vmem [#allocation6], 64
        %v6530 = vld [vmem:[%s6529] ss:$2 sm:$0xff]
        %s6531 = scalar_lea.vmem [#allocation6], 80
        %v6532 = vld [vmem:[%s6531] ss:$2 sm:$0xff]
        %s6533 = scalar_lea.vmem [#allocation6], 96
        %v6534 = vld [vmem:[%s6533] ss:$2 sm:$0xff]
        %s6535 = scalar_lea.vmem [#allocation6], 112
        %v6536 = vld [vmem:[%s6535] ss:$2 sm:$0xff]
        %s6537 = scalar_lea.vmem [#allocation6], 1
        %v6538 = vld [vmem:[%s6537] ss:$2 sm:$0xff]
        %s6539 = scalar_lea.vmem [#allocation6], 17
        %v6540 = vld [vmem:[%s6539] ss:$2 sm:$0xff]
        %s6541 = scalar_lea.vmem [#allocation6], 33
        %v6542 = vld [vmem:[%s6541] ss:$2 sm:$0xff]
        %s6543 = scalar_lea.vmem [#allocation6], 49
        %v6544 = vld [vmem:[%s6543] ss:$2 sm:$0xff]
        %s6545 = scalar_lea.vmem [#allocation6], 65
        %v6546 = vld [vmem:[%s6545] ss:$2 sm:$0xff]
        %s6547 = scalar_lea.vmem [#allocation6], 81
        %v6548 = vld [vmem:[%s6547] ss:$2 sm:$0xff]
        %s6549 = scalar_lea.vmem [#allocation6], 97
        %v6550 = vld [vmem:[%s6549] ss:$2 sm:$0xff]
        %s6551 = scalar_lea.vmem [#allocation6], 113
        %v6552 = vld [vmem:[%s6551] ss:$2 sm:$0xff]
        %v6553 = vadd.f32 %v6522, %v6538
        %v6554 = vadd.f32 %v6524, %v6540
        %v6555 = vadd.f32 %v6526, %v6542
        %v6556 = vadd.f32 %v6528, %v6544
        %v6557 = vadd.f32 %v6530, %v6546
        %v6558 = vadd.f32 %v6532, %v6548
        %v6559 = vadd.f32 %v6534, %v6550
        %v6560 = vadd.f32 %v6536, %v6552
        %v6561 = vmul.f32 %v6553, 0.25
        %v6562 = vmul.f32 %v6554, 0.25
        %v6563 = vmul.f32 %v6555, 0.25
        %v6564 = vmul.f32 %v6556, 0.25
        %v6565 = vmul.f32 %v6557, 0.25
        %v6566 = vmul.f32 %v6558, 0.25
        %v6567 = vmul.f32 %v6559, 0.25
        %v6568 = vmul.f32 %v6560, 0.25
        %6569 = vst.msk [vmem:[#allocation3] sm:$0xff] %vm2160, %v6561
        %6570 = vst.msk [vmem:[#allocation3 + $0x8] sm:$0xff] %vm2160, %v6562
        %6571 = vst.msk [vmem:[#allocation3 + $0x10] sm:$0xff] %vm2160, %v6563
        %6572 = vst.msk [vmem:[#allocation3 + $0x18] sm:$0xff] %vm2160, %v6564
        %6573 = vst.msk [vmem:[#allocation3 + $0x20] sm:$0xff] %vm2160, %v6565
        %6574 = vst.msk [vmem:[#allocation3 + $0x28] sm:$0xff] %vm2160, %v6566
        %6575 = vst.msk [vmem:[#allocation3 + $0x30] sm:$0xff] %vm2160, %v6567
        %6576 = vst.msk [vmem:[#allocation3 + $0x38] sm:$0xff] %vm2160, %v6568
        %v6577 = vld [vmem:[#allocation3] sm:$0xff]
        %v6578 = vld [vmem:[#allocation3 + $0x8] sm:$0xff]
        %v6579 = vld [vmem:[#allocation3 + $0x10] sm:$0xff]
        %v6580 = vld [vmem:[#allocation3 + $0x18] sm:$0xff]
        %v6581 = vld [vmem:[#allocation3 + $0x20] sm:$0xff]
        %v6582 = vld [vmem:[#allocation3 + $0x28] sm:$0xff]
        %v6583 = vld [vmem:[#allocation3 + $0x30] sm:$0xff]
        %v6584 = vld [vmem:[#allocation3 + $0x38] sm:$0xff]
        %s6585 = scalar_lea.vmem %s4, 2
        %v6586 = vld [vmem:[%s6585] sm:$0x1]
        %s6587 = scalar_lea.vmem %s5, 2
        %v6588 = vld [vmem:[%s6587] sm:$0x1]
        %v6590 = vperm.slane %v6586, 0
        %v6592 = vmul.f32 %v6577, %v6590
        %v6593 = vmul.f32 %v6578, %v6590
        %v6594 = vmul.f32 %v6579, %v6590
        %v6595 = vmul.f32 %v6580, %v6590
        %v6596 = vmul.f32 %v6581, %v6590
        %v6597 = vmul.f32 %v6582, %v6590
        %v6598 = vmul.f32 %v6583, %v6590
        %v6599 = vmul.f32 %v6584, %v6590
        %v6601 = vperm.slane %v6588, 0
        %v6603 = vadd.f32 %v6592, %v6601
        %v6604 = vadd.f32 %v6593, %v6601
        %v6605 = vadd.f32 %v6594, %v6601
        %v6606 = vadd.f32 %v6595, %v6601
        %v6607 = vadd.f32 %v6596, %v6601
        %v6608 = vadd.f32 %v6597, %v6601
        %v6609 = vadd.f32 %v6598, %v6601
        %v6610 = vadd.f32 %v6599, %v6601
        %v6611 = vmax.f32 %v6603, 0.0
        %v6612 = vmax.f32 %v6604, 0.0
        %v6613 = vmax.f32 %v6605, 0.0
        %v6614 = vmax.f32 %v6606, 0.0
        %v6615 = vmax.f32 %v6607, 0.0
        %v6616 = vmax.f32 %v6608, 0.0
        %v6617 = vmax.f32 %v6609, 0.0
        %v6618 = vmax.f32 %v6610, 0.0
        %s6619 = scalar_lea.vmem %s6, 64
        %v6620 = vld [vmem:[%s6619] sm:$0xff]
        %v6621 = vld [vmem:[%s6619 + $0x8] sm:$0xff]
        %v6622 = vld [vmem:[%s6619 + $0x10] sm:$0xff]
        %v6623 = vld [vmem:[%s6619 + $0x18] sm:$0xff]
        %v6625 = vsel %vm546, %v6611, 0
        %v6628 = vsel %vm546, %v6612, 0
        %v6631 = vsel %vm546, %v6613, 0
        %v6634 = vsel %vm546, %v6614, 0
        %v6637 = vsel %vm546, %v6615, 0
        %v6640 = vsel %vm546, %v6616, 0
        %v6643 = vsel %vm546, %v6617, 0
        %v6646 = vsel %vm546, %v6618, 0
        %6648 = vmatpush.msra.mxu0 0.0
        %6649 = vmatpush.msra.mxu0 0.0
        %6650 = vmatpush.msra.mxu0 0.0
        %6651 = vmatpush.msra.mxu0 0.0
        %6652 = vmatpush.msra.mxu0 0.0
        %6653 = vmatpush.msra.mxu0 0.0
        %6654 = vmatpush.msra.mxu0 0.0
        %6655 = vmatpush.msra.mxu0 0.0
        %6656 = vmatpush.msra.mxu0 0.0
        %6657 = vmatpush.msra.mxu0 0.0
        %6658 = vmatpush.msra.mxu0 0.0
        %6659 = vmatpush.msra.mxu0 0.0
        %6660 = vmatpush.msra.mxu0 %v6623
        %6661 = vmatpush.msra.mxu0 %v6622
        %6662 = vmatpush.msra.mxu0 %v6621
        %6663 = vmatpush.msra.mxu0 %v6620
        %6664 = vmatmul.f32.gmra.mxu0 %v6625
        %v6665 = vpop.f32.mrf.mxu0
        %v6666 = vadd.f32 0.0, %v6665
        %6667 = vmatmul.f32.gmra.mxu0 %v6628
        %v6668 = vpop.f32.mrf.mxu0
        %v6669 = vadd.f32 0.0, %v6668
        %6670 = vmatmul.f32.gmra.mxu0 %v6631
        %v6671 = vpop.f32.mrf.mxu0
        %v6672 = vadd.f32 0.0, %v6671
        %6673 = vmatmul.f32.gmra.mxu0 %v6634
        %v6674 = vpop.f32.mrf.mxu0
        %v6675 = vadd.f32 0.0, %v6674
        %6676 = vmatmul.f32.gmra.mxu0 %v6637
        %v6677 = vpop.f32.mrf.mxu0
        %v6678 = vadd.f32 0.0, %v6677
        %6679 = vmatmul.f32.gmra.mxu0 %v6640
        %v6680 = vpop.f32.mrf.mxu0
        %v6681 = vadd.f32 0.0, %v6680
        %6682 = vmatmul.f32.gmra.mxu0 %v6643
        %v6683 = vpop.f32.mrf.mxu0
        %v6684 = vadd.f32 0.0, %v6683
        %6685 = vmatmul.f32.gmra.mxu0 %v6646
        %v6686 = vpop.f32.mrf.mxu0
        %v6687 = vadd.f32 0.0, %v6686
        %6688 = vdwg.mxu0
        %s6689 = scalar_lea.vmem %s7, 2
        %v6690 = vld [vmem:[%s6689] sm:$0x1]
        %s6691 = scalar_lea.vmem %s8, 2
        %v6692 = vld [vmem:[%s6691] sm:$0x1]
        %v6694 = vperm.slane %v6690, 0
        %v6696 = vmul.f32 %v6666, %v6694
        %v6697 = vmul.f32 %v6669, %v6694
        %v6698 = vmul.f32 %v6672, %v6694
        %v6699 = vmul.f32 %v6675, %v6694
        %v6700 = vmul.f32 %v6678, %v6694
        %v6701 = vmul.f32 %v6681, %v6694
        %v6702 = vmul.f32 %v6684, %v6694
        %v6703 = vmul.f32 %v6687, %v6694
        %v6705 = vperm.slane %v6692, 0
        %v6707 = vadd.f32 %v6696, %v6705
        %v6708 = vadd.f32 %v6697, %v6705
        %v6709 = vadd.f32 %v6698, %v6705
        %v6710 = vadd.f32 %v6699, %v6705
        %v6711 = vadd.f32 %v6700, %v6705
        %v6712 = vadd.f32 %v6701, %v6705
        %v6713 = vadd.f32 %v6702, %v6705
        %v6714 = vadd.f32 %v6703, %v6705
        %v6715 = vmax.f32 %v6707, 0.0
        %v6716 = vmax.f32 %v6708, 0.0
        %v6717 = vmax.f32 %v6709, 0.0
        %v6718 = vmax.f32 %v6710, 0.0
        %v6719 = vmax.f32 %v6711, 0.0
        %v6720 = vmax.f32 %v6712, 0.0
        %v6721 = vmax.f32 %v6713, 0.0
        %v6722 = vmax.f32 %v6714, 0.0
        %s6723 = scalar_lea.vmem [#allocation5], 24
        %6724 = vst.msk [vmem:[%s6723 + $0x8] sm:$0xff] %vm546, %v6715
        %6725 = vst.msk [vmem:[%s6723 + $0x20] sm:$0xff] %vm546, %v6716
        %6726 = vst.msk [vmem:[%s6723 + $0x38] sm:$0xff] %vm546, %v6717
        %6727 = vst.msk [vmem:[%s6723 + $0x50] sm:$0xff] %vm546, %v6718
        %6728 = vst.msk [vmem:[%s6723 + $0x68] sm:$0xff] %vm546, %v6719
        %6729 = vst.msk [vmem:[%s6723 + $0x80] sm:$0xff] %vm546, %v6720
        %6730 = vst.msk [vmem:[%s6723 + $0x98] sm:$0xff] %vm546, %v6721
        %6731 = vst.msk [vmem:[%s6723 + $0xb0] sm:$0xff] %vm546, %v6722
        %s6732 = scalar_lea.vmem %s9, 576
        %v6733 = vld [vmem:[%s6732] sm:$0xff]
        %v6734 = vld [vmem:[%s6732 + $0x8] sm:$0xff]
        %v6735 = vld [vmem:[%s6732 + $0x10] sm:$0xff]
        %v6736 = vld [vmem:[%s6732 + $0x18] sm:$0xff]
        %v6737 = vld [vmem:[%s6732 + $0x20] sm:$0xff]
        %v6738 = vld [vmem:[%s6732 + $0x28] sm:$0xff]
        %v6739 = vld [vmem:[%s6732 + $0x30] sm:$0xff]
        %v6740 = vld [vmem:[%s6732 + $0x38] sm:$0xff]
        %v6741 = vld [vmem:[%s6732 + $0x40] sm:$0xff]
        %v6742 = vld [vmem:[%s6732 + $0x48] sm:$0xff]
        %v6743 = vld [vmem:[%s6732 + $0x50] sm:$0xff]
        %v6744 = vld [vmem:[%s6732 + $0x58] sm:$0xff]
        %v6745 = vld [vmem:[%s6732 + $0x60] sm:$0xff]
        %v6746 = vld [vmem:[%s6732 + $0x68] sm:$0xff]
        %v6747 = vld [vmem:[%s6732 + $0x70] sm:$0xff]
        %v6748 = vld [vmem:[%s6732 + $0x78] sm:$0xff]
        %v6749 = vld [vmem:[%s6732 + $0x80] sm:$0xff]
        %v6750 = vld [vmem:[%s6732 + $0x88] sm:$0xff]
        %v6751 = vld [vmem:[%s6732 + $0x90] sm:$0xff]
        %v6752 = vld [vmem:[%s6732 + $0x98] sm:$0xff]
        %v6753 = vld [vmem:[%s6732 + $0xa0] sm:$0xff]
        %v6754 = vld [vmem:[%s6732 + $0xa8] sm:$0xff]
        %v6755 = vld [vmem:[%s6732 + $0xb0] sm:$0xff]
        %v6756 = vld [vmem:[%s6732 + $0xb8] sm:$0xff]
        %v6757 = vld [vmem:[%s6732 + $0xc0] sm:$0xff]
        %v6758 = vld [vmem:[%s6732 + $0xc8] sm:$0xff]
        %v6759 = vld [vmem:[%s6732 + $0xd0] sm:$0xff]
        %v6760 = vld [vmem:[%s6732 + $0xd8] sm:$0xff]
        %v6761 = vld [vmem:[%s6732 + $0xe0] sm:$0xff]
        %v6762 = vld [vmem:[%s6732 + $0xe8] sm:$0xff]
        %v6763 = vld [vmem:[%s6732 + $0xf0] sm:$0xff]
        %v6764 = vld [vmem:[%s6732 + $0xf8] sm:$0xff]
        %v6765 = vld [vmem:[%s6732 + $0x100] sm:$0xff]
        %v6766 = vld [vmem:[%s6732 + $0x108] sm:$0xff]
        %v6767 = vld [vmem:[%s6732 + $0x110] sm:$0xff]
        %v6768 = vld [vmem:[%s6732 + $0x118] sm:$0xff]
        %v6769 = vld [vmem:[#allocation5] sm:$0xff]
        %v6770 = vld [vmem:[#allocation5 + $0x8] sm:$0xff]
        %v6771 = vld [vmem:[#allocation5 + $0x10] sm:$0x1]
        %v6772 = vld [vmem:[#allocation5 + $0x18] sm:$0xff]
        %v6773 = vld [vmem:[#allocation5 + $0x20] sm:$0xff]
        %v6774 = vld [vmem:[#allocation5 + $0x28] sm:$0x1]
        %v6775 = vld [vmem:[#allocation5 + $0x30] sm:$0xff]
        %v6776 = vld [vmem:[#allocation5 + $0x38] sm:$0xff]
        %v6777 = vld [vmem:[#allocation5 + $0x40] sm:$0x1]
        %v6778 = vld [vmem:[#allocation5 + $0x48] sm:$0xff]
        %v6779 = vld [vmem:[#allocation5 + $0x50] sm:$0xff]
        %v6780 = vld [vmem:[#allocation5 + $0x58] sm:$0x1]
        %v6781 = vld [vmem:[#allocation5 + $0x60] sm:$0xff]
        %v6782 = vld [vmem:[#allocation5 + $0x68] sm:$0xff]
        %v6783 = vld [vmem:[#allocation5 + $0x70] sm:$0x1]
        %v6784 = vld [vmem:[#allocation5 + $0x78] sm:$0xff]
        %v6785 = vld [vmem:[#allocation5 + $0x80] sm:$0xff]
        %v6786 = vld [vmem:[#allocation5 + $0x88] sm:$0x1]
        %v6787 = vld [vmem:[#allocation5 + $0x90] sm:$0xff]
        %v6788 = vld [vmem:[#allocation5 + $0x98] sm:$0xff]
        %v6789 = vld [vmem:[#allocation5 + $0xa0] sm:$0x1]
        %v6790 = vld [vmem:[#allocation5 + $0xa8] sm:$0xff]
        %v6791 = vld [vmem:[#allocation5 + $0xb0] sm:$0xff]
        %v6792 = vld [vmem:[#allocation5 + $0xb8] sm:$0x1]
        %v6793 = vld [vmem:[#allocation5 + $0xc0] sm:$0xff]
        %v6794 = vld [vmem:[#allocation5 + $0xc8] sm:$0xff]
        %v6795 = vld [vmem:[#allocation5 + $0xd0] sm:$0x1]
        %v6796 = vld [vmem:[#allocation5 + $0xd8] sm:$0xff]
        %v6797 = vld [vmem:[#allocation5 + $0xe0] sm:$0xff]
        %v6798 = vld [vmem:[#allocation5 + $0xe8] sm:$0x1]
        %v6809 = vrot.slane %v6770, 1
        %v6810 = vrot.slane %v6773, 1
        %v6811 = vrot.slane %v6776, 1
        %v6812 = vrot.slane %v6779, 1
        %v6813 = vrot.slane %v6782, 1
        %v6814 = vrot.slane %v6785, 1
        %v6815 = vrot.slane %v6788, 1
        %v6816 = vrot.slane %v6791, 1
        %v6817 = vrot.slane %v6794, 1
        %v6818 = vrot.slane %v6797, 1
        %6819 = vrot.lane.b32.xlu0 %v6809, 32
        %v6820 = vpop.permute.xlu0 %6819
        %6821 = vrot.lane.b32.xlu0 %v6810, 32
        %v6822 = vpop.permute.xlu0 %6821
        %6823 = vrot.lane.b32.xlu0 %v6811, 32
        %v6824 = vpop.permute.xlu0 %6823
        %6825 = vrot.lane.b32.xlu0 %v6812, 32
        %v6826 = vpop.permute.xlu0 %6825
        %6827 = vrot.lane.b32.xlu0 %v6813, 32
        %v6828 = vpop.permute.xlu0 %6827
        %6829 = vrot.lane.b32.xlu0 %v6814, 32
        %v6830 = vpop.permute.xlu0 %6829
        %6831 = vrot.lane.b32.xlu0 %v6815, 32
        %v6832 = vpop.permute.xlu0 %6831
        %6833 = vrot.lane.b32.xlu0 %v6816, 32
        %v6834 = vpop.permute.xlu0 %6833
        %6835 = vrot.lane.b32.xlu0 %v6817, 32
        %v6836 = vpop.permute.xlu0 %6835
        %6837 = vrot.lane.b32.xlu0 %v6818, 32
        %v6838 = vpop.permute.xlu0 %6837
        %v6859 = vrot.slane %v6770, 2
        %v6860 = vrot.slane %v6771, 2
        %v6861 = vsel %vm1105, %v6859, %v6860
        %v6862 = vrot.slane %v6773, 2
        %v6863 = vrot.slane %v6774, 2
        %v6864 = vsel %vm1105, %v6862, %v6863
        %v6865 = vrot.slane %v6776, 2
        %v6866 = vrot.slane %v6777, 2
        %v6867 = vsel %vm1105, %v6865, %v6866
        %v6868 = vrot.slane %v6779, 2
        %v6869 = vrot.slane %v6780, 2
        %v6870 = vsel %vm1105, %v6868, %v6869
        %v6871 = vrot.slane %v6782, 2
        %v6872 = vrot.slane %v6783, 2
        %v6873 = vsel %vm1105, %v6871, %v6872
        %v6874 = vrot.slane %v6785, 2
        %v6875 = vrot.slane %v6786, 2
        %v6876 = vsel %vm1105, %v6874, %v6875
        %v6877 = vrot.slane %v6788, 2
        %v6878 = vrot.slane %v6789, 2
        %v6879 = vsel %vm1105, %v6877, %v6878
        %v6880 = vrot.slane %v6791, 2
        %v6881 = vrot.slane %v6792, 2
        %v6882 = vsel %vm1105, %v6880, %v6881
        %v6883 = vrot.slane %v6794, 2
        %v6884 = vrot.slane %v6795, 2
        %v6885 = vsel %vm1105, %v6883, %v6884
        %v6886 = vrot.slane %v6797, 2
        %v6887 = vrot.slane %v6798, 2
        %v6888 = vsel %vm1105, %v6886, %v6887
        %6889 = vrot.lane.b32.xlu0 %v6859, 64
        %v6890 = vpop.permute.xlu0 %6889
        %6891 = vrot.lane.b32.xlu0 %v6861, 64
        %v6892 = vpop.permute.xlu0 %6891
        %6893 = vrot.lane.b32.xlu0 %v6862, 64
        %v6894 = vpop.permute.xlu0 %6893
        %6895 = vrot.lane.b32.xlu0 %v6864, 64
        %v6896 = vpop.permute.xlu0 %6895
        %6897 = vrot.lane.b32.xlu0 %v6865, 64
        %v6898 = vpop.permute.xlu0 %6897
        %6899 = vrot.lane.b32.xlu0 %v6867, 64
        %v6900 = vpop.permute.xlu0 %6899
        %6901 = vrot.lane.b32.xlu0 %v6868, 64
        %v6902 = vpop.permute.xlu0 %6901
        %6903 = vrot.lane.b32.xlu0 %v6870, 64
        %v6904 = vpop.permute.xlu0 %6903
        %6905 = vrot.lane.b32.xlu0 %v6871, 64
        %v6906 = vpop.permute.xlu0 %6905
        %6907 = vrot.lane.b32.xlu0 %v6873, 64
        %v6908 = vpop.permute.xlu0 %6907
        %6909 = vrot.lane.b32.xlu0 %v6874, 64
        %v6910 = vpop.permute.xlu0 %6909
        %6911 = vrot.lane.b32.xlu0 %v6876, 64
        %v6912 = vpop.permute.xlu0 %6911
        %6913 = vrot.lane.b32.xlu0 %v6877, 64
        %v6914 = vpop.permute.xlu0 %6913
        %6915 = vrot.lane.b32.xlu0 %v6879, 64
        %v6916 = vpop.permute.xlu0 %6915
        %6917 = vrot.lane.b32.xlu0 %v6880, 64
        %v6918 = vpop.permute.xlu0 %6917
        %6919 = vrot.lane.b32.xlu0 %v6882, 64
        %v6920 = vpop.permute.xlu0 %6919
        %6921 = vrot.lane.b32.xlu0 %v6883, 64
        %v6922 = vpop.permute.xlu0 %6921
        %6923 = vrot.lane.b32.xlu0 %v6885, 64
        %v6924 = vpop.permute.xlu0 %6923
        %6925 = vrot.lane.b32.xlu0 %v6886, 64
        %v6926 = vpop.permute.xlu0 %6925
        %6927 = vrot.lane.b32.xlu0 %v6888, 64
        %v6928 = vpop.permute.xlu0 %6927
        %v6949 = vsel %vm546, %v6769, %v6820
        %v6950 = vsel %vm546, %v6770, %v6820
        %v6951 = vsel %vm546, %v6772, %v6822
        %v6952 = vsel %vm546, %v6773, %v6822
        %v6953 = vsel %vm546, %v6775, %v6824
        %v6954 = vsel %vm546, %v6776, %v6824
        %v6955 = vsel %vm546, %v6778, %v6826
        %v6956 = vsel %vm546, %v6779, %v6826
        %v6957 = vsel %vm546, %v6781, %v6828
        %v6958 = vsel %vm546, %v6782, %v6828
        %v6959 = vsel %vm546, %v6784, %v6830
        %v6960 = vsel %vm546, %v6785, %v6830
        %v6961 = vsel %vm546, %v6787, %v6832
        %v6962 = vsel %vm546, %v6788, %v6832
        %v6963 = vsel %vm546, %v6790, %v6834
        %v6964 = vsel %vm546, %v6791, %v6834
        %v6965 = vsel %vm546, %v6793, %v6836
        %v6966 = vsel %vm546, %v6794, %v6836
        %v6967 = vsel %vm546, %v6796, %v6838
        %v6968 = vsel %vm546, %v6797, %v6838
        %v6969 = vsel %vm1412, %v6949, %v6890
        %v6970 = vsel %vm1412, %v6950, %v6892
        %v6971 = vsel %vm1412, %v6951, %v6894
        %v6972 = vsel %vm1412, %v6952, %v6896
        %v6973 = vsel %vm1412, %v6953, %v6898
        %v6974 = vsel %vm1412, %v6954, %v6900
        %v6975 = vsel %vm1412, %v6955, %v6902
        %v6976 = vsel %vm1412, %v6956, %v6904
        %v6977 = vsel %vm1412, %v6957, %v6906
        %v6978 = vsel %vm1412, %v6958, %v6908
        %v6979 = vsel %vm1412, %v6959, %v6910
        %v6980 = vsel %vm1412, %v6960, %v6912
        %v6981 = vsel %vm1412, %v6961, %v6914
        %v6982 = vsel %vm1412, %v6962, %v6916
        %v6983 = vsel %vm1412, %v6963, %v6918
        %v6984 = vsel %vm1412, %v6964, %v6920
        %v6985 = vsel %vm1412, %v6965, %v6922
        %v6986 = vsel %vm1412, %v6966, %v6924
        %v6987 = vsel %vm1412, %v6967, %v6926
        %v6988 = vsel %vm1412, %v6968, %v6928
        %v7005 = vrot.slane %v6969, 7
        %v7006 = vrot.slane %v6970, 7
        %v7007 = vsel %vm1515, %v7005, %v7006
        %v7008 = vrot.slane %v6971, 7
        %v7009 = vrot.slane %v6972, 7
        %v7010 = vsel %vm1515, %v7008, %v7009
        %v7011 = vrot.slane %v6973, 7
        %v7012 = vrot.slane %v6974, 7
        %v7013 = vsel %vm1515, %v7011, %v7012
        %v7014 = vrot.slane %v6975, 7
        %v7015 = vrot.slane %v6976, 7
        %v7016 = vsel %vm1515, %v7014, %v7015
        %v7017 = vrot.slane %v6977, 7
        %v7018 = vrot.slane %v6978, 7
        %v7019 = vsel %vm1515, %v7017, %v7018
        %v7020 = vrot.slane %v6979, 7
        %v7021 = vrot.slane %v6980, 7
        %v7022 = vsel %vm1515, %v7020, %v7021
        %v7023 = vrot.slane %v6981, 7
        %v7024 = vrot.slane %v6982, 7
        %v7025 = vsel %vm1515, %v7023, %v7024
        %v7026 = vrot.slane %v6983, 7
        %v7027 = vrot.slane %v6984, 7
        %v7028 = vsel %vm1515, %v7026, %v7027
        %v7031 = vrot.slane %v6985, 7
        %v7032 = vrot.slane %v6986, 7
        %v7033 = vsel %vm1515, %v7031, %v7032
        %v7034 = vsel %vm1604, %v7010, 0
        %v7036 = vsel %vm1604, %v7013, 0
        %v7038 = vsel %vm1604, %v7016, 0
        %v7040 = vsel %vm1604, %v7019, 0
        %v7042 = vsel %vm1604, %v7022, 0
        %v7044 = vsel %vm1604, %v7025, 0
        %v7046 = vsel %vm1604, %v7028, 0
        %v7048 = vsel %vm1604, %v7033, 0
        %7050 = vmatpush.msra.mxu0 0.0
        %7051 = vmatpush.msra.mxu0 0.0
        %7052 = vmatpush.msra.mxu0 0.0
        %7053 = vmatpush.msra.mxu0 0.0
        %7054 = vmatpush.msra.mxu0 %v6756
        %7055 = vmatpush.msra.mxu0 %v6755
        %7056 = vmatpush.msra.mxu0 %v6754
        %7057 = vmatpush.msra.mxu0 %v6753
        %7058 = vmatpush.msra.mxu0 %v6752
        %7059 = vmatpush.msra.mxu0 %v6751
        %7060 = vmatpush.msra.mxu0 %v6750
        %7061 = vmatpush.msra.mxu0 %v6749
        %7062 = vmatpush.msra.mxu0 %v6748
        %7063 = vmatpush.msra.mxu0 %v6747
        %7064 = vmatpush.msra.mxu0 %v6746
        %7065 = vmatpush.msra.mxu0 %v6745
        %7066 = vmatmul.f32.gmra.mxu0 %v7034
        %v7067 = vpop.f32.mrf.mxu0
        %v7068 = vadd.f32 0.0, %v7067
        %7069 = vmatmul.f32.gmra.mxu0 %v7036
        %v7070 = vpop.f32.mrf.mxu0
        %v7071 = vadd.f32 0.0, %v7070
        %7072 = vmatmul.f32.gmra.mxu0 %v7038
        %v7073 = vpop.f32.mrf.mxu0
        %v7074 = vadd.f32 0.0, %v7073
        %7075 = vmatmul.f32.gmra.mxu0 %v7040
        %v7076 = vpop.f32.mrf.mxu0
        %v7077 = vadd.f32 0.0, %v7076
        %7078 = vmatmul.f32.gmra.mxu0 %v7042
        %v7079 = vpop.f32.mrf.mxu0
        %v7080 = vadd.f32 0.0, %v7079
        %7081 = vmatmul.f32.gmra.mxu0 %v7044
        %v7082 = vpop.f32.mrf.mxu0
        %v7083 = vadd.f32 0.0, %v7082
        %7084 = vmatmul.f32.gmra.mxu0 %v7046
        %v7085 = vpop.f32.mrf.mxu0
        %v7086 = vadd.f32 0.0, %v7085
        %7087 = vmatmul.f32.gmra.mxu0 %v7048
        %v7088 = vpop.f32.mrf.mxu0
        %v7089 = vadd.f32 0.0, %v7088
        %7090 = vdwg.mxu0
        %v7091 = vsel %vm1604, %v7007, 0
        %7093 = vmatpush.msra.mxu0 0.0
        %7094 = vmatpush.msra.mxu0 0.0
        %7095 = vmatpush.msra.mxu0 0.0
        %7096 = vmatpush.msra.mxu0 0.0
        %7097 = vmatpush.msra.mxu0 %v6744
        %7098 = vmatpush.msra.mxu0 %v6743
        %7099 = vmatpush.msra.mxu0 %v6742
        %7100 = vmatpush.msra.mxu0 %v6741
        %7101 = vmatpush.msra.mxu0 %v6740
        %7102 = vmatpush.msra.mxu0 %v6739
        %7103 = vmatpush.msra.mxu0 %v6738
        %7104 = vmatpush.msra.mxu0 %v6737
        %7105 = vmatpush.msra.mxu0 %v6736
        %7106 = vmatpush.msra.mxu0 %v6735
        %7107 = vmatpush.msra.mxu0 %v6734
        %7108 = vmatpush.msra.mxu0 %v6733
        %7109 = vmatmul.f32.gmra.mxu0 %v7091
        %v7110 = vpop.f32.mrf.mxu0
        %v7111 = vadd.f32 %v7068, %v7110
        %7112 = vmatmul.f32.gmra.mxu0 %v7034
        %v7113 = vpop.f32.mrf.mxu0
        %v7114 = vadd.f32 %v7071, %v7113
        %7115 = vmatmul.f32.gmra.mxu0 %v7036
        %v7116 = vpop.f32.mrf.mxu0
        %v7117 = vadd.f32 %v7074, %v7116
        %7118 = vmatmul.f32.gmra.mxu0 %v7038
        %v7119 = vpop.f32.mrf.mxu0
        %v7120 = vadd.f32 %v7077, %v7119
        %7121 = vmatmul.f32.gmra.mxu0 %v7040
        %v7122 = vpop.f32.mrf.mxu0
        %v7123 = vadd.f32 %v7080, %v7122
        %7124 = vmatmul.f32.gmra.mxu0 %v7042
        %v7125 = vpop.f32.mrf.mxu0
        %v7126 = vadd.f32 %v7083, %v7125
        %7127 = vmatmul.f32.gmra.mxu0 %v7044
        %v7128 = vpop.f32.mrf.mxu0
        %v7129 = vadd.f32 %v7086, %v7128
        %7130 = vmatmul.f32.gmra.mxu0 %v7046
        %v7131 = vpop.f32.mrf.mxu0
        %v7132 = vadd.f32 %v7089, %v7131
        %7133 = vdwg.mxu0
        %v7136 = vrot.slane %v6987, 7
        %v7137 = vrot.slane %v6988, 7
        %v7138 = vsel %vm1515, %v7136, %v7137
        %v7139 = vsel %vm1604, %v7138, 0
        %7141 = vmatpush.msra.mxu0 0.0
        %7142 = vmatpush.msra.mxu0 0.0
        %7143 = vmatpush.msra.mxu0 0.0
        %7144 = vmatpush.msra.mxu0 0.0
        %7145 = vmatpush.msra.mxu0 %v6768
        %7146 = vmatpush.msra.mxu0 %v6767
        %7147 = vmatpush.msra.mxu0 %v6766
        %7148 = vmatpush.msra.mxu0 %v6765
        %7149 = vmatpush.msra.mxu0 %v6764
        %7150 = vmatpush.msra.mxu0 %v6763
        %7151 = vmatpush.msra.mxu0 %v6762
        %7152 = vmatpush.msra.mxu0 %v6761
        %7153 = vmatpush.msra.mxu0 %v6760
        %7154 = vmatpush.msra.mxu0 %v6759
        %7155 = vmatpush.msra.mxu0 %v6758
        %7156 = vmatpush.msra.mxu0 %v6757
        %7157 = vmatmul.f32.gmra.mxu0 %v7036
        %v7158 = vpop.f32.mrf.mxu0
        %v7159 = vadd.f32 0.0, %v7158
        %7160 = vmatmul.f32.gmra.mxu0 %v7038
        %v7161 = vpop.f32.mrf.mxu0
        %v7162 = vadd.f32 0.0, %v7161
        %7163 = vmatmul.f32.gmra.mxu0 %v7040
        %v7164 = vpop.f32.mrf.mxu0
        %v7165 = vadd.f32 0.0, %v7164
        %7166 = vmatmul.f32.gmra.mxu0 %v7042
        %v7167 = vpop.f32.mrf.mxu0
        %v7168 = vadd.f32 0.0, %v7167
        %7169 = vmatmul.f32.gmra.mxu0 %v7044
        %v7170 = vpop.f32.mrf.mxu0
        %v7171 = vadd.f32 0.0, %v7170
        %7172 = vmatmul.f32.gmra.mxu0 %v7046
        %v7173 = vpop.f32.mrf.mxu0
        %v7174 = vadd.f32 0.0, %v7173
        %7175 = vmatmul.f32.gmra.mxu0 %v7048
        %v7176 = vpop.f32.mrf.mxu0
        %v7177 = vadd.f32 0.0, %v7176
        %7178 = vmatmul.f32.gmra.mxu0 %v7139
        %v7179 = vpop.f32.mrf.mxu0
        %v7180 = vadd.f32 0.0, %v7179
        %7181 = vdwg.mxu0
        %v7182 = vadd.f32 %v7111, %v7159
        %v7183 = vadd.f32 %v7114, %v7162
        %v7184 = vadd.f32 %v7117, %v7165
        %v7185 = vadd.f32 %v7120, %v7168
        %v7186 = vadd.f32 %v7123, %v7171
        %v7187 = vadd.f32 %v7126, %v7174
        %v7188 = vadd.f32 %v7129, %v7177
        %v7189 = vadd.f32 %v7132, %v7180
        %7198 = vrot.lane.b32.xlu0 %v7182, 16
        %v7199 = vpop.permute.xlu0 %7198
        %7200 = vrot.lane.b32.xlu0 %v7183, 16
        %v7201 = vpop.permute.xlu0 %7200
        %7202 = vrot.lane.b32.xlu0 %v7184, 16
        %v7203 = vpop.permute.xlu0 %7202
        %7204 = vrot.lane.b32.xlu0 %v7185, 16
        %v7205 = vpop.permute.xlu0 %7204
        %7206 = vrot.lane.b32.xlu0 %v7186, 16
        %v7207 = vpop.permute.xlu0 %7206
        %7208 = vrot.lane.b32.xlu0 %v7187, 16
        %v7209 = vpop.permute.xlu0 %7208
        %7210 = vrot.lane.b32.xlu0 %v7188, 16
        %v7211 = vpop.permute.xlu0 %7210
        %7212 = vrot.lane.b32.xlu0 %v7189, 16
        %v7213 = vpop.permute.xlu0 %7212
        %7222 = vst.msk [vmem:[#allocation3] sm:$0xff] %vm4131, %v7199
        %7223 = vst.msk [vmem:[#allocation3 + $0x8] sm:$0xff] %vm4131, %v7201
        %7224 = vst.msk [vmem:[#allocation3 + $0x10] sm:$0xff] %vm4131, %v7203
        %7225 = vst.msk [vmem:[#allocation3 + $0x18] sm:$0xff] %vm4131, %v7205
        %7226 = vst.msk [vmem:[#allocation3 + $0x20] sm:$0xff] %vm4131, %v7207
        %7227 = vst.msk [vmem:[#allocation3 + $0x28] sm:$0xff] %vm4131, %v7209
        %7228 = vst.msk [vmem:[#allocation3 + $0x30] sm:$0xff] %vm4131, %v7211
        %7229 = vst.msk [vmem:[#allocation3 + $0x38] sm:$0xff] %vm4131, %v7213
        %v7230 = vld [vmem:[#allocation3] sm:$0xff]
        %v7231 = vld [vmem:[#allocation3 + $0x8] sm:$0xff]
        %v7232 = vld [vmem:[#allocation3 + $0x10] sm:$0xff]
        %v7233 = vld [vmem:[#allocation3 + $0x18] sm:$0xff]
        %v7234 = vld [vmem:[#allocation3 + $0x20] sm:$0xff]
        %v7235 = vld [vmem:[#allocation3 + $0x28] sm:$0xff]
        %v7236 = vld [vmem:[#allocation3 + $0x30] sm:$0xff]
        %v7237 = vld [vmem:[#allocation3 + $0x38] sm:$0xff]
        %s7238 = scalar_lea.vmem %s4, 3
        %v7239 = vld [vmem:[%s7238] sm:$0x1]
        %s7240 = scalar_lea.vmem %s5, 3
        %v7241 = vld [vmem:[%s7240] sm:$0x1]
        %v7243 = vperm.slane %v7239, 0
        %v7245 = vmul.f32 %v7230, %v7243
        %v7246 = vmul.f32 %v7231, %v7243
        %v7247 = vmul.f32 %v7232, %v7243
        %v7248 = vmul.f32 %v7233, %v7243
        %v7249 = vmul.f32 %v7234, %v7243
        %v7250 = vmul.f32 %v7235, %v7243
        %v7251 = vmul.f32 %v7236, %v7243
        %v7252 = vmul.f32 %v7237, %v7243
        %v7254 = vperm.slane %v7241, 0
        %v7256 = vadd.f32 %v7245, %v7254
        %v7257 = vadd.f32 %v7246, %v7254
        %v7258 = vadd.f32 %v7247, %v7254
        %v7259 = vadd.f32 %v7248, %v7254
        %v7260 = vadd.f32 %v7249, %v7254
        %v7261 = vadd.f32 %v7250, %v7254
        %v7262 = vadd.f32 %v7251, %v7254
        %v7263 = vadd.f32 %v7252, %v7254
        %v7264 = vmax.f32 %v7256, 0.0
        %v7265 = vmax.f32 %v7257, 0.0
        %v7266 = vmax.f32 %v7258, 0.0
        %v7267 = vmax.f32 %v7259, 0.0
        %v7268 = vmax.f32 %v7260, 0.0
        %v7269 = vmax.f32 %v7261, 0.0
        %v7270 = vmax.f32 %v7262, 0.0
        %v7271 = vmax.f32 %v7263, 0.0
        %s7272 = scalar_lea.vmem %s6, 96
        %v7273 = vld [vmem:[%s7272] sm:$0xff]
        %v7274 = vld [vmem:[%s7272 + $0x8] sm:$0xff]
        %v7275 = vld [vmem:[%s7272 + $0x10] sm:$0xff]
        %v7276 = vld [vmem:[%s7272 + $0x18] sm:$0xff]
        %v7278 = vsel %vm546, %v7264, 0
        %v7281 = vsel %vm546, %v7265, 0
        %v7284 = vsel %vm546, %v7266, 0
        %v7287 = vsel %vm546, %v7267, 0
        %v7290 = vsel %vm546, %v7268, 0
        %v7293 = vsel %vm546, %v7269, 0
        %v7296 = vsel %vm546, %v7270, 0
        %v7299 = vsel %vm546, %v7271, 0
        %7301 = vmatpush.msra.mxu0 0.0
        %7302 = vmatpush.msra.mxu0 0.0
        %7303 = vmatpush.msra.mxu0 0.0
        %7304 = vmatpush.msra.mxu0 0.0
        %7305 = vmatpush.msra.mxu0 0.0
        %7306 = vmatpush.msra.mxu0 0.0
        %7307 = vmatpush.msra.mxu0 0.0
        %7308 = vmatpush.msra.mxu0 0.0
        %7309 = vmatpush.msra.mxu0 0.0
        %7310 = vmatpush.msra.mxu0 0.0
        %7311 = vmatpush.msra.mxu0 0.0
        %7312 = vmatpush.msra.mxu0 0.0
        %7313 = vmatpush.msra.mxu0 %v7276
        %7314 = vmatpush.msra.mxu0 %v7275
        %7315 = vmatpush.msra.mxu0 %v7274
        %7316 = vmatpush.msra.mxu0 %v7273
        %7317 = vmatmul.f32.gmra.mxu0 %v7278
        %v7318 = vpop.f32.mrf.mxu0
        %v7319 = vadd.f32 0.0, %v7318
        %7320 = vmatmul.f32.gmra.mxu0 %v7281
        %v7321 = vpop.f32.mrf.mxu0
        %v7322 = vadd.f32 0.0, %v7321
        %7323 = vmatmul.f32.gmra.mxu0 %v7284
        %v7324 = vpop.f32.mrf.mxu0
        %v7325 = vadd.f32 0.0, %v7324
        %7326 = vmatmul.f32.gmra.mxu0 %v7287
        %v7327 = vpop.f32.mrf.mxu0
        %v7328 = vadd.f32 0.0, %v7327
        %7329 = vmatmul.f32.gmra.mxu0 %v7290
        %v7330 = vpop.f32.mrf.mxu0
        %v7331 = vadd.f32 0.0, %v7330
        %7332 = vmatmul.f32.gmra.mxu0 %v7293
        %v7333 = vpop.f32.mrf.mxu0
        %v7334 = vadd.f32 0.0, %v7333
        %7335 = vmatmul.f32.gmra.mxu0 %v7296
        %v7336 = vpop.f32.mrf.mxu0
        %v7337 = vadd.f32 0.0, %v7336
        %7338 = vmatmul.f32.gmra.mxu0 %v7299
        %v7339 = vpop.f32.mrf.mxu0
        %v7340 = vadd.f32 0.0, %v7339
        %7341 = vdwg.mxu0
        %s7342 = scalar_lea.vmem %s7, 3
        %v7343 = vld [vmem:[%s7342] sm:$0x1]
        %s7344 = scalar_lea.vmem %s8, 3
        %v7345 = vld [vmem:[%s7344] sm:$0x1]
        %v7347 = vperm.slane %v7343, 0
        %v7349 = vmul.f32 %v7319, %v7347
        %v7350 = vmul.f32 %v7322, %v7347
        %v7351 = vmul.f32 %v7325, %v7347
        %v7352 = vmul.f32 %v7328, %v7347
        %v7353 = vmul.f32 %v7331, %v7347
        %v7354 = vmul.f32 %v7334, %v7347
        %v7355 = vmul.f32 %v7337, %v7347
        %v7356 = vmul.f32 %v7340, %v7347
        %v7358 = vperm.slane %v7345, 0
        %v7360 = vadd.f32 %v7349, %v7358
        %v7361 = vadd.f32 %v7350, %v7358
        %v7362 = vadd.f32 %v7351, %v7358
        %v7363 = vadd.f32 %v7352, %v7358
        %v7364 = vadd.f32 %v7353, %v7358
        %v7365 = vadd.f32 %v7354, %v7358
        %v7366 = vadd.f32 %v7355, %v7358
        %v7367 = vadd.f32 %v7356, %v7358
        %v7368 = vmax.f32 %v7360, 0.0
        %v7369 = vmax.f32 %v7361, 0.0
        %v7370 = vmax.f32 %v7362, 0.0
        %v7371 = vmax.f32 %v7363, 0.0
        %v7372 = vmax.f32 %v7364, 0.0
        %v7373 = vmax.f32 %v7365, 0.0
        %v7374 = vmax.f32 %v7366, 0.0
        %v7375 = vmax.f32 %v7367, 0.0
        %7376 = vst.msk [vmem:[%s6723 + $0x8] sm:$0xff] %vm546, %v7368
        %7377 = vst.msk [vmem:[%s6723 + $0x20] sm:$0xff] %vm546, %v7369
        %7378 = vst.msk [vmem:[%s6723 + $0x38] sm:$0xff] %vm546, %v7370
        %7379 = vst.msk [vmem:[%s6723 + $0x50] sm:$0xff] %vm546, %v7371
        %7380 = vst.msk [vmem:[%s6723 + $0x68] sm:$0xff] %vm546, %v7372
        %7381 = vst.msk [vmem:[%s6723 + $0x80] sm:$0xff] %vm546, %v7373
        %7382 = vst.msk [vmem:[%s6723 + $0x98] sm:$0xff] %vm546, %v7374
        %7383 = vst.msk [vmem:[%s6723 + $0xb0] sm:$0xff] %vm546, %v7375
        %s7384 = scalar_lea.vmem %s9, 864
        %v7385 = vld [vmem:[%s7384] sm:$0xff]
        %v7386 = vld [vmem:[%s7384 + $0x8] sm:$0xff]
        %v7387 = vld [vmem:[%s7384 + $0x10] sm:$0xff]
        %v7388 = vld [vmem:[%s7384 + $0x18] sm:$0xff]
        %v7389 = vld [vmem:[%s7384 + $0x20] sm:$0xff]
        %v7390 = vld [vmem:[%s7384 + $0x28] sm:$0xff]
        %v7391 = vld [vmem:[%s7384 + $0x30] sm:$0xff]
        %v7392 = vld [vmem:[%s7384 + $0x38] sm:$0xff]
        %v7393 = vld [vmem:[%s7384 + $0x40] sm:$0xff]
        %v7394 = vld [vmem:[%s7384 + $0x48] sm:$0xff]
        %v7395 = vld [vmem:[%s7384 + $0x50] sm:$0xff]
        %v7396 = vld [vmem:[%s7384 + $0x58] sm:$0xff]
        %v7397 = vld [vmem:[%s7384 + $0x60] sm:$0xff]
        %v7398 = vld [vmem:[%s7384 + $0x68] sm:$0xff]
        %v7399 = vld [vmem:[%s7384 + $0x70] sm:$0xff]
        %v7400 = vld [vmem:[%s7384 + $0x78] sm:$0xff]
        %v7401 = vld [vmem:[%s7384 + $0x80] sm:$0xff]
        %v7402 = vld [vmem:[%s7384 + $0x88] sm:$0xff]
        %v7403 = vld [vmem:[%s7384 + $0x90] sm:$0xff]
        %v7404 = vld [vmem:[%s7384 + $0x98] sm:$0xff]
        %v7405 = vld [vmem:[%s7384 + $0xa0] sm:$0xff]
        %v7406 = vld [vmem:[%s7384 + $0xa8] sm:$0xff]
        %v7407 = vld [vmem:[%s7384 + $0xb0] sm:$0xff]
        %v7408 = vld [vmem:[%s7384 + $0xb8] sm:$0xff]
        %v7409 = vld [vmem:[%s7384 + $0xc0] sm:$0xff]
        %v7410 = vld [vmem:[%s7384 + $0xc8] sm:$0xff]
        %v7411 = vld [vmem:[%s7384 + $0xd0] sm:$0xff]
        %v7412 = vld [vmem:[%s7384 + $0xd8] sm:$0xff]
        %v7413 = vld [vmem:[%s7384 + $0xe0] sm:$0xff]
        %v7414 = vld [vmem:[%s7384 + $0xe8] sm:$0xff]
        %v7415 = vld [vmem:[%s7384 + $0xf0] sm:$0xff]
        %v7416 = vld [vmem:[%s7384 + $0xf8] sm:$0xff]
        %v7417 = vld [vmem:[%s7384 + $0x100] sm:$0xff]
        %v7418 = vld [vmem:[%s7384 + $0x108] sm:$0xff]
        %v7419 = vld [vmem:[%s7384 + $0x110] sm:$0xff]
        %v7420 = vld [vmem:[%s7384 + $0x118] sm:$0xff]
        %v7421 = vld [vmem:[#allocation5] sm:$0xff]
        %v7422 = vld [vmem:[#allocation5 + $0x8] sm:$0xff]
        %v7423 = vld [vmem:[#allocation5 + $0x10] sm:$0x1]
        %v7424 = vld [vmem:[#allocation5 + $0x18] sm:$0xff]
        %v7425 = vld [vmem:[#allocation5 + $0x20] sm:$0xff]
        %v7426 = vld [vmem:[#allocation5 + $0x28] sm:$0x1]
        %v7427 = vld [vmem:[#allocation5 + $0x30] sm:$0xff]
        %v7428 = vld [vmem:[#allocation5 + $0x38] sm:$0xff]
        %v7429 = vld [vmem:[#allocation5 + $0x40] sm:$0x1]
        %v7430 = vld [vmem:[#allocation5 + $0x48] sm:$0xff]
        %v7431 = vld [vmem:[#allocation5 + $0x50] sm:$0xff]
        %v7432 = vld [vmem:[#allocation5 + $0x58] sm:$0x1]
        %v7433 = vld [vmem:[#allocation5 + $0x60] sm:$0xff]
        %v7434 = vld [vmem:[#allocation5 + $0x68] sm:$0xff]
        %v7435 = vld [vmem:[#allocation5 + $0x70] sm:$0x1]
        %v7436 = vld [vmem:[#allocation5 + $0x78] sm:$0xff]
        %v7437 = vld [vmem:[#allocation5 + $0x80] sm:$0xff]
        %v7438 = vld [vmem:[#allocation5 + $0x88] sm:$0x1]
        %v7439 = vld [vmem:[#allocation5 + $0x90] sm:$0xff]
        %v7440 = vld [vmem:[#allocation5 + $0x98] sm:$0xff]
        %v7441 = vld [vmem:[#allocation5 + $0xa0] sm:$0x1]
        %v7442 = vld [vmem:[#allocation5 + $0xa8] sm:$0xff]
        %v7443 = vld [vmem:[#allocation5 + $0xb0] sm:$0xff]
        %v7444 = vld [vmem:[#allocation5 + $0xb8] sm:$0x1]
        %v7445 = vld [vmem:[#allocation5 + $0xc0] sm:$0xff]
        %v7446 = vld [vmem:[#allocation5 + $0xc8] sm:$0xff]
        %v7447 = vld [vmem:[#allocation5 + $0xd0] sm:$0x1]
        %v7448 = vld [vmem:[#allocation5 + $0xd8] sm:$0xff]
        %v7449 = vld [vmem:[#allocation5 + $0xe0] sm:$0xff]
        %v7450 = vld [vmem:[#allocation5 + $0xe8] sm:$0x1]
        %v7461 = vrot.slane %v7422, 1
        %v7462 = vrot.slane %v7425, 1
        %v7463 = vrot.slane %v7428, 1
        %v7464 = vrot.slane %v7431, 1
        %v7465 = vrot.slane %v7434, 1
        %v7466 = vrot.slane %v7437, 1
        %v7467 = vrot.slane %v7440, 1
        %v7468 = vrot.slane %v7443, 1
        %v7469 = vrot.slane %v7446, 1
        %v7470 = vrot.slane %v7449, 1
        %7471 = vrot.lane.b32.xlu0 %v7461, 32
        %v7472 = vpop.permute.xlu0 %7471
        %7473 = vrot.lane.b32.xlu0 %v7462, 32
        %v7474 = vpop.permute.xlu0 %7473
        %7475 = vrot.lane.b32.xlu0 %v7463, 32
        %v7476 = vpop.permute.xlu0 %7475
        %7477 = vrot.lane.b32.xlu0 %v7464, 32
        %v7478 = vpop.permute.xlu0 %7477
        %7479 = vrot.lane.b32.xlu0 %v7465, 32
        %v7480 = vpop.permute.xlu0 %7479
        %7481 = vrot.lane.b32.xlu0 %v7466, 32
        %v7482 = vpop.permute.xlu0 %7481
        %7483 = vrot.lane.b32.xlu0 %v7467, 32
        %v7484 = vpop.permute.xlu0 %7483
        %7485 = vrot.lane.b32.xlu0 %v7468, 32
        %v7486 = vpop.permute.xlu0 %7485
        %7487 = vrot.lane.b32.xlu0 %v7469, 32
        %v7488 = vpop.permute.xlu0 %7487
        %7489 = vrot.lane.b32.xlu0 %v7470, 32
        %v7490 = vpop.permute.xlu0 %7489
        %v7511 = vrot.slane %v7422, 2
        %v7512 = vrot.slane %v7423, 2
        %v7513 = vsel %vm1105, %v7511, %v7512
        %v7514 = vrot.slane %v7425, 2
        %v7515 = vrot.slane %v7426, 2
        %v7516 = vsel %vm1105, %v7514, %v7515
        %v7517 = vrot.slane %v7428, 2
        %v7518 = vrot.slane %v7429, 2
        %v7519 = vsel %vm1105, %v7517, %v7518
        %v7520 = vrot.slane %v7431, 2
        %v7521 = vrot.slane %v7432, 2
        %v7522 = vsel %vm1105, %v7520, %v7521
        %v7523 = vrot.slane %v7434, 2
        %v7524 = vrot.slane %v7435, 2
        %v7525 = vsel %vm1105, %v7523, %v7524
        %v7526 = vrot.slane %v7437, 2
        %v7527 = vrot.slane %v7438, 2
        %v7528 = vsel %vm1105, %v7526, %v7527
        %v7529 = vrot.slane %v7440, 2
        %v7530 = vrot.slane %v7441, 2
        %v7531 = vsel %vm1105, %v7529, %v7530
        %v7532 = vrot.slane %v7443, 2
        %v7533 = vrot.slane %v7444, 2
        %v7534 = vsel %vm1105, %v7532, %v7533
        %v7535 = vrot.slane %v7446, 2
        %v7536 = vrot.slane %v7447, 2
        %v7537 = vsel %vm1105, %v7535, %v7536
        %v7538 = vrot.slane %v7449, 2
        %v7539 = vrot.slane %v7450, 2
        %v7540 = vsel %vm1105, %v7538, %v7539
        %7541 = vrot.lane.b32.xlu0 %v7511, 64
        %v7542 = vpop.permute.xlu0 %7541
        %7543 = vrot.lane.b32.xlu0 %v7513, 64
        %v7544 = vpop.permute.xlu0 %7543
        %7545 = vrot.lane.b32.xlu0 %v7514, 64
        %v7546 = vpop.permute.xlu0 %7545
        %7547 = vrot.lane.b32.xlu0 %v7516, 64
        %v7548 = vpop.permute.xlu0 %7547
        %7549 = vrot.lane.b32.xlu0 %v7517, 64
        %v7550 = vpop.permute.xlu0 %7549
        %7551 = vrot.lane.b32.xlu0 %v7519, 64
        %v7552 = vpop.permute.xlu0 %7551
        %7553 = vrot.lane.b32.xlu0 %v7520, 64
        %v7554 = vpop.permute.xlu0 %7553
        %7555 = vrot.lane.b32.xlu0 %v7522, 64
        %v7556 = vpop.permute.xlu0 %7555
        %7557 = vrot.lane.b32.xlu0 %v7523, 64
        %v7558 = vpop.permute.xlu0 %7557
        %7559 = vrot.lane.b32.xlu0 %v7525, 64
        %v7560 = vpop.permute.xlu0 %7559
        %7561 = vrot.lane.b32.xlu0 %v7526, 64
        %v7562 = vpop.permute.xlu0 %7561
        %7563 = vrot.lane.b32.xlu0 %v7528, 64
        %v7564 = vpop.permute.xlu0 %7563
        %7565 = vrot.lane.b32.xlu0 %v7529, 64
        %v7566 = vpop.permute.xlu0 %7565
        %7567 = vrot.lane.b32.xlu0 %v7531, 64
        %v7568 = vpop.permute.xlu0 %7567
        %7569 = vrot.lane.b32.xlu0 %v7532, 64
        %v7570 = vpop.permute.xlu0 %7569
        %7571 = vrot.lane.b32.xlu0 %v7534, 64
        %v7572 = vpop.permute.xlu0 %7571
        %7573 = vrot.lane.b32.xlu0 %v7535, 64
        %v7574 = vpop.permute.xlu0 %7573
        %7575 = vrot.lane.b32.xlu0 %v7537, 64
        %v7576 = vpop.permute.xlu0 %7575
        %7577 = vrot.lane.b32.xlu0 %v7538, 64
        %v7578 = vpop.permute.xlu0 %7577
        %7579 = vrot.lane.b32.xlu0 %v7540, 64
        %v7580 = vpop.permute.xlu0 %7579
        %v7601 = vsel %vm546, %v7421, %v7472
        %v7602 = vsel %vm546, %v7422, %v7472
        %v7603 = vsel %vm546, %v7424, %v7474
        %v7604 = vsel %vm546, %v7425, %v7474
        %v7605 = vsel %vm546, %v7427, %v7476
        %v7606 = vsel %vm546, %v7428, %v7476
        %v7607 = vsel %vm546, %v7430, %v7478
        %v7608 = vsel %vm546, %v7431, %v7478
        %v7609 = vsel %vm546, %v7433, %v7480
        %v7610 = vsel %vm546, %v7434, %v7480
        %v7611 = vsel %vm546, %v7436, %v7482
        %v7612 = vsel %vm546, %v7437, %v7482
        %v7613 = vsel %vm546, %v7439, %v7484
        %v7614 = vsel %vm546, %v7440, %v7484
        %v7615 = vsel %vm546, %v7442, %v7486
        %v7616 = vsel %vm546, %v7443, %v7486
        %v7617 = vsel %vm546, %v7445, %v7488
        %v7618 = vsel %vm546, %v7446, %v7488
        %v7619 = vsel %vm546, %v7448, %v7490
        %v7620 = vsel %vm546, %v7449, %v7490
        %v7621 = vsel %vm1412, %v7601, %v7542
        %v7622 = vsel %vm1412, %v7602, %v7544
        %v7623 = vsel %vm1412, %v7603, %v7546
        %v7624 = vsel %vm1412, %v7604, %v7548
        %v7625 = vsel %vm1412, %v7605, %v7550
        %v7626 = vsel %vm1412, %v7606, %v7552
        %v7627 = vsel %vm1412, %v7607, %v7554
        %v7628 = vsel %vm1412, %v7608, %v7556
        %v7629 = vsel %vm1412, %v7609, %v7558
        %v7630 = vsel %vm1412, %v7610, %v7560
        %v7631 = vsel %vm1412, %v7611, %v7562
        %v7632 = vsel %vm1412, %v7612, %v7564
        %v7633 = vsel %vm1412, %v7613, %v7566
        %v7634 = vsel %vm1412, %v7614, %v7568
        %v7635 = vsel %vm1412, %v7615, %v7570
        %v7636 = vsel %vm1412, %v7616, %v7572
        %v7637 = vsel %vm1412, %v7617, %v7574
        %v7638 = vsel %vm1412, %v7618, %v7576
        %v7639 = vsel %vm1412, %v7619, %v7578
        %v7640 = vsel %vm1412, %v7620, %v7580
        %v7657 = vrot.slane %v7621, 7
        %v7658 = vrot.slane %v7622, 7
        %v7659 = vsel %vm1515, %v7657, %v7658
        %v7660 = vrot.slane %v7623, 7
        %v7661 = vrot.slane %v7624, 7
        %v7662 = vsel %vm1515, %v7660, %v7661
        %v7663 = vrot.slane %v7625, 7
        %v7664 = vrot.slane %v7626, 7
        %v7665 = vsel %vm1515, %v7663, %v7664
        %v7666 = vrot.slane %v7627, 7
        %v7667 = vrot.slane %v7628, 7
        %v7668 = vsel %vm1515, %v7666, %v7667
        %v7669 = vrot.slane %v7629, 7
        %v7670 = vrot.slane %v7630, 7
        %v7671 = vsel %vm1515, %v7669, %v7670
        %v7672 = vrot.slane %v7631, 7
        %v7673 = vrot.slane %v7632, 7
        %v7674 = vsel %vm1515, %v7672, %v7673
        %v7675 = vrot.slane %v7633, 7
        %v7676 = vrot.slane %v7634, 7
        %v7677 = vsel %vm1515, %v7675, %v7676
        %v7678 = vrot.slane %v7635, 7
        %v7679 = vrot.slane %v7636, 7
        %v7680 = vsel %vm1515, %v7678, %v7679
        %v7683 = vrot.slane %v7637, 7
        %v7684 = vrot.slane %v7638, 7
        %v7685 = vsel %vm1515, %v7683, %v7684
        %v7686 = vsel %vm1604, %v7662, 0
        %v7688 = vsel %vm1604, %v7665, 0
        %v7690 = vsel %vm1604, %v7668, 0
        %v7692 = vsel %vm1604, %v7671, 0
        %v7694 = vsel %vm1604, %v7674, 0
        %v7696 = vsel %vm1604, %v7677, 0
        %v7698 = vsel %vm1604, %v7680, 0
        %v7700 = vsel %vm1604, %v7685, 0
        %7702 = vmatpush.msra.mxu0 0.0
        %7703 = vmatpush.msra.mxu0 0.0
        %7704 = vmatpush.msra.mxu0 0.0
        %7705 = vmatpush.msra.mxu0 0.0
        %7706 = vmatpush.msra.mxu0 %v7408
        %7707 = vmatpush.msra.mxu0 %v7407
        %7708 = vmatpush.msra.mxu0 %v7406
        %7709 = vmatpush.msra.mxu0 %v7405
        %7710 = vmatpush.msra.mxu0 %v7404
        %7711 = vmatpush.msra.mxu0 %v7403
        %7712 = vmatpush.msra.mxu0 %v7402
        %7713 = vmatpush.msra.mxu0 %v7401
        %7714 = vmatpush.msra.mxu0 %v7400
        %7715 = vmatpush.msra.mxu0 %v7399
        %7716 = vmatpush.msra.mxu0 %v7398
        %7717 = vmatpush.msra.mxu0 %v7397
        %7718 = vmatmul.f32.gmra.mxu0 %v7686
        %v7719 = vpop.f32.mrf.mxu0
        %v7720 = vadd.f32 0.0, %v7719
        %7721 = vmatmul.f32.gmra.mxu0 %v7688
        %v7722 = vpop.f32.mrf.mxu0
        %v7723 = vadd.f32 0.0, %v7722
        %7724 = vmatmul.f32.gmra.mxu0 %v7690
        %v7725 = vpop.f32.mrf.mxu0
        %v7726 = vadd.f32 0.0, %v7725
        %7727 = vmatmul.f32.gmra.mxu0 %v7692
        %v7728 = vpop.f32.mrf.mxu0
        %v7729 = vadd.f32 0.0, %v7728
        %7730 = vmatmul.f32.gmra.mxu0 %v7694
        %v7731 = vpop.f32.mrf.mxu0
        %v7732 = vadd.f32 0.0, %v7731
        %7733 = vmatmul.f32.gmra.mxu0 %v7696
        %v7734 = vpop.f32.mrf.mxu0
        %v7735 = vadd.f32 0.0, %v7734
        %7736 = vmatmul.f32.gmra.mxu0 %v7698
        %v7737 = vpop.f32.mrf.mxu0
        %v7738 = vadd.f32 0.0, %v7737
        %7739 = vmatmul.f32.gmra.mxu0 %v7700
        %v7740 = vpop.f32.mrf.mxu0
        %v7741 = vadd.f32 0.0, %v7740
        %7742 = vdwg.mxu0
        %v7743 = vsel %vm1604, %v7659, 0
        %7745 = vmatpush.msra.mxu0 0.0
        %7746 = vmatpush.msra.mxu0 0.0
        %7747 = vmatpush.msra.mxu0 0.0
        %7748 = vmatpush.msra.mxu0 0.0
        %7749 = vmatpush.msra.mxu0 %v7396
        %7750 = vmatpush.msra.mxu0 %v7395
        %7751 = vmatpush.msra.mxu0 %v7394
        %7752 = vmatpush.msra.mxu0 %v7393
        %7753 = vmatpush.msra.mxu0 %v7392
        %7754 = vmatpush.msra.mxu0 %v7391
        %7755 = vmatpush.msra.mxu0 %v7390
        %7756 = vmatpush.msra.mxu0 %v7389
        %7757 = vmatpush.msra.mxu0 %v7388
        %7758 = vmatpush.msra.mxu0 %v7387
        %7759 = vmatpush.msra.mxu0 %v7386
        %7760 = vmatpush.msra.mxu0 %v7385
        %7761 = vmatmul.f32.gmra.mxu0 %v7743
        %v7762 = vpop.f32.mrf.mxu0
        %v7763 = vadd.f32 %v7720, %v7762
        %7764 = vmatmul.f32.gmra.mxu0 %v7686
        %v7765 = vpop.f32.mrf.mxu0
        %v7766 = vadd.f32 %v7723, %v7765
        %7767 = vmatmul.f32.gmra.mxu0 %v7688
        %v7768 = vpop.f32.mrf.mxu0
        %v7769 = vadd.f32 %v7726, %v7768
        %7770 = vmatmul.f32.gmra.mxu0 %v7690
        %v7771 = vpop.f32.mrf.mxu0
        %v7772 = vadd.f32 %v7729, %v7771
        %7773 = vmatmul.f32.gmra.mxu0 %v7692
        %v7774 = vpop.f32.mrf.mxu0
        %v7775 = vadd.f32 %v7732, %v7774
        %7776 = vmatmul.f32.gmra.mxu0 %v7694
        %v7777 = vpop.f32.mrf.mxu0
        %v7778 = vadd.f32 %v7735, %v7777
        %7779 = vmatmul.f32.gmra.mxu0 %v7696
        %v7780 = vpop.f32.mrf.mxu0
        %v7781 = vadd.f32 %v7738, %v7780
        %7782 = vmatmul.f32.gmra.mxu0 %v7698
        %v7783 = vpop.f32.mrf.mxu0
        %v7784 = vadd.f32 %v7741, %v7783
        %7785 = vdwg.mxu0
        %v7788 = vrot.slane %v7639, 7
        %v7789 = vrot.slane %v7640, 7
        %v7790 = vsel %vm1515, %v7788, %v7789
        %v7791 = vsel %vm1604, %v7790, 0
        %7793 = vmatpush.msra.mxu0 0.0
        %7794 = vmatpush.msra.mxu0 0.0
        %7795 = vmatpush.msra.mxu0 0.0
        %7796 = vmatpush.msra.mxu0 0.0
        %7797 = vmatpush.msra.mxu0 %v7420
        %7798 = vmatpush.msra.mxu0 %v7419
        %7799 = vmatpush.msra.mxu0 %v7418
        %7800 = vmatpush.msra.mxu0 %v7417
        %7801 = vmatpush.msra.mxu0 %v7416
        %7802 = vmatpush.msra.mxu0 %v7415
        %7803 = vmatpush.msra.mxu0 %v7414
        %7804 = vmatpush.msra.mxu0 %v7413
        %7805 = vmatpush.msra.mxu0 %v7412
        %7806 = vmatpush.msra.mxu0 %v7411
        %7807 = vmatpush.msra.mxu0 %v7410
        %7808 = vmatpush.msra.mxu0 %v7409
        %7809 = vmatmul.f32.gmra.mxu0 %v7688
        %v7810 = vpop.f32.mrf.mxu0
        %v7811 = vadd.f32 0.0, %v7810
        %7812 = vmatmul.f32.gmra.mxu0 %v7690
        %v7813 = vpop.f32.mrf.mxu0
        %v7814 = vadd.f32 0.0, %v7813
        %7815 = vmatmul.f32.gmra.mxu0 %v7692
        %v7816 = vpop.f32.mrf.mxu0
        %v7817 = vadd.f32 0.0, %v7816
        %7818 = vmatmul.f32.gmra.mxu0 %v7694
        %v7819 = vpop.f32.mrf.mxu0
        %v7820 = vadd.f32 0.0, %v7819
        %7821 = vmatmul.f32.gmra.mxu0 %v7696
        %v7822 = vpop.f32.mrf.mxu0
        %v7823 = vadd.f32 0.0, %v7822
        %7824 = vmatmul.f32.gmra.mxu0 %v7698
        %v7825 = vpop.f32.mrf.mxu0
        %v7826 = vadd.f32 0.0, %v7825
        %7827 = vmatmul.f32.gmra.mxu0 %v7700
        %v7828 = vpop.f32.mrf.mxu0
        %v7829 = vadd.f32 0.0, %v7828
        %7830 = vmatmul.f32.gmra.mxu0 %v7791
        %v7831 = vpop.f32.mrf.mxu0
        %v7832 = vadd.f32 0.0, %v7831
        %7833 = vdwg.mxu0
        %v7834 = vadd.f32 %v7763, %v7811
        %v7835 = vadd.f32 %v7766, %v7814
        %v7836 = vadd.f32 %v7769, %v7817
        %v7837 = vadd.f32 %v7772, %v7820
        %v7838 = vadd.f32 %v7775, %v7823
        %v7839 = vadd.f32 %v7778, %v7826
        %v7840 = vadd.f32 %v7781, %v7829
        %v7841 = vadd.f32 %v7784, %v7832
        %7850 = vrot.lane.b32.xlu0 %v7834, 24
        %v7851 = vpop.permute.xlu0 %7850
        %7852 = vrot.lane.b32.xlu0 %v7835, 24
        %v7853 = vpop.permute.xlu0 %7852
        %7854 = vrot.lane.b32.xlu0 %v7836, 24
        %v7855 = vpop.permute.xlu0 %7854
        %7856 = vrot.lane.b32.xlu0 %v7837, 24
        %v7857 = vpop.permute.xlu0 %7856
        %7858 = vrot.lane.b32.xlu0 %v7838, 24
        %v7859 = vpop.permute.xlu0 %7858
        %7860 = vrot.lane.b32.xlu0 %v7839, 24
        %v7861 = vpop.permute.xlu0 %7860
        %7862 = vrot.lane.b32.xlu0 %v7840, 24
        %v7863 = vpop.permute.xlu0 %7862
        %7864 = vrot.lane.b32.xlu0 %v7841, 24
        %v7865 = vpop.permute.xlu0 %7864
        %7874 = vst.msk [vmem:[#allocation3] sm:$0xff] %vm6108, %v7851
        %7875 = vst.msk [vmem:[#allocation3 + $0x8] sm:$0xff] %vm6108, %v7853
        %7876 = vst.msk [vmem:[#allocation3 + $0x10] sm:$0xff] %vm6108, %v7855
        %7877 = vst.msk [vmem:[#allocation3 + $0x18] sm:$0xff] %vm6108, %v7857
        %7878 = vst.msk [vmem:[#allocation3 + $0x20] sm:$0xff] %vm6108, %v7859
        %7879 = vst.msk [vmem:[#allocation3 + $0x28] sm:$0xff] %vm6108, %v7861
        %7880 = vst.msk [vmem:[#allocation3 + $0x30] sm:$0xff] %vm6108, %v7863
        %7881 = vst.msk [vmem:[#allocation3 + $0x38] sm:$0xff] %vm6108, %v7865
        %v7882 = vld [vmem:[#allocation3] sm:$0xff]
        %v7883 = vld [vmem:[#allocation3 + $0x8] sm:$0xff]
        %v7884 = vld [vmem:[#allocation3 + $0x10] sm:$0xff]
        %v7885 = vld [vmem:[#allocation3 + $0x18] sm:$0xff]
        %v7886 = vld [vmem:[#allocation3 + $0x20] sm:$0xff]
        %v7887 = vld [vmem:[#allocation3 + $0x28] sm:$0xff]
        %v7888 = vld [vmem:[#allocation3 + $0x30] sm:$0xff]
        %v7889 = vld [vmem:[#allocation3 + $0x38] sm:$0xff]
        %v7890 = vld [vmem:[%s13] sm:$0x1]
        %v7891 = vld [vmem:[%s14] sm:$0x1]
        %v7893 = vperm.slane %v7890, 0
        %v7895 = vmul.f32 %v7882, %v7893
        %v7896 = vmul.f32 %v7883, %v7893
        %v7897 = vmul.f32 %v7884, %v7893
        %v7898 = vmul.f32 %v7885, %v7893
        %v7899 = vmul.f32 %v7886, %v7893
        %v7900 = vmul.f32 %v7887, %v7893
        %v7901 = vmul.f32 %v7888, %v7893
        %v7902 = vmul.f32 %v7889, %v7893
        %v7904 = vperm.slane %v7891, 0
        %v7906 = vadd.f32 %v7895, %v7904
        %v7907 = vadd.f32 %v7896, %v7904
        %v7908 = vadd.f32 %v7897, %v7904
        %v7909 = vadd.f32 %v7898, %v7904
        %v7910 = vadd.f32 %v7899, %v7904
        %v7911 = vadd.f32 %v7900, %v7904
        %v7912 = vadd.f32 %v7901, %v7904
        %v7913 = vadd.f32 %v7902, %v7904
        %v7914 = vmax.f32 %v7906, 0.0
        %v7915 = vmax.f32 %v7907, 0.0
        %v7916 = vmax.f32 %v7908, 0.0
        %v7917 = vmax.f32 %v7909, 0.0
        %v7918 = vmax.f32 %v7910, 0.0
        %v7919 = vmax.f32 %v7911, 0.0
        %v7920 = vmax.f32 %v7912, 0.0
        %v7921 = vmax.f32 %v7913, 0.0
        %v7922 = vsel %vm546, %v7914, 0.0
        %v7923 = vsel %vm546, %v7915, 0.0
        %v7924 = vadd.f32 %v7922, %v7923
        %v7925 = vsel %vm546, %v7916, 0.0
        %v7926 = vadd.f32 %v7924, %v7925
        %v7927 = vsel %vm546, %v7917, 0.0
        %v7928 = vadd.f32 %v7926, %v7927
        %v7929 = vsel %vm546, %v7918, 0.0
        %v7930 = vadd.f32 %v7928, %v7929
        %v7931 = vsel %vm546, %v7919, 0.0
        %v7932 = vadd.f32 %v7930, %v7931
        %v7933 = vsel %vm546, %v7920, 0.0
        %v7934 = vadd.f32 %v7932, %v7933
        %v7935 = vsel %vm546, %v7921, 0.0
        %v7936 = vadd.f32 %v7934, %v7935
        %v7937 = vrot.slane %v7936, 4
        %v7938 = vadd.f32 %v7936, %v7937
        %v7939 = vrot.slane %v7938, 2
        %v7940 = vadd.f32 %v7938, %v7939
        %v7941 = vrot.slane %v7940, 1
        %v7942 = vadd.f32 %v7940, %v7941
        %v7943 = vmul.f32 %v7942, 0.015625
        %v7944 = vld [vmem:[%s15] sm:$0xff]
        %v7945 = vld [vmem:[%s15 + $0x8] sm:$0xff]
        %v7946 = vld [vmem:[%s15 + $0x10] sm:$0xff]
        %v7947 = vld [vmem:[%s15 + $0x18] sm:$0xff]
        %v7948 = vld [vmem:[%s16] sm:$0x1]
        %v7950 = vsel %vm546, %v7943, 0
        %7952 = vmatpush.msra.mxu0 0.0
        %7953 = vmatpush.msra.mxu0 0.0
        %7954 = vmatpush.msra.mxu0 0.0
        %7955 = vmatpush.msra.mxu0 0.0
        %7956 = vmatpush.msra.mxu0 0.0
        %7957 = vmatpush.msra.mxu0 0.0
        %7958 = vmatpush.msra.mxu0 0.0
        %7959 = vmatpush.msra.mxu0 0.0
        %7960 = vmatpush.msra.mxu0 0.0
        %7961 = vmatpush.msra.mxu0 0.0
        %7962 = vmatpush.msra.mxu0 0.0
        %7963 = vmatpush.msra.mxu0 0.0
        %7964 = vmatpush.msra.mxu0 %v7947
        %7965 = vmatpush.msra.mxu0 %v7946
        %7966 = vmatpush.msra.mxu0 %v7945
        %7967 = vmatpush.msra.mxu0 %v7944
        %7968 = vmatmul.f32.gmra.mxu0 %v7950
        %v7969 = vpop.f32.mrf.mxu0
        %v7970 = vadd.f32 %v7948, %v7969
        %7971 = vdwg.mxu0
        %vm7972 = vcmask 24576
        %7973 = vst.msk [vmem:[%s540] sm:$0x1] %vm7972, %v7970
        %s7974 = sand.u32 %s401, 1
        %s7975 = scalar_lea.sflag [#allocation8], %s7974
        %s7976 = sand.u32 %s401, 1
        %s7977 = scalar_lea.vmem [#allocation7], %s7976
        // Predicated region
        $region89: #{main_model_forward.1} parent=87 // pred_check
          %p7978 = pneg %p411
        $region90: #{main_model_forward.1} parent=87 // pred_check_branch
          %7980 = sbr.rel (%p7978) target = $region92
        $region91: #{main_model_forward.1} parent=87 // pred_region
          %7982 = vsyncadd %s7975, 0
          %s7983 = scalar_lea.hbm %s17, %s31
          %s7985 = sshll.u32 %s7977, 4
          %s7986 = int_to_ptr.vmem [resolvable:$true] %s7985
          %s7987 = sshll.u32 %s7983, 4
          %s7988 = int_to_ptr.hbm [resolvable:$true] %s7987
          %7990 = dma.vmem_to_hbm [thread:$0]  %s7986, 16, %s7988, %s7975
        $region92: #{main_model_forward.1} parent=87 // pred_fallthru
          _
      $region88: #{main_model_forward.1} parent=5 // pred_fallthru
        _
      %p7991 = scmp.le.s32.totalorder 2, %s26
      // Predicated region
      $region93: #{main_model_forward.1} parent=5 // pred_check
        %p7992 = pneg %p7991
      $region94: #{main_model_forward.1} parent=5 // pred_check_branch
        %7994 = sbr.rel (%p7992) target = $region96
      $region95: #{main_model_forward.1} parent=5 // pred_region
        %s7995 = ssub.s32 %s26, 2
        // Predicated region
        $region97: #{main_model_forward.1} parent=95 // pred_check
          %p7996 = pneg %p417
        $region98: #{main_model_forward.1} parent=95 // pred_check_branch
          %7998 = sbr.rel (%p7996) target = $region100
        $region99: #{main_model_forward.1} parent=95 // pred_region
          %s7999 = sand.u32 %s402, 1
          %s8000 = scalar_lea.sflag [#allocation8], %s7999
          %s8001 = sand.u32 %s402, 1
          %s8002 = scalar_lea.vmem [#allocation7], %s8001
          %8004 = dma.done %s8000, 16
        $region100: #{main_model_forward.1} parent=95 // pred_fallthru
          _
      $region96: #{main_model_forward.1} parent=5 // pred_fallthru
        _
    $region6: #{main_model_forward.1} parent=1 // loop_footer
      %s30 = sadd.s32 1, %s26
    $region7: #{main_model_forward.1} parent=1 // loop_footer_branch
      %25 = sbr.rel target = $region3
    $region8: #{main_model_forward.1} parent=1 // loop_exit
      _
    %8005 = vsyncpa [#allocation8], 1
    %s8006 = scalar_lea.sflag [#allocation8], 1
    %8007 = vsyncpa %s8006, 1

</llo_original>
